<compile_context>
chip_gen: v7x
topology: tpu7x:2x2x1
jax: 0.10.0
libtpu: 0.0.40
codegen_flags: <defaults>
</compile_context>

<pallas_src>
import functools

import jax
import jax.numpy as jnp
from jax.experimental import pallas as pl
from jax.experimental.pallas import tpu as pltpu

BN_EPS = 1e-5
_LANE = 128


def _round_up(n, m):
    return (n + m - 1) // m * m


def _vmem_limit_bytes():
    """Scoped-VMEM limit derived from the actual chip (v7x 64MiB, else 128MiB)."""
    try:
        cap = int(pltpu.get_tpu_info().vmem_capacity_bytes)
    except Exception:
        cap = 64 * 1024 * 1024          # conservative fallback (v7x per-core)
    return max(min(int(cap * 0.75), cap - (8 << 20)), 16 << 20)


def _conv_step_bytes(B, TH, W, Cp, in_bytes, cd_bytes):
    """Per-grid-step VMEM audit for the conv kernel (double-buffered streams)."""
    m = B * TH * W
    stage = B * (TH + 2) * W * 3 * Cp * cd_bytes          # K-packed staging scratch
    ins = 2 * B * (TH + 2) * W * Cp * in_bytes            # mid + 2 halo rows, 2x buf
    outs = 2 * (m * Cp * cd_bytes + 2 * Cp * 4)           # y + stats, 2x buf
    wts = 2 * 9 * Cp * Cp * cd_bytes                      # resident weights (2x alloc)
    vecs = 2 * 2 * Cp * 4
    acc = m * Cp * 4                                      # f32 accumulator value
    return stage + ins + outs + wts + vecs + acc


def _res_step_bytes(B, TH, W, Cp, cd_bytes):
    tile = B * TH * W * Cp
    return 2 * (tile * (4 + cd_bytes + 4) + 2 * Cp * 4)


def _pick_tile_h(H, fits, big_enough):
    """Largest divisor of H whose per-step VMEM fits; prefer nt>=2 if still big."""
    divs = [d for d in range(1, H + 1) if H % d == 0 and fits(d)]
    if not divs:
        return 1
    th = max(divs)
    if th == H:
        # Prefer nt >= 2 so the single "parallel" grid axis can split across
        # v7x's two TensorCores, as long as each step stays large enough.
        alts = [d for d in divs if d < H and big_enough(d)]
        if alts:
            th = max(alts)
    return th
    # TODO(synk): H with no good divisor still falls back to a small TH; a
    # pl.when-guarded ragged last tile would lift the "TH divides H" rule.


# ---------------------------------------------------------------------------
# Conv kernel: reflection-padded 3x3 conv + fused per-tile BN statistics.
# Optionally applies a per-channel affine (+ReLU) to its *input* first, which
# is how the previous layer's BatchNorm (+activation) is applied on the fly.
# ---------------------------------------------------------------------------
def _conv3x3_kernel(top_ref, mid_ref, bot_ref, w_ref, scale_ref, shift_ref,
                    y_ref, stats_ref, stage_ref,
                    *, TH, W, Cp, pre_affine, pre_relu):
    B = mid_ref.shape[0]
    cd = stage_ref.dtype                 # compute dtype (bf16 or f32)

    if pre_affine:
        scale = scale_ref[...]           # (1, Cp) -> broadcasts over channels
        shift = shift_ref[...]

    def pre(v):
        v = v.astype(jnp.float32)
        if pre_affine:
            v = v * scale + shift
        if pre_relu:
            v = jnp.maximum(v, 0.0)
        return v.astype(cd)              # single cast per stream (bf16 MXU path)

    def stage_rows(r0, nrows, v):
        # Write the 3 width-reflected dx taps of v into the K-packed staging
        # buffer at lane offsets {0, Cp, 2Cp} (lane-aligned segment writes).
        rs = slice(r0, r0 + nrows)
        # dx = 1 (center tap): columns align 1:1.
        stage_ref[:, rs, :, Cp:2 * Cp] = v
        # dx = 0 (left tap): out col w reads in col w-1; col 0 reflects col 1.
        stage_ref[:, rs, 1:W, 0:Cp] = v[:, :, 0:W - 1, :]
        stage_ref[:, rs, 0:1, 0:Cp] = v[:, :, 1:2, :]
        # dx = 2 (right tap): out col w reads in col w+1; col W-1 reflects W-2.
        stage_ref[:, rs, 0:W - 1, 2 * Cp:3 * Cp] = v[:, :, 1:W, :]
        stage_ref[:, rs, W - 1:W, 2 * Cp:3 * Cp] = v[:, :, W - 2:W - 1, :]

    # Halo rows arrive pre-reflected (in H) via their BlockSpec index_maps.
    stage_rows(1, TH, pre(mid_ref[...]))
    stage_rows(0, 1, pre(top_ref[...]))
    stage_rows(TH + 1, 1, pre(bot_ref[...]))

    M = B * TH * W
    K = 3 * Cp
    # 3 dy taps, each an (M, 3*Cp) x (3*Cp, Cp) MXU matmul, accumulated in a
    # JAX value (no VMEM read-modify-write of an accumulator ref).
    acc = jnp.dot(stage_ref[:, 0:TH, :, :].reshape(M, K), w_ref[0],
                  preferred_element_type=jnp.float32)
    acc = acc + jnp.dot(stage_ref[:, 1:TH + 1, :, :].reshape(M, K), w_ref[1],
                        preferred_element_type=jnp.float32)
    acc = acc + jnp.dot(stage_ref[:, 2:TH + 2, :, :].reshape(M, K), w_ref[2],
                        preferred_element_type=jnp.float32)

    y_ref[...] = acc.reshape(B, TH, W, Cp).astype(y_ref.dtype)
    # Fused BN statistics: per-tile per-channel sum / sum-of-squares partials
    # taken from the f32 accumulator (single-pass; guarded in the wrapper).
    stats_ref[0:1, 0:1, :] = jnp.sum(acc, axis=0).reshape(1, 1, Cp)
    stats_ref[0:1, 1:2, :] = jnp.sum(acc * acc, axis=0).reshape(1, 1, Cp)


def _conv3x3_bn_stats(x, w3, scale, shift, *, TH, pre_affine, pre_relu,
                      compute_dtype, vmem_limit):
    B, H, W, Cp = x.shape
    nt = H // TH
    kernel = functools.partial(_conv3x3_kernel, TH=TH, W=W, Cp=Cp,
                               pre_affine=pre_affine, pre_relu=pre_relu)

    # Three row streams over the *same* input array: a TH-row main block plus
    # two single-row halo streams (block size 1 => block index == row index).
    # The halo index_maps fold in the H reflection at the image boundaries.
    top_spec = pl.BlockSpec(
        (B, 1, W, Cp), lambda i: (0, jnp.where(i == 0, 1, i * TH - 1), 0, 0))
    mid_spec = pl.BlockSpec((B, TH, W, Cp), lambda i: (0, i, 0, 0))
    bot_spec = pl.BlockSpec(
        (B, 1, W, Cp),
        lambda i: (0, jnp.where(i == nt - 1, H - 2, i * TH + TH), 0, 0))
    # Constant index_map => weights / scale / shift are fetched once and stay
    # resident (bf16 weights halve their footprint; single-buffering them via
    # pl.Buffered(1) would save a bit more VMEM at very large Cp).
    w_spec = pl.BlockSpec((3, 3 * Cp, Cp), lambda i: (0, 0, 0))
    vec_spec = pl.BlockSpec((1, Cp), lambda i: (0, 0))

    grid_spec = pltpu.PrefetchScalarGridSpec(
        num_scalar_prefetch=0,
        grid=(nt,),
        in_specs=[top_spec, mid_spec, bot_spec, w_spec, vec_spec, vec_spec],
        out_specs=[pl.BlockSpec((B, TH, W, Cp), lambda i: (0, i, 0, 0)),
                   pl.BlockSpec((1, 2, Cp), lambda i: (i, 0, 0))],
        scratch_shapes=[pltpu.VMEM((B, TH + 2, W, 3 * Cp), compute_dtype)],
    )
    y, stats = pl.pallas_call(
        kernel,
        grid_spec=grid_spec,
        out_shape=(jax.ShapeDtypeStruct((B, H, W, Cp), compute_dtype),
                   jax.ShapeDtypeStruct((nt, 2, Cp), jnp.float32)),
        compiler_params=pltpu.CompilerParams(
            dimension_semantics=("parallel",),
            vmem_limit_bytes=vmem_limit),
    )(x, x, x, w3, scale, shift)
    return y, stats


# ---------------------------------------------------------------------------
# Finalize kernel: out = x + scale2 * conv2_raw + shift2   (BN2 + residual)
# ---------------------------------------------------------------------------
def _residual_affine_kernel(x_ref, h_ref, scale_ref, shift_ref, o_ref):
    h = h_ref[...].astype(jnp.float32)
    o_ref[...] = x_ref[...] + (h * scale_ref[...] + shift_ref[...])


def _residual_affine(x, h, scale, shift, *, TH, vmem_limit):
    B, H, W, Cp = x.shape
    nt = H // TH
    tile = pl.BlockSpec((B, TH, W, Cp), lambda i: (0, i, 0, 0))
    vec = pl.BlockSpec((1, Cp), lambda i: (0, 0))
    grid_spec = pltpu.PrefetchScalarGridSpec(
        num_scalar_prefetch=0,
        grid=(nt,),
        in_specs=[tile, tile, vec, vec],
        out_specs=tile,
    )
    return pl.pallas_call(
        _residual_affine_kernel,
        grid_spec=grid_spec,
        out_shape=jax.ShapeDtypeStruct((B, H, W, Cp), jnp.float32),
        compiler_params=pltpu.CompilerParams(
            dimension_semantics=("parallel",),
            vmem_limit_bytes=vmem_limit),
    )(x, h, scale, shift)


def _bn_scale_shift(stats, count, gamma, beta):
    """Global training-mode BN from per-tile partials, folded to scale/shift."""
    total = jnp.sum(stats[:, 0, :], axis=0)          # (Cp,)
    total_sq = jnp.sum(stats[:, 1, :], axis=0)       # (Cp,)
    mean = total / count
    var = jnp.maximum(total_sq / count - mean * mean, 0.0)   # biased variance
    scale = gamma * jax.lax.rsqrt(var + BN_EPS)      # (1, Cp)
    shift = beta - mean * scale                      # (1, Cp)
    return scale, shift


def resblock_forward(x_nchw, params, *, mxu_bf16=True):
    """ResBlock forward. x_nchw: (B, C, H, W) float32 -> (B, C, H, W) float32.

    mxu_bf16=True (default) feeds the MXU bf16 operands with f32 accumulation
    and keeps inter-kernel intermediates in bf16 (all three MXU generations are
    bf16-native).  mxu_bf16=False is a pure-f32 path for strict numerics.
    """
    B, C, H, W = x_nchw.shape
    if H < 2 or W < 2:
        raise ValueError("ReflectionPad2d(1) requires H >= 2 and W >= 2")

    compute_dtype = jnp.bfloat16 if mxu_bf16 else jnp.float32
    cd_bytes = 2 if mxu_bf16 else 4

    Cp = _round_up(C, _LANE)    # lane-dense channels (multiple of 128)
    x = jnp.transpose(x_nchw, (0, 2, 3, 1)).astype(jnp.float32)   # NCHW->NHWC
    if Cp != C:
        x = jnp.pad(x, ((0, 0), (0, 0), (0, 0), (0, Cp - C)))
    # TODO(synk): when stacking several ResBlocks, keep NHWC/Cp end-to-end and
    # hoist this transpose/pad out of the per-block wrapper.

    def prep_w(w):   # (Cout, Cin, 3, 3) -> (3, 3*Cin_p, Cout_p), dx packed in K
        w = jnp.transpose(w.astype(jnp.float32), (2, 3, 1, 0)).reshape(9, C, C)
        if Cp != C:
            w = jnp.pad(w, ((0, 0), (0, Cp - C), (0, Cp - C)))
        return w.reshape(3, 3 * Cp, Cp).astype(compute_dtype)

    def prep_vec(v):  # (C,) -> (1, Cp); padded channels get 0
        v = v.astype(jnp.float32).reshape(1, C)
        if Cp != C:
            v = jnp.pad(v, ((0, 0), (0, Cp - C)))
        return v

    w1, w2 = prep_w(params['w1']), prep_w(params['w2'])
    gamma1, beta1 = prep_vec(params['gamma1']), prep_vec(params['beta1'])
    gamma2, beta2 = prep_vec(params['gamma2']), prep_vec(params['beta2'])
    # NOTE: conv biases (params['b1'], params['b2']) are intentionally unused:
    # training-mode BatchNorm subtracts the per-channel mean, which cancels a
    # constant per-channel bias exactly.

    vmem_limit = _vmem_limit_bytes()
    budget = int(vmem_limit * 0.85)
    th_conv = _pick_tile_h(
        H,
        fits=lambda d: _conv_step_bytes(B, d, W, Cp, 4, cd_bytes) <= budget,
        big_enough=lambda d: B * d * W >= 1024)
    th_res = _pick_tile_h(
        H,
        fits=lambda d: _res_step_bytes(B, d, W, Cp, cd_bytes) <= budget,
        big_enough=lambda d: B * d * W * Cp * 4 >= (4 << 20))

    count = float(B * H * W)
    zeros = jnp.zeros((1, Cp), jnp.float32)

    # CBR2d #1: conv (+ fused BN stats).
    h1_raw, stats1 = _conv3x3_bn_stats(
        x, w1, zeros, zeros, TH=th_conv, pre_affine=False, pre_relu=False,
        compute_dtype=compute_dtype, vmem_limit=vmem_limit)
    scale1, shift1 = _bn_scale_shift(stats1, count, gamma1, beta1)

    # CBR2d #2: BN1 + ReLU applied on the fly, then conv (+ fused BN stats).
    # TODO(synk): reference builds nn.LeakyReLU(None) for relu=None, which
    # would raise in PyTorch; intended CycleGAN semantics is "no activation".
    h2_raw, stats2 = _conv3x3_bn_stats(
        h1_raw, w2, scale1, shift1, TH=th_conv, pre_affine=True, pre_relu=True,
        compute_dtype=compute_dtype, vmem_limit=vmem_limit)
    scale2, shift2 = _bn_scale_shift(stats2, count, gamma2, beta2)

    # Residual: out = x + BN2(conv2), with its own (larger) memory-bound tile.
    out = _residual_affine(x, h2_raw, scale2, shift2, TH=th_res,
                           vmem_limit=vmem_limit)
    if Cp != C:
        out = out[..., :C]
    return jnp.transpose(out, (0, 3, 1, 2))        # NHWC -> NCHW


def init_params(key, channels):
    """Deterministic synthetic init matching nn.Conv2d/BatchNorm2d shapes."""
    k1, k2, k3, k4 = jax.random.split(key, 4)
    fan_in = channels * 3 * 3
    scale = 1.0 / jnp.sqrt(fan_in)
    return {
        'w1': jax.random.uniform(k1, (channels, channels, 3, 3),
                                 jnp.float32, -scale, scale),
        'b1': jax.random.uniform(k2, (channels,), jnp.float32, -scale, scale),
        'gamma1': jnp.ones((channels,), jnp.float32),
        'beta1': jnp.zeros((channels,), jnp.float32),
        'w2': jax.random.uniform(k3, (channels, channels, 3, 3),
                                 jnp.float32, -scale, scale),
        'b2': jax.random.uniform(k4, (channels,), jnp.float32, -scale, scale),
        'gamma2': jnp.ones((channels,), jnp.float32),
        'beta2': jnp.zeros((channels,), jnp.float32),
    }


def _reference_forward(x_nchw, params):
    """Pure-JAX/XLA reference matching the PyTorch module (training-mode BN)."""
    x = x_nchw.astype(jnp.float32)

    def cbr(t, w, b, gamma, beta, relu):
        t = jnp.pad(t, ((0, 0), (0, 0), (1, 1), (1, 1)), mode='reflect')
        y = jax.lax.conv_general_dilated(
            t, w.astype(jnp.float32), (1, 1), 'VALID',
            dimension_numbers=('NCHW', 'OIHW', 'NCHW'))
        y = y + b.reshape(1, -1, 1, 1)
        mean = jnp.mean(y, axis=(0, 2, 3), keepdims=True)
        var = jnp.mean((y - mean) ** 2, axis=(0, 2, 3), keepdims=True)
        y = (gamma.reshape(1, -1, 1, 1) * (y - mean) *
             jax.lax.rsqrt(var + BN_EPS) + beta.reshape(1, -1, 1, 1))
        return jnp.maximum(y, 0.0) if relu else y

    h = cbr(x, params['w1'], params['b1'], params['gamma1'],
            params['beta1'], True)
    h = cbr(h, params['w2'], params['b2'], params['gamma2'],
            params['beta2'], False)
    return x + h


if __name__ == "__main__":
    key = jax.random.PRNGKey(0)
    kx, kp = jax.random.split(key)

    B, C, H, W = 2, 4, 16, 16
    x = jax.random.normal(kx, (B, C, H, W), jnp.float32)
    params = init_params(kp, C)

    ref = _reference_forward(x, params)

    # Strict numerical check on the pure-f32 MXU path.
    out_f32 = jax.jit(functools.partial(resblock_forward, mxu_bf16=False))(
        x, params)
    jax.block_until_ready(out_f32)
    assert out_f32.shape == (B, C, H, W), out_f32.shape
    assert out_f32.dtype == jnp.float32, out_f32.dtype
    assert bool(jnp.all(jnp.isfinite(out_f32))), "non-finite output (f32 path)"
    err_f32 = float(jnp.max(jnp.abs(out_f32 - ref)))
    assert err_f32 < 1e-3, f"f32 path mismatch vs reference: {err_f32}"

    # Default bf16-MXU perf path: looser tolerance (bf16 operands + bf16
    # inter-kernel intermediates change conv/BN numerics slightly).
    out = jax.jit(resblock_forward)(x, params)
    jax.block_until_ready(out)
    assert out.shape == (B, C, H, W), out.shape
    assert out.dtype == jnp.float32, out.dtype
    assert bool(jnp.all(jnp.isfinite(out))), "non-finite output (bf16 path)"
    err_bf16 = float(jnp.max(jnp.abs(out - ref)))
    assert err_bf16 < 2e-1, f"bf16 path mismatch vs reference: {err_bf16}"

    print("KERNEL_OK")
</pallas_src>

<mosaic_0001>
module attributes {stable_mosaic.version = 11 : i64} {
  func.func @_conv3x3_kernel(%arg0: i32, %arg1: memref<2x1x16x128xf32, #tpu.memory_space<vmem>>, %arg2: memref<2x16x16x128xf32, #tpu.memory_space<vmem>>, %arg3: memref<2x1x16x128xf32, #tpu.memory_space<vmem>>, %arg4: memref<3x384x128xf32, #tpu.memory_space<vmem>>, %arg5: memref<1x128xf32, #tpu.memory_space<vmem>>, %arg6: memref<1x128xf32, #tpu.memory_space<vmem>>, %arg7: memref<2x16x16x128xf32, #tpu.memory_space<vmem>>, %arg8: memref<1x2x128xf32, #tpu.memory_space<vmem>>, %arg9: memref<2x18x16x384xf32, #tpu.memory_space<vmem>>) attributes {dimension_semantics = [#tpu.dimension_semantics<parallel>], iteration_bounds = array<i64: 1>, scalar_prefetch = 0 : i64, scratch_operands = 1 : i64, tpu.core_type = #tpu.core_type<tc>, window_params = [{transform_indices = @transform_0, window_bounds = array<i64: 2, 1, 16, 128>}, {transform_indices = @transform_1, window_bounds = array<i64: 2, 16, 16, 128>}, {transform_indices = @transform_2, window_bounds = array<i64: 2, 1, 16, 128>}, {pipeline_mode = #tpu.pipeline_mode<synchronous>, transform_indices = @transform_3, window_bounds = array<i64: 3, 384, 128>}, {pipeline_mode = #tpu.pipeline_mode<synchronous>, transform_indices = @transform_4, window_bounds = array<i64: 1, 128>}, {pipeline_mode = #tpu.pipeline_mode<synchronous>, transform_indices = @transform_5, window_bounds = array<i64: 1, 128>}, {transform_indices = @transform_6, window_bounds = array<i64: 2, 16, 16, 128>}, {transform_indices = @transform_7, window_bounds = array<i64: 1, 2, 128>}]} {
    %c0 = arith.constant 0 : index
    %c0_0 = arith.constant 0 : index
    %c0_1 = arith.constant 0 : index
    %c0_2 = arith.constant 0 : index
    %0 = vector.load %arg2[%c0, %c0_0, %c0_1, %c0_2] : memref<2x16x16x128xf32, #tpu.memory_space<vmem>>, vector<2x16x16x128xf32>
    %c0_3 = arith.constant 0 : index
    %c1 = arith.constant 1 : index
    %c0_4 = arith.constant 0 : index
    %c128 = arith.constant 128 : index
    %1 = vector.load %arg9[%c0_3, %c1, %c0_4, %c128] : memref<2x18x16x384xf32, #tpu.memory_space<vmem>>, vector<2x16x16x128xf32>
    tpu.vector_store %arg9[%c0_3, %c1, %c0_4, %c128], %0 {strides = array<i32>} : memref<2x18x16x384xf32, #tpu.memory_space<vmem>>, vector<2x16x16x128xf32>,
    %2 = vector.extract_strided_slice %0 {offsets = [0, 0, 0, 0], sizes = [2, 16, 15, 128], strides = [1, 1, 1, 1]} : vector<2x16x16x128xf32> to vector<2x16x15x128xf32>
    %c0_5 = arith.constant 0 : index
    %c1_6 = arith.constant 1 : index
    %c1_7 = arith.constant 1 : index
    %c0_8 = arith.constant 0 : index
    %3 = vector.load %arg9[%c0_5, %c1_6, %c1_7, %c0_8] : memref<2x18x16x384xf32, #tpu.memory_space<vmem>>, vector<2x16x15x128xf32>
    tpu.vector_store %arg9[%c0_5, %c1_6, %c1_7, %c0_8], %2 {strides = array<i32>} : memref<2x18x16x384xf32, #tpu.memory_space<vmem>>, vector<2x16x15x128xf32>,
    %4 = vector.extract_strided_slice %0 {offsets = [0, 0, 1, 0], sizes = [2, 16, 1, 128], strides = [1, 1, 1, 1]} : vector<2x16x16x128xf32> to vector<2x16x1x128xf32>
    %c0_9 = arith.constant 0 : index
    %c1_10 = arith.constant 1 : index
    %c0_11 = arith.constant 0 : index
    %c0_12 = arith.constant 0 : index
    %5 = vector.load %arg9[%c0_9, %c1_10, %c0_11, %c0_12] : memref<2x18x16x384xf32, #tpu.memory_space<vmem>>, vector<2x16x1x128xf32>
    tpu.vector_store %arg9[%c0_9, %c1_10, %c0_11, %c0_12], %4 {strides = array<i32>} : memref<2x18x16x384xf32, #tpu.memory_space<vmem>>, vector<2x16x1x128xf32>,
    %6 = vector.extract_strided_slice %0 {offsets = [0, 0, 1, 0], sizes = [2, 16, 15, 128], strides = [1, 1, 1, 1]} : vector<2x16x16x128xf32> to vector<2x16x15x128xf32>
    %c0_13 = arith.constant 0 : index
    %c1_14 = arith.constant 1 : index
    %c0_15 = arith.constant 0 : index
    %c256 = arith.constant 256 : index
    %7 = vector.load %arg9[%c0_13, %c1_14, %c0_15, %c256] : memref<2x18x16x384xf32, #tpu.memory_space<vmem>>, vector<2x16x15x128xf32>
    tpu.vector_store %arg9[%c0_13, %c1_14, %c0_15, %c256], %6 {strides = array<i32>} : memref<2x18x16x384xf32, #tpu.memory_space<vmem>>, vector<2x16x15x128xf32>,
    %8 = vector.extract_strided_slice %0 {offsets = [0, 0, 14, 0], sizes = [2, 16, 1, 128], strides = [1, 1, 1, 1]} : vector<2x16x16x128xf32> to vector<2x16x1x128xf32>
    %c0_16 = arith.constant 0 : index
    %c1_17 = arith.constant 1 : index
    %c15 = arith.constant 15 : index
    %c256_18 = arith.constant 256 : index
    %9 = vector.load %arg9[%c0_16, %c1_17, %c15, %c256_18] : memref<2x18x16x384xf32, #tpu.memory_space<vmem>>, vector<2x16x1x128xf32>
    tpu.vector_store %arg9[%c0_16, %c1_17, %c15, %c256_18], %8 {strides = array<i32>} : memref<2x18x16x384xf32, #tpu.memory_space<vmem>>, vector<2x16x1x128xf32>,
    %c0_19 = arith.constant 0 : index
    %c0_20 = arith.constant 0 : index
    %c0_21 = arith.constant 0 : index
    %c0_22 = arith.constant 0 : index
    %10 = vector.load %arg1[%c0_19, %c0_20, %c0_21, %c0_22] : memref<2x1x16x128xf32, #tpu.memory_space<vmem>>, vector<2x1x16x128xf32>
    %c0_23 = arith.constant 0 : index
    %c0_24 = arith.constant 0 : index
    %c0_25 = arith.constant 0 : index
    %c128_26 = arith.constant 128 : index
    %11 = vector.load %arg9[%c0_23, %c0_24, %c0_25, %c128_26] : memref<2x18x16x384xf32, #tpu.memory_space<vmem>>, vector<2x1x16x128xf32>
    tpu.vector_store %arg9[%c0_23, %c0_24, %c0_25, %c128_26], %10 {strides = array<i32>} : memref<2x18x16x384xf32, #tpu.memory_space<vmem>>, vector<2x1x16x128xf32>,
    %12 = vector.extract_strided_slice %10 {offsets = [0, 0, 0, 0], sizes = [2, 1, 15, 128], strides = [1, 1, 1, 1]} : vector<2x1x16x128xf32> to vector<2x1x15x128xf32>
    %c0_27 = arith.constant 0 : index
    %c0_28 = arith.constant 0 : index
    %c1_29 = arith.constant 1 : index
    %c0_30 = arith.constant 0 : index
    %13 = vector.load %arg9[%c0_27, %c0_28, %c1_29, %c0_30] : memref<2x18x16x384xf32, #tpu.memory_space<vmem>>, vector<2x1x15x128xf32>
    tpu.vector_store %arg9[%c0_27, %c0_28, %c1_29, %c0_30], %12 {strides = array<i32>} : memref<2x18x16x384xf32, #tpu.memory_space<vmem>>, vector<2x1x15x128xf32>,
    %14 = vector.extract_strided_slice %10 {offsets = [0, 0, 1, 0], sizes = [2, 1, 1, 128], strides = [1, 1, 1, 1]} : vector<2x1x16x128xf32> to vector<2x1x1x128xf32>
    %c0_31 = arith.constant 0 : index
    %c0_32 = arith.constant 0 : index
    %c0_33 = arith.constant 0 : index
    %c0_34 = arith.constant 0 : index
    %15 = vector.load %arg9[%c0_31, %c0_32, %c0_33, %c0_34] : memref<2x18x16x384xf32, #tpu.memory_space<vmem>>, vector<2x1x1x128xf32>
    tpu.vector_store %arg9[%c0_31, %c0_32, %c0_33, %c0_34], %14 {strides = array<i32>} : memref<2x18x16x384xf32, #tpu.memory_space<vmem>>, vector<2x1x1x128xf32>,
    %16 = vector.extract_strided_slice %10 {offsets = [0, 0, 1, 0], sizes = [2, 1, 15, 128], strides = [1, 1, 1, 1]} : vector<2x1x16x128xf32> to vector<2x1x15x128xf32>
    %c0_35 = arith.constant 0 : index
    %c0_36 = arith.constant 0 : index
    %c0_37 = arith.constant 0 : index
    %c256_38 = arith.constant 256 : index
    %17 = vector.load %arg9[%c0_35, %c0_36, %c0_37, %c256_38] : memref<2x18x16x384xf32, #tpu.memory_space<vmem>>, vector<2x1x15x128xf32>
    tpu.vector_store %arg9[%c0_35, %c0_36, %c0_37, %c256_38], %16 {strides = array<i32>} : memref<2x18x16x384xf32, #tpu.memory_space<vmem>>, vector<2x1x15x128xf32>,
    %18 = vector.extract_strided_slice %10 {offsets = [0, 0, 14, 0], sizes = [2, 1, 1, 128], strides = [1, 1, 1, 1]} : vector<2x1x16x128xf32> to vector<2x1x1x128xf32>
    %c0_39 = arith.constant 0 : index
    %c0_40 = arith.constant 0 : index
    %c15_41 = arith.constant 15 : index
    %c256_42 = arith.constant 256 : index
    %19 = vector.load %arg9[%c0_39, %c0_40, %c15_41, %c256_42] : memref<2x18x16x384xf32, #tpu.memory_space<vmem>>, vector<2x1x1x128xf32>
    tpu.vector_store %arg9[%c0_39, %c0_40, %c15_41, %c256_42], %18 {strides = array<i32>} : memref<2x18x16x384xf32, #tpu.memory_space<vmem>>, vector<2x1x1x128xf32>,
    %c0_43 = arith.constant 0 : index
    %c0_44 = arith.constant 0 : index
    %c0_45 = arith.constant 0 : index
    %c0_46 = arith.constant 0 : index
    %20 = vector.load %arg3[%c0_43, %c0_44, %c0_45, %c0_46] : memref<2x1x16x128xf32, #tpu.memory_space<vmem>>, vector<2x1x16x128xf32>
    %c0_47 = arith.constant 0 : index
    %c17 = arith.constant 17 : index
    %c0_48 = arith.constant 0 : index
    %c128_49 = arith.constant 128 : index
    %21 = vector.load %arg9[%c0_47, %c17, %c0_48, %c128_49] : memref<2x18x16x384xf32, #tpu.memory_space<vmem>>, vector<2x1x16x128xf32>
    tpu.vector_store %arg9[%c0_47, %c17, %c0_48, %c128_49], %20 {strides = array<i32>} : memref<2x18x16x384xf32, #tpu.memory_space<vmem>>, vector<2x1x16x128xf32>,
    %22 = vector.extract_strided_slice %20 {offsets = [0, 0, 0, 0], sizes = [2, 1, 15, 128], strides = [1, 1, 1, 1]} : vector<2x1x16x128xf32> to vector<2x1x15x128xf32>
    %c0_50 = arith.constant 0 : index
    %c17_51 = arith.constant 17 : index
    %c1_52 = arith.constant 1 : index
    %c0_53 = arith.constant 0 : index
    %23 = vector.load %arg9[%c0_50, %c17_51, %c1_52, %c0_53] : memref<2x18x16x384xf32, #tpu.memory_space<vmem>>, vector<2x1x15x128xf32>
    tpu.vector_store %arg9[%c0_50, %c17_51, %c1_52, %c0_53], %22 {strides = array<i32>} : memref<2x18x16x384xf32, #tpu.memory_space<vmem>>, vector<2x1x15x128xf32>,
    %24 = vector.extract_strided_slice %20 {offsets = [0, 0, 1, 0], sizes = [2, 1, 1, 128], strides = [1, 1, 1, 1]} : vector<2x1x16x128xf32> to vector<2x1x1x128xf32>
    %c0_54 = arith.constant 0 : index
    %c17_55 = arith.constant 17 : index
    %c0_56 = arith.constant 0 : index
    %c0_57 = arith.constant 0 : index
    %25 = vector.load %arg9[%c0_54, %c17_55, %c0_56, %c0_57] : memref<2x18x16x384xf32, #tpu.memory_space<vmem>>, vector<2x1x1x128xf32>
    tpu.vector_store %arg9[%c0_54, %c17_55, %c0_56, %c0_57], %24 {strides = array<i32>} : memref<2x18x16x384xf32, #tpu.memory_space<vmem>>, vector<2x1x1x128xf32>,
    %26 = vector.extract_strided_slice %20 {offsets = [0, 0, 1, 0], sizes = [2, 1, 15, 128], strides = [1, 1, 1, 1]} : vector<2x1x16x128xf32> to vector<2x1x15x128xf32>
    %c0_58 = arith.constant 0 : index
    %c17_59 = arith.constant 17 : index
    %c0_60 = arith.constant 0 : index
    %c256_61 = arith.constant 256 : index
    %27 = vector.load %arg9[%c0_58, %c17_59, %c0_60, %c256_61] : memref<2x18x16x384xf32, #tpu.memory_space<vmem>>, vector<2x1x15x128xf32>
    tpu.vector_store %arg9[%c0_58, %c17_59, %c0_60, %c256_61], %26 {strides = array<i32>} : memref<2x18x16x384xf32, #tpu.memory_space<vmem>>, vector<2x1x15x128xf32>,
    %28 = vector.extract_strided_slice %20 {offsets = [0, 0, 14, 0], sizes = [2, 1, 1, 128], strides = [1, 1, 1, 1]} : vector<2x1x16x128xf32> to vector<2x1x1x128xf32>
    %c0_62 = arith.constant 0 : index
    %c17_63 = arith.constant 17 : index
    %c15_64 = arith.constant 15 : index
    %c256_65 = arith.constant 256 : index
    %29 = vector.load %arg9[%c0_62, %c17_63, %c15_64, %c256_65] : memref<2x18x16x384xf32, #tpu.memory_space<vmem>>, vector<2x1x1x128xf32>
    tpu.vector_store %arg9[%c0_62, %c17_63, %c15_64, %c256_65], %28 {strides = array<i32>} : memref<2x18x16x384xf32, #tpu.memory_space<vmem>>, vector<2x1x1x128xf32>,
    %c0_66 = arith.constant 0 : index
    %c0_67 = arith.constant 0 : index
    %c0_68 = arith.constant 0 : index
    %c0_69 = arith.constant 0 : index
    %30 = vector.load %arg9[%c0_66, %c0_67, %c0_68, %c0_69] : memref<2x18x16x384xf32, #tpu.memory_space<vmem>>, vector<2x16x16x384xf32>
    %31 = vector.shape_cast %30 : vector<2x16x16x384xf32> to vector<512x384xf32>
    %c0_70 = arith.constant 0 : index
    %c0_71 = arith.constant 0 : index
    %c0_72 = arith.constant 0 : index
    %32 = vector.load %arg4[%c0_70, %c0_71, %c0_72] : memref<3x384x128xf32, #tpu.memory_space<vmem>>, vector<1x384x128xf32>
    %33 = vector.shape_cast %32 : vector<1x384x128xf32> to vector<384x128xf32>
    %cst = arith.constant dense<0.000000e+00> : vector<512x128xf32>
    %34 = tpu.matmul %31, %33, %cst {dimension_numbers = #tpu.dot_dimension_numbers<[1], [0], [0], [1], [0, 0, 1, 1], [], []>} : vector<512x384xf32>, vector<384x128xf32>, vector<512x128xf32> -> vector<512x128xf32>
    %c0_73 = arith.constant 0 : index
    %c1_74 = arith.constant 1 : index
    %c0_75 = arith.constant 0 : index
    %c0_76 = arith.constant 0 : index
    %35 = vector.load %arg9[%c0_73, %c1_74, %c0_75, %c0_76] : memref<2x18x16x384xf32, #tpu.memory_space<vmem>>, vector<2x16x16x384xf32>
    %36 = vector.shape_cast %35 : vector<2x16x16x384xf32> to vector<512x384xf32>
    %c1_77 = arith.constant 1 : index
    %c0_78 = arith.constant 0 : index
    %c0_79 = arith.constant 0 : index
    %37 = vector.load %arg4[%c1_77, %c0_78, %c0_79] : memref<3x384x128xf32, #tpu.memory_space<vmem>>, vector<1x384x128xf32>
    %38 = vector.shape_cast %37 : vector<1x384x128xf32> to vector<384x128xf32>
    %cst_80 = arith.constant dense<0.000000e+00> : vector<512x128xf32>
    %39 = tpu.matmul %36, %38, %cst_80 {dimension_numbers = #tpu.dot_dimension_numbers<[1], [0], [0], [1], [0, 0, 1, 1], [], []>} : vector<512x384xf32>, vector<384x128xf32>, vector<512x128xf32> -> vector<512x128xf32>
    %40 = arith.addf %34, %39 : vector<512x128xf32>
    %c0_81 = arith.constant 0 : index
    %c2 = arith.constant 2 : index
    %c0_82 = arith.constant 0 : index
    %c0_83 = arith.constant 0 : index
    %41 = vector.load %arg9[%c0_81, %c2, %c0_82, %c0_83] : memref<2x18x16x384xf32, #tpu.memory_space<vmem>>, vector<2x16x16x384xf32>
    %42 = vector.shape_cast %41 : vector<2x16x16x384xf32> to vector<512x384xf32>
    %c2_84 = arith.constant 2 : index
    %c0_85 = arith.constant 0 : index
    %c0_86 = arith.constant 0 : index
    %43 = vector.load %arg4[%c2_84, %c0_85, %c0_86] : memref<3x384x128xf32, #tpu.memory_space<vmem>>, vector<1x384x128xf32>
    %44 = vector.shape_cast %43 : vector<1x384x128xf32> to vector<384x128xf32>
    %cst_87 = arith.constant dense<0.000000e+00> : vector<512x128xf32>
    %45 = tpu.matmul %42, %44, %cst_87 {dimension_numbers = #tpu.dot_dimension_numbers<[1], [0], [0], [1], [0, 0, 1, 1], [], []>} : vector<512x384xf32>, vector<384x128xf32>, vector<512x128xf32> -> vector<512x128xf32>
    %46 = arith.addf %40, %45 : vector<512x128xf32>
    %47 = vector.shape_cast %46 : vector<512x128xf32> to vector<2x16x16x128xf32>
    %c0_88 = arith.constant 0 : index
    %c0_89 = arith.constant 0 : index
    %c0_90 = arith.constant 0 : index
    %c0_91 = arith.constant 0 : index
    %48 = vector.load %arg7[%c0_88, %c0_89, %c0_90, %c0_91] : memref<2x16x16x128xf32, #tpu.memory_space<vmem>>, vector<2x16x16x128xf32>
    tpu.vector_store %arg7[%c0_88, %c0_89, %c0_90, %c0_91], %47 {strides = array<i32>} : memref<2x16x16x128xf32, #tpu.memory_space<vmem>>, vector<2x16x16x128xf32>,
    %cst_92 = arith.constant dense<0.000000e+00> : vector<128xf32>
    %49 = vector.multi_reduction <add>, %46, %cst_92 [0] : vector<512x128xf32> to vector<128xf32>
    %50 = vector.shape_cast %49 : vector<128xf32> to vector<1x1x128xf32>
    %c0_93 = arith.constant 0 : index
    %c0_94 = arith.constant 0 : index
    %c0_95 = arith.constant 0 : index
    %51 = vector.load %arg8[%c0_93, %c0_94, %c0_95] : memref<1x2x128xf32, #tpu.memory_space<vmem>>, vector<1x1x128xf32>
    tpu.vector_store %arg8[%c0_93, %c0_94, %c0_95], %50 {strides = array<i32>} : memref<1x2x128xf32, #tpu.memory_space<vmem>>, vector<1x1x128xf32>,
    %52 = arith.mulf %46, %46 : vector<512x128xf32>
    %cst_96 = arith.constant dense<0.000000e+00> : vector<128xf32>
    %53 = vector.multi_reduction <add>, %52, %cst_96 [0] : vector<512x128xf32> to vector<128xf32>
    %54 = vector.shape_cast %53 : vector<128xf32> to vector<1x1x128xf32>
    %c0_97 = arith.constant 0 : index
    %c1_98 = arith.constant 1 : index
    %c0_99 = arith.constant 0 : index
    %55 = vector.load %arg8[%c0_97, %c1_98, %c0_99] : memref<1x2x128xf32, #tpu.memory_space<vmem>>, vector<1x1x128xf32>
    tpu.vector_store %arg8[%c0_97, %c1_98, %c0_99], %54 {strides = array<i32>} : memref<1x2x128xf32, #tpu.memory_space<vmem>>, vector<1x1x128xf32>,
    return
  }
  func.func @transform_0(%arg0: i32) -> (i32, i32, i32, i32) {
    %c0_i32 = arith.constant 0 : i32
    %0 = arith.cmpi eq, %arg0, %c0_i32 : i32
    %c16_i32 = arith.constant 16 : i32
    %1 = arith.muli %arg0, %c16_i32 : i32
    %c1_i32 = arith.constant 1 : i32
    %2 = arith.subi %1, %c1_i32 : i32
    %c1_i32_0 = arith.constant 1 : i32
    %3 = arith.select %0, %c1_i32_0, %2 : i32
    %c0_i32_1 = arith.constant 0 : i32
    %c0_i32_2 = arith.constant 0 : i32
    %c0_i32_3 = arith.constant 0 : i32
    %c0_i32_4 = arith.constant 0 : i32
    return %c0_i32_1, %3, %c0_i32_2, %c0_i32_3 : i32, i32, i32, i32
  }
  func.func @transform_1(%arg0: i32) -> (i32, i32, i32, i32) {
    %c0_i32 = arith.constant 0 : i32
    %c0_i32_0 = arith.constant 0 : i32
    %c0_i32_1 = arith.constant 0 : i32
    %c0_i32_2 = arith.constant 0 : i32
    return %c0_i32, %arg0, %c0_i32_0, %c0_i32_1 : i32, i32, i32, i32
  }
  func.func @transform_2(%arg0: i32) -> (i32, i32, i32, i32) {
    %c0_i32 = arith.constant 0 : i32
    %0 = arith.cmpi eq, %arg0, %c0_i32 : i32
    %c16_i32 = arith.constant 16 : i32
    %1 = arith.muli %arg0, %c16_i32 : i32
    %c16_i32_0 = arith.constant 16 : i32
    %2 = arith.addi %1, %c16_i32_0 : i32
    %c14_i32 = arith.constant 14 : i32
    %3 = arith.select %0, %c14_i32, %2 : i32
    %c0_i32_1 = arith.constant 0 : i32
    %c0_i32_2 = arith.constant 0 : i32
    %c0_i32_3 = arith.constant 0 : i32
    %c0_i32_4 = arith.constant 0 : i32
    return %c0_i32_1, %3, %c0_i32_2, %c0_i32_3 : i32, i32, i32, i32
  }
  func.func @transform_3(%arg0: i32) -> (i32, i32, i32) {
    %c0_i32 = arith.constant 0 : i32
    %c0_i32_0 = arith.constant 0 : i32
    %c0_i32_1 = arith.constant 0 : i32
    %c0_i32_2 = arith.constant 0 : i32
    return %c0_i32, %c0_i32_0, %c0_i32_1 : i32, i32, i32
  }
  func.func @transform_4(%arg0: i32) -> (i32, i32) {
    %c0_i32 = arith.constant 0 : i32
    %c0_i32_0 = arith.constant 0 : i32
    %c0_i32_1 = arith.constant 0 : i32
    return %c0_i32, %c0_i32_0 : i32, i32
  }
  func.func @transform_5(%arg0: i32) -> (i32, i32) {
    %c0_i32 = arith.constant 0 : i32
    %c0_i32_0 = arith.constant 0 : i32
    %c0_i32_1 = arith.constant 0 : i32
    return %c0_i32, %c0_i32_0 : i32, i32
  }
  func.func @transform_6(%arg0: i32) -> (i32, i32, i32, i32) {
    %c0_i32 = arith.constant 0 : i32
    %c0_i32_0 = arith.constant 0 : i32
    %c0_i32_1 = arith.constant 0 : i32
    %c0_i32_2 = arith.constant 0 : i32
    return %c0_i32, %arg0, %c0_i32_0, %c0_i32_1 : i32, i32, i32, i32
  }
  func.func @transform_7(%arg0: i32) -> (i32, i32, i32) {
    %c0_i32 = arith.constant 0 : i32
    %c0_i32_0 = arith.constant 0 : i32
    %c0_i32_1 = arith.constant 0 : i32
    return %arg0, %c0_i32, %c0_i32_0 : i32, i32, i32
  }
}

module attributes {stable_mosaic.version = 11 : i64} {
  func.func @_conv3x3_kernel(%arg0: i32, %arg1: memref<2x1x16x128xf32, #tpu.memory_space<vmem>>, %arg2: memref<2x16x16x128xf32, #tpu.memory_space<vmem>>, %arg3: memref<2x1x16x128xf32, #tpu.memory_space<vmem>>, %arg4: memref<3x384x128xf32, #tpu.memory_space<vmem>>, %arg5: memref<1x128xf32, #tpu.memory_space<vmem>>, %arg6: memref<1x128xf32, #tpu.memory_space<vmem>>, %arg7: memref<2x16x16x128xf32, #tpu.memory_space<vmem>>, %arg8: memref<1x2x128xf32, #tpu.memory_space<vmem>>, %arg9: memref<2x18x16x384xf32, #tpu.memory_space<vmem>>) attributes {dimension_semantics = [#tpu.dimension_semantics<parallel>], iteration_bounds = array<i64: 1>, scalar_prefetch = 0 : i64, scratch_operands = 1 : i64, tpu.core_type = #tpu.core_type<tc>, window_params = [{transform_indices = @transform_0, window_bounds = array<i64: 2, 1, 16, 128>}, {transform_indices = @transform_1, window_bounds = array<i64: 2, 16, 16, 128>}, {transform_indices = @transform_2, window_bounds = array<i64: 2, 1, 16, 128>}, {pipeline_mode = #tpu.pipeline_mode<synchronous>, transform_indices = @transform_3, window_bounds = array<i64: 3, 384, 128>}, {pipeline_mode = #tpu.pipeline_mode<synchronous>, transform_indices = @transform_4, window_bounds = array<i64: 1, 128>}, {pipeline_mode = #tpu.pipeline_mode<synchronous>, transform_indices = @transform_5, window_bounds = array<i64: 1, 128>}, {transform_indices = @transform_6, window_bounds = array<i64: 2, 16, 16, 128>}, {transform_indices = @transform_7, window_bounds = array<i64: 1, 2, 128>}]} {
    %c0 = arith.constant 0 : index
    %c0_0 = arith.constant 0 : index
    %0 = vector.load %arg5[%c0, %c0_0] : memref<1x128xf32, #tpu.memory_space<vmem>>, vector<1x128xf32>
    %c0_1 = arith.constant 0 : index
    %c0_2 = arith.constant 0 : index
    %1 = vector.load %arg6[%c0_1, %c0_2] : memref<1x128xf32, #tpu.memory_space<vmem>>, vector<1x128xf32>
    %c0_3 = arith.constant 0 : index
    %c0_4 = arith.constant 0 : index
    %c0_5 = arith.constant 0 : index
    %c0_6 = arith.constant 0 : index
    %2 = vector.load %arg2[%c0_3, %c0_4, %c0_5, %c0_6] : memref<2x16x16x128xf32, #tpu.memory_space<vmem>>, vector<2x16x16x128xf32>
    %3 = vector.shape_cast %0 : vector<1x128xf32> to vector<1x1x1x128xf32>
    %4 = vector.broadcast %3 : vector<1x1x1x128xf32> to vector<2x16x16x128xf32>
    %5 = arith.mulf %2, %4 : vector<2x16x16x128xf32>
    %6 = vector.shape_cast %1 : vector<1x128xf32> to vector<1x1x1x128xf32>
    %7 = vector.broadcast %6 : vector<1x1x1x128xf32> to vector<2x16x16x128xf32>
    %8 = arith.addf %5, %7 : vector<2x16x16x128xf32>
    %cst = arith.constant 0.000000e+00 : f32
    %9 = vector.broadcast %cst : f32 to vector<2x16x16x128xf32>
    %10 = arith.maximumf %8, %9 : vector<2x16x16x128xf32>
    %c0_7 = arith.constant 0 : index
    %c1 = arith.constant 1 : index
    %c0_8 = arith.constant 0 : index
    %c128 = arith.constant 128 : index
    %11 = vector.load %arg9[%c0_7, %c1, %c0_8, %c128] : memref<2x18x16x384xf32, #tpu.memory_space<vmem>>, vector<2x16x16x128xf32>
    tpu.vector_store %arg9[%c0_7, %c1, %c0_8, %c128], %10 {strides = array<i32>} : memref<2x18x16x384xf32, #tpu.memory_space<vmem>>, vector<2x16x16x128xf32>,
    %12 = vector.extract_strided_slice %10 {offsets = [0, 0, 0, 0], sizes = [2, 16, 15, 128], strides = [1, 1, 1, 1]} : vector<2x16x16x128xf32> to vector<2x16x15x128xf32>
    %c0_9 = arith.constant 0 : index
    %c1_10 = arith.constant 1 : index
    %c1_11 = arith.constant 1 : index
    %c0_12 = arith.constant 0 : index
    %13 = vector.load %arg9[%c0_9, %c1_10, %c1_11, %c0_12] : memref<2x18x16x384xf32, #tpu.memory_space<vmem>>, vector<2x16x15x128xf32>
    tpu.vector_store %arg9[%c0_9, %c1_10, %c1_11, %c0_12], %12 {strides = array<i32>} : memref<2x18x16x384xf32, #tpu.memory_space<vmem>>, vector<2x16x15x128xf32>,
    %14 = vector.extract_strided_slice %10 {offsets = [0, 0, 1, 0], sizes = [2, 16, 1, 128], strides = [1, 1, 1, 1]} : vector<2x16x16x128xf32> to vector<2x16x1x128xf32>
    %c0_13 = arith.constant 0 : index
    %c1_14 = arith.constant 1 : index
    %c0_15 = arith.constant 0 : index
    %c0_16 = arith.constant 0 : index
    %15 = vector.load %arg9[%c0_13, %c1_14, %c0_15, %c0_16] : memref<2x18x16x384xf32, #tpu.memory_space<vmem>>, vector<2x16x1x128xf32>
    tpu.vector_store %arg9[%c0_13, %c1_14, %c0_15, %c0_16], %14 {strides = array<i32>} : memref<2x18x16x384xf32, #tpu.memory_space<vmem>>, vector<2x16x1x128xf32>,
    %16 = vector.extract_strided_slice %10 {offsets = [0, 0, 1, 0], sizes = [2, 16, 15, 128], strides = [1, 1, 1, 1]} : vector<2x16x16x128xf32> to vector<2x16x15x128xf32>
    %c0_17 = arith.constant 0 : index
    %c1_18 = arith.constant 1 : index
    %c0_19 = arith.constant 0 : index
    %c256 = arith.constant 256 : index
    %17 = vector.load %arg9[%c0_17, %c1_18, %c0_19, %c256] : memref<2x18x16x384xf32, #tpu.memory_space<vmem>>, vector<2x16x15x128xf32>
    tpu.vector_store %arg9[%c0_17, %c1_18, %c0_19, %c256], %16 {strides = array<i32>} : memref<2x18x16x384xf32, #tpu.memory_space<vmem>>, vector<2x16x15x128xf32>,
    %18 = vector.extract_strided_slice %10 {offsets = [0, 0, 14, 0], sizes = [2, 16, 1, 128], strides = [1, 1, 1, 1]} : vector<2x16x16x128xf32> to vector<2x16x1x128xf32>
    %c0_20 = arith.constant 0 : index
    %c1_21 = arith.constant 1 : index
    %c15 = arith.constant 15 : index
    %c256_22 = arith.constant 256 : index
    %19 = vector.load %arg9[%c0_20, %c1_21, %c15, %c256_22] : memref<2x18x16x384xf32, #tpu.memory_space<vmem>>, vector<2x16x1x128xf32>
    tpu.vector_store %arg9[%c0_20, %c1_21, %c15, %c256_22], %18 {strides = array<i32>} : memref<2x18x16x384xf32, #tpu.memory_space<vmem>>, vector<2x16x1x128xf32>,
    %c0_23 = arith.constant 0 : index
    %c0_24 = arith.constant 0 : index
    %c0_25 = arith.constant 0 : index
    %c0_26 = arith.constant 0 : index
    %20 = vector.load %arg1[%c0_23, %c0_24, %c0_25, %c0_26] : memref<2x1x16x128xf32, #tpu.memory_space<vmem>>, vector<2x1x16x128xf32>
    %21 = vector.shape_cast %0 : vector<1x128xf32> to vector<1x1x1x128xf32>
    %22 = vector.broadcast %21 : vector<1x1x1x128xf32> to vector<2x1x16x128xf32>
    %23 = arith.mulf %20, %22 : vector<2x1x16x128xf32>
    %24 = vector.shape_cast %1 : vector<1x128xf32> to vector<1x1x1x128xf32>
    %25 = vector.broadcast %24 : vector<1x1x1x128xf32> to vector<2x1x16x128xf32>
    %26 = arith.addf %23, %25 : vector<2x1x16x128xf32>
    %cst_27 = arith.constant 0.000000e+00 : f32
    %27 = vector.broadcast %cst_27 : f32 to vector<2x1x16x128xf32>
    %28 = arith.maximumf %26, %27 : vector<2x1x16x128xf32>
    %c0_28 = arith.constant 0 : index
    %c0_29 = arith.constant 0 : index
    %c0_30 = arith.constant 0 : index
    %c128_31 = arith.constant 128 : index
    %29 = vector.load %arg9[%c0_28, %c0_29, %c0_30, %c128_31] : memref<2x18x16x384xf32, #tpu.memory_space<vmem>>, vector<2x1x16x128xf32>
    tpu.vector_store %arg9[%c0_28, %c0_29, %c0_30, %c128_31], %28 {strides = array<i32>} : memref<2x18x16x384xf32, #tpu.memory_space<vmem>>, vector<2x1x16x128xf32>,
    %30 = vector.extract_strided_slice %28 {offsets = [0, 0, 0, 0], sizes = [2, 1, 15, 128], strides = [1, 1, 1, 1]} : vector<2x1x16x128xf32> to vector<2x1x15x128xf32>
    %c0_32 = arith.constant 0 : index
    %c0_33 = arith.constant 0 : index
    %c1_34 = arith.constant 1 : index
    %c0_35 = arith.constant 0 : index
    %31 = vector.load %arg9[%c0_32, %c0_33, %c1_34, %c0_35] : memref<2x18x16x384xf32, #tpu.memory_space<vmem>>, vector<2x1x15x128xf32>
    tpu.vector_store %arg9[%c0_32, %c0_33, %c1_34, %c0_35], %30 {strides = array<i32>} : memref<2x18x16x384xf32, #tpu.memory_space<vmem>>, vector<2x1x15x128xf32>,
    %32 = vector.extract_strided_slice %28 {offsets = [0, 0, 1, 0], sizes = [2, 1, 1, 128], strides = [1, 1, 1, 1]} : vector<2x1x16x128xf32> to vector<2x1x1x128xf32>
    %c0_36 = arith.constant 0 : index
    %c0_37 = arith.constant 0 : index
    %c0_38 = arith.constant 0 : index
    %c0_39 = arith.constant 0 : index
    %33 = vector.load %arg9[%c0_36, %c0_37, %c0_38, %c0_39] : memref<2x18x16x384xf32, #tpu.memory_space<vmem>>, vector<2x1x1x128xf32>
    tpu.vector_store %arg9[%c0_36, %c0_37, %c0_38, %c0_39], %32 {strides = array<i32>} : memref<2x18x16x384xf32, #tpu.memory_space<vmem>>, vector<2x1x1x128xf32>,
    %34 = vector.extract_strided_slice %28 {offsets = [0, 0, 1, 0], sizes = [2, 1, 15, 128], strides = [1, 1, 1, 1]} : vector<2x1x16x128xf32> to vector<2x1x15x128xf32>
    %c0_40 = arith.constant 0 : index
    %c0_41 = arith.constant 0 : index
    %c0_42 = arith.constant 0 : index
    %c256_43 = arith.constant 256 : index
    %35 = vector.load %arg9[%c0_40, %c0_41, %c0_42, %c256_43] : memref<2x18x16x384xf32, #tpu.memory_space<vmem>>, vector<2x1x15x128xf32>
    tpu.vector_store %arg9[%c0_40, %c0_41, %c0_42, %c256_43], %34 {strides = array<i32>} : memref<2x18x16x384xf32, #tpu.memory_space<vmem>>, vector<2x1x15x128xf32>,
    %36 = vector.extract_strided_slice %28 {offsets = [0, 0, 14, 0], sizes = [2, 1, 1, 128], strides = [1, 1, 1, 1]} : vector<2x1x16x128xf32> to vector<2x1x1x128xf32>
    %c0_44 = arith.constant 0 : index
    %c0_45 = arith.constant 0 : index
    %c15_46 = arith.constant 15 : index
    %c256_47 = arith.constant 256 : index
    %37 = vector.load %arg9[%c0_44, %c0_45, %c15_46, %c256_47] : memref<2x18x16x384xf32, #tpu.memory_space<vmem>>, vector<2x1x1x128xf32>
    tpu.vector_store %arg9[%c0_44, %c0_45, %c15_46, %c256_47], %36 {strides = array<i32>} : memref<2x18x16x384xf32, #tpu.memory_space<vmem>>, vector<2x1x1x128xf32>,
    %c0_48 = arith.constant 0 : index
    %c0_49 = arith.constant 0 : index
    %c0_50 = arith.constant 0 : index
    %c0_51 = arith.constant 0 : index
    %38 = vector.load %arg3[%c0_48, %c0_49, %c0_50, %c0_51] : memref<2x1x16x128xf32, #tpu.memory_space<vmem>>, vector<2x1x16x128xf32>
    %39 = vector.shape_cast %0 : vector<1x128xf32> to vector<1x1x1x128xf32>
    %40 = vector.broadcast %39 : vector<1x1x1x128xf32> to vector<2x1x16x128xf32>
    %41 = arith.mulf %38, %40 : vector<2x1x16x128xf32>
    %42 = vector.shape_cast %1 : vector<1x128xf32> to vector<1x1x1x128xf32>
    %43 = vector.broadcast %42 : vector<1x1x1x128xf32> to vector<2x1x16x128xf32>
    %44 = arith.addf %41, %43 : vector<2x1x16x128xf32>
    %cst_52 = arith.constant 0.000000e+00 : f32
    %45 = vector.broadcast %cst_52 : f32 to vector<2x1x16x128xf32>
    %46 = arith.maximumf %44, %45 : vector<2x1x16x128xf32>
    %c0_53 = arith.constant 0 : index
    %c17 = arith.constant 17 : index
    %c0_54 = arith.constant 0 : index
    %c128_55 = arith.constant 128 : index
    %47 = vector.load %arg9[%c0_53, %c17, %c0_54, %c128_55] : memref<2x18x16x384xf32, #tpu.memory_space<vmem>>, vector<2x1x16x128xf32>
    tpu.vector_store %arg9[%c0_53, %c17, %c0_54, %c128_55], %46 {strides = array<i32>} : memref<2x18x16x384xf32, #tpu.memory_space<vmem>>, vector<2x1x16x128xf32>,
    %48 = vector.extract_strided_slice %46 {offsets = [0, 0, 0, 0], sizes = [2, 1, 15, 128], strides = [1, 1, 1, 1]} : vector<2x1x16x128xf32> to vector<2x1x15x128xf32>
    %c0_56 = arith.constant 0 : index
    %c17_57 = arith.constant 17 : index
    %c1_58 = arith.constant 1 : index
    %c0_59 = arith.constant 0 : index
    %49 = vector.load %arg9[%c0_56, %c17_57, %c1_58, %c0_59] : memref<2x18x16x384xf32, #tpu.memory_space<vmem>>, vector<2x1x15x128xf32>
    tpu.vector_store %arg9[%c0_56, %c17_57, %c1_58, %c0_59], %48 {strides = array<i32>} : memref<2x18x16x384xf32, #tpu.memory_space<vmem>>, vector<2x1x15x128xf32>,
    %50 = vector.extract_strided_slice %46 {offsets = [0, 0, 1, 0], sizes = [2, 1, 1, 128], strides = [1, 1, 1, 1]} : vector<2x1x16x128xf32> to vector<2x1x1x128xf32>
    %c0_60 = arith.constant 0 : index
    %c17_61 = arith.constant 17 : index
    %c0_62 = arith.constant 0 : index
    %c0_63 = arith.constant 0 : index
    %51 = vector.load %arg9[%c0_60, %c17_61, %c0_62, %c0_63] : memref<2x18x16x384xf32, #tpu.memory_space<vmem>>, vector<2x1x1x128xf32>
    tpu.vector_store %arg9[%c0_60, %c17_61, %c0_62, %c0_63], %50 {strides = array<i32>} : memref<2x18x16x384xf32, #tpu.memory_space<vmem>>, vector<2x1x1x128xf32>,
    %52 = vector.extract_strided_slice %46 {offsets = [0, 0, 1, 0], sizes = [2, 1, 15, 128], strides = [1, 1, 1, 1]} : vector<2x1x16x128xf32> to vector<2x1x15x128xf32>
    %c0_64 = arith.constant 0 : index
    %c17_65 = arith.constant 17 : index
    %c0_66 = arith.constant 0 : index
    %c256_67 = arith.constant 256 : index
    %53 = vector.load %arg9[%c0_64, %c17_65, %c0_66, %c256_67] : memref<2x18x16x384xf32, #tpu.memory_space<vmem>>, vector<2x1x15x128xf32>
    tpu.vector_store %arg9[%c0_64, %c17_65, %c0_66, %c256_67], %52 {strides = array<i32>} : memref<2x18x16x384xf32, #tpu.memory_space<vmem>>, vector<2x1x15x128xf32>,
    %54 = vector.extract_strided_slice %46 {offsets = [0, 0, 14, 0], sizes = [2, 1, 1, 128], strides = [1, 1, 1, 1]} : vector<2x1x16x128xf32> to vector<2x1x1x128xf32>
    %c0_68 = arith.constant 0 : index
    %c17_69 = arith.constant 17 : index
    %c15_70 = arith.constant 15 : index
    %c256_71 = arith.constant 256 : index
    %55 = vector.load %arg9[%c0_68, %c17_69, %c15_70, %c256_71] : memref<2x18x16x384xf32, #tpu.memory_space<vmem>>, vector<2x1x1x128xf32>
    tpu.vector_store %arg9[%c0_68, %c17_69, %c15_70, %c256_71], %54 {strides = array<i32>} : memref<2x18x16x384xf32, #tpu.memory_space<vmem>>, vector<2x1x1x128xf32>,
    %c0_72 = arith.constant 0 : index
    %c0_73 = arith.constant 0 : index
    %c0_74 = arith.constant 0 : index
    %c0_75 = arith.constant 0 : index
    %56 = vector.load %arg9[%c0_72, %c0_73, %c0_74, %c0_75] : memref<2x18x16x384xf32, #tpu.memory_space<vmem>>, vector<2x16x16x384xf32>
    %57 = vector.shape_cast %56 : vector<2x16x16x384xf32> to vector<512x384xf32>
    %c0_76 = arith.constant 0 : index
    %c0_77 = arith.constant 0 : index
    %c0_78 = arith.constant 0 : index
    %58 = vector.load %arg4[%c0_76, %c0_77, %c0_78] : memref<3x384x128xf32, #tpu.memory_space<vmem>>, vector<1x384x128xf32>
    %59 = vector.shape_cast %58 : vector<1x384x128xf32> to vector<384x128xf32>
    %cst_79 = arith.constant dense<0.000000e+00> : vector<512x128xf32>
    %60 = tpu.matmul %57, %59, %cst_79 {dimension_numbers = #tpu.dot_dimension_numbers<[1], [0], [0], [1], [0, 0, 1, 1], [], []>} : vector<512x384xf32>, vector<384x128xf32>, vector<512x128xf32> -> vector<512x128xf32>
    %c0_80 = arith.constant 0 : index
    %c1_81 = arith.constant 1 : index
    %c0_82 = arith.constant 0 : index
    %c0_83 = arith.constant 0 : index
    %61 = vector.load %arg9[%c0_80, %c1_81, %c0_82, %c0_83] : memref<2x18x16x384xf32, #tpu.memory_space<vmem>>, vector<2x16x16x384xf32>
    %62 = vector.shape_cast %61 : vector<2x16x16x384xf32> to vector<512x384xf32>
    %c1_84 = arith.constant 1 : index
    %c0_85 = arith.constant 0 : index
    %c0_86 = arith.constant 0 : index
    %63 = vector.load %arg4[%c1_84, %c0_85, %c0_86] : memref<3x384x128xf32, #tpu.memory_space<vmem>>, vector<1x384x128xf32>
    %64 = vector.shape_cast %63 : vector<1x384x128xf32> to vector<384x128xf32>
    %cst_87 = arith.constant dense<0.000000e+00> : vector<512x128xf32>
    %65 = tpu.matmul %62, %64, %cst_87 {dimension_numbers = #tpu.dot_dimension_numbers<[1], [0], [0], [1], [0, 0, 1, 1], [], []>} : vector<512x384xf32>, vector<384x128xf32>, vector<512x128xf32> -> vector<512x128xf32>
    %66 = arith.addf %60, %65 : vector<512x128xf32>
    %c0_88 = arith.constant 0 : index
    %c2 = arith.constant 2 : index
    %c0_89 = arith.constant 0 : index
    %c0_90 = arith.constant 0 : index
    %67 = vector.load %arg9[%c0_88, %c2, %c0_89, %c0_90] : memref<2x18x16x384xf32, #tpu.memory_space<vmem>>, vector<2x16x16x384xf32>
    %68 = vector.shape_cast %67 : vector<2x16x16x384xf32> to vector<512x384xf32>
    %c2_91 = arith.constant 2 : index
    %c0_92 = arith.constant 0 : index
    %c0_93 = arith.constant 0 : index
    %69 = vector.load %arg4[%c2_91, %c0_92, %c0_93] : memref<3x384x128xf32, #tpu.memory_space<vmem>>, vector<1x384x128xf32>
    %70 = vector.shape_cast %69 : vector<1x384x128xf32> to vector<384x128xf32>
    %cst_94 = arith.constant dense<0.000000e+00> : vector<512x128xf32>
    %71 = tpu.matmul %68, %70, %cst_94 {dimension_numbers = #tpu.dot_dimension_numbers<[1], [0], [0], [1], [0, 0, 1, 1], [], []>} : vector<512x384xf32>, vector<384x128xf32>, vector<512x128xf32> -> vector<512x128xf32>
    %72 = arith.addf %66, %71 : vector<512x128xf32>
    %73 = vector.shape_cast %72 : vector<512x128xf32> to vector<2x16x16x128xf32>
    %c0_95 = arith.constant 0 : index
    %c0_96 = arith.constant 0 : index
    %c0_97 = arith.constant 0 : index
    %c0_98 = arith.constant 0 : index
    %74 = vector.load %arg7[%c0_95, %c0_96, %c0_97, %c0_98] : memref<2x16x16x128xf32, #tpu.memory_space<vmem>>, vector<2x16x16x128xf32>
    tpu.vector_store %arg7[%c0_95, %c0_96, %c0_97, %c0_98], %73 {strides = array<i32>} : memref<2x16x16x128xf32, #tpu.memory_space<vmem>>, vector<2x16x16x128xf32>,
    %cst_99 = arith.constant dense<0.000000e+00> : vector<128xf32>
    %75 = vector.multi_reduction <add>, %72, %cst_99 [0] : vector<512x128xf32> to vector<128xf32>
    %76 = vector.shape_cast %75 : vector<128xf32> to vector<1x1x128xf32>
    %c0_100 = arith.constant 0 : index
    %c0_101 = arith.constant 0 : index
    %c0_102 = arith.constant 0 : index
    %77 = vector.load %arg8[%c0_100, %c0_101, %c0_102] : memref<1x2x128xf32, #tpu.memory_space<vmem>>, vector<1x1x128xf32>
    tpu.vector_store %arg8[%c0_100, %c0_101, %c0_102], %76 {strides = array<i32>} : memref<1x2x128xf32, #tpu.memory_space<vmem>>, vector<1x1x128xf32>,
    %78 = arith.mulf %72, %72 : vector<512x128xf32>
    %cst_103 = arith.constant dense<0.000000e+00> : vector<128xf32>
    %79 = vector.multi_reduction <add>, %78, %cst_103 [0] : vector<512x128xf32> to vector<128xf32>
    %80 = vector.shape_cast %79 : vector<128xf32> to vector<1x1x128xf32>
    %c0_104 = arith.constant 0 : index
    %c1_105 = arith.constant 1 : index
    %c0_106 = arith.constant 0 : index
    %81 = vector.load %arg8[%c0_104, %c1_105, %c0_106] : memref<1x2x128xf32, #tpu.memory_space<vmem>>, vector<1x1x128xf32>
    tpu.vector_store %arg8[%c0_104, %c1_105, %c0_106], %80 {strides = array<i32>} : memref<1x2x128xf32, #tpu.memory_space<vmem>>, vector<1x1x128xf32>,
    return
  }
  func.func @transform_0(%arg0: i32) -> (i32, i32, i32, i32) {
    %c0_i32 = arith.constant 0 : i32
    %0 = arith.cmpi eq, %arg0, %c0_i32 : i32
    %c16_i32 = arith.constant 16 : i32
    %1 = arith.muli %arg0, %c16_i32 : i32
    %c1_i32 = arith.constant 1 : i32
    %2 = arith.subi %1, %c1_i32 : i32
    %c1_i32_0 = arith.constant 1 : i32
    %3 = arith.select %0, %c1_i32_0, %2 : i32
    %c0_i32_1 = arith.constant 0 : i32
    %c0_i32_2 = arith.constant 0 : i32
    %c0_i32_3 = arith.constant 0 : i32
    %c0_i32_4 = arith.constant 0 : i32
    return %c0_i32_1, %3, %c0_i32_2, %c0_i32_3 : i32, i32, i32, i32
  }
  func.func @transform_1(%arg0: i32) -> (i32, i32, i32, i32) {
    %c0_i32 = arith.constant 0 : i32
    %c0_i32_0 = arith.constant 0 : i32
    %c0_i32_1 = arith.constant 0 : i32
    %c0_i32_2 = arith.constant 0 : i32
    return %c0_i32, %arg0, %c0_i32_0, %c0_i32_1 : i32, i32, i32, i32
  }
  func.func @transform_2(%arg0: i32) -> (i32, i32, i32, i32) {
    %c0_i32 = arith.constant 0 : i32
    %0 = arith.cmpi eq, %arg0, %c0_i32 : i32
    %c16_i32 = arith.constant 16 : i32
    %1 = arith.muli %arg0, %c16_i32 : i32
    %c16_i32_0 = arith.constant 16 : i32
    %2 = arith.addi %1, %c16_i32_0 : i32
    %c14_i32 = arith.constant 14 : i32
    %3 = arith.select %0, %c14_i32, %2 : i32
    %c0_i32_1 = arith.constant 0 : i32
    %c0_i32_2 = arith.constant 0 : i32
    %c0_i32_3 = arith.constant 0 : i32
    %c0_i32_4 = arith.constant 0 : i32
    return %c0_i32_1, %3, %c0_i32_2, %c0_i32_3 : i32, i32, i32, i32
  }
  func.func @transform_3(%arg0: i32) -> (i32, i32, i32) {
    %c0_i32 = arith.constant 0 : i32
    %c0_i32_0 = arith.constant 0 : i32
    %c0_i32_1 = arith.constant 0 : i32
    %c0_i32_2 = arith.constant 0 : i32
    return %c0_i32, %c0_i32_0, %c0_i32_1 : i32, i32, i32
  }
  func.func @transform_4(%arg0: i32) -> (i32, i32) {
    %c0_i32 = arith.constant 0 : i32
    %c0_i32_0 = arith.constant 0 : i32
    %c0_i32_1 = arith.constant 0 : i32
    return %c0_i32, %c0_i32_0 : i32, i32
  }
  func.func @transform_5(%arg0: i32) -> (i32, i32) {
    %c0_i32 = arith.constant 0 : i32
    %c0_i32_0 = arith.constant 0 : i32
    %c0_i32_1 = arith.constant 0 : i32
    return %c0_i32, %c0_i32_0 : i32, i32
  }
  func.func @transform_6(%arg0: i32) -> (i32, i32, i32, i32) {
    %c0_i32 = arith.constant 0 : i32
    %c0_i32_0 = arith.constant 0 : i32
    %c0_i32_1 = arith.constant 0 : i32
    %c0_i32_2 = arith.constant 0 : i32
    return %c0_i32, %arg0, %c0_i32_0, %c0_i32_1 : i32, i32, i32, i32
  }
  func.func @transform_7(%arg0: i32) -> (i32, i32, i32) {
    %c0_i32 = arith.constant 0 : i32
    %c0_i32_0 = arith.constant 0 : i32
    %c0_i32_1 = arith.constant 0 : i32
    return %arg0, %c0_i32, %c0_i32_0 : i32, i32, i32
  }
}

module attributes {stable_mosaic.version = 11 : i64} {
  func.func @_residual_affine_kernel(%arg0: i32, %arg1: memref<2x16x16x128xf32, #tpu.memory_space<vmem>>, %arg2: memref<2x16x16x128xf32, #tpu.memory_space<vmem>>, %arg3: memref<1x128xf32, #tpu.memory_space<vmem>>, %arg4: memref<1x128xf32, #tpu.memory_space<vmem>>, %arg5: memref<2x16x16x128xf32, #tpu.memory_space<vmem>>) attributes {dimension_semantics = [#tpu.dimension_semantics<parallel>], iteration_bounds = array<i64: 1>, scalar_prefetch = 0 : i64, scratch_operands = 0 : i64, tpu.core_type = #tpu.core_type<tc>, window_params = [{transform_indices = @transform_0, window_bounds = array<i64: 2, 16, 16, 128>}, {transform_indices = @transform_1, window_bounds = array<i64: 2, 16, 16, 128>}, {pipeline_mode = #tpu.pipeline_mode<synchronous>, transform_indices = @transform_2, window_bounds = array<i64: 1, 128>}, {pipeline_mode = #tpu.pipeline_mode<synchronous>, transform_indices = @transform_3, window_bounds = array<i64: 1, 128>}, {transform_indices = @transform_4, window_bounds = array<i64: 2, 16, 16, 128>}]} {
    %c0 = arith.constant 0 : index
    %c0_0 = arith.constant 0 : index
    %c0_1 = arith.constant 0 : index
    %c0_2 = arith.constant 0 : index
    %0 = vector.load %arg2[%c0, %c0_0, %c0_1, %c0_2] : memref<2x16x16x128xf32, #tpu.memory_space<vmem>>, vector<2x16x16x128xf32>
    %c0_3 = arith.constant 0 : index
    %c0_4 = arith.constant 0 : index
    %c0_5 = arith.constant 0 : index
    %c0_6 = arith.constant 0 : index
    %1 = vector.load %arg1[%c0_3, %c0_4, %c0_5, %c0_6] : memref<2x16x16x128xf32, #tpu.memory_space<vmem>>, vector<2x16x16x128xf32>
    %c0_7 = arith.constant 0 : index
    %c0_8 = arith.constant 0 : index
    %2 = vector.load %arg3[%c0_7, %c0_8] : memref<1x128xf32, #tpu.memory_space<vmem>>, vector<1x128xf32>
    %3 = vector.shape_cast %2 : vector<1x128xf32> to vector<1x1x1x128xf32>
    %4 = vector.broadcast %3 : vector<1x1x1x128xf32> to vector<2x16x16x128xf32>
    %5 = arith.mulf %0, %4 : vector<2x16x16x128xf32>
    %c0_9 = arith.constant 0 : index
    %c0_10 = arith.constant 0 : index
    %6 = vector.load %arg4[%c0_9, %c0_10] : memref<1x128xf32, #tpu.memory_space<vmem>>, vector<1x128xf32>
    %7 = vector.shape_cast %6 : vector<1x128xf32> to vector<1x1x1x128xf32>
    %8 = vector.broadcast %7 : vector<1x1x1x128xf32> to vector<2x16x16x128xf32>
    %9 = arith.addf %5, %8 : vector<2x16x16x128xf32>
    %10 = arith.addf %1, %9 : vector<2x16x16x128xf32>
    %c0_11 = arith.constant 0 : index
    %c0_12 = arith.constant 0 : index
    %c0_13 = arith.constant 0 : index
    %c0_14 = arith.constant 0 : index
    %11 = vector.load %arg5[%c0_11, %c0_12, %c0_13, %c0_14] : memref<2x16x16x128xf32, #tpu.memory_space<vmem>>, vector<2x16x16x128xf32>
    tpu.vector_store %arg5[%c0_11, %c0_12, %c0_13, %c0_14], %10 {strides = array<i32>} : memref<2x16x16x128xf32, #tpu.memory_space<vmem>>, vector<2x16x16x128xf32>,
    return
  }
  func.func @transform_0(%arg0: i32) -> (i32, i32, i32, i32) {
    %c0_i32 = arith.constant 0 : i32
    %c0_i32_0 = arith.constant 0 : i32
    %c0_i32_1 = arith.constant 0 : i32
    %c0_i32_2 = arith.constant 0 : i32
    return %c0_i32, %arg0, %c0_i32_0, %c0_i32_1 : i32, i32, i32, i32
  }
  func.func @transform_1(%arg0: i32) -> (i32, i32, i32, i32) {
    %c0_i32 = arith.constant 0 : i32
    %c0_i32_0 = arith.constant 0 : i32
    %c0_i32_1 = arith.constant 0 : i32
    %c0_i32_2 = arith.constant 0 : i32
    return %c0_i32, %arg0, %c0_i32_0, %c0_i32_1 : i32, i32, i32, i32
  }
  func.func @transform_2(%arg0: i32) -> (i32, i32) {
    %c0_i32 = arith.constant 0 : i32
    %c0_i32_0 = arith.constant 0 : i32
    %c0_i32_1 = arith.constant 0 : i32
    return %c0_i32, %c0_i32_0 : i32, i32
  }
  func.func @transform_3(%arg0: i32) -> (i32, i32) {
    %c0_i32 = arith.constant 0 : i32
    %c0_i32_0 = arith.constant 0 : i32
    %c0_i32_1 = arith.constant 0 : i32
    return %c0_i32, %c0_i32_0 : i32, i32
  }
  func.func @transform_4(%arg0: i32) -> (i32, i32, i32, i32) {
    %c0_i32 = arith.constant 0 : i32
    %c0_i32_0 = arith.constant 0 : i32
    %c0_i32_1 = arith.constant 0 : i32
    %c0_i32_2 = arith.constant 0 : i32
    return %c0_i32, %arg0, %c0_i32_0, %c0_i32_1 : i32, i32, i32, i32
  }
}

</mosaic_0001>

<llo_original>
// kernel: resblock_forward.5
$region0: #{resblock_forward.5}
  #allocation0 [shape = 'u32[]', space=smem, size = 0x4, offset = 0x4, fixed_abs, tag = 'smem constant byte address 0x4 - core index']
  #allocation1 [shape = 'u32[144,128]{1,0:T(1,128)}', space=vmem, size = 0x12000, scoped, tag = 'internal scratch']
  %s0 = inlined_call_operand.vmem [shape: f32[2,16,16,128], index: 0, kind: input, shape index: {}]
  %s1 = inlined_call_operand.vmem [shape: f32[2,16,16,128], index: 1, kind: input, shape index: {}]
  %s2 = inlined_call_operand.vmem [shape: f32[1,128], index: 2, kind: input, shape index: {}]
  %s3 = inlined_call_operand.vmem [shape: f32[1,128], index: 3, kind: input, shape index: {}]
  %s4 = inlined_call_operand.vmem [shape: f32[2,16,16,128], index: 4, kind: output, shape index: {}]
  %s5 = sld [smem:[#allocation0]]
  $region26: #{resblock_forward.5} parent=0
    _
  %s7 = ssub.s32 1, %s5
  %s8 = scalar_select 0, %s7, %s5
  // Predicated region
  $region2: #{resblock_forward.5} parent=0 // pred_check
    _
  $region3: #{resblock_forward.5} parent=0 // pred_check_branch
    %10 = sbr.rel (0) target = $region5
  $region4: #{resblock_forward.5} parent=0 // pred_region
    _
  $region5: #{resblock_forward.5} parent=0 // pred_fallthru
    _
  // Predicated region
  $region6: #{resblock_forward.5} parent=0 // pred_check
    _
  $region7: #{resblock_forward.5} parent=0 // pred_check_branch
    %12 = sbr.rel (0) target = $region9
  $region8: #{resblock_forward.5} parent=0 // pred_region
    _
  $region9: #{resblock_forward.5} parent=0 // pred_fallthru
    _
  // Predicated region
  $region10: #{resblock_forward.5} parent=0 // pred_check
    _
  $region11: #{resblock_forward.5} parent=0 // pred_check_branch
    %14 = sbr.rel (0) target = $region13
  $region12: #{resblock_forward.5} parent=0 // pred_region
    _
  $region13: #{resblock_forward.5} parent=0 // pred_fallthru
    _
  // Predicated region
  $region14: #{resblock_forward.5} parent=0 // pred_check
    _
  $region15: #{resblock_forward.5} parent=0 // pred_check_branch
    %16 = sbr.rel (0) target = $region17
  $region16: #{resblock_forward.5} parent=0 // pred_region
    _
  $region17: #{resblock_forward.5} parent=0 // pred_fallthru
    _
  %v17 = vld [vmem:[%s1] sm:$0xff]
  %v18 = vld [vmem:[%s1 + $0x8] sm:$0xff]
  %v19 = vld [vmem:[%s1 + $0x10] sm:$0xff]
  %v20 = vld [vmem:[%s1 + $0x18] sm:$0xff]
  %v21 = vld [vmem:[%s1 + $0x20] sm:$0xff]
  %v22 = vld [vmem:[%s1 + $0x28] sm:$0xff]
  %v23 = vld [vmem:[%s1 + $0x30] sm:$0xff]
  %v24 = vld [vmem:[%s1 + $0x38] sm:$0xff]
  %v25 = vld [vmem:[%s1 + $0x40] sm:$0xff]
  %v26 = vld [vmem:[%s1 + $0x48] sm:$0xff]
  %v27 = vld [vmem:[%s1 + $0x50] sm:$0xff]
  %v28 = vld [vmem:[%s1 + $0x58] sm:$0xff]
  %v29 = vld [vmem:[%s1 + $0x60] sm:$0xff]
  %v30 = vld [vmem:[%s1 + $0x68] sm:$0xff]
  %v31 = vld [vmem:[%s1 + $0x70] sm:$0xff]
  %v32 = vld [vmem:[%s1 + $0x78] sm:$0xff]
  %v33 = vld [vmem:[%s1 + $0x80] sm:$0xff]
  %v34 = vld [vmem:[%s1 + $0x88] sm:$0xff]
  %v35 = vld [vmem:[%s1 + $0x90] sm:$0xff]
  %v36 = vld [vmem:[%s1 + $0x98] sm:$0xff]
  %v37 = vld [vmem:[%s1 + $0xa0] sm:$0xff]
  %v38 = vld [vmem:[%s1 + $0xa8] sm:$0xff]
  %v39 = vld [vmem:[%s1 + $0xb0] sm:$0xff]
  %v40 = vld [vmem:[%s1 + $0xb8] sm:$0xff]
  %v41 = vld [vmem:[%s1 + $0xc0] sm:$0xff]
  %v42 = vld [vmem:[%s1 + $0xc8] sm:$0xff]
  %v43 = vld [vmem:[%s1 + $0xd0] sm:$0xff]
  %v44 = vld [vmem:[%s1 + $0xd8] sm:$0xff]
  %v45 = vld [vmem:[%s1 + $0xe0] sm:$0xff]
  %v46 = vld [vmem:[%s1 + $0xe8] sm:$0xff]
  %v47 = vld [vmem:[%s1 + $0xf0] sm:$0xff]
  %v48 = vld [vmem:[%s1 + $0xf8] sm:$0xff]
  %v49 = vld [vmem:[%s1 + $0x100] sm:$0xff]
  %v50 = vld [vmem:[%s1 + $0x108] sm:$0xff]
  %v51 = vld [vmem:[%s1 + $0x110] sm:$0xff]
  %v52 = vld [vmem:[%s1 + $0x118] sm:$0xff]
  %v53 = vld [vmem:[%s1 + $0x120] sm:$0xff]
  %v54 = vld [vmem:[%s1 + $0x128] sm:$0xff]
  %v55 = vld [vmem:[%s1 + $0x130] sm:$0xff]
  %v56 = vld [vmem:[%s1 + $0x138] sm:$0xff]
  %v57 = vld [vmem:[%s1 + $0x140] sm:$0xff]
  %v58 = vld [vmem:[%s1 + $0x148] sm:$0xff]
  %v59 = vld [vmem:[%s1 + $0x150] sm:$0xff]
  %v60 = vld [vmem:[%s1 + $0x158] sm:$0xff]
  %v61 = vld [vmem:[%s1 + $0x160] sm:$0xff]
  %v62 = vld [vmem:[%s1 + $0x168] sm:$0xff]
  %v63 = vld [vmem:[%s1 + $0x170] sm:$0xff]
  %v64 = vld [vmem:[%s1 + $0x178] sm:$0xff]
  %v65 = vld [vmem:[%s1 + $0x180] sm:$0xff]
  %v66 = vld [vmem:[%s1 + $0x188] sm:$0xff]
  %v67 = vld [vmem:[%s1 + $0x190] sm:$0xff]
  %v68 = vld [vmem:[%s1 + $0x198] sm:$0xff]
  %v69 = vld [vmem:[%s1 + $0x1a0] sm:$0xff]
  %v70 = vld [vmem:[%s1 + $0x1a8] sm:$0xff]
  %v71 = vld [vmem:[%s1 + $0x1b0] sm:$0xff]
  %v72 = vld [vmem:[%s1 + $0x1b8] sm:$0xff]
  %v73 = vld [vmem:[%s1 + $0x1c0] sm:$0xff]
  %v74 = vld [vmem:[%s1 + $0x1c8] sm:$0xff]
  %v75 = vld [vmem:[%s1 + $0x1d0] sm:$0xff]
  %v76 = vld [vmem:[%s1 + $0x1d8] sm:$0xff]
  %v77 = vld [vmem:[%s1 + $0x1e0] sm:$0xff]
  %v78 = vld [vmem:[%s1 + $0x1e8] sm:$0xff]
  %v79 = vld [vmem:[%s1 + $0x1f0] sm:$0xff]
  %v80 = vld [vmem:[%s1 + $0x1f8] sm:$0xff]
  %v81 = vld [vmem:[%s0] sm:$0xff]
  %v82 = vld [vmem:[%s0 + $0x8] sm:$0xff]
  %v83 = vld [vmem:[%s0 + $0x10] sm:$0xff]
  %v84 = vld [vmem:[%s0 + $0x18] sm:$0xff]
  %v85 = vld [vmem:[%s0 + $0x20] sm:$0xff]
  %v86 = vld [vmem:[%s0 + $0x28] sm:$0xff]
  %v87 = vld [vmem:[%s0 + $0x30] sm:$0xff]
  %v88 = vld [vmem:[%s0 + $0x38] sm:$0xff]
  %v89 = vld [vmem:[%s0 + $0x40] sm:$0xff]
  %v90 = vld [vmem:[%s0 + $0x48] sm:$0xff]
  %v91 = vld [vmem:[%s0 + $0x50] sm:$0xff]
  %v92 = vld [vmem:[%s0 + $0x58] sm:$0xff]
  %v93 = vld [vmem:[%s0 + $0x60] sm:$0xff]
  %v94 = vld [vmem:[%s0 + $0x68] sm:$0xff]
  %v95 = vld [vmem:[%s0 + $0x70] sm:$0xff]
  %v96 = vld [vmem:[%s0 + $0x78] sm:$0xff]
  %v97 = vld [vmem:[%s0 + $0x80] sm:$0xff]
  %v98 = vld [vmem:[%s0 + $0x88] sm:$0xff]
  %v99 = vld [vmem:[%s0 + $0x90] sm:$0xff]
  %v100 = vld [vmem:[%s0 + $0x98] sm:$0xff]
  %v101 = vld [vmem:[%s0 + $0xa0] sm:$0xff]
  %v102 = vld [vmem:[%s0 + $0xa8] sm:$0xff]
  %v103 = vld [vmem:[%s0 + $0xb0] sm:$0xff]
  %v104 = vld [vmem:[%s0 + $0xb8] sm:$0xff]
  %v105 = vld [vmem:[%s0 + $0xc0] sm:$0xff]
  %v106 = vld [vmem:[%s0 + $0xc8] sm:$0xff]
  %v107 = vld [vmem:[%s0 + $0xd0] sm:$0xff]
  %v108 = vld [vmem:[%s0 + $0xd8] sm:$0xff]
  %v109 = vld [vmem:[%s0 + $0xe0] sm:$0xff]
  %v110 = vld [vmem:[%s0 + $0xe8] sm:$0xff]
  %v111 = vld [vmem:[%s0 + $0xf0] sm:$0xff]
  %v112 = vld [vmem:[%s0 + $0xf8] sm:$0xff]
  %v113 = vld [vmem:[%s0 + $0x100] sm:$0xff]
  %v114 = vld [vmem:[%s0 + $0x108] sm:$0xff]
  %v115 = vld [vmem:[%s0 + $0x110] sm:$0xff]
  %v116 = vld [vmem:[%s0 + $0x118] sm:$0xff]
  %v117 = vld [vmem:[%s0 + $0x120] sm:$0xff]
  %v118 = vld [vmem:[%s0 + $0x128] sm:$0xff]
  %v119 = vld [vmem:[%s0 + $0x130] sm:$0xff]
  %v120 = vld [vmem:[%s0 + $0x138] sm:$0xff]
  %v121 = vld [vmem:[%s0 + $0x140] sm:$0xff]
  %v122 = vld [vmem:[%s0 + $0x148] sm:$0xff]
  %v123 = vld [vmem:[%s0 + $0x150] sm:$0xff]
  %v124 = vld [vmem:[%s0 + $0x158] sm:$0xff]
  %v125 = vld [vmem:[%s0 + $0x160] sm:$0xff]
  %v126 = vld [vmem:[%s0 + $0x168] sm:$0xff]
  %v127 = vld [vmem:[%s0 + $0x170] sm:$0xff]
  %v128 = vld [vmem:[%s0 + $0x178] sm:$0xff]
  %v129 = vld [vmem:[%s0 + $0x180] sm:$0xff]
  %v130 = vld [vmem:[%s0 + $0x188] sm:$0xff]
  %v131 = vld [vmem:[%s0 + $0x190] sm:$0xff]
  %v132 = vld [vmem:[%s0 + $0x198] sm:$0xff]
  %v133 = vld [vmem:[%s0 + $0x1a0] sm:$0xff]
  %v134 = vld [vmem:[%s0 + $0x1a8] sm:$0xff]
  %v135 = vld [vmem:[%s0 + $0x1b0] sm:$0xff]
  %v136 = vld [vmem:[%s0 + $0x1b8] sm:$0xff]
  %v137 = vld [vmem:[%s0 + $0x1c0] sm:$0xff]
  %v138 = vld [vmem:[%s0 + $0x1c8] sm:$0xff]
  %v139 = vld [vmem:[%s0 + $0x1d0] sm:$0xff]
  %v140 = vld [vmem:[%s0 + $0x1d8] sm:$0xff]
  %v141 = vld [vmem:[%s0 + $0x1e0] sm:$0xff]
  %v142 = vld [vmem:[%s0 + $0x1e8] sm:$0xff]
  %v143 = vld [vmem:[%s0 + $0x1f0] sm:$0xff]
  %v144 = vld [vmem:[%s0 + $0x1f8] sm:$0xff]
  %v145 = vld [vmem:[%s2] sm:$0x1]
  %v147 = vlaneseq
  %v148 = vshrl.u32 %v147, 7
  %v149 = vsub.s32 0, %v148
  %v150 = vrot.slane %v145, %v149
  %v152 = vmul.f32 %v17, %v150
  %v153 = vmul.f32 %v18, %v150
  %v154 = vmul.f32 %v19, %v150
  %v155 = vmul.f32 %v20, %v150
  %v156 = vmul.f32 %v21, %v150
  %v157 = vmul.f32 %v22, %v150
  %v158 = vmul.f32 %v23, %v150
  %v159 = vmul.f32 %v24, %v150
  %v160 = vmul.f32 %v25, %v150
  %v161 = vmul.f32 %v26, %v150
  %v162 = vmul.f32 %v27, %v150
  %v163 = vmul.f32 %v28, %v150
  %v164 = vmul.f32 %v29, %v150
  %v165 = vmul.f32 %v30, %v150
  %v166 = vmul.f32 %v31, %v150
  %v167 = vmul.f32 %v32, %v150
  %v168 = vmul.f32 %v33, %v150
  %v169 = vmul.f32 %v34, %v150
  %v170 = vmul.f32 %v35, %v150
  %v171 = vmul.f32 %v36, %v150
  %v172 = vmul.f32 %v37, %v150
  %v173 = vmul.f32 %v38, %v150
  %v174 = vmul.f32 %v39, %v150
  %v175 = vmul.f32 %v40, %v150
  %v176 = vmul.f32 %v41, %v150
  %v177 = vmul.f32 %v42, %v150
  %v178 = vmul.f32 %v43, %v150
  %v179 = vmul.f32 %v44, %v150
  %v180 = vmul.f32 %v45, %v150
  %v181 = vmul.f32 %v46, %v150
  %v182 = vmul.f32 %v47, %v150
  %v183 = vmul.f32 %v48, %v150
  %v184 = vmul.f32 %v49, %v150
  %v185 = vmul.f32 %v50, %v150
  %v186 = vmul.f32 %v51, %v150
  %v187 = vmul.f32 %v52, %v150
  %v188 = vmul.f32 %v53, %v150
  %v189 = vmul.f32 %v54, %v150
  %v190 = vmul.f32 %v55, %v150
  %v191 = vmul.f32 %v56, %v150
  %v192 = vmul.f32 %v57, %v150
  %v193 = vmul.f32 %v58, %v150
  %v194 = vmul.f32 %v59, %v150
  %v195 = vmul.f32 %v60, %v150
  %v196 = vmul.f32 %v61, %v150
  %v197 = vmul.f32 %v62, %v150
  %v198 = vmul.f32 %v63, %v150
  %v199 = vmul.f32 %v64, %v150
  %v200 = vmul.f32 %v65, %v150
  %v201 = vmul.f32 %v66, %v150
  %v202 = vmul.f32 %v67, %v150
  %v203 = vmul.f32 %v68, %v150
  %v204 = vmul.f32 %v69, %v150
  %v205 = vmul.f32 %v70, %v150
  %v206 = vmul.f32 %v71, %v150
  %v207 = vmul.f32 %v72, %v150
  %v208 = vmul.f32 %v73, %v150
  %v209 = vmul.f32 %v74, %v150
  %v210 = vmul.f32 %v75, %v150
  %v211 = vmul.f32 %v76, %v150
  %v212 = vmul.f32 %v77, %v150
  %v213 = vmul.f32 %v78, %v150
  %v214 = vmul.f32 %v79, %v150
  %v215 = vmul.f32 %v80, %v150
  %v216 = vld [vmem:[%s3] sm:$0x1]
  %v218 = vlaneseq
  %v219 = vshrl.u32 %v218, 7
  %v220 = vsub.s32 0, %v219
  %v221 = vrot.slane %v216, %v220
  %v223 = vadd.f32 %v152, %v221
  %v224 = vadd.f32 %v153, %v221
  %v225 = vadd.f32 %v154, %v221
  %v226 = vadd.f32 %v155, %v221
  %v227 = vadd.f32 %v156, %v221
  %v228 = vadd.f32 %v157, %v221
  %v229 = vadd.f32 %v158, %v221
  %v230 = vadd.f32 %v159, %v221
  %v231 = vadd.f32 %v160, %v221
  %v232 = vadd.f32 %v161, %v221
  %v233 = vadd.f32 %v162, %v221
  %v234 = vadd.f32 %v163, %v221
  %v235 = vadd.f32 %v164, %v221
  %v236 = vadd.f32 %v165, %v221
  %v237 = vadd.f32 %v166, %v221
  %v238 = vadd.f32 %v167, %v221
  %v239 = vadd.f32 %v168, %v221
  %v240 = vadd.f32 %v169, %v221
  %v241 = vadd.f32 %v170, %v221
  %v242 = vadd.f32 %v171, %v221
  %v243 = vadd.f32 %v172, %v221
  %v244 = vadd.f32 %v173, %v221
  %v245 = vadd.f32 %v174, %v221
  %v246 = vadd.f32 %v175, %v221
  %v247 = vadd.f32 %v176, %v221
  %v248 = vadd.f32 %v177, %v221
  %v249 = vadd.f32 %v178, %v221
  %v250 = vadd.f32 %v179, %v221
  %v251 = vadd.f32 %v180, %v221
  %v252 = vadd.f32 %v181, %v221
  %v253 = vadd.f32 %v182, %v221
  %v254 = vadd.f32 %v183, %v221
  %v255 = vadd.f32 %v184, %v221
  %v256 = vadd.f32 %v185, %v221
  %v257 = vadd.f32 %v186, %v221
  %v258 = vadd.f32 %v187, %v221
  %v259 = vadd.f32 %v188, %v221
  %v260 = vadd.f32 %v189, %v221
  %v261 = vadd.f32 %v190, %v221
  %v262 = vadd.f32 %v191, %v221
  %v263 = vadd.f32 %v192, %v221
  %v264 = vadd.f32 %v193, %v221
  %v265 = vadd.f32 %v194, %v221
  %v266 = vadd.f32 %v195, %v221
  %v267 = vadd.f32 %v196, %v221
  %v268 = vadd.f32 %v197, %v221
  %v269 = vadd.f32 %v198, %v221
  %v270 = vadd.f32 %v199, %v221
  %v271 = vadd.f32 %v200, %v221
  %v272 = vadd.f32 %v201, %v221
  %v273 = vadd.f32 %v202, %v221
  %v274 = vadd.f32 %v203, %v221
  %v275 = vadd.f32 %v204, %v221
  %v276 = vadd.f32 %v205, %v221
  %v277 = vadd.f32 %v206, %v221
  %v278 = vadd.f32 %v207, %v221
  %v279 = vadd.f32 %v208, %v221
  %v280 = vadd.f32 %v209, %v221
  %v281 = vadd.f32 %v210, %v221
  %v282 = vadd.f32 %v211, %v221
  %v283 = vadd.f32 %v212, %v221
  %v284 = vadd.f32 %v213, %v221
  %v285 = vadd.f32 %v214, %v221
  %v286 = vadd.f32 %v215, %v221
  %v287 = vadd.f32 %v81, %v223
  %v288 = vadd.f32 %v82, %v224
  %v289 = vadd.f32 %v83, %v225
  %v290 = vadd.f32 %v84, %v226
  %v291 = vadd.f32 %v85, %v227
  %v292 = vadd.f32 %v86, %v228
  %v293 = vadd.f32 %v87, %v229
  %v294 = vadd.f32 %v88, %v230
  %v295 = vadd.f32 %v89, %v231
  %v296 = vadd.f32 %v90, %v232
  %v297 = vadd.f32 %v91, %v233
  %v298 = vadd.f32 %v92, %v234
  %v299 = vadd.f32 %v93, %v235
  %v300 = vadd.f32 %v94, %v236
  %v301 = vadd.f32 %v95, %v237
  %v302 = vadd.f32 %v96, %v238
  %v303 = vadd.f32 %v97, %v239
  %v304 = vadd.f32 %v98, %v240
  %v305 = vadd.f32 %v99, %v241
  %v306 = vadd.f32 %v100, %v242
  %v307 = vadd.f32 %v101, %v243
  %v308 = vadd.f32 %v102, %v244
  %v309 = vadd.f32 %v103, %v245
  %v310 = vadd.f32 %v104, %v246
  %v311 = vadd.f32 %v105, %v247
  %v312 = vadd.f32 %v106, %v248
  %v313 = vadd.f32 %v107, %v249
  %v314 = vadd.f32 %v108, %v250
  %v315 = vadd.f32 %v109, %v251
  %v316 = vadd.f32 %v110, %v252
  %v317 = vadd.f32 %v111, %v253
  %v318 = vadd.f32 %v112, %v254
  %v319 = vadd.f32 %v113, %v255
  %v320 = vadd.f32 %v114, %v256
  %v321 = vadd.f32 %v115, %v257
  %v322 = vadd.f32 %v116, %v258
  %v323 = vadd.f32 %v117, %v259
  %v324 = vadd.f32 %v118, %v260
  %v325 = vadd.f32 %v119, %v261
  %v326 = vadd.f32 %v120, %v262
  %v327 = vadd.f32 %v121, %v263
  %v328 = vadd.f32 %v122, %v264
  %v329 = vadd.f32 %v123, %v265
  %v330 = vadd.f32 %v124, %v266
  %v331 = vadd.f32 %v125, %v267
  %v332 = vadd.f32 %v126, %v268
  %v333 = vadd.f32 %v127, %v269
  %v334 = vadd.f32 %v128, %v270
  %v335 = vadd.f32 %v129, %v271
  %v336 = vadd.f32 %v130, %v272
  %v337 = vadd.f32 %v131, %v273
  %v338 = vadd.f32 %v132, %v274
  %v339 = vadd.f32 %v133, %v275
  %v340 = vadd.f32 %v134, %v276
  %v341 = vadd.f32 %v135, %v277
  %v342 = vadd.f32 %v136, %v278
  %v343 = vadd.f32 %v137, %v279
  %v344 = vadd.f32 %v138, %v280
  %v345 = vadd.f32 %v139, %v281
  %v346 = vadd.f32 %v140, %v282
  %v347 = vadd.f32 %v141, %v283
  %v348 = vadd.f32 %v142, %v284
  %v349 = vadd.f32 %v143, %v285
  %v350 = vadd.f32 %v144, %v286
  %351 = vst [vmem:[%s4] sm:$0xff] %v287
  %352 = vst [vmem:[%s4 + $0x8] sm:$0xff] %v288
  %353 = vst [vmem:[%s4 + $0x10] sm:$0xff] %v289
  %354 = vst [vmem:[%s4 + $0x18] sm:$0xff] %v290
  %355 = vst [vmem:[%s4 + $0x20] sm:$0xff] %v291
  %356 = vst [vmem:[%s4 + $0x28] sm:$0xff] %v292
  %357 = vst [vmem:[%s4 + $0x30] sm:$0xff] %v293
  %358 = vst [vmem:[%s4 + $0x38] sm:$0xff] %v294
  %359 = vst [vmem:[%s4 + $0x40] sm:$0xff] %v295
  %360 = vst [vmem:[%s4 + $0x48] sm:$0xff] %v296
  %361 = vst [vmem:[%s4 + $0x50] sm:$0xff] %v297
  %362 = vst [vmem:[%s4 + $0x58] sm:$0xff] %v298
  %363 = vst [vmem:[%s4 + $0x60] sm:$0xff] %v299
  %364 = vst [vmem:[%s4 + $0x68] sm:$0xff] %v300
  %365 = vst [vmem:[%s4 + $0x70] sm:$0xff] %v301
  %366 = vst [vmem:[%s4 + $0x78] sm:$0xff] %v302
  %367 = vst [vmem:[%s4 + $0x80] sm:$0xff] %v303
  %368 = vst [vmem:[%s4 + $0x88] sm:$0xff] %v304
  %369 = vst [vmem:[%s4 + $0x90] sm:$0xff] %v305
  %370 = vst [vmem:[%s4 + $0x98] sm:$0xff] %v306
  %371 = vst [vmem:[%s4 + $0xa0] sm:$0xff] %v307
  %372 = vst [vmem:[%s4 + $0xa8] sm:$0xff] %v308
  %373 = vst [vmem:[%s4 + $0xb0] sm:$0xff] %v309
  %374 = vst [vmem:[%s4 + $0xb8] sm:$0xff] %v310
  %375 = vst [vmem:[%s4 + $0xc0] sm:$0xff] %v311
  %376 = vst [vmem:[%s4 + $0xc8] sm:$0xff] %v312
  %377 = vst [vmem:[%s4 + $0xd0] sm:$0xff] %v313
  %378 = vst [vmem:[%s4 + $0xd8] sm:$0xff] %v314
  %379 = vst [vmem:[%s4 + $0xe0] sm:$0xff] %v315
  %380 = vst [vmem:[%s4 + $0xe8] sm:$0xff] %v316
  %381 = vst [vmem:[%s4 + $0xf0] sm:$0xff] %v317
  %382 = vst [vmem:[%s4 + $0xf8] sm:$0xff] %v318
  %383 = vst [vmem:[%s4 + $0x100] sm:$0xff] %v319
  %384 = vst [vmem:[%s4 + $0x108] sm:$0xff] %v320
  %385 = vst [vmem:[%s4 + $0x110] sm:$0xff] %v321
  %386 = vst [vmem:[%s4 + $0x118] sm:$0xff] %v322
  %387 = vst [vmem:[%s4 + $0x120] sm:$0xff] %v323
  %388 = vst [vmem:[%s4 + $0x128] sm:$0xff] %v324
  %389 = vst [vmem:[%s4 + $0x130] sm:$0xff] %v325
  %390 = vst [vmem:[%s4 + $0x138] sm:$0xff] %v326
  %391 = vst [vmem:[%s4 + $0x140] sm:$0xff] %v327
  %392 = vst [vmem:[%s4 + $0x148] sm:$0xff] %v328
  %393 = vst [vmem:[%s4 + $0x150] sm:$0xff] %v329
  %394 = vst [vmem:[%s4 + $0x158] sm:$0xff] %v330
  %395 = vst [vmem:[%s4 + $0x160] sm:$0xff] %v331
  %396 = vst [vmem:[%s4 + $0x168] sm:$0xff] %v332
  %397 = vst [vmem:[%s4 + $0x170] sm:$0xff] %v333
  %398 = vst [vmem:[%s4 + $0x178] sm:$0xff] %v334
  %399 = vst [vmem:[%s4 + $0x180] sm:$0xff] %v335
  %400 = vst [vmem:[%s4 + $0x188] sm:$0xff] %v336
  %401 = vst [vmem:[%s4 + $0x190] sm:$0xff] %v337
  %402 = vst [vmem:[%s4 + $0x198] sm:$0xff] %v338
  %403 = vst [vmem:[%s4 + $0x1a0] sm:$0xff] %v339
  %404 = vst [vmem:[%s4 + $0x1a8] sm:$0xff] %v340
  %405 = vst [vmem:[%s4 + $0x1b0] sm:$0xff] %v341
  %406 = vst [vmem:[%s4 + $0x1b8] sm:$0xff] %v342
  %407 = vst [vmem:[%s4 + $0x1c0] sm:$0xff] %v343
  %408 = vst [vmem:[%s4 + $0x1c8] sm:$0xff] %v344
  %409 = vst [vmem:[%s4 + $0x1d0] sm:$0xff] %v345
  %410 = vst [vmem:[%s4 + $0x1d8] sm:$0xff] %v346
  %411 = vst [vmem:[%s4 + $0x1e0] sm:$0xff] %v347
  %412 = vst [vmem:[%s4 + $0x1e8] sm:$0xff] %v348
  %413 = vst [vmem:[%s4 + $0x1f0] sm:$0xff] %v349
  %414 = vst [vmem:[%s4 + $0x1f8] sm:$0xff] %v350
  // Predicated region
  $region18: #{resblock_forward.5} parent=0 // pred_check
    _
  $region19: #{resblock_forward.5} parent=0 // pred_check_branch
    %416 = sbr.rel (0) target = $region21
  $region20: #{resblock_forward.5} parent=0 // pred_region
    _
  $region21: #{resblock_forward.5} parent=0 // pred_fallthru
    _
  // Predicated region
  $region22: #{resblock_forward.5} parent=0 // pred_check
    _
  $region23: #{resblock_forward.5} parent=0 // pred_check_branch
    %418 = sbr.rel (0) target = $region25
  $region24: #{resblock_forward.5} parent=0 // pred_region
    _
  $region25: #{resblock_forward.5} parent=0 // pred_fallthru
    _

// kernel: resblock_forward.3
$region0: #{resblock_forward.3}
  #allocation0 [shape = 'u32[]', space=smem, size = 0x4, offset = 0x4, fixed_abs, tag = 'smem constant byte address 0x4 - core index']
  #allocation1 [shape = 'u32[144,128]{1,0:T(1,128)}', space=vmem, size = 0x12000, scoped, tag = 'internal scratch']
  #allocation2 [shape = 'f32[2,18,16,384]{3,2,1,0:T(8,128)}', space=vmem, size = 0xd8000, scoped, tag = 'scratch operand']
  %s0 = inlined_call_operand.vmem [shape: f32[2,16,16,128], index: 0, kind: input, shape index: {}, may-alias: {0,1,2}]
  %s1 = inlined_call_operand.vmem [shape: f32[2,16,16,128], index: 1, kind: input, shape index: {}, may-alias: {0,1,2}]
  %s2 = inlined_call_operand.vmem [shape: f32[2,16,16,128], index: 2, kind: input, shape index: {}, may-alias: {0,1,2}]
  %s3 = inlined_call_operand.vmem [shape: f32[3,384,128], index: 3, kind: input, shape index: {}]
  %s4 = inlined_call_operand.vmem [shape: f32[1,128], index: 4, kind: input, shape index: {}, may-alias: {4,5}]
  %s5 = inlined_call_operand.vmem [shape: f32[1,128], index: 5, kind: input, shape index: {}, may-alias: {4,5}]
  %s6 = inlined_call_operand.vmem [shape: f32[2,16,16,128], index: 6, kind: output, shape index: {0}]
  %s7 = inlined_call_operand.vmem [shape: f32[1,2,128], index: 7, kind: output, shape index: {1}]
  %8 = xla_tuple %s6, %s7
  %s9 = sld [smem:[#allocation0]]
  $region118: #{resblock_forward.3} parent=0
    _
  %s11 = ssub.s32 1, %s9
  %s12 = scalar_select 0, %s11, %s9
  $region1: #{resblock_forward.3} parent=0
    #allocation3 [shape = 'u8[16384]{0}', space=vmem, size = 0x4000, scoped, tag = 'input window, operand 0, single buffered']
    #allocation4 [shape = 'u8[16384]{0}', space=vmem, size = 0x4000, scoped, tag = 'input window, operand 2, single buffered']
    // Predicated region
    $region2: #{resblock_forward.3} parent=1 // pred_check
      _
    $region3: #{resblock_forward.3} parent=1 // pred_check_branch
      %14 = sbr.rel (0) target = $region5
    $region4: #{resblock_forward.3} parent=1 // pred_region
      %p15 = scmp.eq.s32.totalorder 0, 0
      %s16 = smul.u32 0, 16
      %s17 = ssub.s32 %s16, 1
      %s18 = scalar_select %p15, 1, %s17
      %s19 = smul.addr %s18, 2
      %s20 = smul.addr %s19, 8
      %s21 = scalar_lea.vmem %s0, %s20
      // Predicated region
      $region6: #{resblock_forward.3} parent=4 // pred_check
        _
      $region7: #{resblock_forward.3} parent=4 // pred_check_branch
        %23 = sbr.rel (0) target = $region9
      $region8: #{resblock_forward.3} parent=4 // pred_region
        // Predicated region
        $region10: #{resblock_forward.3} parent=8 // pred_check
          _
        $region11: #{resblock_forward.3} parent=8 // pred_check_branch
          %25 = sbr.rel (0) target = $region13
        $region12: #{resblock_forward.3} parent=8 // pred_region
          // Predicated region
          $region25: #{resblock_forward.3} parent=12 // pred_check
            _
          $region26: #{resblock_forward.3} parent=12 // pred_check_branch
            %46 = sbr.rel (0) target = $region28
          $region27: #{resblock_forward.3} parent=12 // pred_region
            loop: start=0, step=1, limit=1
            $region29: #{resblock_forward.3} parent=27 // loop_pre_header
              _
            $region30: #{resblock_forward.3} parent=27 // loop_header
              %s48 = sphi 0, %s52
              %p49 = scmp.ge.s32.totalorder %s48, 1
              %s53 = sphi %s21, %s21
              %s54 = sphi [#allocation3], [#allocation3]
            $region31: #{resblock_forward.3} parent=27 // loop_header_branch
              %51 = sbr.rel (%p49) target = $region35
            $region32: #{resblock_forward.3} parent=27 // loop_body
              %v55 = vld [vmem:[%s53] sm:$0xff]
              %56 = vst [vmem:[%s54] sm:$0xff] %v55
              %v57 = vld [vmem:[%s53 + $0x8] sm:$0xff]
              %58 = vst [vmem:[%s54 + $0x8] sm:$0xff] %v57
              %v59 = vld [vmem:[%s53 + $0x100] sm:$0xff]
              %60 = vst [vmem:[%s54 + $0x10] sm:$0xff] %v59
              %v61 = vld [vmem:[%s53 + $0x108] sm:$0xff]
              %62 = vst [vmem:[%s54 + $0x18] sm:$0xff] %v61
            $region33: #{resblock_forward.3} parent=27 // loop_footer
              %s52 = sadd.s32 1, %s48
            $region34: #{resblock_forward.3} parent=27 // loop_footer_branch
              %47 = sbr.rel target = $region30
            $region35: #{resblock_forward.3} parent=27 // loop_exit
              _
          $region28: #{resblock_forward.3} parent=12 // pred_fallthru
            _
          // Predicated region
          $region36: #{resblock_forward.3} parent=12 // pred_check
            _
          $region37: #{resblock_forward.3} parent=12 // pred_check_branch
            %64 = sbr.rel target = $region39
          $region38: #{resblock_forward.3} parent=12 // pred_region
            _
          $region39: #{resblock_forward.3} parent=12 // pred_fallthru
            _
        $region13: #{resblock_forward.3} parent=8 // pred_fallthru
          _
        // Predicated region
        $region14: #{resblock_forward.3} parent=8 // pred_check
          _
        $region15: #{resblock_forward.3} parent=8 // pred_check_branch
          %27 = sbr.rel target = $region17
        $region16: #{resblock_forward.3} parent=8 // pred_region
          loop: start=0, step=1, limit=1
          $region18: #{resblock_forward.3} parent=16 // loop_pre_header
            _
          $region19: #{resblock_forward.3} parent=16 // loop_header
            %s30 = sphi 0, %s34
            %p31 = scmp.ge.s32.totalorder %s30, 1
            %s35 = sphi %s21, %s21
            %s36 = sphi [#allocation3], [#allocation3]
          $region20: #{resblock_forward.3} parent=16 // loop_header_branch
            %33 = sbr.rel (%p31) target = $region24
          $region21: #{resblock_forward.3} parent=16 // loop_body
            %v37 = vld [vmem:[%s35] sm:$0xff]
            %38 = vst [vmem:[%s36] sm:$0xff] %v37
            %v39 = vld [vmem:[%s35 + $0x8] sm:$0xff]
            %40 = vst [vmem:[%s36 + $0x8] sm:$0xff] %v39
            %v41 = vld [vmem:[%s35 + $0x100] sm:$0xff]
            %42 = vst [vmem:[%s36 + $0x10] sm:$0xff] %v41
            %v43 = vld [vmem:[%s35 + $0x108] sm:$0xff]
            %44 = vst [vmem:[%s36 + $0x18] sm:$0xff] %v43
          $region22: #{resblock_forward.3} parent=16 // loop_footer
            %s34 = sadd.s32 1, %s30
          $region23: #{resblock_forward.3} parent=16 // loop_footer_branch
            %29 = sbr.rel target = $region19
          $region24: #{resblock_forward.3} parent=16 // loop_exit
            _
        $region17: #{resblock_forward.3} parent=8 // pred_fallthru
          _
      $region9: #{resblock_forward.3} parent=4 // pred_fallthru
        _
      %65 = vnop
    $region5: #{resblock_forward.3} parent=1 // pred_fallthru
      _
    // Predicated region
    $region40: #{resblock_forward.3} parent=1 // pred_check
      _
    $region41: #{resblock_forward.3} parent=1 // pred_check_branch
      %67 = sbr.rel (0) target = $region43
    $region42: #{resblock_forward.3} parent=1 // pred_region
      _
    $region43: #{resblock_forward.3} parent=1 // pred_fallthru
      _
    // Predicated region
    $region44: #{resblock_forward.3} parent=1 // pred_check
      _
    $region45: #{resblock_forward.3} parent=1 // pred_check_branch
      %69 = sbr.rel (0) target = $region47
    $region46: #{resblock_forward.3} parent=1 // pred_region
      %p70 = scmp.eq.s32.totalorder 0, 0
      %s71 = smul.u32 0, 16
      %s72 = sadd.s32 %s71, 16
      %s73 = scalar_select %p70, 14, %s72
      %s74 = smul.addr %s73, 2
      %s75 = smul.addr %s74, 8
      %s76 = scalar_lea.vmem %s2, %s75
      // Predicated region
      $region48: #{resblock_forward.3} parent=46 // pred_check
        _
      $region49: #{resblock_forward.3} parent=46 // pred_check_branch
        %78 = sbr.rel (0) target = $region51
      $region50: #{resblock_forward.3} parent=46 // pred_region
        // Predicated region
        $region52: #{resblock_forward.3} parent=50 // pred_check
          _
        $region53: #{resblock_forward.3} parent=50 // pred_check_branch
          %80 = sbr.rel (0) target = $region55
        $region54: #{resblock_forward.3} parent=50 // pred_region
          // Predicated region
          $region67: #{resblock_forward.3} parent=54 // pred_check
            _
          $region68: #{resblock_forward.3} parent=54 // pred_check_branch
            %101 = sbr.rel (0) target = $region70
          $region69: #{resblock_forward.3} parent=54 // pred_region
            loop: start=0, step=1, limit=1
            $region71: #{resblock_forward.3} parent=69 // loop_pre_header
              _
            $region72: #{resblock_forward.3} parent=69 // loop_header
              %s103 = sphi 0, %s107
              %p104 = scmp.ge.s32.totalorder %s103, 1
              %s108 = sphi %s76, %s76
              %s109 = sphi [#allocation4], [#allocation4]
            $region73: #{resblock_forward.3} parent=69 // loop_header_branch
              %106 = sbr.rel (%p104) target = $region77
            $region74: #{resblock_forward.3} parent=69 // loop_body
              %v110 = vld [vmem:[%s108] sm:$0xff]
              %111 = vst [vmem:[%s109] sm:$0xff] %v110
              %v112 = vld [vmem:[%s108 + $0x8] sm:$0xff]
              %113 = vst [vmem:[%s109 + $0x8] sm:$0xff] %v112
              %v114 = vld [vmem:[%s108 + $0x100] sm:$0xff]
              %115 = vst [vmem:[%s109 + $0x10] sm:$0xff] %v114
              %v116 = vld [vmem:[%s108 + $0x108] sm:$0xff]
              %117 = vst [vmem:[%s109 + $0x18] sm:$0xff] %v116
            $region75: #{resblock_forward.3} parent=69 // loop_footer
              %s107 = sadd.s32 1, %s103
            $region76: #{resblock_forward.3} parent=69 // loop_footer_branch
              %102 = sbr.rel target = $region72
            $region77: #{resblock_forward.3} parent=69 // loop_exit
              _
          $region70: #{resblock_forward.3} parent=54 // pred_fallthru
            _
          // Predicated region
          $region78: #{resblock_forward.3} parent=54 // pred_check
            _
          $region79: #{resblock_forward.3} parent=54 // pred_check_branch
            %119 = sbr.rel target = $region81
          $region80: #{resblock_forward.3} parent=54 // pred_region
            _
          $region81: #{resblock_forward.3} parent=54 // pred_fallthru
            _
        $region55: #{resblock_forward.3} parent=50 // pred_fallthru
          _
        // Predicated region
        $region56: #{resblock_forward.3} parent=50 // pred_check
          _
        $region57: #{resblock_forward.3} parent=50 // pred_check_branch
          %82 = sbr.rel target = $region59
        $region58: #{resblock_forward.3} parent=50 // pred_region
          loop: start=0, step=1, limit=1
          $region60: #{resblock_forward.3} parent=58 // loop_pre_header
            _
          $region61: #{resblock_forward.3} parent=58 // loop_header
            %s85 = sphi 0, %s89
            %p86 = scmp.ge.s32.totalorder %s85, 1
            %s90 = sphi %s76, %s76
            %s91 = sphi [#allocation4], [#allocation4]
          $region62: #{resblock_forward.3} parent=58 // loop_header_branch
            %88 = sbr.rel (%p86) target = $region66
          $region63: #{resblock_forward.3} parent=58 // loop_body
            %v92 = vld [vmem:[%s90] sm:$0xff]
            %93 = vst [vmem:[%s91] sm:$0xff] %v92
            %v94 = vld [vmem:[%s90 + $0x8] sm:$0xff]
            %95 = vst [vmem:[%s91 + $0x8] sm:$0xff] %v94
            %v96 = vld [vmem:[%s90 + $0x100] sm:$0xff]
            %97 = vst [vmem:[%s91 + $0x10] sm:$0xff] %v96
            %v98 = vld [vmem:[%s90 + $0x108] sm:$0xff]
            %99 = vst [vmem:[%s91 + $0x18] sm:$0xff] %v98
          $region64: #{resblock_forward.3} parent=58 // loop_footer
            %s89 = sadd.s32 1, %s85
          $region65: #{resblock_forward.3} parent=58 // loop_footer_branch
            %84 = sbr.rel target = $region61
          $region66: #{resblock_forward.3} parent=58 // loop_exit
            _
        $region59: #{resblock_forward.3} parent=50 // pred_fallthru
          _
      $region51: #{resblock_forward.3} parent=46 // pred_fallthru
        _
      %120 = vnop
    $region47: #{resblock_forward.3} parent=1 // pred_fallthru
      _
    // Predicated region
    $region82: #{resblock_forward.3} parent=1 // pred_check
      _
    $region83: #{resblock_forward.3} parent=1 // pred_check_branch
      %122 = sbr.rel (0) target = $region85
    $region84: #{resblock_forward.3} parent=1 // pred_region
      _
    $region85: #{resblock_forward.3} parent=1 // pred_fallthru
      _
    // Predicated region
    $region86: #{resblock_forward.3} parent=1 // pred_check
      _
    $region87: #{resblock_forward.3} parent=1 // pred_check_branch
      %124 = sbr.rel (0) target = $region89
    $region88: #{resblock_forward.3} parent=1 // pred_region
      _
    $region89: #{resblock_forward.3} parent=1 // pred_fallthru
      _
    // Predicated region
    $region90: #{resblock_forward.3} parent=1 // pred_check
      _
    $region91: #{resblock_forward.3} parent=1 // pred_check_branch
      %126 = sbr.rel (0) target = $region93
    $region92: #{resblock_forward.3} parent=1 // pred_region
      _
    $region93: #{resblock_forward.3} parent=1 // pred_fallthru
      _
    // Predicated region
    $region94: #{resblock_forward.3} parent=1 // pred_check
      _
    $region95: #{resblock_forward.3} parent=1 // pred_check_branch
      %128 = sbr.rel (0) target = $region97
    $region96: #{resblock_forward.3} parent=1 // pred_region
      _
    $region97: #{resblock_forward.3} parent=1 // pred_fallthru
      _
    // Predicated region
    $region98: #{resblock_forward.3} parent=1 // pred_check
      _
    $region99: #{resblock_forward.3} parent=1 // pred_check_branch
      %130 = sbr.rel (0) target = $region101
    $region100: #{resblock_forward.3} parent=1 // pred_region
      _
    $region101: #{resblock_forward.3} parent=1 // pred_fallthru
      _
    %p131 = scmp.eq.s32.totalorder 0, 0
    %s132 = smul.u32 0, 16
    %s133 = ssub.s32 %s132, 1
    %s134 = scalar_select %p131, 1, %s133
    %p135 = scmp.eq.s32.totalorder 0, 0
    %s136 = smul.u32 0, 16
    %s137 = sadd.s32 %s136, 16
    %s138 = scalar_select %p135, 14, %s137
    %v139 = vld [vmem:[%s1] sm:$0xff]
    %v140 = vld [vmem:[%s1 + $0x8] sm:$0xff]
    %v141 = vld [vmem:[%s1 + $0x10] sm:$0xff]
    %v142 = vld [vmem:[%s1 + $0x18] sm:$0xff]
    %v143 = vld [vmem:[%s1 + $0x20] sm:$0xff]
    %v144 = vld [vmem:[%s1 + $0x28] sm:$0xff]
    %v145 = vld [vmem:[%s1 + $0x30] sm:$0xff]
    %v146 = vld [vmem:[%s1 + $0x38] sm:$0xff]
    %v147 = vld [vmem:[%s1 + $0x40] sm:$0xff]
    %v148 = vld [vmem:[%s1 + $0x48] sm:$0xff]
    %v149 = vld [vmem:[%s1 + $0x50] sm:$0xff]
    %v150 = vld [vmem:[%s1 + $0x58] sm:$0xff]
    %v151 = vld [vmem:[%s1 + $0x60] sm:$0xff]
    %v152 = vld [vmem:[%s1 + $0x68] sm:$0xff]
    %v153 = vld [vmem:[%s1 + $0x70] sm:$0xff]
    %v154 = vld [vmem:[%s1 + $0x78] sm:$0xff]
    %v155 = vld [vmem:[%s1 + $0x80] sm:$0xff]
    %v156 = vld [vmem:[%s1 + $0x88] sm:$0xff]
    %v157 = vld [vmem:[%s1 + $0x90] sm:$0xff]
    %v158 = vld [vmem:[%s1 + $0x98] sm:$0xff]
    %v159 = vld [vmem:[%s1 + $0xa0] sm:$0xff]
    %v160 = vld [vmem:[%s1 + $0xa8] sm:$0xff]
    %v161 = vld [vmem:[%s1 + $0xb0] sm:$0xff]
    %v162 = vld [vmem:[%s1 + $0xb8] sm:$0xff]
    %v163 = vld [vmem:[%s1 + $0xc0] sm:$0xff]
    %v164 = vld [vmem:[%s1 + $0xc8] sm:$0xff]
    %v165 = vld [vmem:[%s1 + $0xd0] sm:$0xff]
    %v166 = vld [vmem:[%s1 + $0xd8] sm:$0xff]
    %v167 = vld [vmem:[%s1 + $0xe0] sm:$0xff]
    %v168 = vld [vmem:[%s1 + $0xe8] sm:$0xff]
    %v169 = vld [vmem:[%s1 + $0xf0] sm:$0xff]
    %v170 = vld [vmem:[%s1 + $0xf8] sm:$0xff]
    %v171 = vld [vmem:[%s1 + $0x100] sm:$0xff]
    %v172 = vld [vmem:[%s1 + $0x108] sm:$0xff]
    %v173 = vld [vmem:[%s1 + $0x110] sm:$0xff]
    %v174 = vld [vmem:[%s1 + $0x118] sm:$0xff]
    %v175 = vld [vmem:[%s1 + $0x120] sm:$0xff]
    %v176 = vld [vmem:[%s1 + $0x128] sm:$0xff]
    %v177 = vld [vmem:[%s1 + $0x130] sm:$0xff]
    %v178 = vld [vmem:[%s1 + $0x138] sm:$0xff]
    %v179 = vld [vmem:[%s1 + $0x140] sm:$0xff]
    %v180 = vld [vmem:[%s1 + $0x148] sm:$0xff]
    %v181 = vld [vmem:[%s1 + $0x150] sm:$0xff]
    %v182 = vld [vmem:[%s1 + $0x158] sm:$0xff]
    %v183 = vld [vmem:[%s1 + $0x160] sm:$0xff]
    %v184 = vld [vmem:[%s1 + $0x168] sm:$0xff]
    %v185 = vld [vmem:[%s1 + $0x170] sm:$0xff]
    %v186 = vld [vmem:[%s1 + $0x178] sm:$0xff]
    %v187 = vld [vmem:[%s1 + $0x180] sm:$0xff]
    %v188 = vld [vmem:[%s1 + $0x188] sm:$0xff]
    %v189 = vld [vmem:[%s1 + $0x190] sm:$0xff]
    %v190 = vld [vmem:[%s1 + $0x198] sm:$0xff]
    %v191 = vld [vmem:[%s1 + $0x1a0] sm:$0xff]
    %v192 = vld [vmem:[%s1 + $0x1a8] sm:$0xff]
    %v193 = vld [vmem:[%s1 + $0x1b0] sm:$0xff]
    %v194 = vld [vmem:[%s1 + $0x1b8] sm:$0xff]
    %v195 = vld [vmem:[%s1 + $0x1c0] sm:$0xff]
    %v196 = vld [vmem:[%s1 + $0x1c8] sm:$0xff]
    %v197 = vld [vmem:[%s1 + $0x1d0] sm:$0xff]
    %v198 = vld [vmem:[%s1 + $0x1d8] sm:$0xff]
    %v199 = vld [vmem:[%s1 + $0x1e0] sm:$0xff]
    %v200 = vld [vmem:[%s1 + $0x1e8] sm:$0xff]
    %v201 = vld [vmem:[%s1 + $0x1f0] sm:$0xff]
    %v202 = vld [vmem:[%s1 + $0x1f8] sm:$0xff]
    %s203 = scalar_lea.vmem [#allocation2], 48
    %204 = vst [vmem:[%s203 + $0x8] sm:$0xff] %v139
    %205 = vst [vmem:[%s203 + $0x20] sm:$0xff] %v140
    %206 = vst [vmem:[%s203 + $0x38] sm:$0xff] %v141
    %207 = vst [vmem:[%s203 + $0x50] sm:$0xff] %v142
    %208 = vst [vmem:[%s203 + $0x68] sm:$0xff] %v143
    %209 = vst [vmem:[%s203 + $0x80] sm:$0xff] %v144
    %210 = vst [vmem:[%s203 + $0x98] sm:$0xff] %v145
    %211 = vst [vmem:[%s203 + $0xb0] sm:$0xff] %v146
    %212 = vst [vmem:[%s203 + $0xc8] sm:$0xff] %v147
    %213 = vst [vmem:[%s203 + $0xe0] sm:$0xff] %v148
    %214 = vst [vmem:[%s203 + $0xf8] sm:$0xff] %v149
    %215 = vst [vmem:[%s203 + $0x110] sm:$0xff] %v150
    %216 = vst [vmem:[%s203 + $0x128] sm:$0xff] %v151
    %217 = vst [vmem:[%s203 + $0x140] sm:$0xff] %v152
    %218 = vst [vmem:[%s203 + $0x158] sm:$0xff] %v153
    %219 = vst [vmem:[%s203 + $0x170] sm:$0xff] %v154
    %220 = vst [vmem:[%s203 + $0x188] sm:$0xff] %v155
    %221 = vst [vmem:[%s203 + $0x1a0] sm:$0xff] %v156
    %222 = vst [vmem:[%s203 + $0x1b8] sm:$0xff] %v157
    %223 = vst [vmem:[%s203 + $0x1d0] sm:$0xff] %v158
    %224 = vst [vmem:[%s203 + $0x1e8] sm:$0xff] %v159
    %225 = vst [vmem:[%s203 + $0x200] sm:$0xff] %v160
    %226 = vst [vmem:[%s203 + $0x218] sm:$0xff] %v161
    %227 = vst [vmem:[%s203 + $0x230] sm:$0xff] %v162
    %228 = vst [vmem:[%s203 + $0x248] sm:$0xff] %v163
    %229 = vst [vmem:[%s203 + $0x260] sm:$0xff] %v164
    %230 = vst [vmem:[%s203 + $0x278] sm:$0xff] %v165
    %231 = vst [vmem:[%s203 + $0x290] sm:$0xff] %v166
    %232 = vst [vmem:[%s203 + $0x2a8] sm:$0xff] %v167
    %233 = vst [vmem:[%s203 + $0x2c0] sm:$0xff] %v168
    %234 = vst [vmem:[%s203 + $0x2d8] sm:$0xff] %v169
    %235 = vst [vmem:[%s203 + $0x2f0] sm:$0xff] %v170
    %236 = vst [vmem:[%s203 + $0x368] sm:$0xff] %v171
    %237 = vst [vmem:[%s203 + $0x380] sm:$0xff] %v172
    %238 = vst [vmem:[%s203 + $0x398] sm:$0xff] %v173
    %239 = vst [vmem:[%s203 + $0x3b0] sm:$0xff] %v174
    %240 = vst [vmem:[%s203 + $0x3c8] sm:$0xff] %v175
    %241 = vst [vmem:[%s203 + $0x3e0] sm:$0xff] %v176
    %242 = vst [vmem:[%s203 + $0x3f8] sm:$0xff] %v177
    %243 = vst [vmem:[%s203 + $0x410] sm:$0xff] %v178
    %244 = vst [vmem:[%s203 + $0x428] sm:$0xff] %v179
    %245 = vst [vmem:[%s203 + $0x440] sm:$0xff] %v180
    %246 = vst [vmem:[%s203 + $0x458] sm:$0xff] %v181
    %247 = vst [vmem:[%s203 + $0x470] sm:$0xff] %v182
    %248 = vst [vmem:[%s203 + $0x488] sm:$0xff] %v183
    %249 = vst [vmem:[%s203 + $0x4a0] sm:$0xff] %v184
    %250 = vst [vmem:[%s203 + $0x4b8] sm:$0xff] %v185
    %251 = vst [vmem:[%s203 + $0x4d0] sm:$0xff] %v186
    %252 = vst [vmem:[%s203 + $0x4e8] sm:$0xff] %v187
    %253 = vst [vmem:[%s203 + $0x500] sm:$0xff] %v188
    %254 = vst [vmem:[%s203 + $0x518] sm:$0xff] %v189
    %255 = vst [vmem:[%s203 + $0x530] sm:$0xff] %v190
    %256 = vst [vmem:[%s203 + $0x548] sm:$0xff] %v191
    %257 = vst [vmem:[%s203 + $0x560] sm:$0xff] %v192
    %258 = vst [vmem:[%s203 + $0x578] sm:$0xff] %v193
    %259 = vst [vmem:[%s203 + $0x590] sm:$0xff] %v194
    %260 = vst [vmem:[%s203 + $0x5a8] sm:$0xff] %v195
    %261 = vst [vmem:[%s203 + $0x5c0] sm:$0xff] %v196
    %262 = vst [vmem:[%s203 + $0x5d8] sm:$0xff] %v197
    %263 = vst [vmem:[%s203 + $0x5f0] sm:$0xff] %v198
    %264 = vst [vmem:[%s203 + $0x608] sm:$0xff] %v199
    %265 = vst [vmem:[%s203 + $0x620] sm:$0xff] %v200
    %266 = vst [vmem:[%s203 + $0x638] sm:$0xff] %v201
    %267 = vst [vmem:[%s203 + $0x650] sm:$0xff] %v202
    %vm332 = vcmask 1040384
    %v333 = vrot.slane %v139, 7
    %v334 = vrot.slane %v140, 7
    %v335 = vsel %vm332, %v333, %v334
    %v336 = vrot.slane %v141, 7
    %v337 = vrot.slane %v142, 7
    %v338 = vsel %vm332, %v336, %v337
    %v339 = vrot.slane %v143, 7
    %v340 = vrot.slane %v144, 7
    %v341 = vsel %vm332, %v339, %v340
    %v342 = vrot.slane %v145, 7
    %v343 = vrot.slane %v146, 7
    %v344 = vsel %vm332, %v342, %v343
    %v345 = vrot.slane %v147, 7
    %v346 = vrot.slane %v148, 7
    %v347 = vsel %vm332, %v345, %v346
    %v348 = vrot.slane %v149, 7
    %v349 = vrot.slane %v150, 7
    %v350 = vsel %vm332, %v348, %v349
    %v351 = vrot.slane %v151, 7
    %v352 = vrot.slane %v152, 7
    %v353 = vsel %vm332, %v351, %v352
    %v354 = vrot.slane %v153, 7
    %v355 = vrot.slane %v154, 7
    %v356 = vsel %vm332, %v354, %v355
    %v357 = vrot.slane %v155, 7
    %v358 = vrot.slane %v156, 7
    %v359 = vsel %vm332, %v357, %v358
    %v360 = vrot.slane %v157, 7
    %v361 = vrot.slane %v158, 7
    %v362 = vsel %vm332, %v360, %v361
    %v363 = vrot.slane %v159, 7
    %v364 = vrot.slane %v160, 7
    %v365 = vsel %vm332, %v363, %v364
    %v366 = vrot.slane %v161, 7
    %v367 = vrot.slane %v162, 7
    %v368 = vsel %vm332, %v366, %v367
    %v369 = vrot.slane %v163, 7
    %v370 = vrot.slane %v164, 7
    %v371 = vsel %vm332, %v369, %v370
    %v372 = vrot.slane %v165, 7
    %v373 = vrot.slane %v166, 7
    %v374 = vsel %vm332, %v372, %v373
    %v375 = vrot.slane %v167, 7
    %v376 = vrot.slane %v168, 7
    %v377 = vsel %vm332, %v375, %v376
    %v378 = vrot.slane %v169, 7
    %v379 = vrot.slane %v170, 7
    %v380 = vsel %vm332, %v378, %v379
    %v381 = vrot.slane %v171, 7
    %v382 = vrot.slane %v172, 7
    %v383 = vsel %vm332, %v381, %v382
    %v384 = vrot.slane %v173, 7
    %v385 = vrot.slane %v174, 7
    %v386 = vsel %vm332, %v384, %v385
    %v387 = vrot.slane %v175, 7
    %v388 = vrot.slane %v176, 7
    %v389 = vsel %vm332, %v387, %v388
    %v390 = vrot.slane %v177, 7
    %v391 = vrot.slane %v178, 7
    %v392 = vsel %vm332, %v390, %v391
    %v393 = vrot.slane %v179, 7
    %v394 = vrot.slane %v180, 7
    %v395 = vsel %vm332, %v393, %v394
    %v396 = vrot.slane %v181, 7
    %v397 = vrot.slane %v182, 7
    %v398 = vsel %vm332, %v396, %v397
    %v399 = vrot.slane %v183, 7
    %v400 = vrot.slane %v184, 7
    %v401 = vsel %vm332, %v399, %v400
    %v402 = vrot.slane %v185, 7
    %v403 = vrot.slane %v186, 7
    %v404 = vsel %vm332, %v402, %v403
    %v405 = vrot.slane %v187, 7
    %v406 = vrot.slane %v188, 7
    %v407 = vsel %vm332, %v405, %v406
    %v408 = vrot.slane %v189, 7
    %v409 = vrot.slane %v190, 7
    %v410 = vsel %vm332, %v408, %v409
    %v411 = vrot.slane %v191, 7
    %v412 = vrot.slane %v192, 7
    %v413 = vsel %vm332, %v411, %v412
    %v414 = vrot.slane %v193, 7
    %v415 = vrot.slane %v194, 7
    %v416 = vsel %vm332, %v414, %v415
    %v417 = vrot.slane %v195, 7
    %v418 = vrot.slane %v196, 7
    %v419 = vsel %vm332, %v417, %v418
    %v420 = vrot.slane %v197, 7
    %v421 = vrot.slane %v198, 7
    %v422 = vsel %vm332, %v420, %v421
    %v423 = vrot.slane %v199, 7
    %v424 = vrot.slane %v200, 7
    %v425 = vsel %vm332, %v423, %v424
    %v426 = vrot.slane %v201, 7
    %v427 = vrot.slane %v202, 7
    %v428 = vsel %vm332, %v426, %v427
    %493 = vst [vmem:[%s203] sm:$0xfe] %v333
    %494 = vst [vmem:[%s203 + $0x18] sm:$0xff] %v335
    %495 = vst [vmem:[%s203 + $0x30] sm:$0xfe] %v336
    %496 = vst [vmem:[%s203 + $0x48] sm:$0xff] %v338
    %497 = vst [vmem:[%s203 + $0x60] sm:$0xfe] %v339
    %498 = vst [vmem:[%s203 + $0x78] sm:$0xff] %v341
    %499 = vst [vmem:[%s203 + $0x90] sm:$0xfe] %v342
    %500 = vst [vmem:[%s203 + $0xa8] sm:$0xff] %v344
    %501 = vst [vmem:[%s203 + $0xc0] sm:$0xfe] %v345
    %502 = vst [vmem:[%s203 + $0xd8] sm:$0xff] %v347
    %503 = vst [vmem:[%s203 + $0xf0] sm:$0xfe] %v348
    %504 = vst [vmem:[%s203 + $0x108] sm:$0xff] %v350
    %505 = vst [vmem:[%s203 + $0x120] sm:$0xfe] %v351
    %506 = vst [vmem:[%s203 + $0x138] sm:$0xff] %v353
    %507 = vst [vmem:[%s203 + $0x150] sm:$0xfe] %v354
    %508 = vst [vmem:[%s203 + $0x168] sm:$0xff] %v356
    %509 = vst [vmem:[%s203 + $0x180] sm:$0xfe] %v357
    %510 = vst [vmem:[%s203 + $0x198] sm:$0xff] %v359
    %511 = vst [vmem:[%s203 + $0x1b0] sm:$0xfe] %v360
    %512 = vst [vmem:[%s203 + $0x1c8] sm:$0xff] %v362
    %513 = vst [vmem:[%s203 + $0x1e0] sm:$0xfe] %v363
    %514 = vst [vmem:[%s203 + $0x1f8] sm:$0xff] %v365
    %515 = vst [vmem:[%s203 + $0x210] sm:$0xfe] %v366
    %516 = vst [vmem:[%s203 + $0x228] sm:$0xff] %v368
    %517 = vst [vmem:[%s203 + $0x240] sm:$0xfe] %v369
    %518 = vst [vmem:[%s203 + $0x258] sm:$0xff] %v371
    %519 = vst [vmem:[%s203 + $0x270] sm:$0xfe] %v372
    %520 = vst [vmem:[%s203 + $0x288] sm:$0xff] %v374
    %521 = vst [vmem:[%s203 + $0x2a0] sm:$0xfe] %v375
    %522 = vst [vmem:[%s203 + $0x2b8] sm:$0xff] %v377
    %523 = vst [vmem:[%s203 + $0x2d0] sm:$0xfe] %v378
    %524 = vst [vmem:[%s203 + $0x2e8] sm:$0xff] %v380
    %525 = vst [vmem:[%s203 + $0x360] sm:$0xfe] %v381
    %526 = vst [vmem:[%s203 + $0x378] sm:$0xff] %v383
    %527 = vst [vmem:[%s203 + $0x390] sm:$0xfe] %v384
    %528 = vst [vmem:[%s203 + $0x3a8] sm:$0xff] %v386
    %529 = vst [vmem:[%s203 + $0x3c0] sm:$0xfe] %v387
    %530 = vst [vmem:[%s203 + $0x3d8] sm:$0xff] %v389
    %531 = vst [vmem:[%s203 + $0x3f0] sm:$0xfe] %v390
    %532 = vst [vmem:[%s203 + $0x408] sm:$0xff] %v392
    %533 = vst [vmem:[%s203 + $0x420] sm:$0xfe] %v393
    %534 = vst [vmem:[%s203 + $0x438] sm:$0xff] %v395
    %535 = vst [vmem:[%s203 + $0x450] sm:$0xfe] %v396
    %536 = vst [vmem:[%s203 + $0x468] sm:$0xff] %v398
    %537 = vst [vmem:[%s203 + $0x480] sm:$0xfe] %v399
    %538 = vst [vmem:[%s203 + $0x498] sm:$0xff] %v401
    %539 = vst [vmem:[%s203 + $0x4b0] sm:$0xfe] %v402
    %540 = vst [vmem:[%s203 + $0x4c8] sm:$0xff] %v404
    %541 = vst [vmem:[%s203 + $0x4e0] sm:$0xfe] %v405
    %542 = vst [vmem:[%s203 + $0x4f8] sm:$0xff] %v407
    %543 = vst [vmem:[%s203 + $0x510] sm:$0xfe] %v408
    %544 = vst [vmem:[%s203 + $0x528] sm:$0xff] %v410
    %545 = vst [vmem:[%s203 + $0x540] sm:$0xfe] %v411
    %546 = vst [vmem:[%s203 + $0x558] sm:$0xff] %v413
    %547 = vst [vmem:[%s203 + $0x570] sm:$0xfe] %v414
    %548 = vst [vmem:[%s203 + $0x588] sm:$0xff] %v416
    %549 = vst [vmem:[%s203 + $0x5a0] sm:$0xfe] %v417
    %550 = vst [vmem:[%s203 + $0x5b8] sm:$0xff] %v419
    %551 = vst [vmem:[%s203 + $0x5d0] sm:$0xfe] %v420
    %552 = vst [vmem:[%s203 + $0x5e8] sm:$0xff] %v422
    %553 = vst [vmem:[%s203 + $0x600] sm:$0xfe] %v423
    %554 = vst [vmem:[%s203 + $0x618] sm:$0xff] %v425
    %555 = vst [vmem:[%s203 + $0x630] sm:$0xfe] %v426
    %556 = vst [vmem:[%s203 + $0x648] sm:$0xff] %v428
    %v557 = vrot.slane %v139, 1
    %v558 = vrot.slane %v141, 1
    %v559 = vrot.slane %v143, 1
    %v560 = vrot.slane %v145, 1
    %v561 = vrot.slane %v147, 1
    %v562 = vrot.slane %v149, 1
    %v563 = vrot.slane %v151, 1
    %v564 = vrot.slane %v153, 1
    %v565 = vrot.slane %v155, 1
    %v566 = vrot.slane %v157, 1
    %v567 = vrot.slane %v159, 1
    %v568 = vrot.slane %v161, 1
    %v569 = vrot.slane %v163, 1
    %v570 = vrot.slane %v165, 1
    %v571 = vrot.slane %v167, 1
    %v572 = vrot.slane %v169, 1
    %v573 = vrot.slane %v171, 1
    %v574 = vrot.slane %v173, 1
    %v575 = vrot.slane %v175, 1
    %v576 = vrot.slane %v177, 1
    %v577 = vrot.slane %v179, 1
    %v578 = vrot.slane %v181, 1
    %v579 = vrot.slane %v183, 1
    %v580 = vrot.slane %v185, 1
    %v581 = vrot.slane %v187, 1
    %v582 = vrot.slane %v189, 1
    %v583 = vrot.slane %v191, 1
    %v584 = vrot.slane %v193, 1
    %v585 = vrot.slane %v195, 1
    %v586 = vrot.slane %v197, 1
    %v587 = vrot.slane %v199, 1
    %v588 = vrot.slane %v201, 1
    %621 = vst [vmem:[%s203] sm:$0x1] %v557
    %622 = vst [vmem:[%s203 + $0x30] sm:$0x1] %v558
    %623 = vst [vmem:[%s203 + $0x60] sm:$0x1] %v559
    %624 = vst [vmem:[%s203 + $0x90] sm:$0x1] %v560
    %625 = vst [vmem:[%s203 + $0xc0] sm:$0x1] %v561
    %626 = vst [vmem:[%s203 + $0xf0] sm:$0x1] %v562
    %627 = vst [vmem:[%s203 + $0x120] sm:$0x1] %v563
    %628 = vst [vmem:[%s203 + $0x150] sm:$0x1] %v564
    %629 = vst [vmem:[%s203 + $0x180] sm:$0x1] %v565
    %630 = vst [vmem:[%s203 + $0x1b0] sm:$0x1] %v566
    %631 = vst [vmem:[%s203 + $0x1e0] sm:$0x1] %v567
    %632 = vst [vmem:[%s203 + $0x210] sm:$0x1] %v568
    %633 = vst [vmem:[%s203 + $0x240] sm:$0x1] %v569
    %634 = vst [vmem:[%s203 + $0x270] sm:$0x1] %v570
    %635 = vst [vmem:[%s203 + $0x2a0] sm:$0x1] %v571
    %636 = vst [vmem:[%s203 + $0x2d0] sm:$0x1] %v572
    %637 = vst [vmem:[%s203 + $0x360] sm:$0x1] %v573
    %638 = vst [vmem:[%s203 + $0x390] sm:$0x1] %v574
    %639 = vst [vmem:[%s203 + $0x3c0] sm:$0x1] %v575
    %640 = vst [vmem:[%s203 + $0x3f0] sm:$0x1] %v576
    %641 = vst [vmem:[%s203 + $0x420] sm:$0x1] %v577
    %642 = vst [vmem:[%s203 + $0x450] sm:$0x1] %v578
    %643 = vst [vmem:[%s203 + $0x480] sm:$0x1] %v579
    %644 = vst [vmem:[%s203 + $0x4b0] sm:$0x1] %v580
    %645 = vst [vmem:[%s203 + $0x4e0] sm:$0x1] %v581
    %646 = vst [vmem:[%s203 + $0x510] sm:$0x1] %v582
    %647 = vst [vmem:[%s203 + $0x540] sm:$0x1] %v583
    %648 = vst [vmem:[%s203 + $0x570] sm:$0x1] %v584
    %649 = vst [vmem:[%s203 + $0x5a0] sm:$0x1] %v585
    %650 = vst [vmem:[%s203 + $0x5d0] sm:$0x1] %v586
    %651 = vst [vmem:[%s203 + $0x600] sm:$0x1] %v587
    %652 = vst [vmem:[%s203 + $0x630] sm:$0x1] %v588
    %vm653 = vcmask 1046528
    %v654 = vrot.slane %v140, 1
    %v655 = vsel %vm653, %v557, %v654
    %v656 = vrot.slane %v142, 1
    %v657 = vsel %vm653, %v558, %v656
    %v658 = vrot.slane %v144, 1
    %v659 = vsel %vm653, %v559, %v658
    %v660 = vrot.slane %v146, 1
    %v661 = vsel %vm653, %v560, %v660
    %v662 = vrot.slane %v148, 1
    %v663 = vsel %vm653, %v561, %v662
    %v664 = vrot.slane %v150, 1
    %v665 = vsel %vm653, %v562, %v664
    %v666 = vrot.slane %v152, 1
    %v667 = vsel %vm653, %v563, %v666
    %v668 = vrot.slane %v154, 1
    %v669 = vsel %vm653, %v564, %v668
    %v670 = vrot.slane %v156, 1
    %v671 = vsel %vm653, %v565, %v670
    %v672 = vrot.slane %v158, 1
    %v673 = vsel %vm653, %v566, %v672
    %v674 = vrot.slane %v160, 1
    %v675 = vsel %vm653, %v567, %v674
    %v676 = vrot.slane %v162, 1
    %v677 = vsel %vm653, %v568, %v676
    %v678 = vrot.slane %v164, 1
    %v679 = vsel %vm653, %v569, %v678
    %v680 = vrot.slane %v166, 1
    %v681 = vsel %vm653, %v570, %v680
    %v682 = vrot.slane %v168, 1
    %v683 = vsel %vm653, %v571, %v682
    %v684 = vrot.slane %v170, 1
    %v685 = vsel %vm653, %v572, %v684
    %v686 = vrot.slane %v172, 1
    %v687 = vsel %vm653, %v573, %v686
    %v688 = vrot.slane %v174, 1
    %v689 = vsel %vm653, %v574, %v688
    %v690 = vrot.slane %v176, 1
    %v691 = vsel %vm653, %v575, %v690
    %v692 = vrot.slane %v178, 1
    %v693 = vsel %vm653, %v576, %v692
    %v694 = vrot.slane %v180, 1
    %v695 = vsel %vm653, %v577, %v694
    %v696 = vrot.slane %v182, 1
    %v697 = vsel %vm653, %v578, %v696
    %v698 = vrot.slane %v184, 1
    %v699 = vsel %vm653, %v579, %v698
    %v700 = vrot.slane %v186, 1
    %v701 = vsel %vm653, %v580, %v700
    %v702 = vrot.slane %v188, 1
    %v703 = vsel %vm653, %v581, %v702
    %v704 = vrot.slane %v190, 1
    %v705 = vsel %vm653, %v582, %v704
    %v706 = vrot.slane %v192, 1
    %v707 = vsel %vm653, %v583, %v706
    %v708 = vrot.slane %v194, 1
    %v709 = vsel %vm653, %v584, %v708
    %v710 = vrot.slane %v196, 1
    %v711 = vsel %vm653, %v585, %v710
    %v712 = vrot.slane %v198, 1
    %v713 = vsel %vm653, %v586, %v712
    %v714 = vrot.slane %v200, 1
    %v715 = vsel %vm653, %v587, %v714
    %v716 = vrot.slane %v202, 1
    %v717 = vsel %vm653, %v588, %v716
    %782 = vst [vmem:[%s203 + $0x10] sm:$0xff] %v655
    %783 = vst [vmem:[%s203 + $0x28] sm:$0x7f] %v654
    %784 = vst [vmem:[%s203 + $0x40] sm:$0xff] %v657
    %785 = vst [vmem:[%s203 + $0x58] sm:$0x7f] %v656
    %786 = vst [vmem:[%s203 + $0x70] sm:$0xff] %v659
    %787 = vst [vmem:[%s203 + $0x88] sm:$0x7f] %v658
    %788 = vst [vmem:[%s203 + $0xa0] sm:$0xff] %v661
    %789 = vst [vmem:[%s203 + $0xb8] sm:$0x7f] %v660
    %790 = vst [vmem:[%s203 + $0xd0] sm:$0xff] %v663
    %791 = vst [vmem:[%s203 + $0xe8] sm:$0x7f] %v662
    %792 = vst [vmem:[%s203 + $0x100] sm:$0xff] %v665
    %793 = vst [vmem:[%s203 + $0x118] sm:$0x7f] %v664
    %794 = vst [vmem:[%s203 + $0x130] sm:$0xff] %v667
    %795 = vst [vmem:[%s203 + $0x148] sm:$0x7f] %v666
    %796 = vst [vmem:[%s203 + $0x160] sm:$0xff] %v669
    %797 = vst [vmem:[%s203 + $0x178] sm:$0x7f] %v668
    %798 = vst [vmem:[%s203 + $0x190] sm:$0xff] %v671
    %799 = vst [vmem:[%s203 + $0x1a8] sm:$0x7f] %v670
    %800 = vst [vmem:[%s203 + $0x1c0] sm:$0xff] %v673
    %801 = vst [vmem:[%s203 + $0x1d8] sm:$0x7f] %v672
    %802 = vst [vmem:[%s203 + $0x1f0] sm:$0xff] %v675
    %803 = vst [vmem:[%s203 + $0x208] sm:$0x7f] %v674
    %804 = vst [vmem:[%s203 + $0x220] sm:$0xff] %v677
    %805 = vst [vmem:[%s203 + $0x238] sm:$0x7f] %v676
    %806 = vst [vmem:[%s203 + $0x250] sm:$0xff] %v679
    %807 = vst [vmem:[%s203 + $0x268] sm:$0x7f] %v678
    %808 = vst [vmem:[%s203 + $0x280] sm:$0xff] %v681
    %809 = vst [vmem:[%s203 + $0x298] sm:$0x7f] %v680
    %810 = vst [vmem:[%s203 + $0x2b0] sm:$0xff] %v683
    %811 = vst [vmem:[%s203 + $0x2c8] sm:$0x7f] %v682
    %812 = vst [vmem:[%s203 + $0x2e0] sm:$0xff] %v685
    %813 = vst [vmem:[%s203 + $0x2f8] sm:$0x7f] %v684
    %814 = vst [vmem:[%s203 + $0x370] sm:$0xff] %v687
    %815 = vst [vmem:[%s203 + $0x388] sm:$0x7f] %v686
    %816 = vst [vmem:[%s203 + $0x3a0] sm:$0xff] %v689
    %817 = vst [vmem:[%s203 + $0x3b8] sm:$0x7f] %v688
    %818 = vst [vmem:[%s203 + $0x3d0] sm:$0xff] %v691
    %819 = vst [vmem:[%s203 + $0x3e8] sm:$0x7f] %v690
    %820 = vst [vmem:[%s203 + $0x400] sm:$0xff] %v693
    %821 = vst [vmem:[%s203 + $0x418] sm:$0x7f] %v692
    %822 = vst [vmem:[%s203 + $0x430] sm:$0xff] %v695
    %823 = vst [vmem:[%s203 + $0x448] sm:$0x7f] %v694
    %824 = vst [vmem:[%s203 + $0x460] sm:$0xff] %v697
    %825 = vst [vmem:[%s203 + $0x478] sm:$0x7f] %v696
    %826 = vst [vmem:[%s203 + $0x490] sm:$0xff] %v699
    %827 = vst [vmem:[%s203 + $0x4a8] sm:$0x7f] %v698
    %828 = vst [vmem:[%s203 + $0x4c0] sm:$0xff] %v701
    %829 = vst [vmem:[%s203 + $0x4d8] sm:$0x7f] %v700
    %830 = vst [vmem:[%s203 + $0x4f0] sm:$0xff] %v703
    %831 = vst [vmem:[%s203 + $0x508] sm:$0x7f] %v702
    %832 = vst [vmem:[%s203 + $0x520] sm:$0xff] %v705
    %833 = vst [vmem:[%s203 + $0x538] sm:$0x7f] %v704
    %834 = vst [vmem:[%s203 + $0x550] sm:$0xff] %v707
    %835 = vst [vmem:[%s203 + $0x568] sm:$0x7f] %v706
    %836 = vst [vmem:[%s203 + $0x580] sm:$0xff] %v709
    %837 = vst [vmem:[%s203 + $0x598] sm:$0x7f] %v708
    %838 = vst [vmem:[%s203 + $0x5b0] sm:$0xff] %v711
    %839 = vst [vmem:[%s203 + $0x5c8] sm:$0x7f] %v710
    %840 = vst [vmem:[%s203 + $0x5e0] sm:$0xff] %v713
    %841 = vst [vmem:[%s203 + $0x5f8] sm:$0x7f] %v712
    %842 = vst [vmem:[%s203 + $0x610] sm:$0xff] %v715
    %843 = vst [vmem:[%s203 + $0x628] sm:$0x7f] %v714
    %844 = vst [vmem:[%s203 + $0x640] sm:$0xff] %v717
    %845 = vst [vmem:[%s203 + $0x658] sm:$0x7f] %v716
    %v846 = vrot.slane %v140, 6
    %v847 = vrot.slane %v142, 6
    %v848 = vrot.slane %v144, 6
    %v849 = vrot.slane %v146, 6
    %v850 = vrot.slane %v148, 6
    %v851 = vrot.slane %v150, 6
    %v852 = vrot.slane %v152, 6
    %v853 = vrot.slane %v154, 6
    %v854 = vrot.slane %v156, 6
    %v855 = vrot.slane %v158, 6
    %v856 = vrot.slane %v160, 6
    %v857 = vrot.slane %v162, 6
    %v858 = vrot.slane %v164, 6
    %v859 = vrot.slane %v166, 6
    %v860 = vrot.slane %v168, 6
    %v861 = vrot.slane %v170, 6
    %v862 = vrot.slane %v172, 6
    %v863 = vrot.slane %v174, 6
    %v864 = vrot.slane %v176, 6
    %v865 = vrot.slane %v178, 6
    %v866 = vrot.slane %v180, 6
    %v867 = vrot.slane %v182, 6
    %v868 = vrot.slane %v184, 6
    %v869 = vrot.slane %v186, 6
    %v870 = vrot.slane %v188, 6
    %v871 = vrot.slane %v190, 6
    %v872 = vrot.slane %v192, 6
    %v873 = vrot.slane %v194, 6
    %v874 = vrot.slane %v196, 6
    %v875 = vrot.slane %v198, 6
    %v876 = vrot.slane %v200, 6
    %v877 = vrot.slane %v202, 6
    %910 = vst [vmem:[%s203 + $0x2f] sm:$0x1] %v846
    %911 = vst [vmem:[%s203 + $0x5f] sm:$0x1] %v847
    %912 = vst [vmem:[%s203 + $0x8f] sm:$0x1] %v848
    %913 = vst [vmem:[%s203 + $0xbf] sm:$0x1] %v849
    %914 = vst [vmem:[%s203 + $0xef] sm:$0x1] %v850
    %915 = vst [vmem:[%s203 + $0x11f] sm:$0x1] %v851
    %916 = vst [vmem:[%s203 + $0x14f] sm:$0x1] %v852
    %917 = vst [vmem:[%s203 + $0x17f] sm:$0x1] %v853
    %918 = vst [vmem:[%s203 + $0x1af] sm:$0x1] %v854
    %919 = vst [vmem:[%s203 + $0x1df] sm:$0x1] %v855
    %920 = vst [vmem:[%s203 + $0x20f] sm:$0x1] %v856
    %921 = vst [vmem:[%s203 + $0x23f] sm:$0x1] %v857
    %922 = vst [vmem:[%s203 + $0x26f] sm:$0x1] %v858
    %923 = vst [vmem:[%s203 + $0x29f] sm:$0x1] %v859
    %924 = vst [vmem:[%s203 + $0x2cf] sm:$0x1] %v860
    %925 = vst [vmem:[%s203 + $0x2ff] sm:$0x1] %v861
    %926 = vst [vmem:[%s203 + $0x38f] sm:$0x1] %v862
    %927 = vst [vmem:[%s203 + $0x3bf] sm:$0x1] %v863
    %928 = vst [vmem:[%s203 + $0x3ef] sm:$0x1] %v864
    %929 = vst [vmem:[%s203 + $0x41f] sm:$0x1] %v865
    %930 = vst [vmem:[%s203 + $0x44f] sm:$0x1] %v866
    %931 = vst [vmem:[%s203 + $0x47f] sm:$0x1] %v867
    %932 = vst [vmem:[%s203 + $0x4af] sm:$0x1] %v868
    %933 = vst [vmem:[%s203 + $0x4df] sm:$0x1] %v869
    %934 = vst [vmem:[%s203 + $0x50f] sm:$0x1] %v870
    %935 = vst [vmem:[%s203 + $0x53f] sm:$0x1] %v871
    %936 = vst [vmem:[%s203 + $0x56f] sm:$0x1] %v872
    %937 = vst [vmem:[%s203 + $0x59f] sm:$0x1] %v873
    %938 = vst [vmem:[%s203 + $0x5cf] sm:$0x1] %v874
    %939 = vst [vmem:[%s203 + $0x5ff] sm:$0x1] %v875
    %940 = vst [vmem:[%s203 + $0x62f] sm:$0x1] %v876
    %941 = vst [vmem:[%s203 + $0x65f] sm:$0x1] %v877
    %v942 = vld [vmem:[#allocation3] sm:$0xff]
    %v943 = vld [vmem:[#allocation3 + $0x8] sm:$0xff]
    %v944 = vld [vmem:[#allocation3 + $0x10] sm:$0xff]
    %v945 = vld [vmem:[#allocation3 + $0x18] sm:$0xff]
    %946 = vst [vmem:[#allocation2 + $0x8] sm:$0xff] %v942
    %947 = vst [vmem:[#allocation2 + $0x20] sm:$0xff] %v943
    %948 = vst [vmem:[#allocation2 + $0x368] sm:$0xff] %v944
    %949 = vst [vmem:[#allocation2 + $0x380] sm:$0xff] %v945
    %v954 = vrot.slane %v942, 7
    %v955 = vrot.slane %v943, 7
    %v956 = vsel %vm332, %v954, %v955
    %v957 = vrot.slane %v944, 7
    %v958 = vrot.slane %v945, 7
    %v959 = vsel %vm332, %v957, %v958
    %964 = vst [vmem:[#allocation2] sm:$0xfe] %v954
    %965 = vst [vmem:[#allocation2 + $0x18] sm:$0xff] %v956
    %966 = vst [vmem:[#allocation2 + $0x360] sm:$0xfe] %v957
    %967 = vst [vmem:[#allocation2 + $0x378] sm:$0xff] %v959
    %v968 = vrot.slane %v942, 1
    %v969 = vrot.slane %v944, 1
    %972 = vst [vmem:[#allocation2] sm:$0x1] %v968
    %973 = vst [vmem:[#allocation2 + $0x360] sm:$0x1] %v969
    %v974 = vrot.slane %v943, 1
    %v975 = vsel %vm653, %v968, %v974
    %v976 = vrot.slane %v945, 1
    %v977 = vsel %vm653, %v969, %v976
    %982 = vst [vmem:[#allocation2 + $0x10] sm:$0xff] %v975
    %983 = vst [vmem:[#allocation2 + $0x28] sm:$0x7f] %v974
    %984 = vst [vmem:[#allocation2 + $0x370] sm:$0xff] %v977
    %985 = vst [vmem:[#allocation2 + $0x388] sm:$0x7f] %v976
    %v986 = vrot.slane %v943, 6
    %v987 = vrot.slane %v945, 6
    %990 = vst [vmem:[#allocation2 + $0x2f] sm:$0x1] %v986
    %991 = vst [vmem:[#allocation2 + $0x38f] sm:$0x1] %v987
    %v992 = vld [vmem:[#allocation4] sm:$0xff]
    %v993 = vld [vmem:[#allocation4 + $0x8] sm:$0xff]
    %v994 = vld [vmem:[#allocation4 + $0x10] sm:$0xff]
    %v995 = vld [vmem:[#allocation4 + $0x18] sm:$0xff]
    %s996 = scalar_lea.vmem [#allocation2], 816
    %997 = vst [vmem:[%s996 + $0x8] sm:$0xff] %v992
    %998 = vst [vmem:[%s996 + $0x20] sm:$0xff] %v993
    %999 = vst [vmem:[%s996 + $0x368] sm:$0xff] %v994
    %1000 = vst [vmem:[%s996 + $0x380] sm:$0xff] %v995
    %v1005 = vrot.slane %v992, 7
    %v1006 = vrot.slane %v993, 7
    %v1007 = vsel %vm332, %v1005, %v1006
    %v1008 = vrot.slane %v994, 7
    %v1009 = vrot.slane %v995, 7
    %v1010 = vsel %vm332, %v1008, %v1009
    %1015 = vst [vmem:[%s996] sm:$0xfe] %v1005
    %1016 = vst [vmem:[%s996 + $0x18] sm:$0xff] %v1007
    %1017 = vst [vmem:[%s996 + $0x360] sm:$0xfe] %v1008
    %1018 = vst [vmem:[%s996 + $0x378] sm:$0xff] %v1010
    %v1019 = vrot.slane %v992, 1
    %v1020 = vrot.slane %v994, 1
    %1023 = vst [vmem:[%s996] sm:$0x1] %v1019
    %1024 = vst [vmem:[%s996 + $0x360] sm:$0x1] %v1020
    %v1025 = vrot.slane %v993, 1
    %v1026 = vsel %vm653, %v1019, %v1025
    %v1027 = vrot.slane %v995, 1
    %v1028 = vsel %vm653, %v1020, %v1027
    %1033 = vst [vmem:[%s996 + $0x10] sm:$0xff] %v1026
    %1034 = vst [vmem:[%s996 + $0x28] sm:$0x7f] %v1025
    %1035 = vst [vmem:[%s996 + $0x370] sm:$0xff] %v1028
    %1036 = vst [vmem:[%s996 + $0x388] sm:$0x7f] %v1027
    %v1037 = vrot.slane %v993, 6
    %v1038 = vrot.slane %v995, 6
    %1041 = vst [vmem:[%s996 + $0x2f] sm:$0x1] %v1037
    %1042 = vst [vmem:[%s996 + $0x38f] sm:$0x1] %v1038
    %v1043 = vld [vmem:[#allocation2] sm:$0xff]
    %v1044 = vld [vmem:[#allocation2 + $0x8] sm:$0xff]
    %v1045 = vld [vmem:[#allocation2 + $0x10] sm:$0xff]
    %v1046 = vld [vmem:[#allocation2 + $0x18] sm:$0xff]
    %v1047 = vld [vmem:[#allocation2 + $0x20] sm:$0xff]
    %v1048 = vld [vmem:[#allocation2 + $0x28] sm:$0xff]
    %v1049 = vld [vmem:[#allocation2 + $0x30] sm:$0xff]
    %v1050 = vld [vmem:[#allocation2 + $0x38] sm:$0xff]
    %v1051 = vld [vmem:[#allocation2 + $0x40] sm:$0xff]
    %v1052 = vld [vmem:[#allocation2 + $0x48] sm:$0xff]
    %v1053 = vld [vmem:[#allocation2 + $0x50] sm:$0xff]
    %v1054 = vld [vmem:[#allocation2 + $0x58] sm:$0xff]
    %v1055 = vld [vmem:[#allocation2 + $0x60] sm:$0xff]
    %v1056 = vld [vmem:[#allocation2 + $0x68] sm:$0xff]
    %v1057 = vld [vmem:[#allocation2 + $0x70] sm:$0xff]
    %v1058 = vld [vmem:[#allocation2 + $0x78] sm:$0xff]
    %v1059 = vld [vmem:[#allocation2 + $0x80] sm:$0xff]
    %v1060 = vld [vmem:[#allocation2 + $0x88] sm:$0xff]
    %v1061 = vld [vmem:[#allocation2 + $0x90] sm:$0xff]
    %v1062 = vld [vmem:[#allocation2 + $0x98] sm:$0xff]
    %v1063 = vld [vmem:[#allocation2 + $0xa0] sm:$0xff]
    %v1064 = vld [vmem:[#allocation2 + $0xa8] sm:$0xff]
    %v1065 = vld [vmem:[#allocation2 + $0xb0] sm:$0xff]
    %v1066 = vld [vmem:[#allocation2 + $0xb8] sm:$0xff]
    %v1067 = vld [vmem:[#allocation2 + $0xc0] sm:$0xff]
    %v1068 = vld [vmem:[#allocation2 + $0xc8] sm:$0xff]
    %v1069 = vld [vmem:[#allocation2 + $0xd0] sm:$0xff]
    %v1070 = vld [vmem:[#allocation2 + $0xd8] sm:$0xff]
    %v1071 = vld [vmem:[#allocation2 + $0xe0] sm:$0xff]
    %v1072 = vld [vmem:[#allocation2 + $0xe8] sm:$0xff]
    %v1073 = vld [vmem:[#allocation2 + $0xf0] sm:$0xff]
    %v1074 = vld [vmem:[#allocation2 + $0xf8] sm:$0xff]
    %v1075 = vld [vmem:[#allocation2 + $0x100] sm:$0xff]
    %v1076 = vld [vmem:[#allocation2 + $0x108] sm:$0xff]
    %v1077 = vld [vmem:[#allocation2 + $0x110] sm:$0xff]
    %v1078 = vld [vmem:[#allocation2 + $0x118] sm:$0xff]
    %v1079 = vld [vmem:[#allocation2 + $0x120] sm:$0xff]
    %v1080 = vld [vmem:[#allocation2 + $0x128] sm:$0xff]
    %v1081 = vld [vmem:[#allocation2 + $0x130] sm:$0xff]
    %v1082 = vld [vmem:[#allocation2 + $0x138] sm:$0xff]
    %v1083 = vld [vmem:[#allocation2 + $0x140] sm:$0xff]
    %v1084 = vld [vmem:[#allocation2 + $0x148] sm:$0xff]
    %v1085 = vld [vmem:[#allocation2 + $0x150] sm:$0xff]
    %v1086 = vld [vmem:[#allocation2 + $0x158] sm:$0xff]
    %v1087 = vld [vmem:[#allocation2 + $0x160] sm:$0xff]
    %v1088 = vld [vmem:[#allocation2 + $0x168] sm:$0xff]
    %v1089 = vld [vmem:[#allocation2 + $0x170] sm:$0xff]
    %v1090 = vld [vmem:[#allocation2 + $0x178] sm:$0xff]
    %v1091 = vld [vmem:[#allocation2 + $0x180] sm:$0xff]
    %v1092 = vld [vmem:[#allocation2 + $0x188] sm:$0xff]
    %v1093 = vld [vmem:[#allocation2 + $0x190] sm:$0xff]
    %v1094 = vld [vmem:[#allocation2 + $0x198] sm:$0xff]
    %v1095 = vld [vmem:[#allocation2 + $0x1a0] sm:$0xff]
    %v1096 = vld [vmem:[#allocation2 + $0x1a8] sm:$0xff]
    %v1097 = vld [vmem:[#allocation2 + $0x1b0] sm:$0xff]
    %v1098 = vld [vmem:[#allocation2 + $0x1b8] sm:$0xff]
    %v1099 = vld [vmem:[#allocation2 + $0x1c0] sm:$0xff]
    %v1100 = vld [vmem:[#allocation2 + $0x1c8] sm:$0xff]
    %v1101 = vld [vmem:[#allocation2 + $0x1d0] sm:$0xff]
    %v1102 = vld [vmem:[#allocation2 + $0x1d8] sm:$0xff]
    %v1103 = vld [vmem:[#allocation2 + $0x1e0] sm:$0xff]
    %v1104 = vld [vmem:[#allocation2 + $0x1e8] sm:$0xff]
    %v1105 = vld [vmem:[#allocation2 + $0x1f0] sm:$0xff]
    %v1106 = vld [vmem:[#allocation2 + $0x1f8] sm:$0xff]
    %v1107 = vld [vmem:[#allocation2 + $0x200] sm:$0xff]
    %v1108 = vld [vmem:[#allocation2 + $0x208] sm:$0xff]
    %v1109 = vld [vmem:[#allocation2 + $0x210] sm:$0xff]
    %v1110 = vld [vmem:[#allocation2 + $0x218] sm:$0xff]
    %v1111 = vld [vmem:[#allocation2 + $0x220] sm:$0xff]
    %v1112 = vld [vmem:[#allocation2 + $0x228] sm:$0xff]
    %v1113 = vld [vmem:[#allocation2 + $0x230] sm:$0xff]
    %v1114 = vld [vmem:[#allocation2 + $0x238] sm:$0xff]
    %v1115 = vld [vmem:[#allocation2 + $0x240] sm:$0xff]
    %v1116 = vld [vmem:[#allocation2 + $0x248] sm:$0xff]
    %v1117 = vld [vmem:[#allocation2 + $0x250] sm:$0xff]
    %v1118 = vld [vmem:[#allocation2 + $0x258] sm:$0xff]
    %v1119 = vld [vmem:[#allocation2 + $0x260] sm:$0xff]
    %v1120 = vld [vmem:[#allocation2 + $0x268] sm:$0xff]
    %v1121 = vld [vmem:[#allocation2 + $0x270] sm:$0xff]
    %v1122 = vld [vmem:[#allocation2 + $0x278] sm:$0xff]
    %v1123 = vld [vmem:[#allocation2 + $0x280] sm:$0xff]
    %v1124 = vld [vmem:[#allocation2 + $0x288] sm:$0xff]
    %v1125 = vld [vmem:[#allocation2 + $0x290] sm:$0xff]
    %v1126 = vld [vmem:[#allocation2 + $0x298] sm:$0xff]
    %v1127 = vld [vmem:[#allocation2 + $0x2a0] sm:$0xff]
    %v1128 = vld [vmem:[#allocation2 + $0x2a8] sm:$0xff]
    %v1129 = vld [vmem:[#allocation2 + $0x2b0] sm:$0xff]
    %v1130 = vld [vmem:[#allocation2 + $0x2b8] sm:$0xff]
    %v1131 = vld [vmem:[#allocation2 + $0x2c0] sm:$0xff]
    %v1132 = vld [vmem:[#allocation2 + $0x2c8] sm:$0xff]
    %v1133 = vld [vmem:[#allocation2 + $0x2d0] sm:$0xff]
    %v1134 = vld [vmem:[#allocation2 + $0x2d8] sm:$0xff]
    %v1135 = vld [vmem:[#allocation2 + $0x2e0] sm:$0xff]
    %v1136 = vld [vmem:[#allocation2 + $0x2e8] sm:$0xff]
    %v1137 = vld [vmem:[#allocation2 + $0x2f0] sm:$0xff]
    %v1138 = vld [vmem:[#allocation2 + $0x2f8] sm:$0xff]
    %v1139 = vld [vmem:[#allocation2 + $0x360] sm:$0xff]
    %v1140 = vld [vmem:[#allocation2 + $0x368] sm:$0xff]
    %v1141 = vld [vmem:[#allocation2 + $0x370] sm:$0xff]
    %v1142 = vld [vmem:[#allocation2 + $0x378] sm:$0xff]
    %v1143 = vld [vmem:[#allocation2 + $0x380] sm:$0xff]
    %v1144 = vld [vmem:[#allocation2 + $0x388] sm:$0xff]
    %v1145 = vld [vmem:[#allocation2 + $0x390] sm:$0xff]
    %v1146 = vld [vmem:[#allocation2 + $0x398] sm:$0xff]
    %v1147 = vld [vmem:[#allocation2 + $0x3a0] sm:$0xff]
    %v1148 = vld [vmem:[#allocation2 + $0x3a8] sm:$0xff]
    %v1149 = vld [vmem:[#allocation2 + $0x3b0] sm:$0xff]
    %v1150 = vld [vmem:[#allocation2 + $0x3b8] sm:$0xff]
    %v1151 = vld [vmem:[#allocation2 + $0x3c0] sm:$0xff]
    %v1152 = vld [vmem:[#allocation2 + $0x3c8] sm:$0xff]
    %v1153 = vld [vmem:[#allocation2 + $0x3d0] sm:$0xff]
    %v1154 = vld [vmem:[#allocation2 + $0x3d8] sm:$0xff]
    %v1155 = vld [vmem:[#allocation2 + $0x3e0] sm:$0xff]
    %v1156 = vld [vmem:[#allocation2 + $0x3e8] sm:$0xff]
    %v1157 = vld [vmem:[#allocation2 + $0x3f0] sm:$0xff]
    %v1158 = vld [vmem:[#allocation2 + $0x3f8] sm:$0xff]
    %v1159 = vld [vmem:[#allocation2 + $0x400] sm:$0xff]
    %v1160 = vld [vmem:[#allocation2 + $0x408] sm:$0xff]
    %v1161 = vld [vmem:[#allocation2 + $0x410] sm:$0xff]
    %v1162 = vld [vmem:[#allocation2 + $0x418] sm:$0xff]
    %v1163 = vld [vmem:[#allocation2 + $0x420] sm:$0xff]
    %v1164 = vld [vmem:[#allocation2 + $0x428] sm:$0xff]
    %v1165 = vld [vmem:[#allocation2 + $0x430] sm:$0xff]
    %v1166 = vld [vmem:[#allocation2 + $0x438] sm:$0xff]
    %v1167 = vld [vmem:[#allocation2 + $0x440] sm:$0xff]
    %v1168 = vld [vmem:[#allocation2 + $0x448] sm:$0xff]
    %v1169 = vld [vmem:[#allocation2 + $0x450] sm:$0xff]
    %v1170 = vld [vmem:[#allocation2 + $0x458] sm:$0xff]
    %v1171 = vld [vmem:[#allocation2 + $0x460] sm:$0xff]
    %v1172 = vld [vmem:[#allocation2 + $0x468] sm:$0xff]
    %v1173 = vld [vmem:[#allocation2 + $0x470] sm:$0xff]
    %v1174 = vld [vmem:[#allocation2 + $0x478] sm:$0xff]
    %v1175 = vld [vmem:[#allocation2 + $0x480] sm:$0xff]
    %v1176 = vld [vmem:[#allocation2 + $0x488] sm:$0xff]
    %v1177 = vld [vmem:[#allocation2 + $0x490] sm:$0xff]
    %v1178 = vld [vmem:[#allocation2 + $0x498] sm:$0xff]
    %v1179 = vld [vmem:[#allocation2 + $0x4a0] sm:$0xff]
    %v1180 = vld [vmem:[#allocation2 + $0x4a8] sm:$0xff]
    %v1181 = vld [vmem:[#allocation2 + $0x4b0] sm:$0xff]
    %v1182 = vld [vmem:[#allocation2 + $0x4b8] sm:$0xff]
    %v1183 = vld [vmem:[#allocation2 + $0x4c0] sm:$0xff]
    %v1184 = vld [vmem:[#allocation2 + $0x4c8] sm:$0xff]
    %v1185 = vld [vmem:[#allocation2 + $0x4d0] sm:$0xff]
    %v1186 = vld [vmem:[#allocation2 + $0x4d8] sm:$0xff]
    %v1187 = vld [vmem:[#allocation2 + $0x4e0] sm:$0xff]
    %v1188 = vld [vmem:[#allocation2 + $0x4e8] sm:$0xff]
    %v1189 = vld [vmem:[#allocation2 + $0x4f0] sm:$0xff]
    %v1190 = vld [vmem:[#allocation2 + $0x4f8] sm:$0xff]
    %v1191 = vld [vmem:[#allocation2 + $0x500] sm:$0xff]
    %v1192 = vld [vmem:[#allocation2 + $0x508] sm:$0xff]
    %v1193 = vld [vmem:[#allocation2 + $0x510] sm:$0xff]
    %v1194 = vld [vmem:[#allocation2 + $0x518] sm:$0xff]
    %v1195 = vld [vmem:[#allocation2 + $0x520] sm:$0xff]
    %v1196 = vld [vmem:[#allocation2 + $0x528] sm:$0xff]
    %v1197 = vld [vmem:[#allocation2 + $0x530] sm:$0xff]
    %v1198 = vld [vmem:[#allocation2 + $0x538] sm:$0xff]
    %v1199 = vld [vmem:[#allocation2 + $0x540] sm:$0xff]
    %v1200 = vld [vmem:[#allocation2 + $0x548] sm:$0xff]
    %v1201 = vld [vmem:[#allocation2 + $0x550] sm:$0xff]
    %v1202 = vld [vmem:[#allocation2 + $0x558] sm:$0xff]
    %v1203 = vld [vmem:[#allocation2 + $0x560] sm:$0xff]
    %v1204 = vld [vmem:[#allocation2 + $0x568] sm:$0xff]
    %v1205 = vld [vmem:[#allocation2 + $0x570] sm:$0xff]
    %v1206 = vld [vmem:[#allocation2 + $0x578] sm:$0xff]
    %v1207 = vld [vmem:[#allocation2 + $0x580] sm:$0xff]
    %v1208 = vld [vmem:[#allocation2 + $0x588] sm:$0xff]
    %v1209 = vld [vmem:[#allocation2 + $0x590] sm:$0xff]
    %v1210 = vld [vmem:[#allocation2 + $0x598] sm:$0xff]
    %v1211 = vld [vmem:[#allocation2 + $0x5a0] sm:$0xff]
    %v1212 = vld [vmem:[#allocation2 + $0x5a8] sm:$0xff]
    %v1213 = vld [vmem:[#allocation2 + $0x5b0] sm:$0xff]
    %v1214 = vld [vmem:[#allocation2 + $0x5b8] sm:$0xff]
    %v1215 = vld [vmem:[#allocation2 + $0x5c0] sm:$0xff]
    %v1216 = vld [vmem:[#allocation2 + $0x5c8] sm:$0xff]
    %v1217 = vld [vmem:[#allocation2 + $0x5d0] sm:$0xff]
    %v1218 = vld [vmem:[#allocation2 + $0x5d8] sm:$0xff]
    %v1219 = vld [vmem:[#allocation2 + $0x5e0] sm:$0xff]
    %v1220 = vld [vmem:[#allocation2 + $0x5e8] sm:$0xff]
    %v1221 = vld [vmem:[#allocation2 + $0x5f0] sm:$0xff]
    %v1222 = vld [vmem:[#allocation2 + $0x5f8] sm:$0xff]
    %v1223 = vld [vmem:[#allocation2 + $0x600] sm:$0xff]
    %v1224 = vld [vmem:[#allocation2 + $0x608] sm:$0xff]
    %v1225 = vld [vmem:[#allocation2 + $0x610] sm:$0xff]
    %v1226 = vld [vmem:[#allocation2 + $0x618] sm:$0xff]
    %v1227 = vld [vmem:[#allocation2 + $0x620] sm:$0xff]
    %v1228 = vld [vmem:[#allocation2 + $0x628] sm:$0xff]
    %v1229 = vld [vmem:[#allocation2 + $0x630] sm:$0xff]
    %v1230 = vld [vmem:[#allocation2 + $0x638] sm:$0xff]
    %v1231 = vld [vmem:[#allocation2 + $0x640] sm:$0xff]
    %v1232 = vld [vmem:[#allocation2 + $0x648] sm:$0xff]
    %v1233 = vld [vmem:[#allocation2 + $0x650] sm:$0xff]
    %v1234 = vld [vmem:[#allocation2 + $0x658] sm:$0xff]
    %v1235 = vld [vmem:[%s3] sm:$0xff]
    %v1236 = vld [vmem:[%s3 + $0x8] sm:$0xff]
    %v1237 = vld [vmem:[%s3 + $0x10] sm:$0xff]
    %v1238 = vld [vmem:[%s3 + $0x18] sm:$0xff]
    %v1239 = vld [vmem:[%s3 + $0x20] sm:$0xff]
    %v1240 = vld [vmem:[%s3 + $0x28] sm:$0xff]
    %v1241 = vld [vmem:[%s3 + $0x30] sm:$0xff]
    %v1242 = vld [vmem:[%s3 + $0x38] sm:$0xff]
    %v1243 = vld [vmem:[%s3 + $0x40] sm:$0xff]
    %v1244 = vld [vmem:[%s3 + $0x48] sm:$0xff]
    %v1245 = vld [vmem:[%s3 + $0x50] sm:$0xff]
    %v1246 = vld [vmem:[%s3 + $0x58] sm:$0xff]
    %v1247 = vld [vmem:[%s3 + $0x60] sm:$0xff]
    %v1248 = vld [vmem:[%s3 + $0x68] sm:$0xff]
    %v1249 = vld [vmem:[%s3 + $0x70] sm:$0xff]
    %v1250 = vld [vmem:[%s3 + $0x78] sm:$0xff]
    %v1251 = vld [vmem:[%s3 + $0x80] sm:$0xff]
    %v1252 = vld [vmem:[%s3 + $0x88] sm:$0xff]
    %v1253 = vld [vmem:[%s3 + $0x90] sm:$0xff]
    %v1254 = vld [vmem:[%s3 + $0x98] sm:$0xff]
    %v1255 = vld [vmem:[%s3 + $0xa0] sm:$0xff]
    %v1256 = vld [vmem:[%s3 + $0xa8] sm:$0xff]
    %v1257 = vld [vmem:[%s3 + $0xb0] sm:$0xff]
    %v1258 = vld [vmem:[%s3 + $0xb8] sm:$0xff]
    %v1259 = vld [vmem:[%s3 + $0xc0] sm:$0xff]
    %v1260 = vld [vmem:[%s3 + $0xc8] sm:$0xff]
    %v1261 = vld [vmem:[%s3 + $0xd0] sm:$0xff]
    %v1262 = vld [vmem:[%s3 + $0xd8] sm:$0xff]
    %v1263 = vld [vmem:[%s3 + $0xe0] sm:$0xff]
    %v1264 = vld [vmem:[%s3 + $0xe8] sm:$0xff]
    %v1265 = vld [vmem:[%s3 + $0xf0] sm:$0xff]
    %v1266 = vld [vmem:[%s3 + $0xf8] sm:$0xff]
    %v1267 = vld [vmem:[%s3 + $0x100] sm:$0xff]
    %v1268 = vld [vmem:[%s3 + $0x108] sm:$0xff]
    %v1269 = vld [vmem:[%s3 + $0x110] sm:$0xff]
    %v1270 = vld [vmem:[%s3 + $0x118] sm:$0xff]
    %v1271 = vld [vmem:[%s3 + $0x120] sm:$0xff]
    %v1272 = vld [vmem:[%s3 + $0x128] sm:$0xff]
    %v1273 = vld [vmem:[%s3 + $0x130] sm:$0xff]
    %v1274 = vld [vmem:[%s3 + $0x138] sm:$0xff]
    %v1275 = vld [vmem:[%s3 + $0x140] sm:$0xff]
    %v1276 = vld [vmem:[%s3 + $0x148] sm:$0xff]
    %v1277 = vld [vmem:[%s3 + $0x150] sm:$0xff]
    %v1278 = vld [vmem:[%s3 + $0x158] sm:$0xff]
    %v1279 = vld [vmem:[%s3 + $0x160] sm:$0xff]
    %v1280 = vld [vmem:[%s3 + $0x168] sm:$0xff]
    %v1281 = vld [vmem:[%s3 + $0x170] sm:$0xff]
    %v1282 = vld [vmem:[%s3 + $0x178] sm:$0xff]
    %v1283 = vld [vmem:[%s203] sm:$0xff]
    %v1284 = vld [vmem:[%s203 + $0x8] sm:$0xff]
    %v1285 = vld [vmem:[%s203 + $0x10] sm:$0xff]
    %v1286 = vld [vmem:[%s203 + $0x18] sm:$0xff]
    %v1287 = vld [vmem:[%s203 + $0x20] sm:$0xff]
    %v1288 = vld [vmem:[%s203 + $0x28] sm:$0xff]
    %v1289 = vld [vmem:[%s203 + $0x30] sm:$0xff]
    %v1290 = vld [vmem:[%s203 + $0x38] sm:$0xff]
    %v1291 = vld [vmem:[%s203 + $0x40] sm:$0xff]
    %v1292 = vld [vmem:[%s203 + $0x48] sm:$0xff]
    %v1293 = vld [vmem:[%s203 + $0x50] sm:$0xff]
    %v1294 = vld [vmem:[%s203 + $0x58] sm:$0xff]
    %v1295 = vld [vmem:[%s203 + $0x60] sm:$0xff]
    %v1296 = vld [vmem:[%s203 + $0x68] sm:$0xff]
    %v1297 = vld [vmem:[%s203 + $0x70] sm:$0xff]
    %v1298 = vld [vmem:[%s203 + $0x78] sm:$0xff]
    %v1299 = vld [vmem:[%s203 + $0x80] sm:$0xff]
    %v1300 = vld [vmem:[%s203 + $0x88] sm:$0xff]
    %v1301 = vld [vmem:[%s203 + $0x90] sm:$0xff]
    %v1302 = vld [vmem:[%s203 + $0x98] sm:$0xff]
    %v1303 = vld [vmem:[%s203 + $0xa0] sm:$0xff]
    %v1304 = vld [vmem:[%s203 + $0xa8] sm:$0xff]
    %v1305 = vld [vmem:[%s203 + $0xb0] sm:$0xff]
    %v1306 = vld [vmem:[%s203 + $0xb8] sm:$0xff]
    %v1307 = vld [vmem:[%s203 + $0xc0] sm:$0xff]
    %v1308 = vld [vmem:[%s203 + $0xc8] sm:$0xff]
    %v1309 = vld [vmem:[%s203 + $0xd0] sm:$0xff]
    %v1310 = vld [vmem:[%s203 + $0xd8] sm:$0xff]
    %v1311 = vld [vmem:[%s203 + $0xe0] sm:$0xff]
    %v1312 = vld [vmem:[%s203 + $0xe8] sm:$0xff]
    %v1313 = vld [vmem:[%s203 + $0xf0] sm:$0xff]
    %v1314 = vld [vmem:[%s203 + $0xf8] sm:$0xff]
    %v1315 = vld [vmem:[%s203 + $0x100] sm:$0xff]
    %v1316 = vld [vmem:[%s203 + $0x108] sm:$0xff]
    %v1317 = vld [vmem:[%s203 + $0x110] sm:$0xff]
    %v1318 = vld [vmem:[%s203 + $0x118] sm:$0xff]
    %v1319 = vld [vmem:[%s203 + $0x120] sm:$0xff]
    %v1320 = vld [vmem:[%s203 + $0x128] sm:$0xff]
    %v1321 = vld [vmem:[%s203 + $0x130] sm:$0xff]
    %v1322 = vld [vmem:[%s203 + $0x138] sm:$0xff]
    %v1323 = vld [vmem:[%s203 + $0x140] sm:$0xff]
    %v1324 = vld [vmem:[%s203 + $0x148] sm:$0xff]
    %v1325 = vld [vmem:[%s203 + $0x150] sm:$0xff]
    %v1326 = vld [vmem:[%s203 + $0x158] sm:$0xff]
    %v1327 = vld [vmem:[%s203 + $0x160] sm:$0xff]
    %v1328 = vld [vmem:[%s203 + $0x168] sm:$0xff]
    %v1329 = vld [vmem:[%s203 + $0x170] sm:$0xff]
    %v1330 = vld [vmem:[%s203 + $0x178] sm:$0xff]
    %v1331 = vld [vmem:[%s203 + $0x180] sm:$0xff]
    %v1332 = vld [vmem:[%s203 + $0x188] sm:$0xff]
    %v1333 = vld [vmem:[%s203 + $0x190] sm:$0xff]
    %v1334 = vld [vmem:[%s203 + $0x198] sm:$0xff]
    %v1335 = vld [vmem:[%s203 + $0x1a0] sm:$0xff]
    %v1336 = vld [vmem:[%s203 + $0x1a8] sm:$0xff]
    %v1337 = vld [vmem:[%s203 + $0x1b0] sm:$0xff]
    %v1338 = vld [vmem:[%s203 + $0x1b8] sm:$0xff]
    %v1339 = vld [vmem:[%s203 + $0x1c0] sm:$0xff]
    %v1340 = vld [vmem:[%s203 + $0x1c8] sm:$0xff]
    %v1341 = vld [vmem:[%s203 + $0x1d0] sm:$0xff]
    %v1342 = vld [vmem:[%s203 + $0x1d8] sm:$0xff]
    %v1343 = vld [vmem:[%s203 + $0x1e0] sm:$0xff]
    %v1344 = vld [vmem:[%s203 + $0x1e8] sm:$0xff]
    %v1345 = vld [vmem:[%s203 + $0x1f0] sm:$0xff]
    %v1346 = vld [vmem:[%s203 + $0x1f8] sm:$0xff]
    %v1347 = vld [vmem:[%s203 + $0x200] sm:$0xff]
    %v1348 = vld [vmem:[%s203 + $0x208] sm:$0xff]
    %v1349 = vld [vmem:[%s203 + $0x210] sm:$0xff]
    %v1350 = vld [vmem:[%s203 + $0x218] sm:$0xff]
    %v1351 = vld [vmem:[%s203 + $0x220] sm:$0xff]
    %v1352 = vld [vmem:[%s203 + $0x228] sm:$0xff]
    %v1353 = vld [vmem:[%s203 + $0x230] sm:$0xff]
    %v1354 = vld [vmem:[%s203 + $0x238] sm:$0xff]
    %v1355 = vld [vmem:[%s203 + $0x240] sm:$0xff]
    %v1356 = vld [vmem:[%s203 + $0x248] sm:$0xff]
    %v1357 = vld [vmem:[%s203 + $0x250] sm:$0xff]
    %v1358 = vld [vmem:[%s203 + $0x258] sm:$0xff]
    %v1359 = vld [vmem:[%s203 + $0x260] sm:$0xff]
    %v1360 = vld [vmem:[%s203 + $0x268] sm:$0xff]
    %v1361 = vld [vmem:[%s203 + $0x270] sm:$0xff]
    %v1362 = vld [vmem:[%s203 + $0x278] sm:$0xff]
    %v1363 = vld [vmem:[%s203 + $0x280] sm:$0xff]
    %v1364 = vld [vmem:[%s203 + $0x288] sm:$0xff]
    %v1365 = vld [vmem:[%s203 + $0x290] sm:$0xff]
    %v1366 = vld [vmem:[%s203 + $0x298] sm:$0xff]
    %v1367 = vld [vmem:[%s203 + $0x2a0] sm:$0xff]
    %v1368 = vld [vmem:[%s203 + $0x2a8] sm:$0xff]
    %v1369 = vld [vmem:[%s203 + $0x2b0] sm:$0xff]
    %v1370 = vld [vmem:[%s203 + $0x2b8] sm:$0xff]
    %v1371 = vld [vmem:[%s203 + $0x2c0] sm:$0xff]
    %v1372 = vld [vmem:[%s203 + $0x2c8] sm:$0xff]
    %v1373 = vld [vmem:[%s203 + $0x2d0] sm:$0xff]
    %v1374 = vld [vmem:[%s203 + $0x2d8] sm:$0xff]
    %v1375 = vld [vmem:[%s203 + $0x2e0] sm:$0xff]
    %v1376 = vld [vmem:[%s203 + $0x2e8] sm:$0xff]
    %v1377 = vld [vmem:[%s203 + $0x2f0] sm:$0xff]
    %v1378 = vld [vmem:[%s203 + $0x2f8] sm:$0xff]
    %v1379 = vld [vmem:[%s203 + $0x360] sm:$0xff]
    %v1380 = vld [vmem:[%s203 + $0x368] sm:$0xff]
    %v1381 = vld [vmem:[%s203 + $0x370] sm:$0xff]
    %v1382 = vld [vmem:[%s203 + $0x378] sm:$0xff]
    %v1383 = vld [vmem:[%s203 + $0x380] sm:$0xff]
    %v1384 = vld [vmem:[%s203 + $0x388] sm:$0xff]
    %v1385 = vld [vmem:[%s203 + $0x390] sm:$0xff]
    %v1386 = vld [vmem:[%s203 + $0x398] sm:$0xff]
    %v1387 = vld [vmem:[%s203 + $0x3a0] sm:$0xff]
    %v1388 = vld [vmem:[%s203 + $0x3a8] sm:$0xff]
    %v1389 = vld [vmem:[%s203 + $0x3b0] sm:$0xff]
    %v1390 = vld [vmem:[%s203 + $0x3b8] sm:$0xff]
    %v1391 = vld [vmem:[%s203 + $0x3c0] sm:$0xff]
    %v1392 = vld [vmem:[%s203 + $0x3c8] sm:$0xff]
    %v1393 = vld [vmem:[%s203 + $0x3d0] sm:$0xff]
    %v1394 = vld [vmem:[%s203 + $0x3d8] sm:$0xff]
    %v1395 = vld [vmem:[%s203 + $0x3e0] sm:$0xff]
    %v1396 = vld [vmem:[%s203 + $0x3e8] sm:$0xff]
    %v1397 = vld [vmem:[%s203 + $0x3f0] sm:$0xff]
    %v1398 = vld [vmem:[%s203 + $0x3f8] sm:$0xff]
    %v1399 = vld [vmem:[%s203 + $0x400] sm:$0xff]
    %v1400 = vld [vmem:[%s203 + $0x408] sm:$0xff]
    %v1401 = vld [vmem:[%s203 + $0x410] sm:$0xff]
    %v1402 = vld [vmem:[%s203 + $0x418] sm:$0xff]
    %v1403 = vld [vmem:[%s203 + $0x420] sm:$0xff]
    %v1404 = vld [vmem:[%s203 + $0x428] sm:$0xff]
    %v1405 = vld [vmem:[%s203 + $0x430] sm:$0xff]
    %v1406 = vld [vmem:[%s203 + $0x438] sm:$0xff]
    %v1407 = vld [vmem:[%s203 + $0x440] sm:$0xff]
    %v1408 = vld [vmem:[%s203 + $0x448] sm:$0xff]
    %v1409 = vld [vmem:[%s203 + $0x450] sm:$0xff]
    %v1410 = vld [vmem:[%s203 + $0x458] sm:$0xff]
    %v1411 = vld [vmem:[%s203 + $0x460] sm:$0xff]
    %v1412 = vld [vmem:[%s203 + $0x468] sm:$0xff]
    %v1413 = vld [vmem:[%s203 + $0x470] sm:$0xff]
    %v1414 = vld [vmem:[%s203 + $0x478] sm:$0xff]
    %v1415 = vld [vmem:[%s203 + $0x480] sm:$0xff]
    %v1416 = vld [vmem:[%s203 + $0x488] sm:$0xff]
    %v1417 = vld [vmem:[%s203 + $0x490] sm:$0xff]
    %v1418 = vld [vmem:[%s203 + $0x498] sm:$0xff]
    %v1419 = vld [vmem:[%s203 + $0x4a0] sm:$0xff]
    %v1420 = vld [vmem:[%s203 + $0x4a8] sm:$0xff]
    %v1421 = vld [vmem:[%s203 + $0x4b0] sm:$0xff]
    %v1422 = vld [vmem:[%s203 + $0x4b8] sm:$0xff]
    %v1423 = vld [vmem:[%s203 + $0x4c0] sm:$0xff]
    %v1424 = vld [vmem:[%s203 + $0x4c8] sm:$0xff]
    %v1425 = vld [vmem:[%s203 + $0x4d0] sm:$0xff]
    %v1426 = vld [vmem:[%s203 + $0x4d8] sm:$0xff]
    %v1427 = vld [vmem:[%s203 + $0x4e0] sm:$0xff]
    %v1428 = vld [vmem:[%s203 + $0x4e8] sm:$0xff]
    %v1429 = vld [vmem:[%s203 + $0x4f0] sm:$0xff]
    %v1430 = vld [vmem:[%s203 + $0x4f8] sm:$0xff]
    %v1431 = vld [vmem:[%s203 + $0x500] sm:$0xff]
    %v1432 = vld [vmem:[%s203 + $0x508] sm:$0xff]
    %v1433 = vld [vmem:[%s203 + $0x510] sm:$0xff]
    %v1434 = vld [vmem:[%s203 + $0x518] sm:$0xff]
    %v1435 = vld [vmem:[%s203 + $0x520] sm:$0xff]
    %v1436 = vld [vmem:[%s203 + $0x528] sm:$0xff]
    %v1437 = vld [vmem:[%s203 + $0x530] sm:$0xff]
    %v1438 = vld [vmem:[%s203 + $0x538] sm:$0xff]
    %v1439 = vld [vmem:[%s203 + $0x540] sm:$0xff]
    %v1440 = vld [vmem:[%s203 + $0x548] sm:$0xff]
    %v1441 = vld [vmem:[%s203 + $0x550] sm:$0xff]
    %v1442 = vld [vmem:[%s203 + $0x558] sm:$0xff]
    %v1443 = vld [vmem:[%s203 + $0x560] sm:$0xff]
    %v1444 = vld [vmem:[%s203 + $0x568] sm:$0xff]
    %v1445 = vld [vmem:[%s203 + $0x570] sm:$0xff]
    %v1446 = vld [vmem:[%s203 + $0x578] sm:$0xff]
    %v1447 = vld [vmem:[%s203 + $0x580] sm:$0xff]
    %v1448 = vld [vmem:[%s203 + $0x588] sm:$0xff]
    %v1449 = vld [vmem:[%s203 + $0x590] sm:$0xff]
    %v1450 = vld [vmem:[%s203 + $0x598] sm:$0xff]
    %v1451 = vld [vmem:[%s203 + $0x5a0] sm:$0xff]
    %v1452 = vld [vmem:[%s203 + $0x5a8] sm:$0xff]
    %v1453 = vld [vmem:[%s203 + $0x5b0] sm:$0xff]
    %v1454 = vld [vmem:[%s203 + $0x5b8] sm:$0xff]
    %v1455 = vld [vmem:[%s203 + $0x5c0] sm:$0xff]
    %v1456 = vld [vmem:[%s203 + $0x5c8] sm:$0xff]
    %v1457 = vld [vmem:[%s203 + $0x5d0] sm:$0xff]
    %v1458 = vld [vmem:[%s203 + $0x5d8] sm:$0xff]
    %v1459 = vld [vmem:[%s203 + $0x5e0] sm:$0xff]
    %v1460 = vld [vmem:[%s203 + $0x5e8] sm:$0xff]
    %v1461 = vld [vmem:[%s203 + $0x5f0] sm:$0xff]
    %v1462 = vld [vmem:[%s203 + $0x5f8] sm:$0xff]
    %v1463 = vld [vmem:[%s203 + $0x600] sm:$0xff]
    %v1464 = vld [vmem:[%s203 + $0x608] sm:$0xff]
    %v1465 = vld [vmem:[%s203 + $0x610] sm:$0xff]
    %v1466 = vld [vmem:[%s203 + $0x618] sm:$0xff]
    %v1467 = vld [vmem:[%s203 + $0x620] sm:$0xff]
    %v1468 = vld [vmem:[%s203 + $0x628] sm:$0xff]
    %v1469 = vld [vmem:[%s203 + $0x630] sm:$0xff]
    %v1470 = vld [vmem:[%s203 + $0x638] sm:$0xff]
    %v1471 = vld [vmem:[%s203 + $0x640] sm:$0xff]
    %v1472 = vld [vmem:[%s203 + $0x648] sm:$0xff]
    %v1473 = vld [vmem:[%s203 + $0x650] sm:$0xff]
    %v1474 = vld [vmem:[%s203 + $0x658] sm:$0xff]
    %s1475 = scalar_lea.vmem %s3, 384
    %v1476 = vld [vmem:[%s1475] sm:$0xff]
    %v1477 = vld [vmem:[%s1475 + $0x8] sm:$0xff]
    %v1478 = vld [vmem:[%s1475 + $0x10] sm:$0xff]
    %v1479 = vld [vmem:[%s1475 + $0x18] sm:$0xff]
    %v1480 = vld [vmem:[%s1475 + $0x20] sm:$0xff]
    %v1481 = vld [vmem:[%s1475 + $0x28] sm:$0xff]
    %v1482 = vld [vmem:[%s1475 + $0x30] sm:$0xff]
    %v1483 = vld [vmem:[%s1475 + $0x38] sm:$0xff]
    %v1484 = vld [vmem:[%s1475 + $0x40] sm:$0xff]
    %v1485 = vld [vmem:[%s1475 + $0x48] sm:$0xff]
    %v1486 = vld [vmem:[%s1475 + $0x50] sm:$0xff]
    %v1487 = vld [vmem:[%s1475 + $0x58] sm:$0xff]
    %v1488 = vld [vmem:[%s1475 + $0x60] sm:$0xff]
    %v1489 = vld [vmem:[%s1475 + $0x68] sm:$0xff]
    %v1490 = vld [vmem:[%s1475 + $0x70] sm:$0xff]
    %v1491 = vld [vmem:[%s1475 + $0x78] sm:$0xff]
    %v1492 = vld [vmem:[%s1475 + $0x80] sm:$0xff]
    %v1493 = vld [vmem:[%s1475 + $0x88] sm:$0xff]
    %v1494 = vld [vmem:[%s1475 + $0x90] sm:$0xff]
    %v1495 = vld [vmem:[%s1475 + $0x98] sm:$0xff]
    %v1496 = vld [vmem:[%s1475 + $0xa0] sm:$0xff]
    %v1497 = vld [vmem:[%s1475 + $0xa8] sm:$0xff]
    %v1498 = vld [vmem:[%s1475 + $0xb0] sm:$0xff]
    %v1499 = vld [vmem:[%s1475 + $0xb8] sm:$0xff]
    %v1500 = vld [vmem:[%s1475 + $0xc0] sm:$0xff]
    %v1501 = vld [vmem:[%s1475 + $0xc8] sm:$0xff]
    %v1502 = vld [vmem:[%s1475 + $0xd0] sm:$0xff]
    %v1503 = vld [vmem:[%s1475 + $0xd8] sm:$0xff]
    %v1504 = vld [vmem:[%s1475 + $0xe0] sm:$0xff]
    %v1505 = vld [vmem:[%s1475 + $0xe8] sm:$0xff]
    %v1506 = vld [vmem:[%s1475 + $0xf0] sm:$0xff]
    %v1507 = vld [vmem:[%s1475 + $0xf8] sm:$0xff]
    %v1508 = vld [vmem:[%s1475 + $0x100] sm:$0xff]
    %v1509 = vld [vmem:[%s1475 + $0x108] sm:$0xff]
    %v1510 = vld [vmem:[%s1475 + $0x110] sm:$0xff]
    %v1511 = vld [vmem:[%s1475 + $0x118] sm:$0xff]
    %v1512 = vld [vmem:[%s1475 + $0x120] sm:$0xff]
    %v1513 = vld [vmem:[%s1475 + $0x128] sm:$0xff]
    %v1514 = vld [vmem:[%s1475 + $0x130] sm:$0xff]
    %v1515 = vld [vmem:[%s1475 + $0x138] sm:$0xff]
    %v1516 = vld [vmem:[%s1475 + $0x140] sm:$0xff]
    %v1517 = vld [vmem:[%s1475 + $0x148] sm:$0xff]
    %v1518 = vld [vmem:[%s1475 + $0x150] sm:$0xff]
    %v1519 = vld [vmem:[%s1475 + $0x158] sm:$0xff]
    %v1520 = vld [vmem:[%s1475 + $0x160] sm:$0xff]
    %v1521 = vld [vmem:[%s1475 + $0x168] sm:$0xff]
    %v1522 = vld [vmem:[%s1475 + $0x170] sm:$0xff]
    %v1523 = vld [vmem:[%s1475 + $0x178] sm:$0xff]
    %1524 = vmatprep.subr.mxu0 0.0
    %1525 = vmatpush1.msra.mxu0 %v1476
    %1526 = vmatprep.subr.mxu0 0.0
    %1527 = vmatpush1.msra.mxu0 %v1477
    %1528 = vmatprep.subr.mxu0 0.0
    %1529 = vmatpush1.msra.mxu0 %v1478
    %1530 = vmatprep.subr.mxu0 0.0
    %1531 = vmatpush1.msra.mxu0 %v1479
    %1532 = vmatprep.subr.mxu0 0.0
    %1533 = vmatpush1.msra.mxu0 %v1480
    %1534 = vmatprep.subr.mxu0 0.0
    %1535 = vmatpush1.msra.mxu0 %v1481
    %1536 = vmatprep.subr.mxu0 0.0
    %1537 = vmatpush1.msra.mxu0 %v1482
    %1538 = vmatprep.subr.mxu0 0.0
    %1539 = vmatpush1.msra.mxu0 %v1483
    %1540 = vmatprep.subr.mxu0 0.0
    %1541 = vmatpush1.msra.mxu0 %v1484
    %1542 = vmatprep.subr.mxu0 0.0
    %1543 = vmatpush1.msra.mxu0 %v1485
    %1544 = vmatprep.subr.mxu0 0.0
    %1545 = vmatpush1.msra.mxu0 %v1486
    %1546 = vmatprep.subr.mxu0 0.0
    %1547 = vmatpush1.msra.mxu0 %v1487
    %1548 = vmatprep.subr.mxu0 0.0
    %1549 = vmatpush1.msra.mxu0 %v1488
    %1550 = vmatprep.subr.mxu0 0.0
    %1551 = vmatpush1.msra.mxu0 %v1489
    %1552 = vmatprep.subr.mxu0 0.0
    %1553 = vmatpush1.msra.mxu0 %v1490
    %1554 = vmatprep.subr.mxu0 0.0
    %1555 = vmatpush1.msra.mxu0 %v1491
    %1556 = vmatprep.subr.mxu0 0.0
    %1557 = vmatpush1.msra.mxu0 %v1492
    %1558 = vmatprep.subr.mxu0 0.0
    %1559 = vmatpush1.msra.mxu0 %v1493
    %1560 = vmatprep.subr.mxu0 0.0
    %1561 = vmatpush1.msra.mxu0 %v1494
    %1562 = vmatprep.subr.mxu0 0.0
    %1563 = vmatpush1.msra.mxu0 %v1495
    %1564 = vmatprep.subr.mxu0 0.0
    %1565 = vmatpush1.msra.mxu0 %v1496
    %1566 = vmatprep.subr.mxu0 0.0
    %1567 = vmatpush1.msra.mxu0 %v1497
    %1568 = vmatprep.subr.mxu0 0.0
    %1569 = vmatpush1.msra.mxu0 %v1498
    %1570 = vmatprep.subr.mxu0 0.0
    %1571 = vmatpush1.msra.mxu0 %v1499
    %1572 = vmatprep.subr.mxu0 0.0
    %1573 = vmatpush1.msra.mxu0 %v1500
    %1574 = vmatprep.subr.mxu0 0.0
    %1575 = vmatpush1.msra.mxu0 %v1501
    %1576 = vmatprep.subr.mxu0 0.0
    %1577 = vmatpush1.msra.mxu0 %v1502
    %1578 = vmatprep.subr.mxu0 0.0
    %1579 = vmatpush1.msra.mxu0 %v1503
    %1580 = vmatprep.subr.mxu0 0.0
    %1581 = vmatpush1.msra.mxu0 %v1504
    %1582 = vmatprep.subr.mxu0 0.0
    %1583 = vmatpush1.msra.mxu0 %v1505
    %1584 = vmatprep.subr.mxu0 0.0
    %1585 = vmatpush1.msra.mxu0 %v1506
    %1586 = vmatprep.subr.mxu0 0.0
    %1587 = vmatpush1.msra.mxu0 %v1507
    %1588 = vmatprep.mubr.f32.mxu0 %v1284
    %1589 = vmatmul.mubr.f32.gmra.mrb[0].mxu0 %v1283
    %v1590 = vpop.f32.mrb[0].mxu0
    %v1591 = vadd.f32 0.0, %v1590
    %v1592 = vpop.f32.mrb[0].mxu0
    %1593 = vmatprep.mubr.f32.mxu0 %v1287
    %1594 = vmatmul.mubr.f32.gmra.mrb[0].mxu0 %v1286
    %v1595 = vpop.f32.mrb[0].mxu0
    %v1596 = vadd.f32 0.0, %v1595
    %v1597 = vpop.f32.mrb[0].mxu0
    %1598 = vmatprep.mubr.f32.mxu0 %v1290
    %1599 = vmatmul.mubr.f32.gmra.mrb[0].mxu0 %v1289
    %v1600 = vpop.f32.mrb[0].mxu0
    %v1601 = vadd.f32 0.0, %v1600
    %v1602 = vpop.f32.mrb[0].mxu0
    %1603 = vmatprep.mubr.f32.mxu0 %v1293
    %1604 = vmatmul.mubr.f32.gmra.mrb[0].mxu0 %v1292
    %v1605 = vpop.f32.mrb[0].mxu0
    %v1606 = vadd.f32 0.0, %v1605
    %v1607 = vpop.f32.mrb[0].mxu0
    %1608 = vmatprep.mubr.f32.mxu0 %v1296
    %1609 = vmatmul.mubr.f32.gmra.mrb[0].mxu0 %v1295
    %v1610 = vpop.f32.mrb[0].mxu0
    %v1611 = vadd.f32 0.0, %v1610
    %v1612 = vpop.f32.mrb[0].mxu0
    %1613 = vmatprep.mubr.f32.mxu0 %v1299
    %1614 = vmatmul.mubr.f32.gmra.mrb[0].mxu0 %v1298
    %v1615 = vpop.f32.mrb[0].mxu0
    %v1616 = vadd.f32 0.0, %v1615
    %v1617 = vpop.f32.mrb[0].mxu0
    %1618 = vmatprep.mubr.f32.mxu0 %v1302
    %1619 = vmatmul.mubr.f32.gmra.mrb[0].mxu0 %v1301
    %v1620 = vpop.f32.mrb[0].mxu0
    %v1621 = vadd.f32 0.0, %v1620
    %v1622 = vpop.f32.mrb[0].mxu0
    %1623 = vmatprep.mubr.f32.mxu0 %v1305
    %1624 = vmatmul.mubr.f32.gmra.mrb[0].mxu0 %v1304
    %v1625 = vpop.f32.mrb[0].mxu0
    %v1626 = vadd.f32 0.0, %v1625
    %v1627 = vpop.f32.mrb[0].mxu0
    %1628 = vmatprep.mubr.f32.mxu0 %v1308
    %1629 = vmatmul.mubr.f32.gmra.mrb[0].mxu0 %v1307
    %v1630 = vpop.f32.mrb[0].mxu0
    %v1631 = vadd.f32 0.0, %v1630
    %v1632 = vpop.f32.mrb[0].mxu0
    %1633 = vmatprep.mubr.f32.mxu0 %v1311
    %1634 = vmatmul.mubr.f32.gmra.mrb[0].mxu0 %v1310
    %v1635 = vpop.f32.mrb[0].mxu0
    %v1636 = vadd.f32 0.0, %v1635
    %v1637 = vpop.f32.mrb[0].mxu0
    %1638 = vmatprep.mubr.f32.mxu0 %v1314
    %1639 = vmatmul.mubr.f32.gmra.mrb[0].mxu0 %v1313
    %v1640 = vpop.f32.mrb[0].mxu0
    %v1641 = vadd.f32 0.0, %v1640
    %v1642 = vpop.f32.mrb[0].mxu0
    %1643 = vmatprep.mubr.f32.mxu0 %v1317
    %1644 = vmatmul.mubr.f32.gmra.mrb[0].mxu0 %v1316
    %v1645 = vpop.f32.mrb[0].mxu0
    %v1646 = vadd.f32 0.0, %v1645
    %v1647 = vpop.f32.mrb[0].mxu0
    %1648 = vmatprep.mubr.f32.mxu0 %v1320
    %1649 = vmatmul.mubr.f32.gmra.mrb[0].mxu0 %v1319
    %v1650 = vpop.f32.mrb[0].mxu0
    %v1651 = vadd.f32 0.0, %v1650
    %v1652 = vpop.f32.mrb[0].mxu0
    %1653 = vmatprep.mubr.f32.mxu0 %v1323
    %1654 = vmatmul.mubr.f32.gmra.mrb[0].mxu0 %v1322
    %v1655 = vpop.f32.mrb[0].mxu0
    %v1656 = vadd.f32 0.0, %v1655
    %v1657 = vpop.f32.mrb[0].mxu0
    %1658 = vmatprep.mubr.f32.mxu0 %v1326
    %1659 = vmatmul.mubr.f32.gmra.mrb[0].mxu0 %v1325
    %v1660 = vpop.f32.mrb[0].mxu0
    %v1661 = vadd.f32 0.0, %v1660
    %v1662 = vpop.f32.mrb[0].mxu0
    %1663 = vmatprep.mubr.f32.mxu0 %v1329
    %1664 = vmatmul.mubr.f32.gmra.mrb[0].mxu0 %v1328
    %v1665 = vpop.f32.mrb[0].mxu0
    %v1666 = vadd.f32 0.0, %v1665
    %v1667 = vpop.f32.mrb[0].mxu0
    %1668 = vmatprep.mubr.f32.mxu0 %v1332
    %1669 = vmatmul.mubr.f32.gmra.mrb[0].mxu0 %v1331
    %v1670 = vpop.f32.mrb[0].mxu0
    %v1671 = vadd.f32 0.0, %v1670
    %v1672 = vpop.f32.mrb[0].mxu0
    %1673 = vmatprep.mubr.f32.mxu0 %v1335
    %1674 = vmatmul.mubr.f32.gmra.mrb[0].mxu0 %v1334
    %v1675 = vpop.f32.mrb[0].mxu0
    %v1676 = vadd.f32 0.0, %v1675
    %v1677 = vpop.f32.mrb[0].mxu0
    %1678 = vmatprep.mubr.f32.mxu0 %v1338
    %1679 = vmatmul.mubr.f32.gmra.mrb[0].mxu0 %v1337
    %v1680 = vpop.f32.mrb[0].mxu0
    %v1681 = vadd.f32 0.0, %v1680
    %v1682 = vpop.f32.mrb[0].mxu0
    %1683 = vmatprep.mubr.f32.mxu0 %v1341
    %1684 = vmatmul.mubr.f32.gmra.mrb[0].mxu0 %v1340
    %v1685 = vpop.f32.mrb[0].mxu0
    %v1686 = vadd.f32 0.0, %v1685
    %v1687 = vpop.f32.mrb[0].mxu0
    %1688 = vmatprep.mubr.f32.mxu0 %v1344
    %1689 = vmatmul.mubr.f32.gmra.mrb[0].mxu0 %v1343
    %v1690 = vpop.f32.mrb[0].mxu0
    %v1691 = vadd.f32 0.0, %v1690
    %v1692 = vpop.f32.mrb[0].mxu0
    %1693 = vmatprep.mubr.f32.mxu0 %v1347
    %1694 = vmatmul.mubr.f32.gmra.mrb[0].mxu0 %v1346
    %v1695 = vpop.f32.mrb[0].mxu0
    %v1696 = vadd.f32 0.0, %v1695
    %v1697 = vpop.f32.mrb[0].mxu0
    %1698 = vmatprep.mubr.f32.mxu0 %v1350
    %1699 = vmatmul.mubr.f32.gmra.mrb[0].mxu0 %v1349
    %v1700 = vpop.f32.mrb[0].mxu0
    %v1701 = vadd.f32 0.0, %v1700
    %v1702 = vpop.f32.mrb[0].mxu0
    %1703 = vmatprep.mubr.f32.mxu0 %v1353
    %1704 = vmatmul.mubr.f32.gmra.mrb[0].mxu0 %v1352
    %v1705 = vpop.f32.mrb[0].mxu0
    %v1706 = vadd.f32 0.0, %v1705
    %v1707 = vpop.f32.mrb[0].mxu0
    %1708 = vmatprep.mubr.f32.mxu0 %v1356
    %1709 = vmatmul.mubr.f32.gmra.mrb[0].mxu0 %v1355
    %v1710 = vpop.f32.mrb[0].mxu0
    %v1711 = vadd.f32 0.0, %v1710
    %v1712 = vpop.f32.mrb[0].mxu0
    %1713 = vmatprep.mubr.f32.mxu0 %v1359
    %1714 = vmatmul.mubr.f32.gmra.mrb[0].mxu0 %v1358
    %v1715 = vpop.f32.mrb[0].mxu0
    %v1716 = vadd.f32 0.0, %v1715
    %v1717 = vpop.f32.mrb[0].mxu0
    %1718 = vmatprep.mubr.f32.mxu0 %v1362
    %1719 = vmatmul.mubr.f32.gmra.mrb[0].mxu0 %v1361
    %v1720 = vpop.f32.mrb[0].mxu0
    %v1721 = vadd.f32 0.0, %v1720
    %v1722 = vpop.f32.mrb[0].mxu0
    %1723 = vmatprep.mubr.f32.mxu0 %v1365
    %1724 = vmatmul.mubr.f32.gmra.mrb[0].mxu0 %v1364
    %v1725 = vpop.f32.mrb[0].mxu0
    %v1726 = vadd.f32 0.0, %v1725
    %v1727 = vpop.f32.mrb[0].mxu0
    %1728 = vmatprep.mubr.f32.mxu0 %v1368
    %1729 = vmatmul.mubr.f32.gmra.mrb[0].mxu0 %v1367
    %v1730 = vpop.f32.mrb[0].mxu0
    %v1731 = vadd.f32 0.0, %v1730
    %v1732 = vpop.f32.mrb[0].mxu0
    %1733 = vmatprep.mubr.f32.mxu0 %v1371
    %1734 = vmatmul.mubr.f32.gmra.mrb[0].mxu0 %v1370
    %v1735 = vpop.f32.mrb[0].mxu0
    %v1736 = vadd.f32 0.0, %v1735
    %v1737 = vpop.f32.mrb[0].mxu0
    %1738 = vmatprep.mubr.f32.mxu0 %v1374
    %1739 = vmatmul.mubr.f32.gmra.mrb[0].mxu0 %v1373
    %v1740 = vpop.f32.mrb[0].mxu0
    %v1741 = vadd.f32 0.0, %v1740
    %v1742 = vpop.f32.mrb[0].mxu0
    %1743 = vmatprep.mubr.f32.mxu0 %v1377
    %1744 = vmatmul.mubr.f32.gmra.mrb[0].mxu0 %v1376
    %v1745 = vpop.f32.mrb[0].mxu0
    %v1746 = vadd.f32 0.0, %v1745
    %v1747 = vpop.f32.mrb[0].mxu0
    %1748 = vmatprep.mubr.f32.mxu0 %v1380
    %1749 = vmatmul.mubr.f32.gmra.mrb[0].mxu0 %v1379
    %v1750 = vpop.f32.mrb[0].mxu0
    %v1751 = vadd.f32 0.0, %v1750
    %v1752 = vpop.f32.mrb[0].mxu0
    %1753 = vmatprep.mubr.f32.mxu0 %v1383
    %1754 = vmatmul.mubr.f32.gmra.mrb[0].mxu0 %v1382
    %v1755 = vpop.f32.mrb[0].mxu0
    %v1756 = vadd.f32 0.0, %v1755
    %v1757 = vpop.f32.mrb[0].mxu0
    %1758 = vmatprep.mubr.f32.mxu0 %v1386
    %1759 = vmatmul.mubr.f32.gmra.mrb[0].mxu0 %v1385
    %v1760 = vpop.f32.mrb[0].mxu0
    %v1761 = vadd.f32 0.0, %v1760
    %v1762 = vpop.f32.mrb[0].mxu0
    %1763 = vmatprep.mubr.f32.mxu0 %v1389
    %1764 = vmatmul.mubr.f32.gmra.mrb[0].mxu0 %v1388
    %v1765 = vpop.f32.mrb[0].mxu0
    %v1766 = vadd.f32 0.0, %v1765
    %v1767 = vpop.f32.mrb[0].mxu0
    %1768 = vmatprep.mubr.f32.mxu0 %v1392
    %1769 = vmatmul.mubr.f32.gmra.mrb[0].mxu0 %v1391
    %v1770 = vpop.f32.mrb[0].mxu0
    %v1771 = vadd.f32 0.0, %v1770
    %v1772 = vpop.f32.mrb[0].mxu0
    %1773 = vmatprep.mubr.f32.mxu0 %v1395
    %1774 = vmatmul.mubr.f32.gmra.mrb[0].mxu0 %v1394
    %v1775 = vpop.f32.mrb[0].mxu0
    %v1776 = vadd.f32 0.0, %v1775
    %v1777 = vpop.f32.mrb[0].mxu0
    %1778 = vmatprep.mubr.f32.mxu0 %v1398
    %1779 = vmatmul.mubr.f32.gmra.mrb[0].mxu0 %v1397
    %v1780 = vpop.f32.mrb[0].mxu0
    %v1781 = vadd.f32 0.0, %v1780
    %v1782 = vpop.f32.mrb[0].mxu0
    %1783 = vmatprep.mubr.f32.mxu0 %v1401
    %1784 = vmatmul.mubr.f32.gmra.mrb[0].mxu0 %v1400
    %v1785 = vpop.f32.mrb[0].mxu0
    %v1786 = vadd.f32 0.0, %v1785
    %v1787 = vpop.f32.mrb[0].mxu0
    %1788 = vmatprep.mubr.f32.mxu0 %v1404
    %1789 = vmatmul.mubr.f32.gmra.mrb[0].mxu0 %v1403
    %v1790 = vpop.f32.mrb[0].mxu0
    %v1791 = vadd.f32 0.0, %v1790
    %v1792 = vpop.f32.mrb[0].mxu0
    %1793 = vmatprep.mubr.f32.mxu0 %v1407
    %1794 = vmatmul.mubr.f32.gmra.mrb[0].mxu0 %v1406
    %v1795 = vpop.f32.mrb[0].mxu0
    %v1796 = vadd.f32 0.0, %v1795
    %v1797 = vpop.f32.mrb[0].mxu0
    %1798 = vmatprep.mubr.f32.mxu0 %v1410
    %1799 = vmatmul.mubr.f32.gmra.mrb[0].mxu0 %v1409
    %v1800 = vpop.f32.mrb[0].mxu0
    %v1801 = vadd.f32 0.0, %v1800
    %v1802 = vpop.f32.mrb[0].mxu0
    %1803 = vmatprep.mubr.f32.mxu0 %v1413
    %1804 = vmatmul.mubr.f32.gmra.mrb[0].mxu0 %v1412
    %v1805 = vpop.f32.mrb[0].mxu0
    %v1806 = vadd.f32 0.0, %v1805
    %v1807 = vpop.f32.mrb[0].mxu0
    %1808 = vmatprep.mubr.f32.mxu0 %v1416
    %1809 = vmatmul.mubr.f32.gmra.mrb[0].mxu0 %v1415
    %v1810 = vpop.f32.mrb[0].mxu0
    %v1811 = vadd.f32 0.0, %v1810
    %v1812 = vpop.f32.mrb[0].mxu0
    %1813 = vmatprep.mubr.f32.mxu0 %v1419
    %1814 = vmatmul.mubr.f32.gmra.mrb[0].mxu0 %v1418
    %v1815 = vpop.f32.mrb[0].mxu0
    %v1816 = vadd.f32 0.0, %v1815
    %v1817 = vpop.f32.mrb[0].mxu0
    %1818 = vmatprep.mubr.f32.mxu0 %v1422
    %1819 = vmatmul.mubr.f32.gmra.mrb[0].mxu0 %v1421
    %v1820 = vpop.f32.mrb[0].mxu0
    %v1821 = vadd.f32 0.0, %v1820
    %v1822 = vpop.f32.mrb[0].mxu0
    %1823 = vmatprep.mubr.f32.mxu0 %v1425
    %1824 = vmatmul.mubr.f32.gmra.mrb[0].mxu0 %v1424
    %v1825 = vpop.f32.mrb[0].mxu0
    %v1826 = vadd.f32 0.0, %v1825
    %v1827 = vpop.f32.mrb[0].mxu0
    %1828 = vmatprep.mubr.f32.mxu0 %v1428
    %1829 = vmatmul.mubr.f32.gmra.mrb[0].mxu0 %v1427
    %v1830 = vpop.f32.mrb[0].mxu0
    %v1831 = vadd.f32 0.0, %v1830
    %v1832 = vpop.f32.mrb[0].mxu0
    %1833 = vmatprep.mubr.f32.mxu0 %v1431
    %1834 = vmatmul.mubr.f32.gmra.mrb[0].mxu0 %v1430
    %v1835 = vpop.f32.mrb[0].mxu0
    %v1836 = vadd.f32 0.0, %v1835
    %v1837 = vpop.f32.mrb[0].mxu0
    %1838 = vmatprep.mubr.f32.mxu0 %v1434
    %1839 = vmatmul.mubr.f32.gmra.mrb[0].mxu0 %v1433
    %v1840 = vpop.f32.mrb[0].mxu0
    %v1841 = vadd.f32 0.0, %v1840
    %v1842 = vpop.f32.mrb[0].mxu0
    %1843 = vmatprep.mubr.f32.mxu0 %v1437
    %1844 = vmatmul.mubr.f32.gmra.mrb[0].mxu0 %v1436
    %v1845 = vpop.f32.mrb[0].mxu0
    %v1846 = vadd.f32 0.0, %v1845
    %v1847 = vpop.f32.mrb[0].mxu0
    %1848 = vmatprep.mubr.f32.mxu0 %v1440
    %1849 = vmatmul.mubr.f32.gmra.mrb[0].mxu0 %v1439
    %v1850 = vpop.f32.mrb[0].mxu0
    %v1851 = vadd.f32 0.0, %v1850
    %v1852 = vpop.f32.mrb[0].mxu0
    %1853 = vmatprep.mubr.f32.mxu0 %v1443
    %1854 = vmatmul.mubr.f32.gmra.mrb[0].mxu0 %v1442
    %v1855 = vpop.f32.mrb[0].mxu0
    %v1856 = vadd.f32 0.0, %v1855
    %v1857 = vpop.f32.mrb[0].mxu0
    %1858 = vmatprep.mubr.f32.mxu0 %v1446
    %1859 = vmatmul.mubr.f32.gmra.mrb[0].mxu0 %v1445
    %v1860 = vpop.f32.mrb[0].mxu0
    %v1861 = vadd.f32 0.0, %v1860
    %v1862 = vpop.f32.mrb[0].mxu0
    %1863 = vmatprep.mubr.f32.mxu0 %v1449
    %1864 = vmatmul.mubr.f32.gmra.mrb[0].mxu0 %v1448
    %v1865 = vpop.f32.mrb[0].mxu0
    %v1866 = vadd.f32 0.0, %v1865
    %v1867 = vpop.f32.mrb[0].mxu0
    %1868 = vmatprep.mubr.f32.mxu0 %v1452
    %1869 = vmatmul.mubr.f32.gmra.mrb[0].mxu0 %v1451
    %v1870 = vpop.f32.mrb[0].mxu0
    %v1871 = vadd.f32 0.0, %v1870
    %v1872 = vpop.f32.mrb[0].mxu0
    %1873 = vmatprep.mubr.f32.mxu0 %v1455
    %1874 = vmatmul.mubr.f32.gmra.mrb[0].mxu0 %v1454
    %v1875 = vpop.f32.mrb[0].mxu0
    %v1876 = vadd.f32 0.0, %v1875
    %v1877 = vpop.f32.mrb[0].mxu0
    %1878 = vmatprep.mubr.f32.mxu0 %v1458
    %1879 = vmatmul.mubr.f32.gmra.mrb[0].mxu0 %v1457
    %v1880 = vpop.f32.mrb[0].mxu0
    %v1881 = vadd.f32 0.0, %v1880
    %v1882 = vpop.f32.mrb[0].mxu0
    %1883 = vmatprep.mubr.f32.mxu0 %v1461
    %1884 = vmatmul.mubr.f32.gmra.mrb[0].mxu0 %v1460
    %v1885 = vpop.f32.mrb[0].mxu0
    %v1886 = vadd.f32 0.0, %v1885
    %v1887 = vpop.f32.mrb[0].mxu0
    %1888 = vmatprep.mubr.f32.mxu0 %v1464
    %1889 = vmatmul.mubr.f32.gmra.mrb[0].mxu0 %v1463
    %v1890 = vpop.f32.mrb[0].mxu0
    %v1891 = vadd.f32 0.0, %v1890
    %v1892 = vpop.f32.mrb[0].mxu0
    %1893 = vmatprep.mubr.f32.mxu0 %v1467
    %1894 = vmatmul.mubr.f32.gmra.mrb[0].mxu0 %v1466
    %v1895 = vpop.f32.mrb[0].mxu0
    %v1896 = vadd.f32 0.0, %v1895
    %v1897 = vpop.f32.mrb[0].mxu0
    %1898 = vmatprep.mubr.f32.mxu0 %v1470
    %1899 = vmatmul.mubr.f32.gmra.mrb[0].mxu0 %v1469
    %v1900 = vpop.f32.mrb[0].mxu0
    %v1901 = vadd.f32 0.0, %v1900
    %v1902 = vpop.f32.mrb[0].mxu0
    %1903 = vmatprep.mubr.f32.mxu0 %v1473
    %1904 = vmatmul.mubr.f32.gmra.mrb[0].mxu0 %v1472
    %v1905 = vpop.f32.mrb[0].mxu0
    %v1906 = vadd.f32 0.0, %v1905
    %v1907 = vpop.f32.mrb[0].mxu0
    %1908 = vdwg.mxu0
    %1909 = vmatprep.subr.mxu0 0.0
    %1910 = vmatpush1.msra.mxu0 %v1508
    %1911 = vmatprep.subr.mxu0 0.0
    %1912 = vmatpush1.msra.mxu0 %v1509
    %1913 = vmatprep.subr.mxu0 0.0
    %1914 = vmatpush1.msra.mxu0 %v1510
    %1915 = vmatprep.subr.mxu0 0.0
    %1916 = vmatpush1.msra.mxu0 %v1511
    %1917 = vmatprep.subr.mxu0 0.0
    %1918 = vmatpush1.msra.mxu0 %v1512
    %1919 = vmatprep.subr.mxu0 0.0
    %1920 = vmatpush1.msra.mxu0 %v1513
    %1921 = vmatprep.subr.mxu0 0.0
    %1922 = vmatpush1.msra.mxu0 %v1514
    %1923 = vmatprep.subr.mxu0 0.0
    %1924 = vmatpush1.msra.mxu0 %v1515
    %1925 = vmatprep.subr.mxu0 0.0
    %1926 = vmatpush1.msra.mxu0 %v1516
    %1927 = vmatprep.subr.mxu0 0.0
    %1928 = vmatpush1.msra.mxu0 %v1517
    %1929 = vmatprep.subr.mxu0 0.0
    %1930 = vmatpush1.msra.mxu0 %v1518
    %1931 = vmatprep.subr.mxu0 0.0
    %1932 = vmatpush1.msra.mxu0 %v1519
    %1933 = vmatprep.subr.mxu0 0.0
    %1934 = vmatpush1.msra.mxu0 %v1520
    %1935 = vmatprep.subr.mxu0 0.0
    %1936 = vmatpush1.msra.mxu0 %v1521
    %1937 = vmatprep.subr.mxu0 0.0
    %1938 = vmatpush1.msra.mxu0 %v1522
    %1939 = vmatprep.subr.mxu0 0.0
    %1940 = vmatpush1.msra.mxu0 %v1523
    %1941 = vmatprep.subr.mxu0 0.0
    %1942 = vmatpush1.msra.mxu0 0.0
    %1943 = vmatprep.subr.mxu0 0.0
    %1944 = vmatpush1.msra.mxu0 0.0
    %1945 = vmatprep.subr.mxu0 0.0
    %1946 = vmatpush1.msra.mxu0 0.0
    %1947 = vmatprep.subr.mxu0 0.0
    %1948 = vmatpush1.msra.mxu0 0.0
    %1949 = vmatprep.subr.mxu0 0.0
    %1950 = vmatpush1.msra.mxu0 0.0
    %1951 = vmatprep.subr.mxu0 0.0
    %1952 = vmatpush1.msra.mxu0 0.0
    %1953 = vmatprep.subr.mxu0 0.0
    %1954 = vmatpush1.msra.mxu0 0.0
    %1955 = vmatprep.subr.mxu0 0.0
    %1956 = vmatpush1.msra.mxu0 0.0
    %1957 = vmatprep.subr.mxu0 0.0
    %1958 = vmatpush1.msra.mxu0 0.0
    %1959 = vmatprep.subr.mxu0 0.0
    %1960 = vmatpush1.msra.mxu0 0.0
    %1961 = vmatprep.subr.mxu0 0.0
    %1962 = vmatpush1.msra.mxu0 0.0
    %1963 = vmatprep.subr.mxu0 0.0
    %1964 = vmatpush1.msra.mxu0 0.0
    %1965 = vmatprep.subr.mxu0 0.0
    %1966 = vmatpush1.msra.mxu0 0.0
    %1967 = vmatprep.subr.mxu0 0.0
    %1968 = vmatpush1.msra.mxu0 0.0
    %1969 = vmatprep.subr.mxu0 0.0
    %1970 = vmatpush1.msra.mxu0 0.0
    %1971 = vmatprep.subr.mxu0 0.0
    %1972 = vmatpush1.msra.mxu0 0.0
    %1973 = vmatprep.mubr.f32.mxu0 0.0
    %1974 = vmatmul.mubr.f32.gmra.mrb[0].mxu0 %v1285
    %v1975 = vpop.f32.mrb[0].mxu0
    %v1976 = vadd.f32 %v1591, %v1975
    %v1977 = vpop.f32.mrb[0].mxu0
    %1978 = vmatprep.mubr.f32.mxu0 0.0
    %1979 = vmatmul.mubr.f32.gmra.mrb[0].mxu0 %v1288
    %v1980 = vpop.f32.mrb[0].mxu0
    %v1981 = vadd.f32 %v1596, %v1980
    %v1982 = vpop.f32.mrb[0].mxu0
    %1983 = vmatprep.mubr.f32.mxu0 0.0
    %1984 = vmatmul.mubr.f32.gmra.mrb[0].mxu0 %v1291
    %v1985 = vpop.f32.mrb[0].mxu0
    %v1986 = vadd.f32 %v1601, %v1985
    %v1987 = vpop.f32.mrb[0].mxu0
    %1988 = vmatprep.mubr.f32.mxu0 0.0
    %1989 = vmatmul.mubr.f32.gmra.mrb[0].mxu0 %v1294
    %v1990 = vpop.f32.mrb[0].mxu0
    %v1991 = vadd.f32 %v1606, %v1990
    %v1992 = vpop.f32.mrb[0].mxu0
    %1993 = vmatprep.mubr.f32.mxu0 0.0
    %1994 = vmatmul.mubr.f32.gmra.mrb[0].mxu0 %v1297
    %v1995 = vpop.f32.mrb[0].mxu0
    %v1996 = vadd.f32 %v1611, %v1995
    %v1997 = vpop.f32.mrb[0].mxu0
    %1998 = vmatprep.mubr.f32.mxu0 0.0
    %1999 = vmatmul.mubr.f32.gmra.mrb[0].mxu0 %v1300
    %v2000 = vpop.f32.mrb[0].mxu0
    %v2001 = vadd.f32 %v1616, %v2000
    %v2002 = vpop.f32.mrb[0].mxu0
    %2003 = vmatprep.mubr.f32.mxu0 0.0
    %2004 = vmatmul.mubr.f32.gmra.mrb[0].mxu0 %v1303
    %v2005 = vpop.f32.mrb[0].mxu0
    %v2006 = vadd.f32 %v1621, %v2005
    %v2007 = vpop.f32.mrb[0].mxu0
    %2008 = vmatprep.mubr.f32.mxu0 0.0
    %2009 = vmatmul.mubr.f32.gmra.mrb[0].mxu0 %v1306
    %v2010 = vpop.f32.mrb[0].mxu0
    %v2011 = vadd.f32 %v1626, %v2010
    %v2012 = vpop.f32.mrb[0].mxu0
    %2013 = vmatprep.mubr.f32.mxu0 0.0
    %2014 = vmatmul.mubr.f32.gmra.mrb[0].mxu0 %v1309
    %v2015 = vpop.f32.mrb[0].mxu0
    %v2016 = vadd.f32 %v1631, %v2015
    %v2017 = vpop.f32.mrb[0].mxu0
    %2018 = vmatprep.mubr.f32.mxu0 0.0
    %2019 = vmatmul.mubr.f32.gmra.mrb[0].mxu0 %v1312
    %v2020 = vpop.f32.mrb[0].mxu0
    %v2021 = vadd.f32 %v1636, %v2020
    %v2022 = vpop.f32.mrb[0].mxu0
    %2023 = vmatprep.mubr.f32.mxu0 0.0
    %2024 = vmatmul.mubr.f32.gmra.mrb[0].mxu0 %v1315
    %v2025 = vpop.f32.mrb[0].mxu0
    %v2026 = vadd.f32 %v1641, %v2025
    %v2027 = vpop.f32.mrb[0].mxu0
    %2028 = vmatprep.mubr.f32.mxu0 0.0
    %2029 = vmatmul.mubr.f32.gmra.mrb[0].mxu0 %v1318
    %v2030 = vpop.f32.mrb[0].mxu0
    %v2031 = vadd.f32 %v1646, %v2030
    %v2032 = vpop.f32.mrb[0].mxu0
    %2033 = vmatprep.mubr.f32.mxu0 0.0
    %2034 = vmatmul.mubr.f32.gmra.mrb[0].mxu0 %v1321
    %v2035 = vpop.f32.mrb[0].mxu0
    %v2036 = vadd.f32 %v1651, %v2035
    %v2037 = vpop.f32.mrb[0].mxu0
    %2038 = vmatprep.mubr.f32.mxu0 0.0
    %2039 = vmatmul.mubr.f32.gmra.mrb[0].mxu0 %v1324
    %v2040 = vpop.f32.mrb[0].mxu0
    %v2041 = vadd.f32 %v1656, %v2040
    %v2042 = vpop.f32.mrb[0].mxu0
    %2043 = vmatprep.mubr.f32.mxu0 0.0
    %2044 = vmatmul.mubr.f32.gmra.mrb[0].mxu0 %v1327
    %v2045 = vpop.f32.mrb[0].mxu0
    %v2046 = vadd.f32 %v1661, %v2045
    %v2047 = vpop.f32.mrb[0].mxu0
    %2048 = vmatprep.mubr.f32.mxu0 0.0
    %2049 = vmatmul.mubr.f32.gmra.mrb[0].mxu0 %v1330
    %v2050 = vpop.f32.mrb[0].mxu0
    %v2051 = vadd.f32 %v1666, %v2050
    %v2052 = vpop.f32.mrb[0].mxu0
    %2053 = vmatprep.mubr.f32.mxu0 0.0
    %2054 = vmatmul.mubr.f32.gmra.mrb[0].mxu0 %v1333
    %v2055 = vpop.f32.mrb[0].mxu0
    %v2056 = vadd.f32 %v1671, %v2055
    %v2057 = vpop.f32.mrb[0].mxu0
    %2058 = vmatprep.mubr.f32.mxu0 0.0
    %2059 = vmatmul.mubr.f32.gmra.mrb[0].mxu0 %v1336
    %v2060 = vpop.f32.mrb[0].mxu0
    %v2061 = vadd.f32 %v1676, %v2060
    %v2062 = vpop.f32.mrb[0].mxu0
    %2063 = vmatprep.mubr.f32.mxu0 0.0
    %2064 = vmatmul.mubr.f32.gmra.mrb[0].mxu0 %v1339
    %v2065 = vpop.f32.mrb[0].mxu0
    %v2066 = vadd.f32 %v1681, %v2065
    %v2067 = vpop.f32.mrb[0].mxu0
    %2068 = vmatprep.mubr.f32.mxu0 0.0
    %2069 = vmatmul.mubr.f32.gmra.mrb[0].mxu0 %v1342
    %v2070 = vpop.f32.mrb[0].mxu0
    %v2071 = vadd.f32 %v1686, %v2070
    %v2072 = vpop.f32.mrb[0].mxu0
    %2073 = vmatprep.mubr.f32.mxu0 0.0
    %2074 = vmatmul.mubr.f32.gmra.mrb[0].mxu0 %v1345
    %v2075 = vpop.f32.mrb[0].mxu0
    %v2076 = vadd.f32 %v1691, %v2075
    %v2077 = vpop.f32.mrb[0].mxu0
    %2078 = vmatprep.mubr.f32.mxu0 0.0
    %2079 = vmatmul.mubr.f32.gmra.mrb[0].mxu0 %v1348
    %v2080 = vpop.f32.mrb[0].mxu0
    %v2081 = vadd.f32 %v1696, %v2080
    %v2082 = vpop.f32.mrb[0].mxu0
    %2083 = vmatprep.mubr.f32.mxu0 0.0
    %2084 = vmatmul.mubr.f32.gmra.mrb[0].mxu0 %v1351
    %v2085 = vpop.f32.mrb[0].mxu0
    %v2086 = vadd.f32 %v1701, %v2085
    %v2087 = vpop.f32.mrb[0].mxu0
    %2088 = vmatprep.mubr.f32.mxu0 0.0
    %2089 = vmatmul.mubr.f32.gmra.mrb[0].mxu0 %v1354
    %v2090 = vpop.f32.mrb[0].mxu0
    %v2091 = vadd.f32 %v1706, %v2090
    %v2092 = vpop.f32.mrb[0].mxu0
    %2093 = vmatprep.mubr.f32.mxu0 0.0
    %2094 = vmatmul.mubr.f32.gmra.mrb[0].mxu0 %v1357
    %v2095 = vpop.f32.mrb[0].mxu0
    %v2096 = vadd.f32 %v1711, %v2095
    %v2097 = vpop.f32.mrb[0].mxu0
    %2098 = vmatprep.mubr.f32.mxu0 0.0
    %2099 = vmatmul.mubr.f32.gmra.mrb[0].mxu0 %v1360
    %v2100 = vpop.f32.mrb[0].mxu0
    %v2101 = vadd.f32 %v1716, %v2100
    %v2102 = vpop.f32.mrb[0].mxu0
    %2103 = vmatprep.mubr.f32.mxu0 0.0
    %2104 = vmatmul.mubr.f32.gmra.mrb[0].mxu0 %v1363
    %v2105 = vpop.f32.mrb[0].mxu0
    %v2106 = vadd.f32 %v1721, %v2105
    %v2107 = vpop.f32.mrb[0].mxu0
    %2108 = vmatprep.mubr.f32.mxu0 0.0
    %2109 = vmatmul.mubr.f32.gmra.mrb[0].mxu0 %v1366
    %v2110 = vpop.f32.mrb[0].mxu0
    %v2111 = vadd.f32 %v1726, %v2110
    %v2112 = vpop.f32.mrb[0].mxu0
    %2113 = vmatprep.mubr.f32.mxu0 0.0
    %2114 = vmatmul.mubr.f32.gmra.mrb[0].mxu0 %v1369
    %v2115 = vpop.f32.mrb[0].mxu0
    %v2116 = vadd.f32 %v1731, %v2115
    %v2117 = vpop.f32.mrb[0].mxu0
    %2118 = vmatprep.mubr.f32.mxu0 0.0
    %2119 = vmatmul.mubr.f32.gmra.mrb[0].mxu0 %v1372
    %v2120 = vpop.f32.mrb[0].mxu0
    %v2121 = vadd.f32 %v1736, %v2120
    %v2122 = vpop.f32.mrb[0].mxu0
    %2123 = vmatprep.mubr.f32.mxu0 0.0
    %2124 = vmatmul.mubr.f32.gmra.mrb[0].mxu0 %v1375
    %v2125 = vpop.f32.mrb[0].mxu0
    %v2126 = vadd.f32 %v1741, %v2125
    %v2127 = vpop.f32.mrb[0].mxu0
    %2128 = vmatprep.mubr.f32.mxu0 0.0
    %2129 = vmatmul.mubr.f32.gmra.mrb[0].mxu0 %v1378
    %v2130 = vpop.f32.mrb[0].mxu0
    %v2131 = vadd.f32 %v1746, %v2130
    %v2132 = vpop.f32.mrb[0].mxu0
    %2133 = vmatprep.mubr.f32.mxu0 0.0
    %2134 = vmatmul.mubr.f32.gmra.mrb[0].mxu0 %v1381
    %v2135 = vpop.f32.mrb[0].mxu0
    %v2136 = vadd.f32 %v1751, %v2135
    %v2137 = vpop.f32.mrb[0].mxu0
    %2138 = vmatprep.mubr.f32.mxu0 0.0
    %2139 = vmatmul.mubr.f32.gmra.mrb[0].mxu0 %v1384
    %v2140 = vpop.f32.mrb[0].mxu0
    %v2141 = vadd.f32 %v1756, %v2140
    %v2142 = vpop.f32.mrb[0].mxu0
    %2143 = vmatprep.mubr.f32.mxu0 0.0
    %2144 = vmatmul.mubr.f32.gmra.mrb[0].mxu0 %v1387
    %v2145 = vpop.f32.mrb[0].mxu0
    %v2146 = vadd.f32 %v1761, %v2145
    %v2147 = vpop.f32.mrb[0].mxu0
    %2148 = vmatprep.mubr.f32.mxu0 0.0
    %2149 = vmatmul.mubr.f32.gmra.mrb[0].mxu0 %v1390
    %v2150 = vpop.f32.mrb[0].mxu0
    %v2151 = vadd.f32 %v1766, %v2150
    %v2152 = vpop.f32.mrb[0].mxu0
    %2153 = vmatprep.mubr.f32.mxu0 0.0
    %2154 = vmatmul.mubr.f32.gmra.mrb[0].mxu0 %v1393
    %v2155 = vpop.f32.mrb[0].mxu0
    %v2156 = vadd.f32 %v1771, %v2155
    %v2157 = vpop.f32.mrb[0].mxu0
    %2158 = vmatprep.mubr.f32.mxu0 0.0
    %2159 = vmatmul.mubr.f32.gmra.mrb[0].mxu0 %v1396
    %v2160 = vpop.f32.mrb[0].mxu0
    %v2161 = vadd.f32 %v1776, %v2160
    %v2162 = vpop.f32.mrb[0].mxu0
    %2163 = vmatprep.mubr.f32.mxu0 0.0
    %2164 = vmatmul.mubr.f32.gmra.mrb[0].mxu0 %v1399
    %v2165 = vpop.f32.mrb[0].mxu0
    %v2166 = vadd.f32 %v1781, %v2165
    %v2167 = vpop.f32.mrb[0].mxu0
    %2168 = vmatprep.mubr.f32.mxu0 0.0
    %2169 = vmatmul.mubr.f32.gmra.mrb[0].mxu0 %v1402
    %v2170 = vpop.f32.mrb[0].mxu0
    %v2171 = vadd.f32 %v1786, %v2170
    %v2172 = vpop.f32.mrb[0].mxu0
    %2173 = vmatprep.mubr.f32.mxu0 0.0
    %2174 = vmatmul.mubr.f32.gmra.mrb[0].mxu0 %v1405
    %v2175 = vpop.f32.mrb[0].mxu0
    %v2176 = vadd.f32 %v1791, %v2175
    %v2177 = vpop.f32.mrb[0].mxu0
    %2178 = vmatprep.mubr.f32.mxu0 0.0
    %2179 = vmatmul.mubr.f32.gmra.mrb[0].mxu0 %v1408
    %v2180 = vpop.f32.mrb[0].mxu0
    %v2181 = vadd.f32 %v1796, %v2180
    %v2182 = vpop.f32.mrb[0].mxu0
    %2183 = vmatprep.mubr.f32.mxu0 0.0
    %2184 = vmatmul.mubr.f32.gmra.mrb[0].mxu0 %v1411
    %v2185 = vpop.f32.mrb[0].mxu0
    %v2186 = vadd.f32 %v1801, %v2185
    %v2187 = vpop.f32.mrb[0].mxu0
    %2188 = vmatprep.mubr.f32.mxu0 0.0
    %2189 = vmatmul.mubr.f32.gmra.mrb[0].mxu0 %v1414
    %v2190 = vpop.f32.mrb[0].mxu0
    %v2191 = vadd.f32 %v1806, %v2190
    %v2192 = vpop.f32.mrb[0].mxu0
    %2193 = vmatprep.mubr.f32.mxu0 0.0
    %2194 = vmatmul.mubr.f32.gmra.mrb[0].mxu0 %v1417
    %v2195 = vpop.f32.mrb[0].mxu0
    %v2196 = vadd.f32 %v1811, %v2195
    %v2197 = vpop.f32.mrb[0].mxu0
    %2198 = vmatprep.mubr.f32.mxu0 0.0
    %2199 = vmatmul.mubr.f32.gmra.mrb[0].mxu0 %v1420
    %v2200 = vpop.f32.mrb[0].mxu0
    %v2201 = vadd.f32 %v1816, %v2200
    %v2202 = vpop.f32.mrb[0].mxu0
    %2203 = vmatprep.mubr.f32.mxu0 0.0
    %2204 = vmatmul.mubr.f32.gmra.mrb[0].mxu0 %v1423
    %v2205 = vpop.f32.mrb[0].mxu0
    %v2206 = vadd.f32 %v1821, %v2205
    %v2207 = vpop.f32.mrb[0].mxu0
    %2208 = vmatprep.mubr.f32.mxu0 0.0
    %2209 = vmatmul.mubr.f32.gmra.mrb[0].mxu0 %v1426
    %v2210 = vpop.f32.mrb[0].mxu0
    %v2211 = vadd.f32 %v1826, %v2210
    %v2212 = vpop.f32.mrb[0].mxu0
    %2213 = vmatprep.mubr.f32.mxu0 0.0
    %2214 = vmatmul.mubr.f32.gmra.mrb[0].mxu0 %v1429
    %v2215 = vpop.f32.mrb[0].mxu0
    %v2216 = vadd.f32 %v1831, %v2215
    %v2217 = vpop.f32.mrb[0].mxu0
    %2218 = vmatprep.mubr.f32.mxu0 0.0
    %2219 = vmatmul.mubr.f32.gmra.mrb[0].mxu0 %v1432
    %v2220 = vpop.f32.mrb[0].mxu0
    %v2221 = vadd.f32 %v1836, %v2220
    %v2222 = vpop.f32.mrb[0].mxu0
    %2223 = vmatprep.mubr.f32.mxu0 0.0
    %2224 = vmatmul.mubr.f32.gmra.mrb[0].mxu0 %v1435
    %v2225 = vpop.f32.mrb[0].mxu0
    %v2226 = vadd.f32 %v1841, %v2225
    %v2227 = vpop.f32.mrb[0].mxu0
    %2228 = vmatprep.mubr.f32.mxu0 0.0
    %2229 = vmatmul.mubr.f32.gmra.mrb[0].mxu0 %v1438
    %v2230 = vpop.f32.mrb[0].mxu0
    %v2231 = vadd.f32 %v1846, %v2230
    %v2232 = vpop.f32.mrb[0].mxu0
    %2233 = vmatprep.mubr.f32.mxu0 0.0
    %2234 = vmatmul.mubr.f32.gmra.mrb[0].mxu0 %v1441
    %v2235 = vpop.f32.mrb[0].mxu0
    %v2236 = vadd.f32 %v1851, %v2235
    %v2237 = vpop.f32.mrb[0].mxu0
    %2238 = vmatprep.mubr.f32.mxu0 0.0
    %2239 = vmatmul.mubr.f32.gmra.mrb[0].mxu0 %v1444
    %v2240 = vpop.f32.mrb[0].mxu0
    %v2241 = vadd.f32 %v1856, %v2240
    %v2242 = vpop.f32.mrb[0].mxu0
    %2243 = vmatprep.mubr.f32.mxu0 0.0
    %2244 = vmatmul.mubr.f32.gmra.mrb[0].mxu0 %v1447
    %v2245 = vpop.f32.mrb[0].mxu0
    %v2246 = vadd.f32 %v1861, %v2245
    %v2247 = vpop.f32.mrb[0].mxu0
    %2248 = vmatprep.mubr.f32.mxu0 0.0
    %2249 = vmatmul.mubr.f32.gmra.mrb[0].mxu0 %v1450
    %v2250 = vpop.f32.mrb[0].mxu0
    %v2251 = vadd.f32 %v1866, %v2250
    %v2252 = vpop.f32.mrb[0].mxu0
    %2253 = vmatprep.mubr.f32.mxu0 0.0
    %2254 = vmatmul.mubr.f32.gmra.mrb[0].mxu0 %v1453
    %v2255 = vpop.f32.mrb[0].mxu0
    %v2256 = vadd.f32 %v1871, %v2255
    %v2257 = vpop.f32.mrb[0].mxu0
    %2258 = vmatprep.mubr.f32.mxu0 0.0
    %2259 = vmatmul.mubr.f32.gmra.mrb[0].mxu0 %v1456
    %v2260 = vpop.f32.mrb[0].mxu0
    %v2261 = vadd.f32 %v1876, %v2260
    %v2262 = vpop.f32.mrb[0].mxu0
    %2263 = vmatprep.mubr.f32.mxu0 0.0
    %2264 = vmatmul.mubr.f32.gmra.mrb[0].mxu0 %v1459
    %v2265 = vpop.f32.mrb[0].mxu0
    %v2266 = vadd.f32 %v1881, %v2265
    %v2267 = vpop.f32.mrb[0].mxu0
    %2268 = vmatprep.mubr.f32.mxu0 0.0
    %2269 = vmatmul.mubr.f32.gmra.mrb[0].mxu0 %v1462
    %v2270 = vpop.f32.mrb[0].mxu0
    %v2271 = vadd.f32 %v1886, %v2270
    %v2272 = vpop.f32.mrb[0].mxu0
    %2273 = vmatprep.mubr.f32.mxu0 0.0
    %2274 = vmatmul.mubr.f32.gmra.mrb[0].mxu0 %v1465
    %v2275 = vpop.f32.mrb[0].mxu0
    %v2276 = vadd.f32 %v1891, %v2275
    %v2277 = vpop.f32.mrb[0].mxu0
    %2278 = vmatprep.mubr.f32.mxu0 0.0
    %2279 = vmatmul.mubr.f32.gmra.mrb[0].mxu0 %v1468
    %v2280 = vpop.f32.mrb[0].mxu0
    %v2281 = vadd.f32 %v1896, %v2280
    %v2282 = vpop.f32.mrb[0].mxu0
    %2283 = vmatprep.mubr.f32.mxu0 0.0
    %2284 = vmatmul.mubr.f32.gmra.mrb[0].mxu0 %v1471
    %v2285 = vpop.f32.mrb[0].mxu0
    %v2286 = vadd.f32 %v1901, %v2285
    %v2287 = vpop.f32.mrb[0].mxu0
    %2288 = vmatprep.mubr.f32.mxu0 0.0
    %2289 = vmatmul.mubr.f32.gmra.mrb[0].mxu0 %v1474
    %v2290 = vpop.f32.mrb[0].mxu0
    %v2291 = vadd.f32 %v1906, %v2290
    %v2292 = vpop.f32.mrb[0].mxu0
    %2293 = vdwg.mxu0
    %2294 = vmatprep.subr.mxu0 0.0
    %2295 = vmatpush1.msra.mxu0 %v1235
    %2296 = vmatprep.subr.mxu0 0.0
    %2297 = vmatpush1.msra.mxu0 %v1236
    %2298 = vmatprep.subr.mxu0 0.0
    %2299 = vmatpush1.msra.mxu0 %v1237
    %2300 = vmatprep.subr.mxu0 0.0
    %2301 = vmatpush1.msra.mxu0 %v1238
    %2302 = vmatprep.subr.mxu0 0.0
    %2303 = vmatpush1.msra.mxu0 %v1239
    %2304 = vmatprep.subr.mxu0 0.0
    %2305 = vmatpush1.msra.mxu0 %v1240
    %2306 = vmatprep.subr.mxu0 0.0
    %2307 = vmatpush1.msra.mxu0 %v1241
    %2308 = vmatprep.subr.mxu0 0.0
    %2309 = vmatpush1.msra.mxu0 %v1242
    %2310 = vmatprep.subr.mxu0 0.0
    %2311 = vmatpush1.msra.mxu0 %v1243
    %2312 = vmatprep.subr.mxu0 0.0
    %2313 = vmatpush1.msra.mxu0 %v1244
    %2314 = vmatprep.subr.mxu0 0.0
    %2315 = vmatpush1.msra.mxu0 %v1245
    %2316 = vmatprep.subr.mxu0 0.0
    %2317 = vmatpush1.msra.mxu0 %v1246
    %2318 = vmatprep.subr.mxu0 0.0
    %2319 = vmatpush1.msra.mxu0 %v1247
    %2320 = vmatprep.subr.mxu0 0.0
    %2321 = vmatpush1.msra.mxu0 %v1248
    %2322 = vmatprep.subr.mxu0 0.0
    %2323 = vmatpush1.msra.mxu0 %v1249
    %2324 = vmatprep.subr.mxu0 0.0
    %2325 = vmatpush1.msra.mxu0 %v1250
    %2326 = vmatprep.subr.mxu0 0.0
    %2327 = vmatpush1.msra.mxu0 %v1251
    %2328 = vmatprep.subr.mxu0 0.0
    %2329 = vmatpush1.msra.mxu0 %v1252
    %2330 = vmatprep.subr.mxu0 0.0
    %2331 = vmatpush1.msra.mxu0 %v1253
    %2332 = vmatprep.subr.mxu0 0.0
    %2333 = vmatpush1.msra.mxu0 %v1254
    %2334 = vmatprep.subr.mxu0 0.0
    %2335 = vmatpush1.msra.mxu0 %v1255
    %2336 = vmatprep.subr.mxu0 0.0
    %2337 = vmatpush1.msra.mxu0 %v1256
    %2338 = vmatprep.subr.mxu0 0.0
    %2339 = vmatpush1.msra.mxu0 %v1257
    %2340 = vmatprep.subr.mxu0 0.0
    %2341 = vmatpush1.msra.mxu0 %v1258
    %2342 = vmatprep.subr.mxu0 0.0
    %2343 = vmatpush1.msra.mxu0 %v1259
    %2344 = vmatprep.subr.mxu0 0.0
    %2345 = vmatpush1.msra.mxu0 %v1260
    %2346 = vmatprep.subr.mxu0 0.0
    %2347 = vmatpush1.msra.mxu0 %v1261
    %2348 = vmatprep.subr.mxu0 0.0
    %2349 = vmatpush1.msra.mxu0 %v1262
    %2350 = vmatprep.subr.mxu0 0.0
    %2351 = vmatpush1.msra.mxu0 %v1263
    %2352 = vmatprep.subr.mxu0 0.0
    %2353 = vmatpush1.msra.mxu0 %v1264
    %2354 = vmatprep.subr.mxu0 0.0
    %2355 = vmatpush1.msra.mxu0 %v1265
    %2356 = vmatprep.subr.mxu0 0.0
    %2357 = vmatpush1.msra.mxu0 %v1266
    %2358 = vmatprep.mubr.f32.mxu0 %v1044
    %2359 = vmatmul.mubr.f32.gmra.mrb[0].mxu0 %v1043
    %v2360 = vpop.f32.mrb[0].mxu0
    %v2361 = vadd.f32 %v1976, %v2360
    %v2362 = vpop.f32.mrb[0].mxu0
    %2363 = vmatprep.mubr.f32.mxu0 %v1047
    %2364 = vmatmul.mubr.f32.gmra.mrb[0].mxu0 %v1046
    %v2365 = vpop.f32.mrb[0].mxu0
    %v2366 = vadd.f32 %v1981, %v2365
    %v2367 = vpop.f32.mrb[0].mxu0
    %2368 = vmatprep.mubr.f32.mxu0 %v1050
    %2369 = vmatmul.mubr.f32.gmra.mrb[0].mxu0 %v1049
    %v2370 = vpop.f32.mrb[0].mxu0
    %v2371 = vadd.f32 %v1986, %v2370
    %v2372 = vpop.f32.mrb[0].mxu0
    %2373 = vmatprep.mubr.f32.mxu0 %v1053
    %2374 = vmatmul.mubr.f32.gmra.mrb[0].mxu0 %v1052
    %v2375 = vpop.f32.mrb[0].mxu0
    %v2376 = vadd.f32 %v1991, %v2375
    %v2377 = vpop.f32.mrb[0].mxu0
    %2378 = vmatprep.mubr.f32.mxu0 %v1056
    %2379 = vmatmul.mubr.f32.gmra.mrb[0].mxu0 %v1055
    %v2380 = vpop.f32.mrb[0].mxu0
    %v2381 = vadd.f32 %v1996, %v2380
    %v2382 = vpop.f32.mrb[0].mxu0
    %2383 = vmatprep.mubr.f32.mxu0 %v1059
    %2384 = vmatmul.mubr.f32.gmra.mrb[0].mxu0 %v1058
    %v2385 = vpop.f32.mrb[0].mxu0
    %v2386 = vadd.f32 %v2001, %v2385
    %v2387 = vpop.f32.mrb[0].mxu0
    %2388 = vmatprep.mubr.f32.mxu0 %v1062
    %2389 = vmatmul.mubr.f32.gmra.mrb[0].mxu0 %v1061
    %v2390 = vpop.f32.mrb[0].mxu0
    %v2391 = vadd.f32 %v2006, %v2390
    %v2392 = vpop.f32.mrb[0].mxu0
    %2393 = vmatprep.mubr.f32.mxu0 %v1065
    %2394 = vmatmul.mubr.f32.gmra.mrb[0].mxu0 %v1064
    %v2395 = vpop.f32.mrb[0].mxu0
    %v2396 = vadd.f32 %v2011, %v2395
    %v2397 = vpop.f32.mrb[0].mxu0
    %2398 = vmatprep.mubr.f32.mxu0 %v1068
    %2399 = vmatmul.mubr.f32.gmra.mrb[0].mxu0 %v1067
    %v2400 = vpop.f32.mrb[0].mxu0
    %v2401 = vadd.f32 %v2016, %v2400
    %v2402 = vpop.f32.mrb[0].mxu0
    %2403 = vmatprep.mubr.f32.mxu0 %v1071
    %2404 = vmatmul.mubr.f32.gmra.mrb[0].mxu0 %v1070
    %v2405 = vpop.f32.mrb[0].mxu0
    %v2406 = vadd.f32 %v2021, %v2405
    %v2407 = vpop.f32.mrb[0].mxu0
    %2408 = vmatprep.mubr.f32.mxu0 %v1074
    %2409 = vmatmul.mubr.f32.gmra.mrb[0].mxu0 %v1073
    %v2410 = vpop.f32.mrb[0].mxu0
    %v2411 = vadd.f32 %v2026, %v2410
    %v2412 = vpop.f32.mrb[0].mxu0
    %2413 = vmatprep.mubr.f32.mxu0 %v1077
    %2414 = vmatmul.mubr.f32.gmra.mrb[0].mxu0 %v1076
    %v2415 = vpop.f32.mrb[0].mxu0
    %v2416 = vadd.f32 %v2031, %v2415
    %v2417 = vpop.f32.mrb[0].mxu0
    %2418 = vmatprep.mubr.f32.mxu0 %v1080
    %2419 = vmatmul.mubr.f32.gmra.mrb[0].mxu0 %v1079
    %v2420 = vpop.f32.mrb[0].mxu0
    %v2421 = vadd.f32 %v2036, %v2420
    %v2422 = vpop.f32.mrb[0].mxu0
    %2423 = vmatprep.mubr.f32.mxu0 %v1083
    %2424 = vmatmul.mubr.f32.gmra.mrb[0].mxu0 %v1082
    %v2425 = vpop.f32.mrb[0].mxu0
    %v2426 = vadd.f32 %v2041, %v2425
    %v2427 = vpop.f32.mrb[0].mxu0
    %2428 = vmatprep.mubr.f32.mxu0 %v1086
    %2429 = vmatmul.mubr.f32.gmra.mrb[0].mxu0 %v1085
    %v2430 = vpop.f32.mrb[0].mxu0
    %v2431 = vadd.f32 %v2046, %v2430
    %v2432 = vpop.f32.mrb[0].mxu0
    %2433 = vmatprep.mubr.f32.mxu0 %v1089
    %2434 = vmatmul.mubr.f32.gmra.mrb[0].mxu0 %v1088
    %v2435 = vpop.f32.mrb[0].mxu0
    %v2436 = vadd.f32 %v2051, %v2435
    %v2437 = vpop.f32.mrb[0].mxu0
    %2438 = vmatprep.mubr.f32.mxu0 %v1092
    %2439 = vmatmul.mubr.f32.gmra.mrb[0].mxu0 %v1091
    %v2440 = vpop.f32.mrb[0].mxu0
    %v2441 = vadd.f32 %v2056, %v2440
    %v2442 = vpop.f32.mrb[0].mxu0
    %2443 = vmatprep.mubr.f32.mxu0 %v1095
    %2444 = vmatmul.mubr.f32.gmra.mrb[0].mxu0 %v1094
    %v2445 = vpop.f32.mrb[0].mxu0
    %v2446 = vadd.f32 %v2061, %v2445
    %v2447 = vpop.f32.mrb[0].mxu0
    %2448 = vmatprep.mubr.f32.mxu0 %v1098
    %2449 = vmatmul.mubr.f32.gmra.mrb[0].mxu0 %v1097
    %v2450 = vpop.f32.mrb[0].mxu0
    %v2451 = vadd.f32 %v2066, %v2450
    %v2452 = vpop.f32.mrb[0].mxu0
    %2453 = vmatprep.mubr.f32.mxu0 %v1101
    %2454 = vmatmul.mubr.f32.gmra.mrb[0].mxu0 %v1100
    %v2455 = vpop.f32.mrb[0].mxu0
    %v2456 = vadd.f32 %v2071, %v2455
    %v2457 = vpop.f32.mrb[0].mxu0
    %2458 = vmatprep.mubr.f32.mxu0 %v1104
    %2459 = vmatmul.mubr.f32.gmra.mrb[0].mxu0 %v1103
    %v2460 = vpop.f32.mrb[0].mxu0
    %v2461 = vadd.f32 %v2076, %v2460
    %v2462 = vpop.f32.mrb[0].mxu0
    %2463 = vmatprep.mubr.f32.mxu0 %v1107
    %2464 = vmatmul.mubr.f32.gmra.mrb[0].mxu0 %v1106
    %v2465 = vpop.f32.mrb[0].mxu0
    %v2466 = vadd.f32 %v2081, %v2465
    %v2467 = vpop.f32.mrb[0].mxu0
    %2468 = vmatprep.mubr.f32.mxu0 %v1110
    %2469 = vmatmul.mubr.f32.gmra.mrb[0].mxu0 %v1109
    %v2470 = vpop.f32.mrb[0].mxu0
    %v2471 = vadd.f32 %v2086, %v2470
    %v2472 = vpop.f32.mrb[0].mxu0
    %2473 = vmatprep.mubr.f32.mxu0 %v1113
    %2474 = vmatmul.mubr.f32.gmra.mrb[0].mxu0 %v1112
    %v2475 = vpop.f32.mrb[0].mxu0
    %v2476 = vadd.f32 %v2091, %v2475
    %v2477 = vpop.f32.mrb[0].mxu0
    %2478 = vmatprep.mubr.f32.mxu0 %v1116
    %2479 = vmatmul.mubr.f32.gmra.mrb[0].mxu0 %v1115
    %v2480 = vpop.f32.mrb[0].mxu0
    %v2481 = vadd.f32 %v2096, %v2480
    %v2482 = vpop.f32.mrb[0].mxu0
    %2483 = vmatprep.mubr.f32.mxu0 %v1119
    %2484 = vmatmul.mubr.f32.gmra.mrb[0].mxu0 %v1118
    %v2485 = vpop.f32.mrb[0].mxu0
    %v2486 = vadd.f32 %v2101, %v2485
    %v2487 = vpop.f32.mrb[0].mxu0
    %2488 = vmatprep.mubr.f32.mxu0 %v1122
    %2489 = vmatmul.mubr.f32.gmra.mrb[0].mxu0 %v1121
    %v2490 = vpop.f32.mrb[0].mxu0
    %v2491 = vadd.f32 %v2106, %v2490
    %v2492 = vpop.f32.mrb[0].mxu0
    %2493 = vmatprep.mubr.f32.mxu0 %v1125
    %2494 = vmatmul.mubr.f32.gmra.mrb[0].mxu0 %v1124
    %v2495 = vpop.f32.mrb[0].mxu0
    %v2496 = vadd.f32 %v2111, %v2495
    %v2497 = vpop.f32.mrb[0].mxu0
    %2498 = vmatprep.mubr.f32.mxu0 %v1128
    %2499 = vmatmul.mubr.f32.gmra.mrb[0].mxu0 %v1127
    %v2500 = vpop.f32.mrb[0].mxu0
    %v2501 = vadd.f32 %v2116, %v2500
    %v2502 = vpop.f32.mrb[0].mxu0
    %2503 = vmatprep.mubr.f32.mxu0 %v1131
    %2504 = vmatmul.mubr.f32.gmra.mrb[0].mxu0 %v1130
    %v2505 = vpop.f32.mrb[0].mxu0
    %v2506 = vadd.f32 %v2121, %v2505
    %v2507 = vpop.f32.mrb[0].mxu0
    %2508 = vmatprep.mubr.f32.mxu0 %v1134
    %2509 = vmatmul.mubr.f32.gmra.mrb[0].mxu0 %v1133
    %v2510 = vpop.f32.mrb[0].mxu0
    %v2511 = vadd.f32 %v2126, %v2510
    %v2512 = vpop.f32.mrb[0].mxu0
    %2513 = vmatprep.mubr.f32.mxu0 %v1137
    %2514 = vmatmul.mubr.f32.gmra.mrb[0].mxu0 %v1136
    %v2515 = vpop.f32.mrb[0].mxu0
    %v2516 = vadd.f32 %v2131, %v2515
    %v2517 = vpop.f32.mrb[0].mxu0
    %2518 = vmatprep.mubr.f32.mxu0 %v1140
    %2519 = vmatmul.mubr.f32.gmra.mrb[0].mxu0 %v1139
    %v2520 = vpop.f32.mrb[0].mxu0
    %v2521 = vadd.f32 %v2136, %v2520
    %v2522 = vpop.f32.mrb[0].mxu0
    %2523 = vmatprep.mubr.f32.mxu0 %v1143
    %2524 = vmatmul.mubr.f32.gmra.mrb[0].mxu0 %v1142
    %v2525 = vpop.f32.mrb[0].mxu0
    %v2526 = vadd.f32 %v2141, %v2525
    %v2527 = vpop.f32.mrb[0].mxu0
    %2528 = vmatprep.mubr.f32.mxu0 %v1146
    %2529 = vmatmul.mubr.f32.gmra.mrb[0].mxu0 %v1145
    %v2530 = vpop.f32.mrb[0].mxu0
    %v2531 = vadd.f32 %v2146, %v2530
    %v2532 = vpop.f32.mrb[0].mxu0
    %2533 = vmatprep.mubr.f32.mxu0 %v1149
    %2534 = vmatmul.mubr.f32.gmra.mrb[0].mxu0 %v1148
    %v2535 = vpop.f32.mrb[0].mxu0
    %v2536 = vadd.f32 %v2151, %v2535
    %v2537 = vpop.f32.mrb[0].mxu0
    %2538 = vmatprep.mubr.f32.mxu0 %v1152
    %2539 = vmatmul.mubr.f32.gmra.mrb[0].mxu0 %v1151
    %v2540 = vpop.f32.mrb[0].mxu0
    %v2541 = vadd.f32 %v2156, %v2540
    %v2542 = vpop.f32.mrb[0].mxu0
    %2543 = vmatprep.mubr.f32.mxu0 %v1155
    %2544 = vmatmul.mubr.f32.gmra.mrb[0].mxu0 %v1154
    %v2545 = vpop.f32.mrb[0].mxu0
    %v2546 = vadd.f32 %v2161, %v2545
    %v2547 = vpop.f32.mrb[0].mxu0
    %2548 = vmatprep.mubr.f32.mxu0 %v1158
    %2549 = vmatmul.mubr.f32.gmra.mrb[0].mxu0 %v1157
    %v2550 = vpop.f32.mrb[0].mxu0
    %v2551 = vadd.f32 %v2166, %v2550
    %v2552 = vpop.f32.mrb[0].mxu0
    %2553 = vmatprep.mubr.f32.mxu0 %v1161
    %2554 = vmatmul.mubr.f32.gmra.mrb[0].mxu0 %v1160
    %v2555 = vpop.f32.mrb[0].mxu0
    %v2556 = vadd.f32 %v2171, %v2555
    %v2557 = vpop.f32.mrb[0].mxu0
    %2558 = vmatprep.mubr.f32.mxu0 %v1164
    %2559 = vmatmul.mubr.f32.gmra.mrb[0].mxu0 %v1163
    %v2560 = vpop.f32.mrb[0].mxu0
    %v2561 = vadd.f32 %v2176, %v2560
    %v2562 = vpop.f32.mrb[0].mxu0
    %2563 = vmatprep.mubr.f32.mxu0 %v1167
    %2564 = vmatmul.mubr.f32.gmra.mrb[0].mxu0 %v1166
    %v2565 = vpop.f32.mrb[0].mxu0
    %v2566 = vadd.f32 %v2181, %v2565
    %v2567 = vpop.f32.mrb[0].mxu0
    %2568 = vmatprep.mubr.f32.mxu0 %v1170
    %2569 = vmatmul.mubr.f32.gmra.mrb[0].mxu0 %v1169
    %v2570 = vpop.f32.mrb[0].mxu0
    %v2571 = vadd.f32 %v2186, %v2570
    %v2572 = vpop.f32.mrb[0].mxu0
    %2573 = vmatprep.mubr.f32.mxu0 %v1173
    %2574 = vmatmul.mubr.f32.gmra.mrb[0].mxu0 %v1172
    %v2575 = vpop.f32.mrb[0].mxu0
    %v2576 = vadd.f32 %v2191, %v2575
    %v2577 = vpop.f32.mrb[0].mxu0
    %2578 = vmatprep.mubr.f32.mxu0 %v1176
    %2579 = vmatmul.mubr.f32.gmra.mrb[0].mxu0 %v1175
    %v2580 = vpop.f32.mrb[0].mxu0
    %v2581 = vadd.f32 %v2196, %v2580
    %v2582 = vpop.f32.mrb[0].mxu0
    %2583 = vmatprep.mubr.f32.mxu0 %v1179
    %2584 = vmatmul.mubr.f32.gmra.mrb[0].mxu0 %v1178
    %v2585 = vpop.f32.mrb[0].mxu0
    %v2586 = vadd.f32 %v2201, %v2585
    %v2587 = vpop.f32.mrb[0].mxu0
    %2588 = vmatprep.mubr.f32.mxu0 %v1182
    %2589 = vmatmul.mubr.f32.gmra.mrb[0].mxu0 %v1181
    %v2590 = vpop.f32.mrb[0].mxu0
    %v2591 = vadd.f32 %v2206, %v2590
    %v2592 = vpop.f32.mrb[0].mxu0
    %2593 = vmatprep.mubr.f32.mxu0 %v1185
    %2594 = vmatmul.mubr.f32.gmra.mrb[0].mxu0 %v1184
    %v2595 = vpop.f32.mrb[0].mxu0
    %v2596 = vadd.f32 %v2211, %v2595
    %v2597 = vpop.f32.mrb[0].mxu0
    %2598 = vmatprep.mubr.f32.mxu0 %v1188
    %2599 = vmatmul.mubr.f32.gmra.mrb[0].mxu0 %v1187
    %v2600 = vpop.f32.mrb[0].mxu0
    %v2601 = vadd.f32 %v2216, %v2600
    %v2602 = vpop.f32.mrb[0].mxu0
    %2603 = vmatprep.mubr.f32.mxu0 %v1191
    %2604 = vmatmul.mubr.f32.gmra.mrb[0].mxu0 %v1190
    %v2605 = vpop.f32.mrb[0].mxu0
    %v2606 = vadd.f32 %v2221, %v2605
    %v2607 = vpop.f32.mrb[0].mxu0
    %2608 = vmatprep.mubr.f32.mxu0 %v1194
    %2609 = vmatmul.mubr.f32.gmra.mrb[0].mxu0 %v1193
    %v2610 = vpop.f32.mrb[0].mxu0
    %v2611 = vadd.f32 %v2226, %v2610
    %v2612 = vpop.f32.mrb[0].mxu0
    %2613 = vmatprep.mubr.f32.mxu0 %v1197
    %2614 = vmatmul.mubr.f32.gmra.mrb[0].mxu0 %v1196
    %v2615 = vpop.f32.mrb[0].mxu0
    %v2616 = vadd.f32 %v2231, %v2615
    %v2617 = vpop.f32.mrb[0].mxu0
    %2618 = vmatprep.mubr.f32.mxu0 %v1200
    %2619 = vmatmul.mubr.f32.gmra.mrb[0].mxu0 %v1199
    %v2620 = vpop.f32.mrb[0].mxu0
    %v2621 = vadd.f32 %v2236, %v2620
    %v2622 = vpop.f32.mrb[0].mxu0
    %2623 = vmatprep.mubr.f32.mxu0 %v1203
    %2624 = vmatmul.mubr.f32.gmra.mrb[0].mxu0 %v1202
    %v2625 = vpop.f32.mrb[0].mxu0
    %v2626 = vadd.f32 %v2241, %v2625
    %v2627 = vpop.f32.mrb[0].mxu0
    %2628 = vmatprep.mubr.f32.mxu0 %v1206
    %2629 = vmatmul.mubr.f32.gmra.mrb[0].mxu0 %v1205
    %v2630 = vpop.f32.mrb[0].mxu0
    %v2631 = vadd.f32 %v2246, %v2630
    %v2632 = vpop.f32.mrb[0].mxu0
    %2633 = vmatprep.mubr.f32.mxu0 %v1209
    %2634 = vmatmul.mubr.f32.gmra.mrb[0].mxu0 %v1208
    %v2635 = vpop.f32.mrb[0].mxu0
    %v2636 = vadd.f32 %v2251, %v2635
    %v2637 = vpop.f32.mrb[0].mxu0
    %2638 = vmatprep.mubr.f32.mxu0 %v1212
    %2639 = vmatmul.mubr.f32.gmra.mrb[0].mxu0 %v1211
    %v2640 = vpop.f32.mrb[0].mxu0
    %v2641 = vadd.f32 %v2256, %v2640
    %v2642 = vpop.f32.mrb[0].mxu0
    %2643 = vmatprep.mubr.f32.mxu0 %v1215
    %2644 = vmatmul.mubr.f32.gmra.mrb[0].mxu0 %v1214
    %v2645 = vpop.f32.mrb[0].mxu0
    %v2646 = vadd.f32 %v2261, %v2645
    %v2647 = vpop.f32.mrb[0].mxu0
    %2648 = vmatprep.mubr.f32.mxu0 %v1218
    %2649 = vmatmul.mubr.f32.gmra.mrb[0].mxu0 %v1217
    %v2650 = vpop.f32.mrb[0].mxu0
    %v2651 = vadd.f32 %v2266, %v2650
    %v2652 = vpop.f32.mrb[0].mxu0
    %2653 = vmatprep.mubr.f32.mxu0 %v1221
    %2654 = vmatmul.mubr.f32.gmra.mrb[0].mxu0 %v1220
    %v2655 = vpop.f32.mrb[0].mxu0
    %v2656 = vadd.f32 %v2271, %v2655
    %v2657 = vpop.f32.mrb[0].mxu0
    %2658 = vmatprep.mubr.f32.mxu0 %v1224
    %2659 = vmatmul.mubr.f32.gmra.mrb[0].mxu0 %v1223
    %v2660 = vpop.f32.mrb[0].mxu0
    %v2661 = vadd.f32 %v2276, %v2660
    %v2662 = vpop.f32.mrb[0].mxu0
    %2663 = vmatprep.mubr.f32.mxu0 %v1227
    %2664 = vmatmul.mubr.f32.gmra.mrb[0].mxu0 %v1226
    %v2665 = vpop.f32.mrb[0].mxu0
    %v2666 = vadd.f32 %v2281, %v2665
    %v2667 = vpop.f32.mrb[0].mxu0
    %2668 = vmatprep.mubr.f32.mxu0 %v1230
    %2669 = vmatmul.mubr.f32.gmra.mrb[0].mxu0 %v1229
    %v2670 = vpop.f32.mrb[0].mxu0
    %v2671 = vadd.f32 %v2286, %v2670
    %v2672 = vpop.f32.mrb[0].mxu0
    %2673 = vmatprep.mubr.f32.mxu0 %v1233
    %2674 = vmatmul.mubr.f32.gmra.mrb[0].mxu0 %v1232
    %v2675 = vpop.f32.mrb[0].mxu0
    %v2676 = vadd.f32 %v2291, %v2675
    %v2677 = vpop.f32.mrb[0].mxu0
    %2678 = vdwg.mxu0
    %2679 = vmatprep.subr.mxu0 0.0
    %2680 = vmatpush1.msra.mxu0 %v1267
    %2681 = vmatprep.subr.mxu0 0.0
    %2682 = vmatpush1.msra.mxu0 %v1268
    %2683 = vmatprep.subr.mxu0 0.0
    %2684 = vmatpush1.msra.mxu0 %v1269
    %2685 = vmatprep.subr.mxu0 0.0
    %2686 = vmatpush1.msra.mxu0 %v1270
    %2687 = vmatprep.subr.mxu0 0.0
    %2688 = vmatpush1.msra.mxu0 %v1271
    %2689 = vmatprep.subr.mxu0 0.0
    %2690 = vmatpush1.msra.mxu0 %v1272
    %2691 = vmatprep.subr.mxu0 0.0
    %2692 = vmatpush1.msra.mxu0 %v1273
    %2693 = vmatprep.subr.mxu0 0.0
    %2694 = vmatpush1.msra.mxu0 %v1274
    %2695 = vmatprep.subr.mxu0 0.0
    %2696 = vmatpush1.msra.mxu0 %v1275
    %2697 = vmatprep.subr.mxu0 0.0
    %2698 = vmatpush1.msra.mxu0 %v1276
    %2699 = vmatprep.subr.mxu0 0.0
    %2700 = vmatpush1.msra.mxu0 %v1277
    %2701 = vmatprep.subr.mxu0 0.0
    %2702 = vmatpush1.msra.mxu0 %v1278
    %2703 = vmatprep.subr.mxu0 0.0
    %2704 = vmatpush1.msra.mxu0 %v1279
    %2705 = vmatprep.subr.mxu0 0.0
    %2706 = vmatpush1.msra.mxu0 %v1280
    %2707 = vmatprep.subr.mxu0 0.0
    %2708 = vmatpush1.msra.mxu0 %v1281
    %2709 = vmatprep.subr.mxu0 0.0
    %2710 = vmatpush1.msra.mxu0 %v1282
    %2711 = vmatprep.subr.mxu0 0.0
    %2712 = vmatpush1.msra.mxu0 0.0
    %2713 = vmatprep.subr.mxu0 0.0
    %2714 = vmatpush1.msra.mxu0 0.0
    %2715 = vmatprep.subr.mxu0 0.0
    %2716 = vmatpush1.msra.mxu0 0.0
    %2717 = vmatprep.subr.mxu0 0.0
    %2718 = vmatpush1.msra.mxu0 0.0
    %2719 = vmatprep.subr.mxu0 0.0
    %2720 = vmatpush1.msra.mxu0 0.0
    %2721 = vmatprep.subr.mxu0 0.0
    %2722 = vmatpush1.msra.mxu0 0.0
    %2723 = vmatprep.subr.mxu0 0.0
    %2724 = vmatpush1.msra.mxu0 0.0
    %2725 = vmatprep.subr.mxu0 0.0
    %2726 = vmatpush1.msra.mxu0 0.0
    %2727 = vmatprep.subr.mxu0 0.0
    %2728 = vmatpush1.msra.mxu0 0.0
    %2729 = vmatprep.subr.mxu0 0.0
    %2730 = vmatpush1.msra.mxu0 0.0
    %2731 = vmatprep.subr.mxu0 0.0
    %2732 = vmatpush1.msra.mxu0 0.0
    %2733 = vmatprep.subr.mxu0 0.0
    %2734 = vmatpush1.msra.mxu0 0.0
    %2735 = vmatprep.subr.mxu0 0.0
    %2736 = vmatpush1.msra.mxu0 0.0
    %2737 = vmatprep.subr.mxu0 0.0
    %2738 = vmatpush1.msra.mxu0 0.0
    %2739 = vmatprep.subr.mxu0 0.0
    %2740 = vmatpush1.msra.mxu0 0.0
    %2741 = vmatprep.subr.mxu0 0.0
    %2742 = vmatpush1.msra.mxu0 0.0
    %2743 = vmatprep.mubr.f32.mxu0 0.0
    %2744 = vmatmul.mubr.f32.gmra.mrb[0].mxu0 %v1045
    %v2745 = vpop.f32.mrb[0].mxu0
    %v2746 = vadd.f32 %v2361, %v2745
    %v2747 = vpop.f32.mrb[0].mxu0
    %2748 = vmatprep.mubr.f32.mxu0 0.0
    %2749 = vmatmul.mubr.f32.gmra.mrb[0].mxu0 %v1048
    %v2750 = vpop.f32.mrb[0].mxu0
    %v2751 = vadd.f32 %v2366, %v2750
    %v2752 = vpop.f32.mrb[0].mxu0
    %2753 = vmatprep.mubr.f32.mxu0 0.0
    %2754 = vmatmul.mubr.f32.gmra.mrb[0].mxu0 %v1051
    %v2755 = vpop.f32.mrb[0].mxu0
    %v2756 = vadd.f32 %v2371, %v2755
    %v2757 = vpop.f32.mrb[0].mxu0
    %2758 = vmatprep.mubr.f32.mxu0 0.0
    %2759 = vmatmul.mubr.f32.gmra.mrb[0].mxu0 %v1054
    %v2760 = vpop.f32.mrb[0].mxu0
    %v2761 = vadd.f32 %v2376, %v2760
    %v2762 = vpop.f32.mrb[0].mxu0
    %2763 = vmatprep.mubr.f32.mxu0 0.0
    %2764 = vmatmul.mubr.f32.gmra.mrb[0].mxu0 %v1057
    %v2765 = vpop.f32.mrb[0].mxu0
    %v2766 = vadd.f32 %v2381, %v2765
    %v2767 = vpop.f32.mrb[0].mxu0
    %2768 = vmatprep.mubr.f32.mxu0 0.0
    %2769 = vmatmul.mubr.f32.gmra.mrb[0].mxu0 %v1060
    %v2770 = vpop.f32.mrb[0].mxu0
    %v2771 = vadd.f32 %v2386, %v2770
    %v2772 = vpop.f32.mrb[0].mxu0
    %2773 = vmatprep.mubr.f32.mxu0 0.0
    %2774 = vmatmul.mubr.f32.gmra.mrb[0].mxu0 %v1063
    %v2775 = vpop.f32.mrb[0].mxu0
    %v2776 = vadd.f32 %v2391, %v2775
    %v2777 = vpop.f32.mrb[0].mxu0
    %2778 = vmatprep.mubr.f32.mxu0 0.0
    %2779 = vmatmul.mubr.f32.gmra.mrb[0].mxu0 %v1066
    %v2780 = vpop.f32.mrb[0].mxu0
    %v2781 = vadd.f32 %v2396, %v2780
    %v2782 = vpop.f32.mrb[0].mxu0
    %2783 = vmatprep.mubr.f32.mxu0 0.0
    %2784 = vmatmul.mubr.f32.gmra.mrb[0].mxu0 %v1069
    %v2785 = vpop.f32.mrb[0].mxu0
    %v2786 = vadd.f32 %v2401, %v2785
    %v2787 = vpop.f32.mrb[0].mxu0
    %2788 = vmatprep.mubr.f32.mxu0 0.0
    %2789 = vmatmul.mubr.f32.gmra.mrb[0].mxu0 %v1072
    %v2790 = vpop.f32.mrb[0].mxu0
    %v2791 = vadd.f32 %v2406, %v2790
    %v2792 = vpop.f32.mrb[0].mxu0
    %2793 = vmatprep.mubr.f32.mxu0 0.0
    %2794 = vmatmul.mubr.f32.gmra.mrb[0].mxu0 %v1075
    %v2795 = vpop.f32.mrb[0].mxu0
    %v2796 = vadd.f32 %v2411, %v2795
    %v2797 = vpop.f32.mrb[0].mxu0
    %2798 = vmatprep.mubr.f32.mxu0 0.0
    %2799 = vmatmul.mubr.f32.gmra.mrb[0].mxu0 %v1078
    %v2800 = vpop.f32.mrb[0].mxu0
    %v2801 = vadd.f32 %v2416, %v2800
    %v2802 = vpop.f32.mrb[0].mxu0
    %2803 = vmatprep.mubr.f32.mxu0 0.0
    %2804 = vmatmul.mubr.f32.gmra.mrb[0].mxu0 %v1081
    %v2805 = vpop.f32.mrb[0].mxu0
    %v2806 = vadd.f32 %v2421, %v2805
    %v2807 = vpop.f32.mrb[0].mxu0
    %2808 = vmatprep.mubr.f32.mxu0 0.0
    %2809 = vmatmul.mubr.f32.gmra.mrb[0].mxu0 %v1084
    %v2810 = vpop.f32.mrb[0].mxu0
    %v2811 = vadd.f32 %v2426, %v2810
    %v2812 = vpop.f32.mrb[0].mxu0
    %2813 = vmatprep.mubr.f32.mxu0 0.0
    %2814 = vmatmul.mubr.f32.gmra.mrb[0].mxu0 %v1087
    %v2815 = vpop.f32.mrb[0].mxu0
    %v2816 = vadd.f32 %v2431, %v2815
    %v2817 = vpop.f32.mrb[0].mxu0
    %2818 = vmatprep.mubr.f32.mxu0 0.0
    %2819 = vmatmul.mubr.f32.gmra.mrb[0].mxu0 %v1090
    %v2820 = vpop.f32.mrb[0].mxu0
    %v2821 = vadd.f32 %v2436, %v2820
    %v2822 = vpop.f32.mrb[0].mxu0
    %2823 = vmatprep.mubr.f32.mxu0 0.0
    %2824 = vmatmul.mubr.f32.gmra.mrb[0].mxu0 %v1093
    %v2825 = vpop.f32.mrb[0].mxu0
    %v2826 = vadd.f32 %v2441, %v2825
    %v2827 = vpop.f32.mrb[0].mxu0
    %2828 = vmatprep.mubr.f32.mxu0 0.0
    %2829 = vmatmul.mubr.f32.gmra.mrb[0].mxu0 %v1096
    %v2830 = vpop.f32.mrb[0].mxu0
    %v2831 = vadd.f32 %v2446, %v2830
    %v2832 = vpop.f32.mrb[0].mxu0
    %2833 = vmatprep.mubr.f32.mxu0 0.0
    %2834 = vmatmul.mubr.f32.gmra.mrb[0].mxu0 %v1099
    %v2835 = vpop.f32.mrb[0].mxu0
    %v2836 = vadd.f32 %v2451, %v2835
    %v2837 = vpop.f32.mrb[0].mxu0
    %2838 = vmatprep.mubr.f32.mxu0 0.0
    %2839 = vmatmul.mubr.f32.gmra.mrb[0].mxu0 %v1102
    %v2840 = vpop.f32.mrb[0].mxu0
    %v2841 = vadd.f32 %v2456, %v2840
    %v2842 = vpop.f32.mrb[0].mxu0
    %2843 = vmatprep.mubr.f32.mxu0 0.0
    %2844 = vmatmul.mubr.f32.gmra.mrb[0].mxu0 %v1105
    %v2845 = vpop.f32.mrb[0].mxu0
    %v2846 = vadd.f32 %v2461, %v2845
    %v2847 = vpop.f32.mrb[0].mxu0
    %2848 = vmatprep.mubr.f32.mxu0 0.0
    %2849 = vmatmul.mubr.f32.gmra.mrb[0].mxu0 %v1108
    %v2850 = vpop.f32.mrb[0].mxu0
    %v2851 = vadd.f32 %v2466, %v2850
    %v2852 = vpop.f32.mrb[0].mxu0
    %2853 = vmatprep.mubr.f32.mxu0 0.0
    %2854 = vmatmul.mubr.f32.gmra.mrb[0].mxu0 %v1111
    %v2855 = vpop.f32.mrb[0].mxu0
    %v2856 = vadd.f32 %v2471, %v2855
    %v2857 = vpop.f32.mrb[0].mxu0
    %2858 = vmatprep.mubr.f32.mxu0 0.0
    %2859 = vmatmul.mubr.f32.gmra.mrb[0].mxu0 %v1114
    %v2860 = vpop.f32.mrb[0].mxu0
    %v2861 = vadd.f32 %v2476, %v2860
    %v2862 = vpop.f32.mrb[0].mxu0
    %2863 = vmatprep.mubr.f32.mxu0 0.0
    %2864 = vmatmul.mubr.f32.gmra.mrb[0].mxu0 %v1117
    %v2865 = vpop.f32.mrb[0].mxu0
    %v2866 = vadd.f32 %v2481, %v2865
    %v2867 = vpop.f32.mrb[0].mxu0
    %2868 = vmatprep.mubr.f32.mxu0 0.0
    %2869 = vmatmul.mubr.f32.gmra.mrb[0].mxu0 %v1120
    %v2870 = vpop.f32.mrb[0].mxu0
    %v2871 = vadd.f32 %v2486, %v2870
    %v2872 = vpop.f32.mrb[0].mxu0
    %2873 = vmatprep.mubr.f32.mxu0 0.0
    %2874 = vmatmul.mubr.f32.gmra.mrb[0].mxu0 %v1123
    %v2875 = vpop.f32.mrb[0].mxu0
    %v2876 = vadd.f32 %v2491, %v2875
    %v2877 = vpop.f32.mrb[0].mxu0
    %2878 = vmatprep.mubr.f32.mxu0 0.0
    %2879 = vmatmul.mubr.f32.gmra.mrb[0].mxu0 %v1126
    %v2880 = vpop.f32.mrb[0].mxu0
    %v2881 = vadd.f32 %v2496, %v2880
    %v2882 = vpop.f32.mrb[0].mxu0
    %2883 = vmatprep.mubr.f32.mxu0 0.0
    %2884 = vmatmul.mubr.f32.gmra.mrb[0].mxu0 %v1129
    %v2885 = vpop.f32.mrb[0].mxu0
    %v2886 = vadd.f32 %v2501, %v2885
    %v2887 = vpop.f32.mrb[0].mxu0
    %2888 = vmatprep.mubr.f32.mxu0 0.0
    %2889 = vmatmul.mubr.f32.gmra.mrb[0].mxu0 %v1132
    %v2890 = vpop.f32.mrb[0].mxu0
    %v2891 = vadd.f32 %v2506, %v2890
    %v2892 = vpop.f32.mrb[0].mxu0
    %2893 = vmatprep.mubr.f32.mxu0 0.0
    %2894 = vmatmul.mubr.f32.gmra.mrb[0].mxu0 %v1135
    %v2895 = vpop.f32.mrb[0].mxu0
    %v2896 = vadd.f32 %v2511, %v2895
    %v2897 = vpop.f32.mrb[0].mxu0
    %2898 = vmatprep.mubr.f32.mxu0 0.0
    %2899 = vmatmul.mubr.f32.gmra.mrb[0].mxu0 %v1138
    %v2900 = vpop.f32.mrb[0].mxu0
    %v2901 = vadd.f32 %v2516, %v2900
    %v2902 = vpop.f32.mrb[0].mxu0
    %2903 = vmatprep.mubr.f32.mxu0 0.0
    %2904 = vmatmul.mubr.f32.gmra.mrb[0].mxu0 %v1141
    %v2905 = vpop.f32.mrb[0].mxu0
    %v2906 = vadd.f32 %v2521, %v2905
    %v2907 = vpop.f32.mrb[0].mxu0
    %2908 = vmatprep.mubr.f32.mxu0 0.0
    %2909 = vmatmul.mubr.f32.gmra.mrb[0].mxu0 %v1144
    %v2910 = vpop.f32.mrb[0].mxu0
    %v2911 = vadd.f32 %v2526, %v2910
    %v2912 = vpop.f32.mrb[0].mxu0
    %2913 = vmatprep.mubr.f32.mxu0 0.0
    %2914 = vmatmul.mubr.f32.gmra.mrb[0].mxu0 %v1147
    %v2915 = vpop.f32.mrb[0].mxu0
    %v2916 = vadd.f32 %v2531, %v2915
    %v2917 = vpop.f32.mrb[0].mxu0
    %2918 = vmatprep.mubr.f32.mxu0 0.0
    %2919 = vmatmul.mubr.f32.gmra.mrb[0].mxu0 %v1150
    %v2920 = vpop.f32.mrb[0].mxu0
    %v2921 = vadd.f32 %v2536, %v2920
    %v2922 = vpop.f32.mrb[0].mxu0
    %2923 = vmatprep.mubr.f32.mxu0 0.0
    %2924 = vmatmul.mubr.f32.gmra.mrb[0].mxu0 %v1153
    %v2925 = vpop.f32.mrb[0].mxu0
    %v2926 = vadd.f32 %v2541, %v2925
    %v2927 = vpop.f32.mrb[0].mxu0
    %2928 = vmatprep.mubr.f32.mxu0 0.0
    %2929 = vmatmul.mubr.f32.gmra.mrb[0].mxu0 %v1156
    %v2930 = vpop.f32.mrb[0].mxu0
    %v2931 = vadd.f32 %v2546, %v2930
    %v2932 = vpop.f32.mrb[0].mxu0
    %2933 = vmatprep.mubr.f32.mxu0 0.0
    %2934 = vmatmul.mubr.f32.gmra.mrb[0].mxu0 %v1159
    %v2935 = vpop.f32.mrb[0].mxu0
    %v2936 = vadd.f32 %v2551, %v2935
    %v2937 = vpop.f32.mrb[0].mxu0
    %2938 = vmatprep.mubr.f32.mxu0 0.0
    %2939 = vmatmul.mubr.f32.gmra.mrb[0].mxu0 %v1162
    %v2940 = vpop.f32.mrb[0].mxu0
    %v2941 = vadd.f32 %v2556, %v2940
    %v2942 = vpop.f32.mrb[0].mxu0
    %2943 = vmatprep.mubr.f32.mxu0 0.0
    %2944 = vmatmul.mubr.f32.gmra.mrb[0].mxu0 %v1165
    %v2945 = vpop.f32.mrb[0].mxu0
    %v2946 = vadd.f32 %v2561, %v2945
    %v2947 = vpop.f32.mrb[0].mxu0
    %2948 = vmatprep.mubr.f32.mxu0 0.0
    %2949 = vmatmul.mubr.f32.gmra.mrb[0].mxu0 %v1168
    %v2950 = vpop.f32.mrb[0].mxu0
    %v2951 = vadd.f32 %v2566, %v2950
    %v2952 = vpop.f32.mrb[0].mxu0
    %2953 = vmatprep.mubr.f32.mxu0 0.0
    %2954 = vmatmul.mubr.f32.gmra.mrb[0].mxu0 %v1171
    %v2955 = vpop.f32.mrb[0].mxu0
    %v2956 = vadd.f32 %v2571, %v2955
    %v2957 = vpop.f32.mrb[0].mxu0
    %2958 = vmatprep.mubr.f32.mxu0 0.0
    %2959 = vmatmul.mubr.f32.gmra.mrb[0].mxu0 %v1174
    %v2960 = vpop.f32.mrb[0].mxu0
    %v2961 = vadd.f32 %v2576, %v2960
    %v2962 = vpop.f32.mrb[0].mxu0
    %2963 = vmatprep.mubr.f32.mxu0 0.0
    %2964 = vmatmul.mubr.f32.gmra.mrb[0].mxu0 %v1177
    %v2965 = vpop.f32.mrb[0].mxu0
    %v2966 = vadd.f32 %v2581, %v2965
    %v2967 = vpop.f32.mrb[0].mxu0
    %2968 = vmatprep.mubr.f32.mxu0 0.0
    %2969 = vmatmul.mubr.f32.gmra.mrb[0].mxu0 %v1180
    %v2970 = vpop.f32.mrb[0].mxu0
    %v2971 = vadd.f32 %v2586, %v2970
    %v2972 = vpop.f32.mrb[0].mxu0
    %2973 = vmatprep.mubr.f32.mxu0 0.0
    %2974 = vmatmul.mubr.f32.gmra.mrb[0].mxu0 %v1183
    %v2975 = vpop.f32.mrb[0].mxu0
    %v2976 = vadd.f32 %v2591, %v2975
    %v2977 = vpop.f32.mrb[0].mxu0
    %2978 = vmatprep.mubr.f32.mxu0 0.0
    %2979 = vmatmul.mubr.f32.gmra.mrb[0].mxu0 %v1186
    %v2980 = vpop.f32.mrb[0].mxu0
    %v2981 = vadd.f32 %v2596, %v2980
    %v2982 = vpop.f32.mrb[0].mxu0
    %2983 = vmatprep.mubr.f32.mxu0 0.0
    %2984 = vmatmul.mubr.f32.gmra.mrb[0].mxu0 %v1189
    %v2985 = vpop.f32.mrb[0].mxu0
    %v2986 = vadd.f32 %v2601, %v2985
    %v2987 = vpop.f32.mrb[0].mxu0
    %2988 = vmatprep.mubr.f32.mxu0 0.0
    %2989 = vmatmul.mubr.f32.gmra.mrb[0].mxu0 %v1192
    %v2990 = vpop.f32.mrb[0].mxu0
    %v2991 = vadd.f32 %v2606, %v2990
    %v2992 = vpop.f32.mrb[0].mxu0
    %2993 = vmatprep.mubr.f32.mxu0 0.0
    %2994 = vmatmul.mubr.f32.gmra.mrb[0].mxu0 %v1195
    %v2995 = vpop.f32.mrb[0].mxu0
    %v2996 = vadd.f32 %v2611, %v2995
    %v2997 = vpop.f32.mrb[0].mxu0
    %2998 = vmatprep.mubr.f32.mxu0 0.0
    %2999 = vmatmul.mubr.f32.gmra.mrb[0].mxu0 %v1198
    %v3000 = vpop.f32.mrb[0].mxu0
    %v3001 = vadd.f32 %v2616, %v3000
    %v3002 = vpop.f32.mrb[0].mxu0
    %3003 = vmatprep.mubr.f32.mxu0 0.0
    %3004 = vmatmul.mubr.f32.gmra.mrb[0].mxu0 %v1201
    %v3005 = vpop.f32.mrb[0].mxu0
    %v3006 = vadd.f32 %v2621, %v3005
    %v3007 = vpop.f32.mrb[0].mxu0
    %3008 = vmatprep.mubr.f32.mxu0 0.0
    %3009 = vmatmul.mubr.f32.gmra.mrb[0].mxu0 %v1204
    %v3010 = vpop.f32.mrb[0].mxu0
    %v3011 = vadd.f32 %v2626, %v3010
    %v3012 = vpop.f32.mrb[0].mxu0
    %3013 = vmatprep.mubr.f32.mxu0 0.0
    %3014 = vmatmul.mubr.f32.gmra.mrb[0].mxu0 %v1207
    %v3015 = vpop.f32.mrb[0].mxu0
    %v3016 = vadd.f32 %v2631, %v3015
    %v3017 = vpop.f32.mrb[0].mxu0
    %3018 = vmatprep.mubr.f32.mxu0 0.0
    %3019 = vmatmul.mubr.f32.gmra.mrb[0].mxu0 %v1210
    %v3020 = vpop.f32.mrb[0].mxu0
    %v3021 = vadd.f32 %v2636, %v3020
    %v3022 = vpop.f32.mrb[0].mxu0
    %3023 = vmatprep.mubr.f32.mxu0 0.0
    %3024 = vmatmul.mubr.f32.gmra.mrb[0].mxu0 %v1213
    %v3025 = vpop.f32.mrb[0].mxu0
    %v3026 = vadd.f32 %v2641, %v3025
    %v3027 = vpop.f32.mrb[0].mxu0
    %3028 = vmatprep.mubr.f32.mxu0 0.0
    %3029 = vmatmul.mubr.f32.gmra.mrb[0].mxu0 %v1216
    %v3030 = vpop.f32.mrb[0].mxu0
    %v3031 = vadd.f32 %v2646, %v3030
    %v3032 = vpop.f32.mrb[0].mxu0
    %3033 = vmatprep.mubr.f32.mxu0 0.0
    %3034 = vmatmul.mubr.f32.gmra.mrb[0].mxu0 %v1219
    %v3035 = vpop.f32.mrb[0].mxu0
    %v3036 = vadd.f32 %v2651, %v3035
    %v3037 = vpop.f32.mrb[0].mxu0
    %3038 = vmatprep.mubr.f32.mxu0 0.0
    %3039 = vmatmul.mubr.f32.gmra.mrb[0].mxu0 %v1222
    %v3040 = vpop.f32.mrb[0].mxu0
    %v3041 = vadd.f32 %v2656, %v3040
    %v3042 = vpop.f32.mrb[0].mxu0
    %3043 = vmatprep.mubr.f32.mxu0 0.0
    %3044 = vmatmul.mubr.f32.gmra.mrb[0].mxu0 %v1225
    %v3045 = vpop.f32.mrb[0].mxu0
    %v3046 = vadd.f32 %v2661, %v3045
    %v3047 = vpop.f32.mrb[0].mxu0
    %3048 = vmatprep.mubr.f32.mxu0 0.0
    %3049 = vmatmul.mubr.f32.gmra.mrb[0].mxu0 %v1228
    %v3050 = vpop.f32.mrb[0].mxu0
    %v3051 = vadd.f32 %v2666, %v3050
    %v3052 = vpop.f32.mrb[0].mxu0
    %3053 = vmatprep.mubr.f32.mxu0 0.0
    %3054 = vmatmul.mubr.f32.gmra.mrb[0].mxu0 %v1231
    %v3055 = vpop.f32.mrb[0].mxu0
    %v3056 = vadd.f32 %v2671, %v3055
    %v3057 = vpop.f32.mrb[0].mxu0
    %3058 = vmatprep.mubr.f32.mxu0 0.0
    %3059 = vmatmul.mubr.f32.gmra.mrb[0].mxu0 %v1234
    %v3060 = vpop.f32.mrb[0].mxu0
    %v3061 = vadd.f32 %v2676, %v3060
    %v3062 = vpop.f32.mrb[0].mxu0
    %3063 = vdwg.mxu0
    %s3064 = scalar_lea.vmem [#allocation2], 96
    %v3065 = vld [vmem:[%s3064] sm:$0xff]
    %v3066 = vld [vmem:[%s3064 + $0x8] sm:$0xff]
    %v3067 = vld [vmem:[%s3064 + $0x10] sm:$0xff]
    %v3068 = vld [vmem:[%s3064 + $0x18] sm:$0xff]
    %v3069 = vld [vmem:[%s3064 + $0x20] sm:$0xff]
    %v3070 = vld [vmem:[%s3064 + $0x28] sm:$0xff]
    %v3071 = vld [vmem:[%s3064 + $0x30] sm:$0xff]
    %v3072 = vld [vmem:[%s3064 + $0x38] sm:$0xff]
    %v3073 = vld [vmem:[%s3064 + $0x40] sm:$0xff]
    %v3074 = vld [vmem:[%s3064 + $0x48] sm:$0xff]
    %v3075 = vld [vmem:[%s3064 + $0x50] sm:$0xff]
    %v3076 = vld [vmem:[%s3064 + $0x58] sm:$0xff]
    %v3077 = vld [vmem:[%s3064 + $0x60] sm:$0xff]
    %v3078 = vld [vmem:[%s3064 + $0x68] sm:$0xff]
    %v3079 = vld [vmem:[%s3064 + $0x70] sm:$0xff]
    %v3080 = vld [vmem:[%s3064 + $0x78] sm:$0xff]
    %v3081 = vld [vmem:[%s3064 + $0x80] sm:$0xff]
    %v3082 = vld [vmem:[%s3064 + $0x88] sm:$0xff]
    %v3083 = vld [vmem:[%s3064 + $0x90] sm:$0xff]
    %v3084 = vld [vmem:[%s3064 + $0x98] sm:$0xff]
    %v3085 = vld [vmem:[%s3064 + $0xa0] sm:$0xff]
    %v3086 = vld [vmem:[%s3064 + $0xa8] sm:$0xff]
    %v3087 = vld [vmem:[%s3064 + $0xb0] sm:$0xff]
    %v3088 = vld [vmem:[%s3064 + $0xb8] sm:$0xff]
    %v3089 = vld [vmem:[%s3064 + $0xc0] sm:$0xff]
    %v3090 = vld [vmem:[%s3064 + $0xc8] sm:$0xff]
    %v3091 = vld [vmem:[%s3064 + $0xd0] sm:$0xff]
    %v3092 = vld [vmem:[%s3064 + $0xd8] sm:$0xff]
    %v3093 = vld [vmem:[%s3064 + $0xe0] sm:$0xff]
    %v3094 = vld [vmem:[%s3064 + $0xe8] sm:$0xff]
    %v3095 = vld [vmem:[%s3064 + $0xf0] sm:$0xff]
    %v3096 = vld [vmem:[%s3064 + $0xf8] sm:$0xff]
    %v3097 = vld [vmem:[%s3064 + $0x100] sm:$0xff]
    %v3098 = vld [vmem:[%s3064 + $0x108] sm:$0xff]
    %v3099 = vld [vmem:[%s3064 + $0x110] sm:$0xff]
    %v3100 = vld [vmem:[%s3064 + $0x118] sm:$0xff]
    %v3101 = vld [vmem:[%s3064 + $0x120] sm:$0xff]
    %v3102 = vld [vmem:[%s3064 + $0x128] sm:$0xff]
    %v3103 = vld [vmem:[%s3064 + $0x130] sm:$0xff]
    %v3104 = vld [vmem:[%s3064 + $0x138] sm:$0xff]
    %v3105 = vld [vmem:[%s3064 + $0x140] sm:$0xff]
    %v3106 = vld [vmem:[%s3064 + $0x148] sm:$0xff]
    %v3107 = vld [vmem:[%s3064 + $0x150] sm:$0xff]
    %v3108 = vld [vmem:[%s3064 + $0x158] sm:$0xff]
    %v3109 = vld [vmem:[%s3064 + $0x160] sm:$0xff]
    %v3110 = vld [vmem:[%s3064 + $0x168] sm:$0xff]
    %v3111 = vld [vmem:[%s3064 + $0x170] sm:$0xff]
    %v3112 = vld [vmem:[%s3064 + $0x178] sm:$0xff]
    %v3113 = vld [vmem:[%s3064 + $0x180] sm:$0xff]
    %v3114 = vld [vmem:[%s3064 + $0x188] sm:$0xff]
    %v3115 = vld [vmem:[%s3064 + $0x190] sm:$0xff]
    %v3116 = vld [vmem:[%s3064 + $0x198] sm:$0xff]
    %v3117 = vld [vmem:[%s3064 + $0x1a0] sm:$0xff]
    %v3118 = vld [vmem:[%s3064 + $0x1a8] sm:$0xff]
    %v3119 = vld [vmem:[%s3064 + $0x1b0] sm:$0xff]
    %v3120 = vld [vmem:[%s3064 + $0x1b8] sm:$0xff]
    %v3121 = vld [vmem:[%s3064 + $0x1c0] sm:$0xff]
    %v3122 = vld [vmem:[%s3064 + $0x1c8] sm:$0xff]
    %v3123 = vld [vmem:[%s3064 + $0x1d0] sm:$0xff]
    %v3124 = vld [vmem:[%s3064 + $0x1d8] sm:$0xff]
    %v3125 = vld [vmem:[%s3064 + $0x1e0] sm:$0xff]
    %v3126 = vld [vmem:[%s3064 + $0x1e8] sm:$0xff]
    %v3127 = vld [vmem:[%s3064 + $0x1f0] sm:$0xff]
    %v3128 = vld [vmem:[%s3064 + $0x1f8] sm:$0xff]
    %v3129 = vld [vmem:[%s3064 + $0x200] sm:$0xff]
    %v3130 = vld [vmem:[%s3064 + $0x208] sm:$0xff]
    %v3131 = vld [vmem:[%s3064 + $0x210] sm:$0xff]
    %v3132 = vld [vmem:[%s3064 + $0x218] sm:$0xff]
    %v3133 = vld [vmem:[%s3064 + $0x220] sm:$0xff]
    %v3134 = vld [vmem:[%s3064 + $0x228] sm:$0xff]
    %v3135 = vld [vmem:[%s3064 + $0x230] sm:$0xff]
    %v3136 = vld [vmem:[%s3064 + $0x238] sm:$0xff]
    %v3137 = vld [vmem:[%s3064 + $0x240] sm:$0xff]
    %v3138 = vld [vmem:[%s3064 + $0x248] sm:$0xff]
    %v3139 = vld [vmem:[%s3064 + $0x250] sm:$0xff]
    %v3140 = vld [vmem:[%s3064 + $0x258] sm:$0xff]
    %v3141 = vld [vmem:[%s3064 + $0x260] sm:$0xff]
    %v3142 = vld [vmem:[%s3064 + $0x268] sm:$0xff]
    %v3143 = vld [vmem:[%s3064 + $0x270] sm:$0xff]
    %v3144 = vld [vmem:[%s3064 + $0x278] sm:$0xff]
    %v3145 = vld [vmem:[%s3064 + $0x280] sm:$0xff]
    %v3146 = vld [vmem:[%s3064 + $0x288] sm:$0xff]
    %v3147 = vld [vmem:[%s3064 + $0x290] sm:$0xff]
    %v3148 = vld [vmem:[%s3064 + $0x298] sm:$0xff]
    %v3149 = vld [vmem:[%s3064 + $0x2a0] sm:$0xff]
    %v3150 = vld [vmem:[%s3064 + $0x2a8] sm:$0xff]
    %v3151 = vld [vmem:[%s3064 + $0x2b0] sm:$0xff]
    %v3152 = vld [vmem:[%s3064 + $0x2b8] sm:$0xff]
    %v3153 = vld [vmem:[%s3064 + $0x2c0] sm:$0xff]
    %v3154 = vld [vmem:[%s3064 + $0x2c8] sm:$0xff]
    %v3155 = vld [vmem:[%s3064 + $0x2d0] sm:$0xff]
    %v3156 = vld [vmem:[%s3064 + $0x2d8] sm:$0xff]
    %v3157 = vld [vmem:[%s3064 + $0x2e0] sm:$0xff]
    %v3158 = vld [vmem:[%s3064 + $0x2e8] sm:$0xff]
    %v3159 = vld [vmem:[%s3064 + $0x2f0] sm:$0xff]
    %v3160 = vld [vmem:[%s3064 + $0x2f8] sm:$0xff]
    %v3161 = vld [vmem:[%s3064 + $0x360] sm:$0xff]
    %v3162 = vld [vmem:[%s3064 + $0x368] sm:$0xff]
    %v3163 = vld [vmem:[%s3064 + $0x370] sm:$0xff]
    %v3164 = vld [vmem:[%s3064 + $0x378] sm:$0xff]
    %v3165 = vld [vmem:[%s3064 + $0x380] sm:$0xff]
    %v3166 = vld [vmem:[%s3064 + $0x388] sm:$0xff]
    %v3167 = vld [vmem:[%s3064 + $0x390] sm:$0xff]
    %v3168 = vld [vmem:[%s3064 + $0x398] sm:$0xff]
    %v3169 = vld [vmem:[%s3064 + $0x3a0] sm:$0xff]
    %v3170 = vld [vmem:[%s3064 + $0x3a8] sm:$0xff]
    %v3171 = vld [vmem:[%s3064 + $0x3b0] sm:$0xff]
    %v3172 = vld [vmem:[%s3064 + $0x3b8] sm:$0xff]
    %v3173 = vld [vmem:[%s3064 + $0x3c0] sm:$0xff]
    %v3174 = vld [vmem:[%s3064 + $0x3c8] sm:$0xff]
    %v3175 = vld [vmem:[%s3064 + $0x3d0] sm:$0xff]
    %v3176 = vld [vmem:[%s3064 + $0x3d8] sm:$0xff]
    %v3177 = vld [vmem:[%s3064 + $0x3e0] sm:$0xff]
    %v3178 = vld [vmem:[%s3064 + $0x3e8] sm:$0xff]
    %v3179 = vld [vmem:[%s3064 + $0x3f0] sm:$0xff]
    %v3180 = vld [vmem:[%s3064 + $0x3f8] sm:$0xff]
    %v3181 = vld [vmem:[%s3064 + $0x400] sm:$0xff]
    %v3182 = vld [vmem:[%s3064 + $0x408] sm:$0xff]
    %v3183 = vld [vmem:[%s3064 + $0x410] sm:$0xff]
    %v3184 = vld [vmem:[%s3064 + $0x418] sm:$0xff]
    %v3185 = vld [vmem:[%s3064 + $0x420] sm:$0xff]
    %v3186 = vld [vmem:[%s3064 + $0x428] sm:$0xff]
    %v3187 = vld [vmem:[%s3064 + $0x430] sm:$0xff]
    %v3188 = vld [vmem:[%s3064 + $0x438] sm:$0xff]
    %v3189 = vld [vmem:[%s3064 + $0x440] sm:$0xff]
    %v3190 = vld [vmem:[%s3064 + $0x448] sm:$0xff]
    %v3191 = vld [vmem:[%s3064 + $0x450] sm:$0xff]
    %v3192 = vld [vmem:[%s3064 + $0x458] sm:$0xff]
    %v3193 = vld [vmem:[%s3064 + $0x460] sm:$0xff]
    %v3194 = vld [vmem:[%s3064 + $0x468] sm:$0xff]
    %v3195 = vld [vmem:[%s3064 + $0x470] sm:$0xff]
    %v3196 = vld [vmem:[%s3064 + $0x478] sm:$0xff]
    %v3197 = vld [vmem:[%s3064 + $0x480] sm:$0xff]
    %v3198 = vld [vmem:[%s3064 + $0x488] sm:$0xff]
    %v3199 = vld [vmem:[%s3064 + $0x490] sm:$0xff]
    %v3200 = vld [vmem:[%s3064 + $0x498] sm:$0xff]
    %v3201 = vld [vmem:[%s3064 + $0x4a0] sm:$0xff]
    %v3202 = vld [vmem:[%s3064 + $0x4a8] sm:$0xff]
    %v3203 = vld [vmem:[%s3064 + $0x4b0] sm:$0xff]
    %v3204 = vld [vmem:[%s3064 + $0x4b8] sm:$0xff]
    %v3205 = vld [vmem:[%s3064 + $0x4c0] sm:$0xff]
    %v3206 = vld [vmem:[%s3064 + $0x4c8] sm:$0xff]
    %v3207 = vld [vmem:[%s3064 + $0x4d0] sm:$0xff]
    %v3208 = vld [vmem:[%s3064 + $0x4d8] sm:$0xff]
    %v3209 = vld [vmem:[%s3064 + $0x4e0] sm:$0xff]
    %v3210 = vld [vmem:[%s3064 + $0x4e8] sm:$0xff]
    %v3211 = vld [vmem:[%s3064 + $0x4f0] sm:$0xff]
    %v3212 = vld [vmem:[%s3064 + $0x4f8] sm:$0xff]
    %v3213 = vld [vmem:[%s3064 + $0x500] sm:$0xff]
    %v3214 = vld [vmem:[%s3064 + $0x508] sm:$0xff]
    %v3215 = vld [vmem:[%s3064 + $0x510] sm:$0xff]
    %v3216 = vld [vmem:[%s3064 + $0x518] sm:$0xff]
    %v3217 = vld [vmem:[%s3064 + $0x520] sm:$0xff]
    %v3218 = vld [vmem:[%s3064 + $0x528] sm:$0xff]
    %v3219 = vld [vmem:[%s3064 + $0x530] sm:$0xff]
    %v3220 = vld [vmem:[%s3064 + $0x538] sm:$0xff]
    %v3221 = vld [vmem:[%s3064 + $0x540] sm:$0xff]
    %v3222 = vld [vmem:[%s3064 + $0x548] sm:$0xff]
    %v3223 = vld [vmem:[%s3064 + $0x550] sm:$0xff]
    %v3224 = vld [vmem:[%s3064 + $0x558] sm:$0xff]
    %v3225 = vld [vmem:[%s3064 + $0x560] sm:$0xff]
    %v3226 = vld [vmem:[%s3064 + $0x568] sm:$0xff]
    %v3227 = vld [vmem:[%s3064 + $0x570] sm:$0xff]
    %v3228 = vld [vmem:[%s3064 + $0x578] sm:$0xff]
    %v3229 = vld [vmem:[%s3064 + $0x580] sm:$0xff]
    %v3230 = vld [vmem:[%s3064 + $0x588] sm:$0xff]
    %v3231 = vld [vmem:[%s3064 + $0x590] sm:$0xff]
    %v3232 = vld [vmem:[%s3064 + $0x598] sm:$0xff]
    %v3233 = vld [vmem:[%s3064 + $0x5a0] sm:$0xff]
    %v3234 = vld [vmem:[%s3064 + $0x5a8] sm:$0xff]
    %v3235 = vld [vmem:[%s3064 + $0x5b0] sm:$0xff]
    %v3236 = vld [vmem:[%s3064 + $0x5b8] sm:$0xff]
    %v3237 = vld [vmem:[%s3064 + $0x5c0] sm:$0xff]
    %v3238 = vld [vmem:[%s3064 + $0x5c8] sm:$0xff]
    %v3239 = vld [vmem:[%s3064 + $0x5d0] sm:$0xff]
    %v3240 = vld [vmem:[%s3064 + $0x5d8] sm:$0xff]
    %v3241 = vld [vmem:[%s3064 + $0x5e0] sm:$0xff]
    %v3242 = vld [vmem:[%s3064 + $0x5e8] sm:$0xff]
    %v3243 = vld [vmem:[%s3064 + $0x5f0] sm:$0xff]
    %v3244 = vld [vmem:[%s3064 + $0x5f8] sm:$0xff]
    %v3245 = vld [vmem:[%s3064 + $0x600] sm:$0xff]
    %v3246 = vld [vmem:[%s3064 + $0x608] sm:$0xff]
    %v3247 = vld [vmem:[%s3064 + $0x610] sm:$0xff]
    %v3248 = vld [vmem:[%s3064 + $0x618] sm:$0xff]
    %v3249 = vld [vmem:[%s3064 + $0x620] sm:$0xff]
    %v3250 = vld [vmem:[%s3064 + $0x628] sm:$0xff]
    %v3251 = vld [vmem:[%s3064 + $0x630] sm:$0xff]
    %v3252 = vld [vmem:[%s3064 + $0x638] sm:$0xff]
    %v3253 = vld [vmem:[%s3064 + $0x640] sm:$0xff]
    %v3254 = vld [vmem:[%s3064 + $0x648] sm:$0xff]
    %v3255 = vld [vmem:[%s3064 + $0x650] sm:$0xff]
    %v3256 = vld [vmem:[%s3064 + $0x658] sm:$0xff]
    %s3257 = scalar_lea.vmem %s3, 768
    %v3258 = vld [vmem:[%s3257] sm:$0xff]
    %v3259 = vld [vmem:[%s3257 + $0x8] sm:$0xff]
    %v3260 = vld [vmem:[%s3257 + $0x10] sm:$0xff]
    %v3261 = vld [vmem:[%s3257 + $0x18] sm:$0xff]
    %v3262 = vld [vmem:[%s3257 + $0x20] sm:$0xff]
    %v3263 = vld [vmem:[%s3257 + $0x28] sm:$0xff]
    %v3264 = vld [vmem:[%s3257 + $0x30] sm:$0xff]
    %v3265 = vld [vmem:[%s3257 + $0x38] sm:$0xff]
    %v3266 = vld [vmem:[%s3257 + $0x40] sm:$0xff]
    %v3267 = vld [vmem:[%s3257 + $0x48] sm:$0xff]
    %v3268 = vld [vmem:[%s3257 + $0x50] sm:$0xff]
    %v3269 = vld [vmem:[%s3257 + $0x58] sm:$0xff]
    %v3270 = vld [vmem:[%s3257 + $0x60] sm:$0xff]
    %v3271 = vld [vmem:[%s3257 + $0x68] sm:$0xff]
    %v3272 = vld [vmem:[%s3257 + $0x70] sm:$0xff]
    %v3273 = vld [vmem:[%s3257 + $0x78] sm:$0xff]
    %v3274 = vld [vmem:[%s3257 + $0x80] sm:$0xff]
    %v3275 = vld [vmem:[%s3257 + $0x88] sm:$0xff]
    %v3276 = vld [vmem:[%s3257 + $0x90] sm:$0xff]
    %v3277 = vld [vmem:[%s3257 + $0x98] sm:$0xff]
    %v3278 = vld [vmem:[%s3257 + $0xa0] sm:$0xff]
    %v3279 = vld [vmem:[%s3257 + $0xa8] sm:$0xff]
    %v3280 = vld [vmem:[%s3257 + $0xb0] sm:$0xff]
    %v3281 = vld [vmem:[%s3257 + $0xb8] sm:$0xff]
    %v3282 = vld [vmem:[%s3257 + $0xc0] sm:$0xff]
    %v3283 = vld [vmem:[%s3257 + $0xc8] sm:$0xff]
    %v3284 = vld [vmem:[%s3257 + $0xd0] sm:$0xff]
    %v3285 = vld [vmem:[%s3257 + $0xd8] sm:$0xff]
    %v3286 = vld [vmem:[%s3257 + $0xe0] sm:$0xff]
    %v3287 = vld [vmem:[%s3257 + $0xe8] sm:$0xff]
    %v3288 = vld [vmem:[%s3257 + $0xf0] sm:$0xff]
    %v3289 = vld [vmem:[%s3257 + $0xf8] sm:$0xff]
    %v3290 = vld [vmem:[%s3257 + $0x100] sm:$0xff]
    %v3291 = vld [vmem:[%s3257 + $0x108] sm:$0xff]
    %v3292 = vld [vmem:[%s3257 + $0x110] sm:$0xff]
    %v3293 = vld [vmem:[%s3257 + $0x118] sm:$0xff]
    %v3294 = vld [vmem:[%s3257 + $0x120] sm:$0xff]
    %v3295 = vld [vmem:[%s3257 + $0x128] sm:$0xff]
    %v3296 = vld [vmem:[%s3257 + $0x130] sm:$0xff]
    %v3297 = vld [vmem:[%s3257 + $0x138] sm:$0xff]
    %v3298 = vld [vmem:[%s3257 + $0x140] sm:$0xff]
    %v3299 = vld [vmem:[%s3257 + $0x148] sm:$0xff]
    %v3300 = vld [vmem:[%s3257 + $0x150] sm:$0xff]
    %v3301 = vld [vmem:[%s3257 + $0x158] sm:$0xff]
    %v3302 = vld [vmem:[%s3257 + $0x160] sm:$0xff]
    %v3303 = vld [vmem:[%s3257 + $0x168] sm:$0xff]
    %v3304 = vld [vmem:[%s3257 + $0x170] sm:$0xff]
    %v3305 = vld [vmem:[%s3257 + $0x178] sm:$0xff]
    %3306 = vmatprep.subr.mxu0 0.0
    %3307 = vmatpush1.msra.mxu0 %v3258
    %3308 = vmatprep.subr.mxu0 0.0
    %3309 = vmatpush1.msra.mxu0 %v3259
    %3310 = vmatprep.subr.mxu0 0.0
    %3311 = vmatpush1.msra.mxu0 %v3260
    %3312 = vmatprep.subr.mxu0 0.0
    %3313 = vmatpush1.msra.mxu0 %v3261
    %3314 = vmatprep.subr.mxu0 0.0
    %3315 = vmatpush1.msra.mxu0 %v3262
    %3316 = vmatprep.subr.mxu0 0.0
    %3317 = vmatpush1.msra.mxu0 %v3263
    %3318 = vmatprep.subr.mxu0 0.0
    %3319 = vmatpush1.msra.mxu0 %v3264
    %3320 = vmatprep.subr.mxu0 0.0
    %3321 = vmatpush1.msra.mxu0 %v3265
    %3322 = vmatprep.subr.mxu0 0.0
    %3323 = vmatpush1.msra.mxu0 %v3266
    %3324 = vmatprep.subr.mxu0 0.0
    %3325 = vmatpush1.msra.mxu0 %v3267
    %3326 = vmatprep.subr.mxu0 0.0
    %3327 = vmatpush1.msra.mxu0 %v3268
    %3328 = vmatprep.subr.mxu0 0.0
    %3329 = vmatpush1.msra.mxu0 %v3269
    %3330 = vmatprep.subr.mxu0 0.0
    %3331 = vmatpush1.msra.mxu0 %v3270
    %3332 = vmatprep.subr.mxu0 0.0
    %3333 = vmatpush1.msra.mxu0 %v3271
    %3334 = vmatprep.subr.mxu0 0.0
    %3335 = vmatpush1.msra.mxu0 %v3272
    %3336 = vmatprep.subr.mxu0 0.0
    %3337 = vmatpush1.msra.mxu0 %v3273
    %3338 = vmatprep.subr.mxu0 0.0
    %3339 = vmatpush1.msra.mxu0 %v3274
    %3340 = vmatprep.subr.mxu0 0.0
    %3341 = vmatpush1.msra.mxu0 %v3275
    %3342 = vmatprep.subr.mxu0 0.0
    %3343 = vmatpush1.msra.mxu0 %v3276
    %3344 = vmatprep.subr.mxu0 0.0
    %3345 = vmatpush1.msra.mxu0 %v3277
    %3346 = vmatprep.subr.mxu0 0.0
    %3347 = vmatpush1.msra.mxu0 %v3278
    %3348 = vmatprep.subr.mxu0 0.0
    %3349 = vmatpush1.msra.mxu0 %v3279
    %3350 = vmatprep.subr.mxu0 0.0
    %3351 = vmatpush1.msra.mxu0 %v3280
    %3352 = vmatprep.subr.mxu0 0.0
    %3353 = vmatpush1.msra.mxu0 %v3281
    %3354 = vmatprep.subr.mxu0 0.0
    %3355 = vmatpush1.msra.mxu0 %v3282
    %3356 = vmatprep.subr.mxu0 0.0
    %3357 = vmatpush1.msra.mxu0 %v3283
    %3358 = vmatprep.subr.mxu0 0.0
    %3359 = vmatpush1.msra.mxu0 %v3284
    %3360 = vmatprep.subr.mxu0 0.0
    %3361 = vmatpush1.msra.mxu0 %v3285
    %3362 = vmatprep.subr.mxu0 0.0
    %3363 = vmatpush1.msra.mxu0 %v3286
    %3364 = vmatprep.subr.mxu0 0.0
    %3365 = vmatpush1.msra.mxu0 %v3287
    %3366 = vmatprep.subr.mxu0 0.0
    %3367 = vmatpush1.msra.mxu0 %v3288
    %3368 = vmatprep.subr.mxu0 0.0
    %3369 = vmatpush1.msra.mxu0 %v3289
    %3370 = vmatprep.mubr.f32.mxu0 %v3066
    %3371 = vmatmul.mubr.f32.gmra.mrb[0].mxu0 %v3065
    %v3372 = vpop.f32.mrb[0].mxu0
    %v3373 = vadd.f32 0.0, %v3372
    %v3374 = vpop.f32.mrb[0].mxu0
    %3375 = vmatprep.mubr.f32.mxu0 %v3069
    %3376 = vmatmul.mubr.f32.gmra.mrb[0].mxu0 %v3068
    %v3377 = vpop.f32.mrb[0].mxu0
    %v3378 = vadd.f32 0.0, %v3377
    %v3379 = vpop.f32.mrb[0].mxu0
    %3380 = vmatprep.mubr.f32.mxu0 %v3072
    %3381 = vmatmul.mubr.f32.gmra.mrb[0].mxu0 %v3071
    %v3382 = vpop.f32.mrb[0].mxu0
    %v3383 = vadd.f32 0.0, %v3382
    %v3384 = vpop.f32.mrb[0].mxu0
    %3385 = vmatprep.mubr.f32.mxu0 %v3075
    %3386 = vmatmul.mubr.f32.gmra.mrb[0].mxu0 %v3074
    %v3387 = vpop.f32.mrb[0].mxu0
    %v3388 = vadd.f32 0.0, %v3387
    %v3389 = vpop.f32.mrb[0].mxu0
    %3390 = vmatprep.mubr.f32.mxu0 %v3078
    %3391 = vmatmul.mubr.f32.gmra.mrb[0].mxu0 %v3077
    %v3392 = vpop.f32.mrb[0].mxu0
    %v3393 = vadd.f32 0.0, %v3392
    %v3394 = vpop.f32.mrb[0].mxu0
    %3395 = vmatprep.mubr.f32.mxu0 %v3081
    %3396 = vmatmul.mubr.f32.gmra.mrb[0].mxu0 %v3080
    %v3397 = vpop.f32.mrb[0].mxu0
    %v3398 = vadd.f32 0.0, %v3397
    %v3399 = vpop.f32.mrb[0].mxu0
    %3400 = vmatprep.mubr.f32.mxu0 %v3084
    %3401 = vmatmul.mubr.f32.gmra.mrb[0].mxu0 %v3083
    %v3402 = vpop.f32.mrb[0].mxu0
    %v3403 = vadd.f32 0.0, %v3402
    %v3404 = vpop.f32.mrb[0].mxu0
    %3405 = vmatprep.mubr.f32.mxu0 %v3087
    %3406 = vmatmul.mubr.f32.gmra.mrb[0].mxu0 %v3086
    %v3407 = vpop.f32.mrb[0].mxu0
    %v3408 = vadd.f32 0.0, %v3407
    %v3409 = vpop.f32.mrb[0].mxu0
    %3410 = vmatprep.mubr.f32.mxu0 %v3090
    %3411 = vmatmul.mubr.f32.gmra.mrb[0].mxu0 %v3089
    %v3412 = vpop.f32.mrb[0].mxu0
    %v3413 = vadd.f32 0.0, %v3412
    %v3414 = vpop.f32.mrb[0].mxu0
    %3415 = vmatprep.mubr.f32.mxu0 %v3093
    %3416 = vmatmul.mubr.f32.gmra.mrb[0].mxu0 %v3092
    %v3417 = vpop.f32.mrb[0].mxu0
    %v3418 = vadd.f32 0.0, %v3417
    %v3419 = vpop.f32.mrb[0].mxu0
    %3420 = vmatprep.mubr.f32.mxu0 %v3096
    %3421 = vmatmul.mubr.f32.gmra.mrb[0].mxu0 %v3095
    %v3422 = vpop.f32.mrb[0].mxu0
    %v3423 = vadd.f32 0.0, %v3422
    %v3424 = vpop.f32.mrb[0].mxu0
    %3425 = vmatprep.mubr.f32.mxu0 %v3099
    %3426 = vmatmul.mubr.f32.gmra.mrb[0].mxu0 %v3098
    %v3427 = vpop.f32.mrb[0].mxu0
    %v3428 = vadd.f32 0.0, %v3427
    %v3429 = vpop.f32.mrb[0].mxu0
    %3430 = vmatprep.mubr.f32.mxu0 %v3102
    %3431 = vmatmul.mubr.f32.gmra.mrb[0].mxu0 %v3101
    %v3432 = vpop.f32.mrb[0].mxu0
    %v3433 = vadd.f32 0.0, %v3432
    %v3434 = vpop.f32.mrb[0].mxu0
    %3435 = vmatprep.mubr.f32.mxu0 %v3105
    %3436 = vmatmul.mubr.f32.gmra.mrb[0].mxu0 %v3104
    %v3437 = vpop.f32.mrb[0].mxu0
    %v3438 = vadd.f32 0.0, %v3437
    %v3439 = vpop.f32.mrb[0].mxu0
    %3440 = vmatprep.mubr.f32.mxu0 %v3108
    %3441 = vmatmul.mubr.f32.gmra.mrb[0].mxu0 %v3107
    %v3442 = vpop.f32.mrb[0].mxu0
    %v3443 = vadd.f32 0.0, %v3442
    %v3444 = vpop.f32.mrb[0].mxu0
    %3445 = vmatprep.mubr.f32.mxu0 %v3111
    %3446 = vmatmul.mubr.f32.gmra.mrb[0].mxu0 %v3110
    %v3447 = vpop.f32.mrb[0].mxu0
    %v3448 = vadd.f32 0.0, %v3447
    %v3449 = vpop.f32.mrb[0].mxu0
    %3450 = vmatprep.mubr.f32.mxu0 %v3114
    %3451 = vmatmul.mubr.f32.gmra.mrb[0].mxu0 %v3113
    %v3452 = vpop.f32.mrb[0].mxu0
    %v3453 = vadd.f32 0.0, %v3452
    %v3454 = vpop.f32.mrb[0].mxu0
    %3455 = vmatprep.mubr.f32.mxu0 %v3117
    %3456 = vmatmul.mubr.f32.gmra.mrb[0].mxu0 %v3116
    %v3457 = vpop.f32.mrb[0].mxu0
    %v3458 = vadd.f32 0.0, %v3457
    %v3459 = vpop.f32.mrb[0].mxu0
    %3460 = vmatprep.mubr.f32.mxu0 %v3120
    %3461 = vmatmul.mubr.f32.gmra.mrb[0].mxu0 %v3119
    %v3462 = vpop.f32.mrb[0].mxu0
    %v3463 = vadd.f32 0.0, %v3462
    %v3464 = vpop.f32.mrb[0].mxu0
    %3465 = vmatprep.mubr.f32.mxu0 %v3123
    %3466 = vmatmul.mubr.f32.gmra.mrb[0].mxu0 %v3122
    %v3467 = vpop.f32.mrb[0].mxu0
    %v3468 = vadd.f32 0.0, %v3467
    %v3469 = vpop.f32.mrb[0].mxu0
    %3470 = vmatprep.mubr.f32.mxu0 %v3126
    %3471 = vmatmul.mubr.f32.gmra.mrb[0].mxu0 %v3125
    %v3472 = vpop.f32.mrb[0].mxu0
    %v3473 = vadd.f32 0.0, %v3472
    %v3474 = vpop.f32.mrb[0].mxu0
    %3475 = vmatprep.mubr.f32.mxu0 %v3129
    %3476 = vmatmul.mubr.f32.gmra.mrb[0].mxu0 %v3128
    %v3477 = vpop.f32.mrb[0].mxu0
    %v3478 = vadd.f32 0.0, %v3477
    %v3479 = vpop.f32.mrb[0].mxu0
    %3480 = vmatprep.mubr.f32.mxu0 %v3132
    %3481 = vmatmul.mubr.f32.gmra.mrb[0].mxu0 %v3131
    %v3482 = vpop.f32.mrb[0].mxu0
    %v3483 = vadd.f32 0.0, %v3482
    %v3484 = vpop.f32.mrb[0].mxu0
    %3485 = vmatprep.mubr.f32.mxu0 %v3135
    %3486 = vmatmul.mubr.f32.gmra.mrb[0].mxu0 %v3134
    %v3487 = vpop.f32.mrb[0].mxu0
    %v3488 = vadd.f32 0.0, %v3487
    %v3489 = vpop.f32.mrb[0].mxu0
    %3490 = vmatprep.mubr.f32.mxu0 %v3138
    %3491 = vmatmul.mubr.f32.gmra.mrb[0].mxu0 %v3137
    %v3492 = vpop.f32.mrb[0].mxu0
    %v3493 = vadd.f32 0.0, %v3492
    %v3494 = vpop.f32.mrb[0].mxu0
    %3495 = vmatprep.mubr.f32.mxu0 %v3141
    %3496 = vmatmul.mubr.f32.gmra.mrb[0].mxu0 %v3140
    %v3497 = vpop.f32.mrb[0].mxu0
    %v3498 = vadd.f32 0.0, %v3497
    %v3499 = vpop.f32.mrb[0].mxu0
    %3500 = vmatprep.mubr.f32.mxu0 %v3144
    %3501 = vmatmul.mubr.f32.gmra.mrb[0].mxu0 %v3143
    %v3502 = vpop.f32.mrb[0].mxu0
    %v3503 = vadd.f32 0.0, %v3502
    %v3504 = vpop.f32.mrb[0].mxu0
    %3505 = vmatprep.mubr.f32.mxu0 %v3147
    %3506 = vmatmul.mubr.f32.gmra.mrb[0].mxu0 %v3146
    %v3507 = vpop.f32.mrb[0].mxu0
    %v3508 = vadd.f32 0.0, %v3507
    %v3509 = vpop.f32.mrb[0].mxu0
    %3510 = vmatprep.mubr.f32.mxu0 %v3150
    %3511 = vmatmul.mubr.f32.gmra.mrb[0].mxu0 %v3149
    %v3512 = vpop.f32.mrb[0].mxu0
    %v3513 = vadd.f32 0.0, %v3512
    %v3514 = vpop.f32.mrb[0].mxu0
    %3515 = vmatprep.mubr.f32.mxu0 %v3153
    %3516 = vmatmul.mubr.f32.gmra.mrb[0].mxu0 %v3152
    %v3517 = vpop.f32.mrb[0].mxu0
    %v3518 = vadd.f32 0.0, %v3517
    %v3519 = vpop.f32.mrb[0].mxu0
    %3520 = vmatprep.mubr.f32.mxu0 %v3156
    %3521 = vmatmul.mubr.f32.gmra.mrb[0].mxu0 %v3155
    %v3522 = vpop.f32.mrb[0].mxu0
    %v3523 = vadd.f32 0.0, %v3522
    %v3524 = vpop.f32.mrb[0].mxu0
    %3525 = vmatprep.mubr.f32.mxu0 %v3159
    %3526 = vmatmul.mubr.f32.gmra.mrb[0].mxu0 %v3158
    %v3527 = vpop.f32.mrb[0].mxu0
    %v3528 = vadd.f32 0.0, %v3527
    %v3529 = vpop.f32.mrb[0].mxu0
    %3530 = vmatprep.mubr.f32.mxu0 %v3162
    %3531 = vmatmul.mubr.f32.gmra.mrb[0].mxu0 %v3161
    %v3532 = vpop.f32.mrb[0].mxu0
    %v3533 = vadd.f32 0.0, %v3532
    %v3534 = vpop.f32.mrb[0].mxu0
    %3535 = vmatprep.mubr.f32.mxu0 %v3165
    %3536 = vmatmul.mubr.f32.gmra.mrb[0].mxu0 %v3164
    %v3537 = vpop.f32.mrb[0].mxu0
    %v3538 = vadd.f32 0.0, %v3537
    %v3539 = vpop.f32.mrb[0].mxu0
    %3540 = vmatprep.mubr.f32.mxu0 %v3168
    %3541 = vmatmul.mubr.f32.gmra.mrb[0].mxu0 %v3167
    %v3542 = vpop.f32.mrb[0].mxu0
    %v3543 = vadd.f32 0.0, %v3542
    %v3544 = vpop.f32.mrb[0].mxu0
    %3545 = vmatprep.mubr.f32.mxu0 %v3171
    %3546 = vmatmul.mubr.f32.gmra.mrb[0].mxu0 %v3170
    %v3547 = vpop.f32.mrb[0].mxu0
    %v3548 = vadd.f32 0.0, %v3547
    %v3549 = vpop.f32.mrb[0].mxu0
    %3550 = vmatprep.mubr.f32.mxu0 %v3174
    %3551 = vmatmul.mubr.f32.gmra.mrb[0].mxu0 %v3173
    %v3552 = vpop.f32.mrb[0].mxu0
    %v3553 = vadd.f32 0.0, %v3552
    %v3554 = vpop.f32.mrb[0].mxu0
    %3555 = vmatprep.mubr.f32.mxu0 %v3177
    %3556 = vmatmul.mubr.f32.gmra.mrb[0].mxu0 %v3176
    %v3557 = vpop.f32.mrb[0].mxu0
    %v3558 = vadd.f32 0.0, %v3557
    %v3559 = vpop.f32.mrb[0].mxu0
    %3560 = vmatprep.mubr.f32.mxu0 %v3180
    %3561 = vmatmul.mubr.f32.gmra.mrb[0].mxu0 %v3179
    %v3562 = vpop.f32.mrb[0].mxu0
    %v3563 = vadd.f32 0.0, %v3562
    %v3564 = vpop.f32.mrb[0].mxu0
    %3565 = vmatprep.mubr.f32.mxu0 %v3183
    %3566 = vmatmul.mubr.f32.gmra.mrb[0].mxu0 %v3182
    %v3567 = vpop.f32.mrb[0].mxu0
    %v3568 = vadd.f32 0.0, %v3567
    %v3569 = vpop.f32.mrb[0].mxu0
    %3570 = vmatprep.mubr.f32.mxu0 %v3186
    %3571 = vmatmul.mubr.f32.gmra.mrb[0].mxu0 %v3185
    %v3572 = vpop.f32.mrb[0].mxu0
    %v3573 = vadd.f32 0.0, %v3572
    %v3574 = vpop.f32.mrb[0].mxu0
    %3575 = vmatprep.mubr.f32.mxu0 %v3189
    %3576 = vmatmul.mubr.f32.gmra.mrb[0].mxu0 %v3188
    %v3577 = vpop.f32.mrb[0].mxu0
    %v3578 = vadd.f32 0.0, %v3577
    %v3579 = vpop.f32.mrb[0].mxu0
    %3580 = vmatprep.mubr.f32.mxu0 %v3192
    %3581 = vmatmul.mubr.f32.gmra.mrb[0].mxu0 %v3191
    %v3582 = vpop.f32.mrb[0].mxu0
    %v3583 = vadd.f32 0.0, %v3582
    %v3584 = vpop.f32.mrb[0].mxu0
    %3585 = vmatprep.mubr.f32.mxu0 %v3195
    %3586 = vmatmul.mubr.f32.gmra.mrb[0].mxu0 %v3194
    %v3587 = vpop.f32.mrb[0].mxu0
    %v3588 = vadd.f32 0.0, %v3587
    %v3589 = vpop.f32.mrb[0].mxu0
    %3590 = vmatprep.mubr.f32.mxu0 %v3198
    %3591 = vmatmul.mubr.f32.gmra.mrb[0].mxu0 %v3197
    %v3592 = vpop.f32.mrb[0].mxu0
    %v3593 = vadd.f32 0.0, %v3592
    %v3594 = vpop.f32.mrb[0].mxu0
    %3595 = vmatprep.mubr.f32.mxu0 %v3201
    %3596 = vmatmul.mubr.f32.gmra.mrb[0].mxu0 %v3200
    %v3597 = vpop.f32.mrb[0].mxu0
    %v3598 = vadd.f32 0.0, %v3597
    %v3599 = vpop.f32.mrb[0].mxu0
    %3600 = vmatprep.mubr.f32.mxu0 %v3204
    %3601 = vmatmul.mubr.f32.gmra.mrb[0].mxu0 %v3203
    %v3602 = vpop.f32.mrb[0].mxu0
    %v3603 = vadd.f32 0.0, %v3602
    %v3604 = vpop.f32.mrb[0].mxu0
    %3605 = vmatprep.mubr.f32.mxu0 %v3207
    %3606 = vmatmul.mubr.f32.gmra.mrb[0].mxu0 %v3206
    %v3607 = vpop.f32.mrb[0].mxu0
    %v3608 = vadd.f32 0.0, %v3607
    %v3609 = vpop.f32.mrb[0].mxu0
    %3610 = vmatprep.mubr.f32.mxu0 %v3210
    %3611 = vmatmul.mubr.f32.gmra.mrb[0].mxu0 %v3209
    %v3612 = vpop.f32.mrb[0].mxu0
    %v3613 = vadd.f32 0.0, %v3612
    %v3614 = vpop.f32.mrb[0].mxu0
    %3615 = vmatprep.mubr.f32.mxu0 %v3213
    %3616 = vmatmul.mubr.f32.gmra.mrb[0].mxu0 %v3212
    %v3617 = vpop.f32.mrb[0].mxu0
    %v3618 = vadd.f32 0.0, %v3617
    %v3619 = vpop.f32.mrb[0].mxu0
    %3620 = vmatprep.mubr.f32.mxu0 %v3216
    %3621 = vmatmul.mubr.f32.gmra.mrb[0].mxu0 %v3215
    %v3622 = vpop.f32.mrb[0].mxu0
    %v3623 = vadd.f32 0.0, %v3622
    %v3624 = vpop.f32.mrb[0].mxu0
    %3625 = vmatprep.mubr.f32.mxu0 %v3219
    %3626 = vmatmul.mubr.f32.gmra.mrb[0].mxu0 %v3218
    %v3627 = vpop.f32.mrb[0].mxu0
    %v3628 = vadd.f32 0.0, %v3627
    %v3629 = vpop.f32.mrb[0].mxu0
    %3630 = vmatprep.mubr.f32.mxu0 %v3222
    %3631 = vmatmul.mubr.f32.gmra.mrb[0].mxu0 %v3221
    %v3632 = vpop.f32.mrb[0].mxu0
    %v3633 = vadd.f32 0.0, %v3632
    %v3634 = vpop.f32.mrb[0].mxu0
    %3635 = vmatprep.mubr.f32.mxu0 %v3225
    %3636 = vmatmul.mubr.f32.gmra.mrb[0].mxu0 %v3224
    %v3637 = vpop.f32.mrb[0].mxu0
    %v3638 = vadd.f32 0.0, %v3637
    %v3639 = vpop.f32.mrb[0].mxu0
    %3640 = vmatprep.mubr.f32.mxu0 %v3228
    %3641 = vmatmul.mubr.f32.gmra.mrb[0].mxu0 %v3227
    %v3642 = vpop.f32.mrb[0].mxu0
    %v3643 = vadd.f32 0.0, %v3642
    %v3644 = vpop.f32.mrb[0].mxu0
    %3645 = vmatprep.mubr.f32.mxu0 %v3231
    %3646 = vmatmul.mubr.f32.gmra.mrb[0].mxu0 %v3230
    %v3647 = vpop.f32.mrb[0].mxu0
    %v3648 = vadd.f32 0.0, %v3647
    %v3649 = vpop.f32.mrb[0].mxu0
    %3650 = vmatprep.mubr.f32.mxu0 %v3234
    %3651 = vmatmul.mubr.f32.gmra.mrb[0].mxu0 %v3233
    %v3652 = vpop.f32.mrb[0].mxu0
    %v3653 = vadd.f32 0.0, %v3652
    %v3654 = vpop.f32.mrb[0].mxu0
    %3655 = vmatprep.mubr.f32.mxu0 %v3237
    %3656 = vmatmul.mubr.f32.gmra.mrb[0].mxu0 %v3236
    %v3657 = vpop.f32.mrb[0].mxu0
    %v3658 = vadd.f32 0.0, %v3657
    %v3659 = vpop.f32.mrb[0].mxu0
    %3660 = vmatprep.mubr.f32.mxu0 %v3240
    %3661 = vmatmul.mubr.f32.gmra.mrb[0].mxu0 %v3239
    %v3662 = vpop.f32.mrb[0].mxu0
    %v3663 = vadd.f32 0.0, %v3662
    %v3664 = vpop.f32.mrb[0].mxu0
    %3665 = vmatprep.mubr.f32.mxu0 %v3243
    %3666 = vmatmul.mubr.f32.gmra.mrb[0].mxu0 %v3242
    %v3667 = vpop.f32.mrb[0].mxu0
    %v3668 = vadd.f32 0.0, %v3667
    %v3669 = vpop.f32.mrb[0].mxu0
    %3670 = vmatprep.mubr.f32.mxu0 %v3246
    %3671 = vmatmul.mubr.f32.gmra.mrb[0].mxu0 %v3245
    %v3672 = vpop.f32.mrb[0].mxu0
    %v3673 = vadd.f32 0.0, %v3672
    %v3674 = vpop.f32.mrb[0].mxu0
    %3675 = vmatprep.mubr.f32.mxu0 %v3249
    %3676 = vmatmul.mubr.f32.gmra.mrb[0].mxu0 %v3248
    %v3677 = vpop.f32.mrb[0].mxu0
    %v3678 = vadd.f32 0.0, %v3677
    %v3679 = vpop.f32.mrb[0].mxu0
    %3680 = vmatprep.mubr.f32.mxu0 %v3252
    %3681 = vmatmul.mubr.f32.gmra.mrb[0].mxu0 %v3251
    %v3682 = vpop.f32.mrb[0].mxu0
    %v3683 = vadd.f32 0.0, %v3682
    %v3684 = vpop.f32.mrb[0].mxu0
    %3685 = vmatprep.mubr.f32.mxu0 %v3255
    %3686 = vmatmul.mubr.f32.gmra.mrb[0].mxu0 %v3254
    %v3687 = vpop.f32.mrb[0].mxu0
    %v3688 = vadd.f32 0.0, %v3687
    %v3689 = vpop.f32.mrb[0].mxu0
    %3690 = vdwg.mxu0
    %3691 = vmatprep.subr.mxu0 0.0
    %3692 = vmatpush1.msra.mxu0 %v3290
    %3693 = vmatprep.subr.mxu0 0.0
    %3694 = vmatpush1.msra.mxu0 %v3291
    %3695 = vmatprep.subr.mxu0 0.0
    %3696 = vmatpush1.msra.mxu0 %v3292
    %3697 = vmatprep.subr.mxu0 0.0
    %3698 = vmatpush1.msra.mxu0 %v3293
    %3699 = vmatprep.subr.mxu0 0.0
    %3700 = vmatpush1.msra.mxu0 %v3294
    %3701 = vmatprep.subr.mxu0 0.0
    %3702 = vmatpush1.msra.mxu0 %v3295
    %3703 = vmatprep.subr.mxu0 0.0
    %3704 = vmatpush1.msra.mxu0 %v3296
    %3705 = vmatprep.subr.mxu0 0.0
    %3706 = vmatpush1.msra.mxu0 %v3297
    %3707 = vmatprep.subr.mxu0 0.0
    %3708 = vmatpush1.msra.mxu0 %v3298
    %3709 = vmatprep.subr.mxu0 0.0
    %3710 = vmatpush1.msra.mxu0 %v3299
    %3711 = vmatprep.subr.mxu0 0.0
    %3712 = vmatpush1.msra.mxu0 %v3300
    %3713 = vmatprep.subr.mxu0 0.0
    %3714 = vmatpush1.msra.mxu0 %v3301
    %3715 = vmatprep.subr.mxu0 0.0
    %3716 = vmatpush1.msra.mxu0 %v3302
    %3717 = vmatprep.subr.mxu0 0.0
    %3718 = vmatpush1.msra.mxu0 %v3303
    %3719 = vmatprep.subr.mxu0 0.0
    %3720 = vmatpush1.msra.mxu0 %v3304
    %3721 = vmatprep.subr.mxu0 0.0
    %3722 = vmatpush1.msra.mxu0 %v3305
    %3723 = vmatprep.subr.mxu0 0.0
    %3724 = vmatpush1.msra.mxu0 0.0
    %3725 = vmatprep.subr.mxu0 0.0
    %3726 = vmatpush1.msra.mxu0 0.0
    %3727 = vmatprep.subr.mxu0 0.0
    %3728 = vmatpush1.msra.mxu0 0.0
    %3729 = vmatprep.subr.mxu0 0.0
    %3730 = vmatpush1.msra.mxu0 0.0
    %3731 = vmatprep.subr.mxu0 0.0
    %3732 = vmatpush1.msra.mxu0 0.0
    %3733 = vmatprep.subr.mxu0 0.0
    %3734 = vmatpush1.msra.mxu0 0.0
    %3735 = vmatprep.subr.mxu0 0.0
    %3736 = vmatpush1.msra.mxu0 0.0
    %3737 = vmatprep.subr.mxu0 0.0
    %3738 = vmatpush1.msra.mxu0 0.0
    %3739 = vmatprep.subr.mxu0 0.0
    %3740 = vmatpush1.msra.mxu0 0.0
    %3741 = vmatprep.subr.mxu0 0.0
    %3742 = vmatpush1.msra.mxu0 0.0
    %3743 = vmatprep.subr.mxu0 0.0
    %3744 = vmatpush1.msra.mxu0 0.0
    %3745 = vmatprep.subr.mxu0 0.0
    %3746 = vmatpush1.msra.mxu0 0.0
    %3747 = vmatprep.subr.mxu0 0.0
    %3748 = vmatpush1.msra.mxu0 0.0
    %3749 = vmatprep.subr.mxu0 0.0
    %3750 = vmatpush1.msra.mxu0 0.0
    %3751 = vmatprep.subr.mxu0 0.0
    %3752 = vmatpush1.msra.mxu0 0.0
    %3753 = vmatprep.subr.mxu0 0.0
    %3754 = vmatpush1.msra.mxu0 0.0
    %3755 = vmatprep.mubr.f32.mxu0 0.0
    %3756 = vmatmul.mubr.f32.gmra.mrb[0].mxu0 %v3067
    %v3757 = vpop.f32.mrb[0].mxu0
    %v3758 = vadd.f32 %v3373, %v3757
    %v3759 = vpop.f32.mrb[0].mxu0
    %3760 = vmatprep.mubr.f32.mxu0 0.0
    %3761 = vmatmul.mubr.f32.gmra.mrb[0].mxu0 %v3070
    %v3762 = vpop.f32.mrb[0].mxu0
    %v3763 = vadd.f32 %v3378, %v3762
    %v3764 = vpop.f32.mrb[0].mxu0
    %3765 = vmatprep.mubr.f32.mxu0 0.0
    %3766 = vmatmul.mubr.f32.gmra.mrb[0].mxu0 %v3073
    %v3767 = vpop.f32.mrb[0].mxu0
    %v3768 = vadd.f32 %v3383, %v3767
    %v3769 = vpop.f32.mrb[0].mxu0
    %3770 = vmatprep.mubr.f32.mxu0 0.0
    %3771 = vmatmul.mubr.f32.gmra.mrb[0].mxu0 %v3076
    %v3772 = vpop.f32.mrb[0].mxu0
    %v3773 = vadd.f32 %v3388, %v3772
    %v3774 = vpop.f32.mrb[0].mxu0
    %3775 = vmatprep.mubr.f32.mxu0 0.0
    %3776 = vmatmul.mubr.f32.gmra.mrb[0].mxu0 %v3079
    %v3777 = vpop.f32.mrb[0].mxu0
    %v3778 = vadd.f32 %v3393, %v3777
    %v3779 = vpop.f32.mrb[0].mxu0
    %3780 = vmatprep.mubr.f32.mxu0 0.0
    %3781 = vmatmul.mubr.f32.gmra.mrb[0].mxu0 %v3082
    %v3782 = vpop.f32.mrb[0].mxu0
    %v3783 = vadd.f32 %v3398, %v3782
    %v3784 = vpop.f32.mrb[0].mxu0
    %3785 = vmatprep.mubr.f32.mxu0 0.0
    %3786 = vmatmul.mubr.f32.gmra.mrb[0].mxu0 %v3085
    %v3787 = vpop.f32.mrb[0].mxu0
    %v3788 = vadd.f32 %v3403, %v3787
    %v3789 = vpop.f32.mrb[0].mxu0
    %3790 = vmatprep.mubr.f32.mxu0 0.0
    %3791 = vmatmul.mubr.f32.gmra.mrb[0].mxu0 %v3088
    %v3792 = vpop.f32.mrb[0].mxu0
    %v3793 = vadd.f32 %v3408, %v3792
    %v3794 = vpop.f32.mrb[0].mxu0
    %3795 = vmatprep.mubr.f32.mxu0 0.0
    %3796 = vmatmul.mubr.f32.gmra.mrb[0].mxu0 %v3091
    %v3797 = vpop.f32.mrb[0].mxu0
    %v3798 = vadd.f32 %v3413, %v3797
    %v3799 = vpop.f32.mrb[0].mxu0
    %3800 = vmatprep.mubr.f32.mxu0 0.0
    %3801 = vmatmul.mubr.f32.gmra.mrb[0].mxu0 %v3094
    %v3802 = vpop.f32.mrb[0].mxu0
    %v3803 = vadd.f32 %v3418, %v3802
    %v3804 = vpop.f32.mrb[0].mxu0
    %3805 = vmatprep.mubr.f32.mxu0 0.0
    %3806 = vmatmul.mubr.f32.gmra.mrb[0].mxu0 %v3097
    %v3807 = vpop.f32.mrb[0].mxu0
    %v3808 = vadd.f32 %v3423, %v3807
    %v3809 = vpop.f32.mrb[0].mxu0
    %3810 = vmatprep.mubr.f32.mxu0 0.0
    %3811 = vmatmul.mubr.f32.gmra.mrb[0].mxu0 %v3100
    %v3812 = vpop.f32.mrb[0].mxu0
    %v3813 = vadd.f32 %v3428, %v3812
    %v3814 = vpop.f32.mrb[0].mxu0
    %3815 = vmatprep.mubr.f32.mxu0 0.0
    %3816 = vmatmul.mubr.f32.gmra.mrb[0].mxu0 %v3103
    %v3817 = vpop.f32.mrb[0].mxu0
    %v3818 = vadd.f32 %v3433, %v3817
    %v3819 = vpop.f32.mrb[0].mxu0
    %3820 = vmatprep.mubr.f32.mxu0 0.0
    %3821 = vmatmul.mubr.f32.gmra.mrb[0].mxu0 %v3106
    %v3822 = vpop.f32.mrb[0].mxu0
    %v3823 = vadd.f32 %v3438, %v3822
    %v3824 = vpop.f32.mrb[0].mxu0
    %3825 = vmatprep.mubr.f32.mxu0 0.0
    %3826 = vmatmul.mubr.f32.gmra.mrb[0].mxu0 %v3109
    %v3827 = vpop.f32.mrb[0].mxu0
    %v3828 = vadd.f32 %v3443, %v3827
    %v3829 = vpop.f32.mrb[0].mxu0
    %3830 = vmatprep.mubr.f32.mxu0 0.0
    %3831 = vmatmul.mubr.f32.gmra.mrb[0].mxu0 %v3112
    %v3832 = vpop.f32.mrb[0].mxu0
    %v3833 = vadd.f32 %v3448, %v3832
    %v3834 = vpop.f32.mrb[0].mxu0
    %3835 = vmatprep.mubr.f32.mxu0 0.0
    %3836 = vmatmul.mubr.f32.gmra.mrb[0].mxu0 %v3115
    %v3837 = vpop.f32.mrb[0].mxu0
    %v3838 = vadd.f32 %v3453, %v3837
    %v3839 = vpop.f32.mrb[0].mxu0
    %3840 = vmatprep.mubr.f32.mxu0 0.0
    %3841 = vmatmul.mubr.f32.gmra.mrb[0].mxu0 %v3118
    %v3842 = vpop.f32.mrb[0].mxu0
    %v3843 = vadd.f32 %v3458, %v3842
    %v3844 = vpop.f32.mrb[0].mxu0
    %3845 = vmatprep.mubr.f32.mxu0 0.0
    %3846 = vmatmul.mubr.f32.gmra.mrb[0].mxu0 %v3121
    %v3847 = vpop.f32.mrb[0].mxu0
    %v3848 = vadd.f32 %v3463, %v3847
    %v3849 = vpop.f32.mrb[0].mxu0
    %3850 = vmatprep.mubr.f32.mxu0 0.0
    %3851 = vmatmul.mubr.f32.gmra.mrb[0].mxu0 %v3124
    %v3852 = vpop.f32.mrb[0].mxu0
    %v3853 = vadd.f32 %v3468, %v3852
    %v3854 = vpop.f32.mrb[0].mxu0
    %3855 = vmatprep.mubr.f32.mxu0 0.0
    %3856 = vmatmul.mubr.f32.gmra.mrb[0].mxu0 %v3127
    %v3857 = vpop.f32.mrb[0].mxu0
    %v3858 = vadd.f32 %v3473, %v3857
    %v3859 = vpop.f32.mrb[0].mxu0
    %3860 = vmatprep.mubr.f32.mxu0 0.0
    %3861 = vmatmul.mubr.f32.gmra.mrb[0].mxu0 %v3130
    %v3862 = vpop.f32.mrb[0].mxu0
    %v3863 = vadd.f32 %v3478, %v3862
    %v3864 = vpop.f32.mrb[0].mxu0
    %3865 = vmatprep.mubr.f32.mxu0 0.0
    %3866 = vmatmul.mubr.f32.gmra.mrb[0].mxu0 %v3133
    %v3867 = vpop.f32.mrb[0].mxu0
    %v3868 = vadd.f32 %v3483, %v3867
    %v3869 = vpop.f32.mrb[0].mxu0
    %3870 = vmatprep.mubr.f32.mxu0 0.0
    %3871 = vmatmul.mubr.f32.gmra.mrb[0].mxu0 %v3136
    %v3872 = vpop.f32.mrb[0].mxu0
    %v3873 = vadd.f32 %v3488, %v3872
    %v3874 = vpop.f32.mrb[0].mxu0
    %3875 = vmatprep.mubr.f32.mxu0 0.0
    %3876 = vmatmul.mubr.f32.gmra.mrb[0].mxu0 %v3139
    %v3877 = vpop.f32.mrb[0].mxu0
    %v3878 = vadd.f32 %v3493, %v3877
    %v3879 = vpop.f32.mrb[0].mxu0
    %3880 = vmatprep.mubr.f32.mxu0 0.0
    %3881 = vmatmul.mubr.f32.gmra.mrb[0].mxu0 %v3142
    %v3882 = vpop.f32.mrb[0].mxu0
    %v3883 = vadd.f32 %v3498, %v3882
    %v3884 = vpop.f32.mrb[0].mxu0
    %3885 = vmatprep.mubr.f32.mxu0 0.0
    %3886 = vmatmul.mubr.f32.gmra.mrb[0].mxu0 %v3145
    %v3887 = vpop.f32.mrb[0].mxu0
    %v3888 = vadd.f32 %v3503, %v3887
    %v3889 = vpop.f32.mrb[0].mxu0
    %3890 = vmatprep.mubr.f32.mxu0 0.0
    %3891 = vmatmul.mubr.f32.gmra.mrb[0].mxu0 %v3148
    %v3892 = vpop.f32.mrb[0].mxu0
    %v3893 = vadd.f32 %v3508, %v3892
    %v3894 = vpop.f32.mrb[0].mxu0
    %3895 = vmatprep.mubr.f32.mxu0 0.0
    %3896 = vmatmul.mubr.f32.gmra.mrb[0].mxu0 %v3151
    %v3897 = vpop.f32.mrb[0].mxu0
    %v3898 = vadd.f32 %v3513, %v3897
    %v3899 = vpop.f32.mrb[0].mxu0
    %3900 = vmatprep.mubr.f32.mxu0 0.0
    %3901 = vmatmul.mubr.f32.gmra.mrb[0].mxu0 %v3154
    %v3902 = vpop.f32.mrb[0].mxu0
    %v3903 = vadd.f32 %v3518, %v3902
    %v3904 = vpop.f32.mrb[0].mxu0
    %3905 = vmatprep.mubr.f32.mxu0 0.0
    %3906 = vmatmul.mubr.f32.gmra.mrb[0].mxu0 %v3157
    %v3907 = vpop.f32.mrb[0].mxu0
    %v3908 = vadd.f32 %v3523, %v3907
    %v3909 = vpop.f32.mrb[0].mxu0
    %3910 = vmatprep.mubr.f32.mxu0 0.0
    %3911 = vmatmul.mubr.f32.gmra.mrb[0].mxu0 %v3160
    %v3912 = vpop.f32.mrb[0].mxu0
    %v3913 = vadd.f32 %v3528, %v3912
    %v3914 = vpop.f32.mrb[0].mxu0
    %3915 = vmatprep.mubr.f32.mxu0 0.0
    %3916 = vmatmul.mubr.f32.gmra.mrb[0].mxu0 %v3163
    %v3917 = vpop.f32.mrb[0].mxu0
    %v3918 = vadd.f32 %v3533, %v3917
    %v3919 = vpop.f32.mrb[0].mxu0
    %3920 = vmatprep.mubr.f32.mxu0 0.0
    %3921 = vmatmul.mubr.f32.gmra.mrb[0].mxu0 %v3166
    %v3922 = vpop.f32.mrb[0].mxu0
    %v3923 = vadd.f32 %v3538, %v3922
    %v3924 = vpop.f32.mrb[0].mxu0
    %3925 = vmatprep.mubr.f32.mxu0 0.0
    %3926 = vmatmul.mubr.f32.gmra.mrb[0].mxu0 %v3169
    %v3927 = vpop.f32.mrb[0].mxu0
    %v3928 = vadd.f32 %v3543, %v3927
    %v3929 = vpop.f32.mrb[0].mxu0
    %3930 = vmatprep.mubr.f32.mxu0 0.0
    %3931 = vmatmul.mubr.f32.gmra.mrb[0].mxu0 %v3172
    %v3932 = vpop.f32.mrb[0].mxu0
    %v3933 = vadd.f32 %v3548, %v3932
    %v3934 = vpop.f32.mrb[0].mxu0
    %3935 = vmatprep.mubr.f32.mxu0 0.0
    %3936 = vmatmul.mubr.f32.gmra.mrb[0].mxu0 %v3175
    %v3937 = vpop.f32.mrb[0].mxu0
    %v3938 = vadd.f32 %v3553, %v3937
    %v3939 = vpop.f32.mrb[0].mxu0
    %3940 = vmatprep.mubr.f32.mxu0 0.0
    %3941 = vmatmul.mubr.f32.gmra.mrb[0].mxu0 %v3178
    %v3942 = vpop.f32.mrb[0].mxu0
    %v3943 = vadd.f32 %v3558, %v3942
    %v3944 = vpop.f32.mrb[0].mxu0
    %3945 = vmatprep.mubr.f32.mxu0 0.0
    %3946 = vmatmul.mubr.f32.gmra.mrb[0].mxu0 %v3181
    %v3947 = vpop.f32.mrb[0].mxu0
    %v3948 = vadd.f32 %v3563, %v3947
    %v3949 = vpop.f32.mrb[0].mxu0
    %3950 = vmatprep.mubr.f32.mxu0 0.0
    %3951 = vmatmul.mubr.f32.gmra.mrb[0].mxu0 %v3184
    %v3952 = vpop.f32.mrb[0].mxu0
    %v3953 = vadd.f32 %v3568, %v3952
    %v3954 = vpop.f32.mrb[0].mxu0
    %3955 = vmatprep.mubr.f32.mxu0 0.0
    %3956 = vmatmul.mubr.f32.gmra.mrb[0].mxu0 %v3187
    %v3957 = vpop.f32.mrb[0].mxu0
    %v3958 = vadd.f32 %v3573, %v3957
    %v3959 = vpop.f32.mrb[0].mxu0
    %3960 = vmatprep.mubr.f32.mxu0 0.0
    %3961 = vmatmul.mubr.f32.gmra.mrb[0].mxu0 %v3190
    %v3962 = vpop.f32.mrb[0].mxu0
    %v3963 = vadd.f32 %v3578, %v3962
    %v3964 = vpop.f32.mrb[0].mxu0
    %3965 = vmatprep.mubr.f32.mxu0 0.0
    %3966 = vmatmul.mubr.f32.gmra.mrb[0].mxu0 %v3193
    %v3967 = vpop.f32.mrb[0].mxu0
    %v3968 = vadd.f32 %v3583, %v3967
    %v3969 = vpop.f32.mrb[0].mxu0
    %3970 = vmatprep.mubr.f32.mxu0 0.0
    %3971 = vmatmul.mubr.f32.gmra.mrb[0].mxu0 %v3196
    %v3972 = vpop.f32.mrb[0].mxu0
    %v3973 = vadd.f32 %v3588, %v3972
    %v3974 = vpop.f32.mrb[0].mxu0
    %3975 = vmatprep.mubr.f32.mxu0 0.0
    %3976 = vmatmul.mubr.f32.gmra.mrb[0].mxu0 %v3199
    %v3977 = vpop.f32.mrb[0].mxu0
    %v3978 = vadd.f32 %v3593, %v3977
    %v3979 = vpop.f32.mrb[0].mxu0
    %3980 = vmatprep.mubr.f32.mxu0 0.0
    %3981 = vmatmul.mubr.f32.gmra.mrb[0].mxu0 %v3202
    %v3982 = vpop.f32.mrb[0].mxu0
    %v3983 = vadd.f32 %v3598, %v3982
    %v3984 = vpop.f32.mrb[0].mxu0
    %3985 = vmatprep.mubr.f32.mxu0 0.0
    %3986 = vmatmul.mubr.f32.gmra.mrb[0].mxu0 %v3205
    %v3987 = vpop.f32.mrb[0].mxu0
    %v3988 = vadd.f32 %v3603, %v3987
    %v3989 = vpop.f32.mrb[0].mxu0
    %3990 = vmatprep.mubr.f32.mxu0 0.0
    %3991 = vmatmul.mubr.f32.gmra.mrb[0].mxu0 %v3208
    %v3992 = vpop.f32.mrb[0].mxu0
    %v3993 = vadd.f32 %v3608, %v3992
    %v3994 = vpop.f32.mrb[0].mxu0
    %3995 = vmatprep.mubr.f32.mxu0 0.0
    %3996 = vmatmul.mubr.f32.gmra.mrb[0].mxu0 %v3211
    %v3997 = vpop.f32.mrb[0].mxu0
    %v3998 = vadd.f32 %v3613, %v3997
    %v3999 = vpop.f32.mrb[0].mxu0
    %4000 = vmatprep.mubr.f32.mxu0 0.0
    %4001 = vmatmul.mubr.f32.gmra.mrb[0].mxu0 %v3214
    %v4002 = vpop.f32.mrb[0].mxu0
    %v4003 = vadd.f32 %v3618, %v4002
    %v4004 = vpop.f32.mrb[0].mxu0
    %4005 = vmatprep.mubr.f32.mxu0 0.0
    %4006 = vmatmul.mubr.f32.gmra.mrb[0].mxu0 %v3217
    %v4007 = vpop.f32.mrb[0].mxu0
    %v4008 = vadd.f32 %v3623, %v4007
    %v4009 = vpop.f32.mrb[0].mxu0
    %4010 = vmatprep.mubr.f32.mxu0 0.0
    %4011 = vmatmul.mubr.f32.gmra.mrb[0].mxu0 %v3220
    %v4012 = vpop.f32.mrb[0].mxu0
    %v4013 = vadd.f32 %v3628, %v4012
    %v4014 = vpop.f32.mrb[0].mxu0
    %4015 = vmatprep.mubr.f32.mxu0 0.0
    %4016 = vmatmul.mubr.f32.gmra.mrb[0].mxu0 %v3223
    %v4017 = vpop.f32.mrb[0].mxu0
    %v4018 = vadd.f32 %v3633, %v4017
    %v4019 = vpop.f32.mrb[0].mxu0
    %4020 = vmatprep.mubr.f32.mxu0 0.0
    %4021 = vmatmul.mubr.f32.gmra.mrb[0].mxu0 %v3226
    %v4022 = vpop.f32.mrb[0].mxu0
    %v4023 = vadd.f32 %v3638, %v4022
    %v4024 = vpop.f32.mrb[0].mxu0
    %4025 = vmatprep.mubr.f32.mxu0 0.0
    %4026 = vmatmul.mubr.f32.gmra.mrb[0].mxu0 %v3229
    %v4027 = vpop.f32.mrb[0].mxu0
    %v4028 = vadd.f32 %v3643, %v4027
    %v4029 = vpop.f32.mrb[0].mxu0
    %4030 = vmatprep.mubr.f32.mxu0 0.0
    %4031 = vmatmul.mubr.f32.gmra.mrb[0].mxu0 %v3232
    %v4032 = vpop.f32.mrb[0].mxu0
    %v4033 = vadd.f32 %v3648, %v4032
    %v4034 = vpop.f32.mrb[0].mxu0
    %4035 = vmatprep.mubr.f32.mxu0 0.0
    %4036 = vmatmul.mubr.f32.gmra.mrb[0].mxu0 %v3235
    %v4037 = vpop.f32.mrb[0].mxu0
    %v4038 = vadd.f32 %v3653, %v4037
    %v4039 = vpop.f32.mrb[0].mxu0
    %4040 = vmatprep.mubr.f32.mxu0 0.0
    %4041 = vmatmul.mubr.f32.gmra.mrb[0].mxu0 %v3238
    %v4042 = vpop.f32.mrb[0].mxu0
    %v4043 = vadd.f32 %v3658, %v4042
    %v4044 = vpop.f32.mrb[0].mxu0
    %4045 = vmatprep.mubr.f32.mxu0 0.0
    %4046 = vmatmul.mubr.f32.gmra.mrb[0].mxu0 %v3241
    %v4047 = vpop.f32.mrb[0].mxu0
    %v4048 = vadd.f32 %v3663, %v4047
    %v4049 = vpop.f32.mrb[0].mxu0
    %4050 = vmatprep.mubr.f32.mxu0 0.0
    %4051 = vmatmul.mubr.f32.gmra.mrb[0].mxu0 %v3244
    %v4052 = vpop.f32.mrb[0].mxu0
    %v4053 = vadd.f32 %v3668, %v4052
    %v4054 = vpop.f32.mrb[0].mxu0
    %4055 = vmatprep.mubr.f32.mxu0 0.0
    %4056 = vmatmul.mubr.f32.gmra.mrb[0].mxu0 %v3247
    %v4057 = vpop.f32.mrb[0].mxu0
    %v4058 = vadd.f32 %v3673, %v4057
    %v4059 = vpop.f32.mrb[0].mxu0
    %4060 = vmatprep.mubr.f32.mxu0 0.0
    %4061 = vmatmul.mubr.f32.gmra.mrb[0].mxu0 %v3250
    %v4062 = vpop.f32.mrb[0].mxu0
    %v4063 = vadd.f32 %v3678, %v4062
    %v4064 = vpop.f32.mrb[0].mxu0
    %4065 = vmatprep.mubr.f32.mxu0 0.0
    %4066 = vmatmul.mubr.f32.gmra.mrb[0].mxu0 %v3253
    %v4067 = vpop.f32.mrb[0].mxu0
    %v4068 = vadd.f32 %v3683, %v4067
    %v4069 = vpop.f32.mrb[0].mxu0
    %4070 = vmatprep.mubr.f32.mxu0 0.0
    %4071 = vmatmul.mubr.f32.gmra.mrb[0].mxu0 %v3256
    %v4072 = vpop.f32.mrb[0].mxu0
    %v4073 = vadd.f32 %v3688, %v4072
    %v4074 = vpop.f32.mrb[0].mxu0
    %4075 = vdwg.mxu0
    %v4076 = vadd.f32 %v2746, %v3758
    %v4077 = vadd.f32 %v2751, %v3763
    %v4078 = vadd.f32 %v2756, %v3768
    %v4079 = vadd.f32 %v2761, %v3773
    %v4080 = vadd.f32 %v2766, %v3778
    %v4081 = vadd.f32 %v2771, %v3783
    %v4082 = vadd.f32 %v2776, %v3788
    %v4083 = vadd.f32 %v2781, %v3793
    %v4084 = vadd.f32 %v2786, %v3798
    %v4085 = vadd.f32 %v2791, %v3803
    %v4086 = vadd.f32 %v2796, %v3808
    %v4087 = vadd.f32 %v2801, %v3813
    %v4088 = vadd.f32 %v2806, %v3818
    %v4089 = vadd.f32 %v2811, %v3823
    %v4090 = vadd.f32 %v2816, %v3828
    %v4091 = vadd.f32 %v2821, %v3833
    %v4092 = vadd.f32 %v2826, %v3838
    %v4093 = vadd.f32 %v2831, %v3843
    %v4094 = vadd.f32 %v2836, %v3848
    %v4095 = vadd.f32 %v2841, %v3853
    %v4096 = vadd.f32 %v2846, %v3858
    %v4097 = vadd.f32 %v2851, %v3863
    %v4098 = vadd.f32 %v2856, %v3868
    %v4099 = vadd.f32 %v2861, %v3873
    %v4100 = vadd.f32 %v2866, %v3878
    %v4101 = vadd.f32 %v2871, %v3883
    %v4102 = vadd.f32 %v2876, %v3888
    %v4103 = vadd.f32 %v2881, %v3893
    %v4104 = vadd.f32 %v2886, %v3898
    %v4105 = vadd.f32 %v2891, %v3903
    %v4106 = vadd.f32 %v2896, %v3908
    %v4107 = vadd.f32 %v2901, %v3913
    %v4108 = vadd.f32 %v2906, %v3918
    %v4109 = vadd.f32 %v2911, %v3923
    %v4110 = vadd.f32 %v2916, %v3928
    %v4111 = vadd.f32 %v2921, %v3933
    %v4112 = vadd.f32 %v2926, %v3938
    %v4113 = vadd.f32 %v2931, %v3943
    %v4114 = vadd.f32 %v2936, %v3948
    %v4115 = vadd.f32 %v2941, %v3953
    %v4116 = vadd.f32 %v2946, %v3958
    %v4117 = vadd.f32 %v2951, %v3963
    %v4118 = vadd.f32 %v2956, %v3968
    %v4119 = vadd.f32 %v2961, %v3973
    %v4120 = vadd.f32 %v2966, %v3978
    %v4121 = vadd.f32 %v2971, %v3983
    %v4122 = vadd.f32 %v2976, %v3988
    %v4123 = vadd.f32 %v2981, %v3993
    %v4124 = vadd.f32 %v2986, %v3998
    %v4125 = vadd.f32 %v2991, %v4003
    %v4126 = vadd.f32 %v2996, %v4008
    %v4127 = vadd.f32 %v3001, %v4013
    %v4128 = vadd.f32 %v3006, %v4018
    %v4129 = vadd.f32 %v3011, %v4023
    %v4130 = vadd.f32 %v3016, %v4028
    %v4131 = vadd.f32 %v3021, %v4033
    %v4132 = vadd.f32 %v3026, %v4038
    %v4133 = vadd.f32 %v3031, %v4043
    %v4134 = vadd.f32 %v3036, %v4048
    %v4135 = vadd.f32 %v3041, %v4053
    %v4136 = vadd.f32 %v3046, %v4058
    %v4137 = vadd.f32 %v3051, %v4063
    %v4138 = vadd.f32 %v3056, %v4068
    %v4139 = vadd.f32 %v3061, %v4073
    %4140 = vst [vmem:[%s6] sm:$0xff] %v4076
    %4141 = vst [vmem:[%s6 + $0x8] sm:$0xff] %v4077
    %4142 = vst [vmem:[%s6 + $0x10] sm:$0xff] %v4078
    %4143 = vst [vmem:[%s6 + $0x18] sm:$0xff] %v4079
    %4144 = vst [vmem:[%s6 + $0x20] sm:$0xff] %v4080
    %4145 = vst [vmem:[%s6 + $0x28] sm:$0xff] %v4081
    %4146 = vst [vmem:[%s6 + $0x30] sm:$0xff] %v4082
    %4147 = vst [vmem:[%s6 + $0x38] sm:$0xff] %v4083
    %4148 = vst [vmem:[%s6 + $0x40] sm:$0xff] %v4084
    %4149 = vst [vmem:[%s6 + $0x48] sm:$0xff] %v4085
    %4150 = vst [vmem:[%s6 + $0x50] sm:$0xff] %v4086
    %4151 = vst [vmem:[%s6 + $0x58] sm:$0xff] %v4087
    %4152 = vst [vmem:[%s6 + $0x60] sm:$0xff] %v4088
    %4153 = vst [vmem:[%s6 + $0x68] sm:$0xff] %v4089
    %4154 = vst [vmem:[%s6 + $0x70] sm:$0xff] %v4090
    %4155 = vst [vmem:[%s6 + $0x78] sm:$0xff] %v4091
    %4156 = vst [vmem:[%s6 + $0x80] sm:$0xff] %v4092
    %4157 = vst [vmem:[%s6 + $0x88] sm:$0xff] %v4093
    %4158 = vst [vmem:[%s6 + $0x90] sm:$0xff] %v4094
    %4159 = vst [vmem:[%s6 + $0x98] sm:$0xff] %v4095
    %4160 = vst [vmem:[%s6 + $0xa0] sm:$0xff] %v4096
    %4161 = vst [vmem:[%s6 + $0xa8] sm:$0xff] %v4097
    %4162 = vst [vmem:[%s6 + $0xb0] sm:$0xff] %v4098
    %4163 = vst [vmem:[%s6 + $0xb8] sm:$0xff] %v4099
    %4164 = vst [vmem:[%s6 + $0xc0] sm:$0xff] %v4100
    %4165 = vst [vmem:[%s6 + $0xc8] sm:$0xff] %v4101
    %4166 = vst [vmem:[%s6 + $0xd0] sm:$0xff] %v4102
    %4167 = vst [vmem:[%s6 + $0xd8] sm:$0xff] %v4103
    %4168 = vst [vmem:[%s6 + $0xe0] sm:$0xff] %v4104
    %4169 = vst [vmem:[%s6 + $0xe8] sm:$0xff] %v4105
    %4170 = vst [vmem:[%s6 + $0xf0] sm:$0xff] %v4106
    %4171 = vst [vmem:[%s6 + $0xf8] sm:$0xff] %v4107
    %4172 = vst [vmem:[%s6 + $0x100] sm:$0xff] %v4108
    %4173 = vst [vmem:[%s6 + $0x108] sm:$0xff] %v4109
    %4174 = vst [vmem:[%s6 + $0x110] sm:$0xff] %v4110
    %4175 = vst [vmem:[%s6 + $0x118] sm:$0xff] %v4111
    %4176 = vst [vmem:[%s6 + $0x120] sm:$0xff] %v4112
    %4177 = vst [vmem:[%s6 + $0x128] sm:$0xff] %v4113
    %4178 = vst [vmem:[%s6 + $0x130] sm:$0xff] %v4114
    %4179 = vst [vmem:[%s6 + $0x138] sm:$0xff] %v4115
    %4180 = vst [vmem:[%s6 + $0x140] sm:$0xff] %v4116
    %4181 = vst [vmem:[%s6 + $0x148] sm:$0xff] %v4117
    %4182 = vst [vmem:[%s6 + $0x150] sm:$0xff] %v4118
    %4183 = vst [vmem:[%s6 + $0x158] sm:$0xff] %v4119
    %4184 = vst [vmem:[%s6 + $0x160] sm:$0xff] %v4120
    %4185 = vst [vmem:[%s6 + $0x168] sm:$0xff] %v4121
    %4186 = vst [vmem:[%s6 + $0x170] sm:$0xff] %v4122
    %4187 = vst [vmem:[%s6 + $0x178] sm:$0xff] %v4123
    %4188 = vst [vmem:[%s6 + $0x180] sm:$0xff] %v4124
    %4189 = vst [vmem:[%s6 + $0x188] sm:$0xff] %v4125
    %4190 = vst [vmem:[%s6 + $0x190] sm:$0xff] %v4126
    %4191 = vst [vmem:[%s6 + $0x198] sm:$0xff] %v4127
    %4192 = vst [vmem:[%s6 + $0x1a0] sm:$0xff] %v4128
    %4193 = vst [vmem:[%s6 + $0x1a8] sm:$0xff] %v4129
    %4194 = vst [vmem:[%s6 + $0x1b0] sm:$0xff] %v4130
    %4195 = vst [vmem:[%s6 + $0x1b8] sm:$0xff] %v4131
    %4196 = vst [vmem:[%s6 + $0x1c0] sm:$0xff] %v4132
    %4197 = vst [vmem:[%s6 + $0x1c8] sm:$0xff] %v4133
    %4198 = vst [vmem:[%s6 + $0x1d0] sm:$0xff] %v4134
    %4199 = vst [vmem:[%s6 + $0x1d8] sm:$0xff] %v4135
    %4200 = vst [vmem:[%s6 + $0x1e0] sm:$0xff] %v4136
    %4201 = vst [vmem:[%s6 + $0x1e8] sm:$0xff] %v4137
    %4202 = vst [vmem:[%s6 + $0x1f0] sm:$0xff] %v4138
    %4203 = vst [vmem:[%s6 + $0x1f8] sm:$0xff] %v4139
    %v4204 = vadd.f32 %v4076, %v4077
    %v4205 = vadd.f32 %v4204, %v4078
    %v4206 = vadd.f32 %v4205, %v4079
    %v4207 = vadd.f32 %v4206, %v4080
    %v4208 = vadd.f32 %v4207, %v4081
    %v4209 = vadd.f32 %v4208, %v4082
    %v4210 = vadd.f32 %v4209, %v4083
    %v4211 = vadd.f32 %v4210, %v4084
    %v4212 = vadd.f32 %v4211, %v4085
    %v4213 = vadd.f32 %v4212, %v4086
    %v4214 = vadd.f32 %v4213, %v4087
    %v4215 = vadd.f32 %v4214, %v4088
    %v4216 = vadd.f32 %v4215, %v4089
    %v4217 = vadd.f32 %v4216, %v4090
    %v4218 = vadd.f32 %v4217, %v4091
    %v4219 = vadd.f32 %v4218, %v4092
    %v4220 = vadd.f32 %v4219, %v4093
    %v4221 = vadd.f32 %v4220, %v4094
    %v4222 = vadd.f32 %v4221, %v4095
    %v4223 = vadd.f32 %v4222, %v4096
    %v4224 = vadd.f32 %v4223, %v4097
    %v4225 = vadd.f32 %v4224, %v4098
    %v4226 = vadd.f32 %v4225, %v4099
    %v4227 = vadd.f32 %v4226, %v4100
    %v4228 = vadd.f32 %v4227, %v4101
    %v4229 = vadd.f32 %v4228, %v4102
    %v4230 = vadd.f32 %v4229, %v4103
    %v4231 = vadd.f32 %v4230, %v4104
    %v4232 = vadd.f32 %v4231, %v4105
    %v4233 = vadd.f32 %v4232, %v4106
    %v4234 = vadd.f32 %v4233, %v4107
    %v4235 = vadd.f32 %v4234, %v4108
    %v4236 = vadd.f32 %v4235, %v4109
    %v4237 = vadd.f32 %v4236, %v4110
    %v4238 = vadd.f32 %v4237, %v4111
    %v4239 = vadd.f32 %v4238, %v4112
    %v4240 = vadd.f32 %v4239, %v4113
    %v4241 = vadd.f32 %v4240, %v4114
    %v4242 = vadd.f32 %v4241, %v4115
    %v4243 = vadd.f32 %v4242, %v4116
    %v4244 = vadd.f32 %v4243, %v4117
    %v4245 = vadd.f32 %v4244, %v4118
    %v4246 = vadd.f32 %v4245, %v4119
    %v4247 = vadd.f32 %v4246, %v4120
    %v4248 = vadd.f32 %v4247, %v4121
    %v4249 = vadd.f32 %v4248, %v4122
    %v4250 = vadd.f32 %v4249, %v4123
    %v4251 = vadd.f32 %v4250, %v4124
    %v4252 = vadd.f32 %v4251, %v4125
    %v4253 = vadd.f32 %v4252, %v4126
    %v4254 = vadd.f32 %v4253, %v4127
    %v4255 = vadd.f32 %v4254, %v4128
    %v4256 = vadd.f32 %v4255, %v4129
    %v4257 = vadd.f32 %v4256, %v4130
    %v4258 = vadd.f32 %v4257, %v4131
    %v4259 = vadd.f32 %v4258, %v4132
    %v4260 = vadd.f32 %v4259, %v4133
    %v4261 = vadd.f32 %v4260, %v4134
    %v4262 = vadd.f32 %v4261, %v4135
    %v4263 = vadd.f32 %v4262, %v4136
    %v4264 = vadd.f32 %v4263, %v4137
    %v4265 = vadd.f32 %v4264, %v4138
    %v4266 = vadd.f32 %v4265, %v4139
    %v4267 = vrot.slane %v4266, 4
    %v4268 = vadd.f32 %v4266, %v4267
    %v4269 = vrot.slane %v4268, 2
    %v4270 = vadd.f32 %v4268, %v4269
    %v4271 = vrot.slane %v4270, 1
    %v4272 = vadd.f32 %v4270, %v4271
    %4273 = vst [vmem:[%s7] sm:$0x1] %v4272
    %v4274 = vmul.f32 %v4076, %v4076
    %v4275 = vmul.f32 %v4077, %v4077
    %v4276 = vmul.f32 %v4078, %v4078
    %v4277 = vmul.f32 %v4079, %v4079
    %v4278 = vmul.f32 %v4080, %v4080
    %v4279 = vmul.f32 %v4081, %v4081
    %v4280 = vmul.f32 %v4082, %v4082
    %v4281 = vmul.f32 %v4083, %v4083
    %v4282 = vmul.f32 %v4084, %v4084
    %v4283 = vmul.f32 %v4085, %v4085
    %v4284 = vmul.f32 %v4086, %v4086
    %v4285 = vmul.f32 %v4087, %v4087
    %v4286 = vmul.f32 %v4088, %v4088
    %v4287 = vmul.f32 %v4089, %v4089
    %v4288 = vmul.f32 %v4090, %v4090
    %v4289 = vmul.f32 %v4091, %v4091
    %v4290 = vmul.f32 %v4092, %v4092
    %v4291 = vmul.f32 %v4093, %v4093
    %v4292 = vmul.f32 %v4094, %v4094
    %v4293 = vmul.f32 %v4095, %v4095
    %v4294 = vmul.f32 %v4096, %v4096
    %v4295 = vmul.f32 %v4097, %v4097
    %v4296 = vmul.f32 %v4098, %v4098
    %v4297 = vmul.f32 %v4099, %v4099
    %v4298 = vmul.f32 %v4100, %v4100
    %v4299 = vmul.f32 %v4101, %v4101
    %v4300 = vmul.f32 %v4102, %v4102
    %v4301 = vmul.f32 %v4103, %v4103
    %v4302 = vmul.f32 %v4104, %v4104
    %v4303 = vmul.f32 %v4105, %v4105
    %v4304 = vmul.f32 %v4106, %v4106
    %v4305 = vmul.f32 %v4107, %v4107
    %v4306 = vmul.f32 %v4108, %v4108
    %v4307 = vmul.f32 %v4109, %v4109
    %v4308 = vmul.f32 %v4110, %v4110
    %v4309 = vmul.f32 %v4111, %v4111
    %v4310 = vmul.f32 %v4112, %v4112
    %v4311 = vmul.f32 %v4113, %v4113
    %v4312 = vmul.f32 %v4114, %v4114
    %v4313 = vmul.f32 %v4115, %v4115
    %v4314 = vmul.f32 %v4116, %v4116
    %v4315 = vmul.f32 %v4117, %v4117
    %v4316 = vmul.f32 %v4118, %v4118
    %v4317 = vmul.f32 %v4119, %v4119
    %v4318 = vmul.f32 %v4120, %v4120
    %v4319 = vmul.f32 %v4121, %v4121
    %v4320 = vmul.f32 %v4122, %v4122
    %v4321 = vmul.f32 %v4123, %v4123
    %v4322 = vmul.f32 %v4124, %v4124
    %v4323 = vmul.f32 %v4125, %v4125
    %v4324 = vmul.f32 %v4126, %v4126
    %v4325 = vmul.f32 %v4127, %v4127
    %v4326 = vmul.f32 %v4128, %v4128
    %v4327 = vmul.f32 %v4129, %v4129
    %v4328 = vmul.f32 %v4130, %v4130
    %v4329 = vmul.f32 %v4131, %v4131
    %v4330 = vmul.f32 %v4132, %v4132
    %v4331 = vmul.f32 %v4133, %v4133
    %v4332 = vmul.f32 %v4134, %v4134
    %v4333 = vmul.f32 %v4135, %v4135
    %v4334 = vmul.f32 %v4136, %v4136
    %v4335 = vmul.f32 %v4137, %v4137
    %v4336 = vmul.f32 %v4138, %v4138
    %v4337 = vmul.f32 %v4139, %v4139
    %v4338 = vadd.f32 %v4274, %v4275
    %v4339 = vadd.f32 %v4338, %v4276
    %v4340 = vadd.f32 %v4339, %v4277
    %v4341 = vadd.f32 %v4340, %v4278
    %v4342 = vadd.f32 %v4341, %v4279
    %v4343 = vadd.f32 %v4342, %v4280
    %v4344 = vadd.f32 %v4343, %v4281
    %v4345 = vadd.f32 %v4344, %v4282
    %v4346 = vadd.f32 %v4345, %v4283
    %v4347 = vadd.f32 %v4346, %v4284
    %v4348 = vadd.f32 %v4347, %v4285
    %v4349 = vadd.f32 %v4348, %v4286
    %v4350 = vadd.f32 %v4349, %v4287
    %v4351 = vadd.f32 %v4350, %v4288
    %v4352 = vadd.f32 %v4351, %v4289
    %v4353 = vadd.f32 %v4352, %v4290
    %v4354 = vadd.f32 %v4353, %v4291
    %v4355 = vadd.f32 %v4354, %v4292
    %v4356 = vadd.f32 %v4355, %v4293
    %v4357 = vadd.f32 %v4356, %v4294
    %v4358 = vadd.f32 %v4357, %v4295
    %v4359 = vadd.f32 %v4358, %v4296
    %v4360 = vadd.f32 %v4359, %v4297
    %v4361 = vadd.f32 %v4360, %v4298
    %v4362 = vadd.f32 %v4361, %v4299
    %v4363 = vadd.f32 %v4362, %v4300
    %v4364 = vadd.f32 %v4363, %v4301
    %v4365 = vadd.f32 %v4364, %v4302
    %v4366 = vadd.f32 %v4365, %v4303
    %v4367 = vadd.f32 %v4366, %v4304
    %v4368 = vadd.f32 %v4367, %v4305
    %v4369 = vadd.f32 %v4368, %v4306
    %v4370 = vadd.f32 %v4369, %v4307
    %v4371 = vadd.f32 %v4370, %v4308
    %v4372 = vadd.f32 %v4371, %v4309
    %v4373 = vadd.f32 %v4372, %v4310
    %v4374 = vadd.f32 %v4373, %v4311
    %v4375 = vadd.f32 %v4374, %v4312
    %v4376 = vadd.f32 %v4375, %v4313
    %v4377 = vadd.f32 %v4376, %v4314
    %v4378 = vadd.f32 %v4377, %v4315
    %v4379 = vadd.f32 %v4378, %v4316
    %v4380 = vadd.f32 %v4379, %v4317
    %v4381 = vadd.f32 %v4380, %v4318
    %v4382 = vadd.f32 %v4381, %v4319
    %v4383 = vadd.f32 %v4382, %v4320
    %v4384 = vadd.f32 %v4383, %v4321
    %v4385 = vadd.f32 %v4384, %v4322
    %v4386 = vadd.f32 %v4385, %v4323
    %v4387 = vadd.f32 %v4386, %v4324
    %v4388 = vadd.f32 %v4387, %v4325
    %v4389 = vadd.f32 %v4388, %v4326
    %v4390 = vadd.f32 %v4389, %v4327
    %v4391 = vadd.f32 %v4390, %v4328
    %v4392 = vadd.f32 %v4391, %v4329
    %v4393 = vadd.f32 %v4392, %v4330
    %v4394 = vadd.f32 %v4393, %v4331
    %v4395 = vadd.f32 %v4394, %v4332
    %v4396 = vadd.f32 %v4395, %v4333
    %v4397 = vadd.f32 %v4396, %v4334
    %v4398 = vadd.f32 %v4397, %v4335
    %v4399 = vadd.f32 %v4398, %v4336
    %v4400 = vadd.f32 %v4399, %v4337
    %v4401 = vrot.slane %v4400, 4
    %v4402 = vadd.f32 %v4400, %v4401
    %v4403 = vrot.slane %v4402, 2
    %v4404 = vadd.f32 %v4402, %v4403
    %v4405 = vrot.slane %v4404, 1
    %v4406 = vadd.f32 %v4404, %v4405
    %4407 = vst [vmem:[%s7 + $0x1] sm:$0x1] %v4406
    // Predicated region
    $region102: #{resblock_forward.3} parent=1 // pred_check
      _
    $region103: #{resblock_forward.3} parent=1 // pred_check_branch
      %4409 = sbr.rel (0) target = $region105
    $region104: #{resblock_forward.3} parent=1 // pred_region
      _
    $region105: #{resblock_forward.3} parent=1 // pred_fallthru
      _
    // Predicated region
    $region106: #{resblock_forward.3} parent=1 // pred_check
      _
    $region107: #{resblock_forward.3} parent=1 // pred_check_branch
      %4411 = sbr.rel (0) target = $region109
    $region108: #{resblock_forward.3} parent=1 // pred_region
      _
    $region109: #{resblock_forward.3} parent=1 // pred_fallthru
      _
    // Predicated region
    $region110: #{resblock_forward.3} parent=1 // pred_check
      _
    $region111: #{resblock_forward.3} parent=1 // pred_check_branch
      %4413 = sbr.rel (0) target = $region113
    $region112: #{resblock_forward.3} parent=1 // pred_region
      _
    $region113: #{resblock_forward.3} parent=1 // pred_fallthru
      _
    // Predicated region
    $region114: #{resblock_forward.3} parent=1 // pred_check
      _
    $region115: #{resblock_forward.3} parent=1 // pred_check_branch
      %4415 = sbr.rel (0) target = $region117
    $region116: #{resblock_forward.3} parent=1 // pred_region
      _
    $region117: #{resblock_forward.3} parent=1 // pred_fallthru
      _

// kernel: resblock_forward.4
$region0: #{resblock_forward.4}
  #allocation0 [shape = 'u32[]', space=smem, size = 0x4, offset = 0x4, fixed_abs, tag = 'smem constant byte address 0x4 - core index']
  #allocation1 [shape = 'u32[144,128]{1,0:T(1,128)}', space=vmem, size = 0x12000, scoped, tag = 'internal scratch']
  #allocation2 [shape = 'f32[2,18,16,384]{3,2,1,0:T(8,128)}', space=vmem, size = 0xd8000, scoped, tag = 'scratch operand']
  %s0 = inlined_call_operand.vmem [shape: f32[2,16,16,128], index: 0, kind: input, shape index: {}, may-alias: {0,1,2}]
  %s1 = inlined_call_operand.vmem [shape: f32[2,16,16,128], index: 1, kind: input, shape index: {}, may-alias: {0,1,2}]
  %s2 = inlined_call_operand.vmem [shape: f32[2,16,16,128], index: 2, kind: input, shape index: {}, may-alias: {0,1,2}]
  %s3 = inlined_call_operand.vmem [shape: f32[3,384,128], index: 3, kind: input, shape index: {}]
  %s4 = inlined_call_operand.vmem [shape: f32[1,128], index: 4, kind: input, shape index: {}]
  %s5 = inlined_call_operand.vmem [shape: f32[1,128], index: 5, kind: input, shape index: {}]
  %s6 = inlined_call_operand.vmem [shape: f32[2,16,16,128], index: 6, kind: output, shape index: {0}]
  %s7 = inlined_call_operand.vmem [shape: f32[1,2,128], index: 7, kind: output, shape index: {1}]
  %8 = xla_tuple %s6, %s7
  %s9 = sld [smem:[#allocation0]]
  $region118: #{resblock_forward.4} parent=0
    _
  %s11 = ssub.s32 1, %s9
  %s12 = scalar_select 0, %s11, %s9
  $region1: #{resblock_forward.4} parent=0
    #allocation3 [shape = 'u8[16384]{0}', space=vmem, size = 0x4000, scoped, tag = 'input window, operand 0, single buffered']
    #allocation4 [shape = 'u8[16384]{0}', space=vmem, size = 0x4000, scoped, tag = 'input window, operand 2, single buffered']
    // Predicated region
    $region2: #{resblock_forward.4} parent=1 // pred_check
      _
    $region3: #{resblock_forward.4} parent=1 // pred_check_branch
      %14 = sbr.rel (0) target = $region5
    $region4: #{resblock_forward.4} parent=1 // pred_region
      %p15 = scmp.eq.s32.totalorder 0, 0
      %s16 = smul.u32 0, 16
      %s17 = ssub.s32 %s16, 1
      %s18 = scalar_select %p15, 1, %s17
      %s19 = smul.addr %s18, 2
      %s20 = smul.addr %s19, 8
      %s21 = scalar_lea.vmem %s0, %s20
      // Predicated region
      $region6: #{resblock_forward.4} parent=4 // pred_check
        _
      $region7: #{resblock_forward.4} parent=4 // pred_check_branch
        %23 = sbr.rel (0) target = $region9
      $region8: #{resblock_forward.4} parent=4 // pred_region
        // Predicated region
        $region10: #{resblock_forward.4} parent=8 // pred_check
          _
        $region11: #{resblock_forward.4} parent=8 // pred_check_branch
          %25 = sbr.rel (0) target = $region13
        $region12: #{resblock_forward.4} parent=8 // pred_region
          // Predicated region
          $region25: #{resblock_forward.4} parent=12 // pred_check
            _
          $region26: #{resblock_forward.4} parent=12 // pred_check_branch
            %46 = sbr.rel (0) target = $region28
          $region27: #{resblock_forward.4} parent=12 // pred_region
            loop: start=0, step=1, limit=1
            $region29: #{resblock_forward.4} parent=27 // loop_pre_header
              _
            $region30: #{resblock_forward.4} parent=27 // loop_header
              %s48 = sphi 0, %s52
              %p49 = scmp.ge.s32.totalorder %s48, 1
              %s53 = sphi %s21, %s21
              %s54 = sphi [#allocation3], [#allocation3]
            $region31: #{resblock_forward.4} parent=27 // loop_header_branch
              %51 = sbr.rel (%p49) target = $region35
            $region32: #{resblock_forward.4} parent=27 // loop_body
              %v55 = vld [vmem:[%s53] sm:$0xff]
              %56 = vst [vmem:[%s54] sm:$0xff] %v55
              %v57 = vld [vmem:[%s53 + $0x8] sm:$0xff]
              %58 = vst [vmem:[%s54 + $0x8] sm:$0xff] %v57
              %v59 = vld [vmem:[%s53 + $0x100] sm:$0xff]
              %60 = vst [vmem:[%s54 + $0x10] sm:$0xff] %v59
              %v61 = vld [vmem:[%s53 + $0x108] sm:$0xff]
              %62 = vst [vmem:[%s54 + $0x18] sm:$0xff] %v61
            $region33: #{resblock_forward.4} parent=27 // loop_footer
              %s52 = sadd.s32 1, %s48
            $region34: #{resblock_forward.4} parent=27 // loop_footer_branch
              %47 = sbr.rel target = $region30
            $region35: #{resblock_forward.4} parent=27 // loop_exit
              _
          $region28: #{resblock_forward.4} parent=12 // pred_fallthru
            _
          // Predicated region
          $region36: #{resblock_forward.4} parent=12 // pred_check
            _
          $region37: #{resblock_forward.4} parent=12 // pred_check_branch
            %64 = sbr.rel target = $region39
          $region38: #{resblock_forward.4} parent=12 // pred_region
            _
          $region39: #{resblock_forward.4} parent=12 // pred_fallthru
            _
        $region13: #{resblock_forward.4} parent=8 // pred_fallthru
          _
        // Predicated region
        $region14: #{resblock_forward.4} parent=8 // pred_check
          _
        $region15: #{resblock_forward.4} parent=8 // pred_check_branch
          %27 = sbr.rel target = $region17
        $region16: #{resblock_forward.4} parent=8 // pred_region
          loop: start=0, step=1, limit=1
          $region18: #{resblock_forward.4} parent=16 // loop_pre_header
            _
          $region19: #{resblock_forward.4} parent=16 // loop_header
            %s30 = sphi 0, %s34
            %p31 = scmp.ge.s32.totalorder %s30, 1
            %s35 = sphi %s21, %s21
            %s36 = sphi [#allocation3], [#allocation3]
          $region20: #{resblock_forward.4} parent=16 // loop_header_branch
            %33 = sbr.rel (%p31) target = $region24
          $region21: #{resblock_forward.4} parent=16 // loop_body
            %v37 = vld [vmem:[%s35] sm:$0xff]
            %38 = vst [vmem:[%s36] sm:$0xff] %v37
            %v39 = vld [vmem:[%s35 + $0x8] sm:$0xff]
            %40 = vst [vmem:[%s36 + $0x8] sm:$0xff] %v39
            %v41 = vld [vmem:[%s35 + $0x100] sm:$0xff]
            %42 = vst [vmem:[%s36 + $0x10] sm:$0xff] %v41
            %v43 = vld [vmem:[%s35 + $0x108] sm:$0xff]
            %44 = vst [vmem:[%s36 + $0x18] sm:$0xff] %v43
          $region22: #{resblock_forward.4} parent=16 // loop_footer
            %s34 = sadd.s32 1, %s30
          $region23: #{resblock_forward.4} parent=16 // loop_footer_branch
            %29 = sbr.rel target = $region19
          $region24: #{resblock_forward.4} parent=16 // loop_exit
            _
        $region17: #{resblock_forward.4} parent=8 // pred_fallthru
          _
      $region9: #{resblock_forward.4} parent=4 // pred_fallthru
        _
      %65 = vnop
    $region5: #{resblock_forward.4} parent=1 // pred_fallthru
      _
    // Predicated region
    $region40: #{resblock_forward.4} parent=1 // pred_check
      _
    $region41: #{resblock_forward.4} parent=1 // pred_check_branch
      %67 = sbr.rel (0) target = $region43
    $region42: #{resblock_forward.4} parent=1 // pred_region
      _
    $region43: #{resblock_forward.4} parent=1 // pred_fallthru
      _
    // Predicated region
    $region44: #{resblock_forward.4} parent=1 // pred_check
      _
    $region45: #{resblock_forward.4} parent=1 // pred_check_branch
      %69 = sbr.rel (0) target = $region47
    $region46: #{resblock_forward.4} parent=1 // pred_region
      %p70 = scmp.eq.s32.totalorder 0, 0
      %s71 = smul.u32 0, 16
      %s72 = sadd.s32 %s71, 16
      %s73 = scalar_select %p70, 14, %s72
      %s74 = smul.addr %s73, 2
      %s75 = smul.addr %s74, 8
      %s76 = scalar_lea.vmem %s2, %s75
      // Predicated region
      $region48: #{resblock_forward.4} parent=46 // pred_check
        _
      $region49: #{resblock_forward.4} parent=46 // pred_check_branch
        %78 = sbr.rel (0) target = $region51
      $region50: #{resblock_forward.4} parent=46 // pred_region
        // Predicated region
        $region52: #{resblock_forward.4} parent=50 // pred_check
          _
        $region53: #{resblock_forward.4} parent=50 // pred_check_branch
          %80 = sbr.rel (0) target = $region55
        $region54: #{resblock_forward.4} parent=50 // pred_region
          // Predicated region
          $region67: #{resblock_forward.4} parent=54 // pred_check
            _
          $region68: #{resblock_forward.4} parent=54 // pred_check_branch
            %101 = sbr.rel (0) target = $region70
          $region69: #{resblock_forward.4} parent=54 // pred_region
            loop: start=0, step=1, limit=1
            $region71: #{resblock_forward.4} parent=69 // loop_pre_header
              _
            $region72: #{resblock_forward.4} parent=69 // loop_header
              %s103 = sphi 0, %s107
              %p104 = scmp.ge.s32.totalorder %s103, 1
              %s108 = sphi %s76, %s76
              %s109 = sphi [#allocation4], [#allocation4]
            $region73: #{resblock_forward.4} parent=69 // loop_header_branch
              %106 = sbr.rel (%p104) target = $region77
            $region74: #{resblock_forward.4} parent=69 // loop_body
              %v110 = vld [vmem:[%s108] sm:$0xff]
              %111 = vst [vmem:[%s109] sm:$0xff] %v110
              %v112 = vld [vmem:[%s108 + $0x8] sm:$0xff]
              %113 = vst [vmem:[%s109 + $0x8] sm:$0xff] %v112
              %v114 = vld [vmem:[%s108 + $0x100] sm:$0xff]
              %115 = vst [vmem:[%s109 + $0x10] sm:$0xff] %v114
              %v116 = vld [vmem:[%s108 + $0x108] sm:$0xff]
              %117 = vst [vmem:[%s109 + $0x18] sm:$0xff] %v116
            $region75: #{resblock_forward.4} parent=69 // loop_footer
              %s107 = sadd.s32 1, %s103
            $region76: #{resblock_forward.4} parent=69 // loop_footer_branch
              %102 = sbr.rel target = $region72
            $region77: #{resblock_forward.4} parent=69 // loop_exit
              _
          $region70: #{resblock_forward.4} parent=54 // pred_fallthru
            _
          // Predicated region
          $region78: #{resblock_forward.4} parent=54 // pred_check
            _
          $region79: #{resblock_forward.4} parent=54 // pred_check_branch
            %119 = sbr.rel target = $region81
          $region80: #{resblock_forward.4} parent=54 // pred_region
            _
          $region81: #{resblock_forward.4} parent=54 // pred_fallthru
            _
        $region55: #{resblock_forward.4} parent=50 // pred_fallthru
          _
        // Predicated region
        $region56: #{resblock_forward.4} parent=50 // pred_check
          _
        $region57: #{resblock_forward.4} parent=50 // pred_check_branch
          %82 = sbr.rel target = $region59
        $region58: #{resblock_forward.4} parent=50 // pred_region
          loop: start=0, step=1, limit=1
          $region60: #{resblock_forward.4} parent=58 // loop_pre_header
            _
          $region61: #{resblock_forward.4} parent=58 // loop_header
            %s85 = sphi 0, %s89
            %p86 = scmp.ge.s32.totalorder %s85, 1
            %s90 = sphi %s76, %s76
            %s91 = sphi [#allocation4], [#allocation4]
          $region62: #{resblock_forward.4} parent=58 // loop_header_branch
            %88 = sbr.rel (%p86) target = $region66
          $region63: #{resblock_forward.4} parent=58 // loop_body
            %v92 = vld [vmem:[%s90] sm:$0xff]
            %93 = vst [vmem:[%s91] sm:$0xff] %v92
            %v94 = vld [vmem:[%s90 + $0x8] sm:$0xff]
            %95 = vst [vmem:[%s91 + $0x8] sm:$0xff] %v94
            %v96 = vld [vmem:[%s90 + $0x100] sm:$0xff]
            %97 = vst [vmem:[%s91 + $0x10] sm:$0xff] %v96
            %v98 = vld [vmem:[%s90 + $0x108] sm:$0xff]
            %99 = vst [vmem:[%s91 + $0x18] sm:$0xff] %v98
          $region64: #{resblock_forward.4} parent=58 // loop_footer
            %s89 = sadd.s32 1, %s85
          $region65: #{resblock_forward.4} parent=58 // loop_footer_branch
            %84 = sbr.rel target = $region61
          $region66: #{resblock_forward.4} parent=58 // loop_exit
            _
        $region59: #{resblock_forward.4} parent=50 // pred_fallthru
          _
      $region51: #{resblock_forward.4} parent=46 // pred_fallthru
        _
      %120 = vnop
    $region47: #{resblock_forward.4} parent=1 // pred_fallthru
      _
    // Predicated region
    $region82: #{resblock_forward.4} parent=1 // pred_check
      _
    $region83: #{resblock_forward.4} parent=1 // pred_check_branch
      %122 = sbr.rel (0) target = $region85
    $region84: #{resblock_forward.4} parent=1 // pred_region
      _
    $region85: #{resblock_forward.4} parent=1 // pred_fallthru
      _
    // Predicated region
    $region86: #{resblock_forward.4} parent=1 // pred_check
      _
    $region87: #{resblock_forward.4} parent=1 // pred_check_branch
      %124 = sbr.rel (0) target = $region89
    $region88: #{resblock_forward.4} parent=1 // pred_region
      _
    $region89: #{resblock_forward.4} parent=1 // pred_fallthru
      _
    // Predicated region
    $region90: #{resblock_forward.4} parent=1 // pred_check
      _
    $region91: #{resblock_forward.4} parent=1 // pred_check_branch
      %126 = sbr.rel (0) target = $region93
    $region92: #{resblock_forward.4} parent=1 // pred_region
      _
    $region93: #{resblock_forward.4} parent=1 // pred_fallthru
      _
    // Predicated region
    $region94: #{resblock_forward.4} parent=1 // pred_check
      _
    $region95: #{resblock_forward.4} parent=1 // pred_check_branch
      %128 = sbr.rel (0) target = $region97
    $region96: #{resblock_forward.4} parent=1 // pred_region
      _
    $region97: #{resblock_forward.4} parent=1 // pred_fallthru
      _
    // Predicated region
    $region98: #{resblock_forward.4} parent=1 // pred_check
      _
    $region99: #{resblock_forward.4} parent=1 // pred_check_branch
      %130 = sbr.rel (0) target = $region101
    $region100: #{resblock_forward.4} parent=1 // pred_region
      _
    $region101: #{resblock_forward.4} parent=1 // pred_fallthru
      _
    %p131 = scmp.eq.s32.totalorder 0, 0
    %s132 = smul.u32 0, 16
    %s133 = ssub.s32 %s132, 1
    %s134 = scalar_select %p131, 1, %s133
    %p135 = scmp.eq.s32.totalorder 0, 0
    %s136 = smul.u32 0, 16
    %s137 = sadd.s32 %s136, 16
    %s138 = scalar_select %p135, 14, %s137
    %v139 = vld [vmem:[%s4] sm:$0x1]
    %v140 = vld [vmem:[%s5] sm:$0x1]
    %v141 = vld [vmem:[%s1] sm:$0xff]
    %v142 = vld [vmem:[%s1 + $0x8] sm:$0xff]
    %v143 = vld [vmem:[%s1 + $0x10] sm:$0xff]
    %v144 = vld [vmem:[%s1 + $0x18] sm:$0xff]
    %v145 = vld [vmem:[%s1 + $0x20] sm:$0xff]
    %v146 = vld [vmem:[%s1 + $0x28] sm:$0xff]
    %v147 = vld [vmem:[%s1 + $0x30] sm:$0xff]
    %v148 = vld [vmem:[%s1 + $0x38] sm:$0xff]
    %v149 = vld [vmem:[%s1 + $0x40] sm:$0xff]
    %v150 = vld [vmem:[%s1 + $0x48] sm:$0xff]
    %v151 = vld [vmem:[%s1 + $0x50] sm:$0xff]
    %v152 = vld [vmem:[%s1 + $0x58] sm:$0xff]
    %v153 = vld [vmem:[%s1 + $0x60] sm:$0xff]
    %v154 = vld [vmem:[%s1 + $0x68] sm:$0xff]
    %v155 = vld [vmem:[%s1 + $0x70] sm:$0xff]
    %v156 = vld [vmem:[%s1 + $0x78] sm:$0xff]
    %v157 = vld [vmem:[%s1 + $0x80] sm:$0xff]
    %v158 = vld [vmem:[%s1 + $0x88] sm:$0xff]
    %v159 = vld [vmem:[%s1 + $0x90] sm:$0xff]
    %v160 = vld [vmem:[%s1 + $0x98] sm:$0xff]
    %v161 = vld [vmem:[%s1 + $0xa0] sm:$0xff]
    %v162 = vld [vmem:[%s1 + $0xa8] sm:$0xff]
    %v163 = vld [vmem:[%s1 + $0xb0] sm:$0xff]
    %v164 = vld [vmem:[%s1 + $0xb8] sm:$0xff]
    %v165 = vld [vmem:[%s1 + $0xc0] sm:$0xff]
    %v166 = vld [vmem:[%s1 + $0xc8] sm:$0xff]
    %v167 = vld [vmem:[%s1 + $0xd0] sm:$0xff]
    %v168 = vld [vmem:[%s1 + $0xd8] sm:$0xff]
    %v169 = vld [vmem:[%s1 + $0xe0] sm:$0xff]
    %v170 = vld [vmem:[%s1 + $0xe8] sm:$0xff]
    %v171 = vld [vmem:[%s1 + $0xf0] sm:$0xff]
    %v172 = vld [vmem:[%s1 + $0xf8] sm:$0xff]
    %v173 = vld [vmem:[%s1 + $0x100] sm:$0xff]
    %v174 = vld [vmem:[%s1 + $0x108] sm:$0xff]
    %v175 = vld [vmem:[%s1 + $0x110] sm:$0xff]
    %v176 = vld [vmem:[%s1 + $0x118] sm:$0xff]
    %v177 = vld [vmem:[%s1 + $0x120] sm:$0xff]
    %v178 = vld [vmem:[%s1 + $0x128] sm:$0xff]
    %v179 = vld [vmem:[%s1 + $0x130] sm:$0xff]
    %v180 = vld [vmem:[%s1 + $0x138] sm:$0xff]
    %v181 = vld [vmem:[%s1 + $0x140] sm:$0xff]
    %v182 = vld [vmem:[%s1 + $0x148] sm:$0xff]
    %v183 = vld [vmem:[%s1 + $0x150] sm:$0xff]
    %v184 = vld [vmem:[%s1 + $0x158] sm:$0xff]
    %v185 = vld [vmem:[%s1 + $0x160] sm:$0xff]
    %v186 = vld [vmem:[%s1 + $0x168] sm:$0xff]
    %v187 = vld [vmem:[%s1 + $0x170] sm:$0xff]
    %v188 = vld [vmem:[%s1 + $0x178] sm:$0xff]
    %v189 = vld [vmem:[%s1 + $0x180] sm:$0xff]
    %v190 = vld [vmem:[%s1 + $0x188] sm:$0xff]
    %v191 = vld [vmem:[%s1 + $0x190] sm:$0xff]
    %v192 = vld [vmem:[%s1 + $0x198] sm:$0xff]
    %v193 = vld [vmem:[%s1 + $0x1a0] sm:$0xff]
    %v194 = vld [vmem:[%s1 + $0x1a8] sm:$0xff]
    %v195 = vld [vmem:[%s1 + $0x1b0] sm:$0xff]
    %v196 = vld [vmem:[%s1 + $0x1b8] sm:$0xff]
    %v197 = vld [vmem:[%s1 + $0x1c0] sm:$0xff]
    %v198 = vld [vmem:[%s1 + $0x1c8] sm:$0xff]
    %v199 = vld [vmem:[%s1 + $0x1d0] sm:$0xff]
    %v200 = vld [vmem:[%s1 + $0x1d8] sm:$0xff]
    %v201 = vld [vmem:[%s1 + $0x1e0] sm:$0xff]
    %v202 = vld [vmem:[%s1 + $0x1e8] sm:$0xff]
    %v203 = vld [vmem:[%s1 + $0x1f0] sm:$0xff]
    %v204 = vld [vmem:[%s1 + $0x1f8] sm:$0xff]
    %v206 = vlaneseq
    %v207 = vshrl.u32 %v206, 7
    %v208 = vsub.s32 0, %v207
    %v209 = vrot.slane %v139, %v208
    %v211 = vmul.f32 %v141, %v209
    %v212 = vmul.f32 %v142, %v209
    %v213 = vmul.f32 %v143, %v209
    %v214 = vmul.f32 %v144, %v209
    %v215 = vmul.f32 %v145, %v209
    %v216 = vmul.f32 %v146, %v209
    %v217 = vmul.f32 %v147, %v209
    %v218 = vmul.f32 %v148, %v209
    %v219 = vmul.f32 %v149, %v209
    %v220 = vmul.f32 %v150, %v209
    %v221 = vmul.f32 %v151, %v209
    %v222 = vmul.f32 %v152, %v209
    %v223 = vmul.f32 %v153, %v209
    %v224 = vmul.f32 %v154, %v209
    %v225 = vmul.f32 %v155, %v209
    %v226 = vmul.f32 %v156, %v209
    %v227 = vmul.f32 %v157, %v209
    %v228 = vmul.f32 %v158, %v209
    %v229 = vmul.f32 %v159, %v209
    %v230 = vmul.f32 %v160, %v209
    %v231 = vmul.f32 %v161, %v209
    %v232 = vmul.f32 %v162, %v209
    %v233 = vmul.f32 %v163, %v209
    %v234 = vmul.f32 %v164, %v209
    %v235 = vmul.f32 %v165, %v209
    %v236 = vmul.f32 %v166, %v209
    %v237 = vmul.f32 %v167, %v209
    %v238 = vmul.f32 %v168, %v209
    %v239 = vmul.f32 %v169, %v209
    %v240 = vmul.f32 %v170, %v209
    %v241 = vmul.f32 %v171, %v209
    %v242 = vmul.f32 %v172, %v209
    %v243 = vmul.f32 %v173, %v209
    %v244 = vmul.f32 %v174, %v209
    %v245 = vmul.f32 %v175, %v209
    %v246 = vmul.f32 %v176, %v209
    %v247 = vmul.f32 %v177, %v209
    %v248 = vmul.f32 %v178, %v209
    %v249 = vmul.f32 %v179, %v209
    %v250 = vmul.f32 %v180, %v209
    %v251 = vmul.f32 %v181, %v209
    %v252 = vmul.f32 %v182, %v209
    %v253 = vmul.f32 %v183, %v209
    %v254 = vmul.f32 %v184, %v209
    %v255 = vmul.f32 %v185, %v209
    %v256 = vmul.f32 %v186, %v209
    %v257 = vmul.f32 %v187, %v209
    %v258 = vmul.f32 %v188, %v209
    %v259 = vmul.f32 %v189, %v209
    %v260 = vmul.f32 %v190, %v209
    %v261 = vmul.f32 %v191, %v209
    %v262 = vmul.f32 %v192, %v209
    %v263 = vmul.f32 %v193, %v209
    %v264 = vmul.f32 %v194, %v209
    %v265 = vmul.f32 %v195, %v209
    %v266 = vmul.f32 %v196, %v209
    %v267 = vmul.f32 %v197, %v209
    %v268 = vmul.f32 %v198, %v209
    %v269 = vmul.f32 %v199, %v209
    %v270 = vmul.f32 %v200, %v209
    %v271 = vmul.f32 %v201, %v209
    %v272 = vmul.f32 %v202, %v209
    %v273 = vmul.f32 %v203, %v209
    %v274 = vmul.f32 %v204, %v209
    %v276 = vlaneseq
    %v277 = vshrl.u32 %v276, 7
    %v278 = vsub.s32 0, %v277
    %v279 = vrot.slane %v140, %v278
    %v281 = vadd.f32 %v211, %v279
    %v282 = vadd.f32 %v212, %v279
    %v283 = vadd.f32 %v213, %v279
    %v284 = vadd.f32 %v214, %v279
    %v285 = vadd.f32 %v215, %v279
    %v286 = vadd.f32 %v216, %v279
    %v287 = vadd.f32 %v217, %v279
    %v288 = vadd.f32 %v218, %v279
    %v289 = vadd.f32 %v219, %v279
    %v290 = vadd.f32 %v220, %v279
    %v291 = vadd.f32 %v221, %v279
    %v292 = vadd.f32 %v222, %v279
    %v293 = vadd.f32 %v223, %v279
    %v294 = vadd.f32 %v224, %v279
    %v295 = vadd.f32 %v225, %v279
    %v296 = vadd.f32 %v226, %v279
    %v297 = vadd.f32 %v227, %v279
    %v298 = vadd.f32 %v228, %v279
    %v299 = vadd.f32 %v229, %v279
    %v300 = vadd.f32 %v230, %v279
    %v301 = vadd.f32 %v231, %v279
    %v302 = vadd.f32 %v232, %v279
    %v303 = vadd.f32 %v233, %v279
    %v304 = vadd.f32 %v234, %v279
    %v305 = vadd.f32 %v235, %v279
    %v306 = vadd.f32 %v236, %v279
    %v307 = vadd.f32 %v237, %v279
    %v308 = vadd.f32 %v238, %v279
    %v309 = vadd.f32 %v239, %v279
    %v310 = vadd.f32 %v240, %v279
    %v311 = vadd.f32 %v241, %v279
    %v312 = vadd.f32 %v242, %v279
    %v313 = vadd.f32 %v243, %v279
    %v314 = vadd.f32 %v244, %v279
    %v315 = vadd.f32 %v245, %v279
    %v316 = vadd.f32 %v246, %v279
    %v317 = vadd.f32 %v247, %v279
    %v318 = vadd.f32 %v248, %v279
    %v319 = vadd.f32 %v249, %v279
    %v320 = vadd.f32 %v250, %v279
    %v321 = vadd.f32 %v251, %v279
    %v322 = vadd.f32 %v252, %v279
    %v323 = vadd.f32 %v253, %v279
    %v324 = vadd.f32 %v254, %v279
    %v325 = vadd.f32 %v255, %v279
    %v326 = vadd.f32 %v256, %v279
    %v327 = vadd.f32 %v257, %v279
    %v328 = vadd.f32 %v258, %v279
    %v329 = vadd.f32 %v259, %v279
    %v330 = vadd.f32 %v260, %v279
    %v331 = vadd.f32 %v261, %v279
    %v332 = vadd.f32 %v262, %v279
    %v333 = vadd.f32 %v263, %v279
    %v334 = vadd.f32 %v264, %v279
    %v335 = vadd.f32 %v265, %v279
    %v336 = vadd.f32 %v266, %v279
    %v337 = vadd.f32 %v267, %v279
    %v338 = vadd.f32 %v268, %v279
    %v339 = vadd.f32 %v269, %v279
    %v340 = vadd.f32 %v270, %v279
    %v341 = vadd.f32 %v271, %v279
    %v342 = vadd.f32 %v272, %v279
    %v343 = vadd.f32 %v273, %v279
    %v344 = vadd.f32 %v274, %v279
    %v345 = vmax.f32 %v281, 0.0
    %v346 = vmax.f32 %v282, 0.0
    %v347 = vmax.f32 %v283, 0.0
    %v348 = vmax.f32 %v284, 0.0
    %v349 = vmax.f32 %v285, 0.0
    %v350 = vmax.f32 %v286, 0.0
    %v351 = vmax.f32 %v287, 0.0
    %v352 = vmax.f32 %v288, 0.0
    %v353 = vmax.f32 %v289, 0.0
    %v354 = vmax.f32 %v290, 0.0
    %v355 = vmax.f32 %v291, 0.0
    %v356 = vmax.f32 %v292, 0.0
    %v357 = vmax.f32 %v293, 0.0
    %v358 = vmax.f32 %v294, 0.0
    %v359 = vmax.f32 %v295, 0.0
    %v360 = vmax.f32 %v296, 0.0
    %v361 = vmax.f32 %v297, 0.0
    %v362 = vmax.f32 %v298, 0.0
    %v363 = vmax.f32 %v299, 0.0
    %v364 = vmax.f32 %v300, 0.0
    %v365 = vmax.f32 %v301, 0.0
    %v366 = vmax.f32 %v302, 0.0
    %v367 = vmax.f32 %v303, 0.0
    %v368 = vmax.f32 %v304, 0.0
    %v369 = vmax.f32 %v305, 0.0
    %v370 = vmax.f32 %v306, 0.0
    %v371 = vmax.f32 %v307, 0.0
    %v372 = vmax.f32 %v308, 0.0
    %v373 = vmax.f32 %v309, 0.0
    %v374 = vmax.f32 %v310, 0.0
    %v375 = vmax.f32 %v311, 0.0
    %v376 = vmax.f32 %v312, 0.0
    %v377 = vmax.f32 %v313, 0.0
    %v378 = vmax.f32 %v314, 0.0
    %v379 = vmax.f32 %v315, 0.0
    %v380 = vmax.f32 %v316, 0.0
    %v381 = vmax.f32 %v317, 0.0
    %v382 = vmax.f32 %v318, 0.0
    %v383 = vmax.f32 %v319, 0.0
    %v384 = vmax.f32 %v320, 0.0
    %v385 = vmax.f32 %v321, 0.0
    %v386 = vmax.f32 %v322, 0.0
    %v387 = vmax.f32 %v323, 0.0
    %v388 = vmax.f32 %v324, 0.0
    %v389 = vmax.f32 %v325, 0.0
    %v390 = vmax.f32 %v326, 0.0
    %v391 = vmax.f32 %v327, 0.0
    %v392 = vmax.f32 %v328, 0.0
    %v393 = vmax.f32 %v329, 0.0
    %v394 = vmax.f32 %v330, 0.0
    %v395 = vmax.f32 %v331, 0.0
    %v396 = vmax.f32 %v332, 0.0
    %v397 = vmax.f32 %v333, 0.0
    %v398 = vmax.f32 %v334, 0.0
    %v399 = vmax.f32 %v335, 0.0
    %v400 = vmax.f32 %v336, 0.0
    %v401 = vmax.f32 %v337, 0.0
    %v402 = vmax.f32 %v338, 0.0
    %v403 = vmax.f32 %v339, 0.0
    %v404 = vmax.f32 %v340, 0.0
    %v405 = vmax.f32 %v341, 0.0
    %v406 = vmax.f32 %v342, 0.0
    %v407 = vmax.f32 %v343, 0.0
    %v408 = vmax.f32 %v344, 0.0
    %s409 = scalar_lea.vmem [#allocation2], 48
    %410 = vst [vmem:[%s409 + $0x8] sm:$0xff] %v345
    %411 = vst [vmem:[%s409 + $0x20] sm:$0xff] %v346
    %412 = vst [vmem:[%s409 + $0x38] sm:$0xff] %v347
    %413 = vst [vmem:[%s409 + $0x50] sm:$0xff] %v348
    %414 = vst [vmem:[%s409 + $0x68] sm:$0xff] %v349
    %415 = vst [vmem:[%s409 + $0x80] sm:$0xff] %v350
    %416 = vst [vmem:[%s409 + $0x98] sm:$0xff] %v351
    %417 = vst [vmem:[%s409 + $0xb0] sm:$0xff] %v352
    %418 = vst [vmem:[%s409 + $0xc8] sm:$0xff] %v353
    %419 = vst [vmem:[%s409 + $0xe0] sm:$0xff] %v354
    %420 = vst [vmem:[%s409 + $0xf8] sm:$0xff] %v355
    %421 = vst [vmem:[%s409 + $0x110] sm:$0xff] %v356
    %422 = vst [vmem:[%s409 + $0x128] sm:$0xff] %v357
    %423 = vst [vmem:[%s409 + $0x140] sm:$0xff] %v358
    %424 = vst [vmem:[%s409 + $0x158] sm:$0xff] %v359
    %425 = vst [vmem:[%s409 + $0x170] sm:$0xff] %v360
    %426 = vst [vmem:[%s409 + $0x188] sm:$0xff] %v361
    %427 = vst [vmem:[%s409 + $0x1a0] sm:$0xff] %v362
    %428 = vst [vmem:[%s409 + $0x1b8] sm:$0xff] %v363
    %429 = vst [vmem:[%s409 + $0x1d0] sm:$0xff] %v364
    %430 = vst [vmem:[%s409 + $0x1e8] sm:$0xff] %v365
    %431 = vst [vmem:[%s409 + $0x200] sm:$0xff] %v366
    %432 = vst [vmem:[%s409 + $0x218] sm:$0xff] %v367
    %433 = vst [vmem:[%s409 + $0x230] sm:$0xff] %v368
    %434 = vst [vmem:[%s409 + $0x248] sm:$0xff] %v369
    %435 = vst [vmem:[%s409 + $0x260] sm:$0xff] %v370
    %436 = vst [vmem:[%s409 + $0x278] sm:$0xff] %v371
    %437 = vst [vmem:[%s409 + $0x290] sm:$0xff] %v372
    %438 = vst [vmem:[%s409 + $0x2a8] sm:$0xff] %v373
    %439 = vst [vmem:[%s409 + $0x2c0] sm:$0xff] %v374
    %440 = vst [vmem:[%s409 + $0x2d8] sm:$0xff] %v375
    %441 = vst [vmem:[%s409 + $0x2f0] sm:$0xff] %v376
    %442 = vst [vmem:[%s409 + $0x368] sm:$0xff] %v377
    %443 = vst [vmem:[%s409 + $0x380] sm:$0xff] %v378
    %444 = vst [vmem:[%s409 + $0x398] sm:$0xff] %v379
    %445 = vst [vmem:[%s409 + $0x3b0] sm:$0xff] %v380
    %446 = vst [vmem:[%s409 + $0x3c8] sm:$0xff] %v381
    %447 = vst [vmem:[%s409 + $0x3e0] sm:$0xff] %v382
    %448 = vst [vmem:[%s409 + $0x3f8] sm:$0xff] %v383
    %449 = vst [vmem:[%s409 + $0x410] sm:$0xff] %v384
    %450 = vst [vmem:[%s409 + $0x428] sm:$0xff] %v385
    %451 = vst [vmem:[%s409 + $0x440] sm:$0xff] %v386
    %452 = vst [vmem:[%s409 + $0x458] sm:$0xff] %v387
    %453 = vst [vmem:[%s409 + $0x470] sm:$0xff] %v388
    %454 = vst [vmem:[%s409 + $0x488] sm:$0xff] %v389
    %455 = vst [vmem:[%s409 + $0x4a0] sm:$0xff] %v390
    %456 = vst [vmem:[%s409 + $0x4b8] sm:$0xff] %v391
    %457 = vst [vmem:[%s409 + $0x4d0] sm:$0xff] %v392
    %458 = vst [vmem:[%s409 + $0x4e8] sm:$0xff] %v393
    %459 = vst [vmem:[%s409 + $0x500] sm:$0xff] %v394
    %460 = vst [vmem:[%s409 + $0x518] sm:$0xff] %v395
    %461 = vst [vmem:[%s409 + $0x530] sm:$0xff] %v396
    %462 = vst [vmem:[%s409 + $0x548] sm:$0xff] %v397
    %463 = vst [vmem:[%s409 + $0x560] sm:$0xff] %v398
    %464 = vst [vmem:[%s409 + $0x578] sm:$0xff] %v399
    %465 = vst [vmem:[%s409 + $0x590] sm:$0xff] %v400
    %466 = vst [vmem:[%s409 + $0x5a8] sm:$0xff] %v401
    %467 = vst [vmem:[%s409 + $0x5c0] sm:$0xff] %v402
    %468 = vst [vmem:[%s409 + $0x5d8] sm:$0xff] %v403
    %469 = vst [vmem:[%s409 + $0x5f0] sm:$0xff] %v404
    %470 = vst [vmem:[%s409 + $0x608] sm:$0xff] %v405
    %471 = vst [vmem:[%s409 + $0x620] sm:$0xff] %v406
    %472 = vst [vmem:[%s409 + $0x638] sm:$0xff] %v407
    %473 = vst [vmem:[%s409 + $0x650] sm:$0xff] %v408
    %vm538 = vcmask 1040384
    %v539 = vrot.slane %v345, 7
    %v540 = vrot.slane %v346, 7
    %v541 = vsel %vm538, %v539, %v540
    %v542 = vrot.slane %v347, 7
    %v543 = vrot.slane %v348, 7
    %v544 = vsel %vm538, %v542, %v543
    %v545 = vrot.slane %v349, 7
    %v546 = vrot.slane %v350, 7
    %v547 = vsel %vm538, %v545, %v546
    %v548 = vrot.slane %v351, 7
    %v549 = vrot.slane %v352, 7
    %v550 = vsel %vm538, %v548, %v549
    %v551 = vrot.slane %v353, 7
    %v552 = vrot.slane %v354, 7
    %v553 = vsel %vm538, %v551, %v552
    %v554 = vrot.slane %v355, 7
    %v555 = vrot.slane %v356, 7
    %v556 = vsel %vm538, %v554, %v555
    %v557 = vrot.slane %v357, 7
    %v558 = vrot.slane %v358, 7
    %v559 = vsel %vm538, %v557, %v558
    %v560 = vrot.slane %v359, 7
    %v561 = vrot.slane %v360, 7
    %v562 = vsel %vm538, %v560, %v561
    %v563 = vrot.slane %v361, 7
    %v564 = vrot.slane %v362, 7
    %v565 = vsel %vm538, %v563, %v564
    %v566 = vrot.slane %v363, 7
    %v567 = vrot.slane %v364, 7
    %v568 = vsel %vm538, %v566, %v567
    %v569 = vrot.slane %v365, 7
    %v570 = vrot.slane %v366, 7
    %v571 = vsel %vm538, %v569, %v570
    %v572 = vrot.slane %v367, 7
    %v573 = vrot.slane %v368, 7
    %v574 = vsel %vm538, %v572, %v573
    %v575 = vrot.slane %v369, 7
    %v576 = vrot.slane %v370, 7
    %v577 = vsel %vm538, %v575, %v576
    %v578 = vrot.slane %v371, 7
    %v579 = vrot.slane %v372, 7
    %v580 = vsel %vm538, %v578, %v579
    %v581 = vrot.slane %v373, 7
    %v582 = vrot.slane %v374, 7
    %v583 = vsel %vm538, %v581, %v582
    %v584 = vrot.slane %v375, 7
    %v585 = vrot.slane %v376, 7
    %v586 = vsel %vm538, %v584, %v585
    %v587 = vrot.slane %v377, 7
    %v588 = vrot.slane %v378, 7
    %v589 = vsel %vm538, %v587, %v588
    %v590 = vrot.slane %v379, 7
    %v591 = vrot.slane %v380, 7
    %v592 = vsel %vm538, %v590, %v591
    %v593 = vrot.slane %v381, 7
    %v594 = vrot.slane %v382, 7
    %v595 = vsel %vm538, %v593, %v594
    %v596 = vrot.slane %v383, 7
    %v597 = vrot.slane %v384, 7
    %v598 = vsel %vm538, %v596, %v597
    %v599 = vrot.slane %v385, 7
    %v600 = vrot.slane %v386, 7
    %v601 = vsel %vm538, %v599, %v600
    %v602 = vrot.slane %v387, 7
    %v603 = vrot.slane %v388, 7
    %v604 = vsel %vm538, %v602, %v603
    %v605 = vrot.slane %v389, 7
    %v606 = vrot.slane %v390, 7
    %v607 = vsel %vm538, %v605, %v606
    %v608 = vrot.slane %v391, 7
    %v609 = vrot.slane %v392, 7
    %v610 = vsel %vm538, %v608, %v609
    %v611 = vrot.slane %v393, 7
    %v612 = vrot.slane %v394, 7
    %v613 = vsel %vm538, %v611, %v612
    %v614 = vrot.slane %v395, 7
    %v615 = vrot.slane %v396, 7
    %v616 = vsel %vm538, %v614, %v615
    %v617 = vrot.slane %v397, 7
    %v618 = vrot.slane %v398, 7
    %v619 = vsel %vm538, %v617, %v618
    %v620 = vrot.slane %v399, 7
    %v621 = vrot.slane %v400, 7
    %v622 = vsel %vm538, %v620, %v621
    %v623 = vrot.slane %v401, 7
    %v624 = vrot.slane %v402, 7
    %v625 = vsel %vm538, %v623, %v624
    %v626 = vrot.slane %v403, 7
    %v627 = vrot.slane %v404, 7
    %v628 = vsel %vm538, %v626, %v627
    %v629 = vrot.slane %v405, 7
    %v630 = vrot.slane %v406, 7
    %v631 = vsel %vm538, %v629, %v630
    %v632 = vrot.slane %v407, 7
    %v633 = vrot.slane %v408, 7
    %v634 = vsel %vm538, %v632, %v633
    %699 = vst [vmem:[%s409] sm:$0xfe] %v539
    %700 = vst [vmem:[%s409 + $0x18] sm:$0xff] %v541
    %701 = vst [vmem:[%s409 + $0x30] sm:$0xfe] %v542
    %702 = vst [vmem:[%s409 + $0x48] sm:$0xff] %v544
    %703 = vst [vmem:[%s409 + $0x60] sm:$0xfe] %v545
    %704 = vst [vmem:[%s409 + $0x78] sm:$0xff] %v547
    %705 = vst [vmem:[%s409 + $0x90] sm:$0xfe] %v548
    %706 = vst [vmem:[%s409 + $0xa8] sm:$0xff] %v550
    %707 = vst [vmem:[%s409 + $0xc0] sm:$0xfe] %v551
    %708 = vst [vmem:[%s409 + $0xd8] sm:$0xff] %v553
    %709 = vst [vmem:[%s409 + $0xf0] sm:$0xfe] %v554
    %710 = vst [vmem:[%s409 + $0x108] sm:$0xff] %v556
    %711 = vst [vmem:[%s409 + $0x120] sm:$0xfe] %v557
    %712 = vst [vmem:[%s409 + $0x138] sm:$0xff] %v559
    %713 = vst [vmem:[%s409 + $0x150] sm:$0xfe] %v560
    %714 = vst [vmem:[%s409 + $0x168] sm:$0xff] %v562
    %715 = vst [vmem:[%s409 + $0x180] sm:$0xfe] %v563
    %716 = vst [vmem:[%s409 + $0x198] sm:$0xff] %v565
    %717 = vst [vmem:[%s409 + $0x1b0] sm:$0xfe] %v566
    %718 = vst [vmem:[%s409 + $0x1c8] sm:$0xff] %v568
    %719 = vst [vmem:[%s409 + $0x1e0] sm:$0xfe] %v569
    %720 = vst [vmem:[%s409 + $0x1f8] sm:$0xff] %v571
    %721 = vst [vmem:[%s409 + $0x210] sm:$0xfe] %v572
    %722 = vst [vmem:[%s409 + $0x228] sm:$0xff] %v574
    %723 = vst [vmem:[%s409 + $0x240] sm:$0xfe] %v575
    %724 = vst [vmem:[%s409 + $0x258] sm:$0xff] %v577
    %725 = vst [vmem:[%s409 + $0x270] sm:$0xfe] %v578
    %726 = vst [vmem:[%s409 + $0x288] sm:$0xff] %v580
    %727 = vst [vmem:[%s409 + $0x2a0] sm:$0xfe] %v581
    %728 = vst [vmem:[%s409 + $0x2b8] sm:$0xff] %v583
    %729 = vst [vmem:[%s409 + $0x2d0] sm:$0xfe] %v584
    %730 = vst [vmem:[%s409 + $0x2e8] sm:$0xff] %v586
    %731 = vst [vmem:[%s409 + $0x360] sm:$0xfe] %v587
    %732 = vst [vmem:[%s409 + $0x378] sm:$0xff] %v589
    %733 = vst [vmem:[%s409 + $0x390] sm:$0xfe] %v590
    %734 = vst [vmem:[%s409 + $0x3a8] sm:$0xff] %v592
    %735 = vst [vmem:[%s409 + $0x3c0] sm:$0xfe] %v593
    %736 = vst [vmem:[%s409 + $0x3d8] sm:$0xff] %v595
    %737 = vst [vmem:[%s409 + $0x3f0] sm:$0xfe] %v596
    %738 = vst [vmem:[%s409 + $0x408] sm:$0xff] %v598
    %739 = vst [vmem:[%s409 + $0x420] sm:$0xfe] %v599
    %740 = vst [vmem:[%s409 + $0x438] sm:$0xff] %v601
    %741 = vst [vmem:[%s409 + $0x450] sm:$0xfe] %v602
    %742 = vst [vmem:[%s409 + $0x468] sm:$0xff] %v604
    %743 = vst [vmem:[%s409 + $0x480] sm:$0xfe] %v605
    %744 = vst [vmem:[%s409 + $0x498] sm:$0xff] %v607
    %745 = vst [vmem:[%s409 + $0x4b0] sm:$0xfe] %v608
    %746 = vst [vmem:[%s409 + $0x4c8] sm:$0xff] %v610
    %747 = vst [vmem:[%s409 + $0x4e0] sm:$0xfe] %v611
    %748 = vst [vmem:[%s409 + $0x4f8] sm:$0xff] %v613
    %749 = vst [vmem:[%s409 + $0x510] sm:$0xfe] %v614
    %750 = vst [vmem:[%s409 + $0x528] sm:$0xff] %v616
    %751 = vst [vmem:[%s409 + $0x540] sm:$0xfe] %v617
    %752 = vst [vmem:[%s409 + $0x558] sm:$0xff] %v619
    %753 = vst [vmem:[%s409 + $0x570] sm:$0xfe] %v620
    %754 = vst [vmem:[%s409 + $0x588] sm:$0xff] %v622
    %755 = vst [vmem:[%s409 + $0x5a0] sm:$0xfe] %v623
    %756 = vst [vmem:[%s409 + $0x5b8] sm:$0xff] %v625
    %757 = vst [vmem:[%s409 + $0x5d0] sm:$0xfe] %v626
    %758 = vst [vmem:[%s409 + $0x5e8] sm:$0xff] %v628
    %759 = vst [vmem:[%s409 + $0x600] sm:$0xfe] %v629
    %760 = vst [vmem:[%s409 + $0x618] sm:$0xff] %v631
    %761 = vst [vmem:[%s409 + $0x630] sm:$0xfe] %v632
    %762 = vst [vmem:[%s409 + $0x648] sm:$0xff] %v634
    %v763 = vrot.slane %v345, 1
    %v764 = vrot.slane %v347, 1
    %v765 = vrot.slane %v349, 1
    %v766 = vrot.slane %v351, 1
    %v767 = vrot.slane %v353, 1
    %v768 = vrot.slane %v355, 1
    %v769 = vrot.slane %v357, 1
    %v770 = vrot.slane %v359, 1
    %v771 = vrot.slane %v361, 1
    %v772 = vrot.slane %v363, 1
    %v773 = vrot.slane %v365, 1
    %v774 = vrot.slane %v367, 1
    %v775 = vrot.slane %v369, 1
    %v776 = vrot.slane %v371, 1
    %v777 = vrot.slane %v373, 1
    %v778 = vrot.slane %v375, 1
    %v779 = vrot.slane %v377, 1
    %v780 = vrot.slane %v379, 1
    %v781 = vrot.slane %v381, 1
    %v782 = vrot.slane %v383, 1
    %v783 = vrot.slane %v385, 1
    %v784 = vrot.slane %v387, 1
    %v785 = vrot.slane %v389, 1
    %v786 = vrot.slane %v391, 1
    %v787 = vrot.slane %v393, 1
    %v788 = vrot.slane %v395, 1
    %v789 = vrot.slane %v397, 1
    %v790 = vrot.slane %v399, 1
    %v791 = vrot.slane %v401, 1
    %v792 = vrot.slane %v403, 1
    %v793 = vrot.slane %v405, 1
    %v794 = vrot.slane %v407, 1
    %827 = vst [vmem:[%s409] sm:$0x1] %v763
    %828 = vst [vmem:[%s409 + $0x30] sm:$0x1] %v764
    %829 = vst [vmem:[%s409 + $0x60] sm:$0x1] %v765
    %830 = vst [vmem:[%s409 + $0x90] sm:$0x1] %v766
    %831 = vst [vmem:[%s409 + $0xc0] sm:$0x1] %v767
    %832 = vst [vmem:[%s409 + $0xf0] sm:$0x1] %v768
    %833 = vst [vmem:[%s409 + $0x120] sm:$0x1] %v769
    %834 = vst [vmem:[%s409 + $0x150] sm:$0x1] %v770
    %835 = vst [vmem:[%s409 + $0x180] sm:$0x1] %v771
    %836 = vst [vmem:[%s409 + $0x1b0] sm:$0x1] %v772
    %837 = vst [vmem:[%s409 + $0x1e0] sm:$0x1] %v773
    %838 = vst [vmem:[%s409 + $0x210] sm:$0x1] %v774
    %839 = vst [vmem:[%s409 + $0x240] sm:$0x1] %v775
    %840 = vst [vmem:[%s409 + $0x270] sm:$0x1] %v776
    %841 = vst [vmem:[%s409 + $0x2a0] sm:$0x1] %v777
    %842 = vst [vmem:[%s409 + $0x2d0] sm:$0x1] %v778
    %843 = vst [vmem:[%s409 + $0x360] sm:$0x1] %v779
    %844 = vst [vmem:[%s409 + $0x390] sm:$0x1] %v780
    %845 = vst [vmem:[%s409 + $0x3c0] sm:$0x1] %v781
    %846 = vst [vmem:[%s409 + $0x3f0] sm:$0x1] %v782
    %847 = vst [vmem:[%s409 + $0x420] sm:$0x1] %v783
    %848 = vst [vmem:[%s409 + $0x450] sm:$0x1] %v784
    %849 = vst [vmem:[%s409 + $0x480] sm:$0x1] %v785
    %850 = vst [vmem:[%s409 + $0x4b0] sm:$0x1] %v786
    %851 = vst [vmem:[%s409 + $0x4e0] sm:$0x1] %v787
    %852 = vst [vmem:[%s409 + $0x510] sm:$0x1] %v788
    %853 = vst [vmem:[%s409 + $0x540] sm:$0x1] %v789
    %854 = vst [vmem:[%s409 + $0x570] sm:$0x1] %v790
    %855 = vst [vmem:[%s409 + $0x5a0] sm:$0x1] %v791
    %856 = vst [vmem:[%s409 + $0x5d0] sm:$0x1] %v792
    %857 = vst [vmem:[%s409 + $0x600] sm:$0x1] %v793
    %858 = vst [vmem:[%s409 + $0x630] sm:$0x1] %v794
    %vm859 = vcmask 1046528
    %v860 = vrot.slane %v346, 1
    %v861 = vsel %vm859, %v763, %v860
    %v862 = vrot.slane %v348, 1
    %v863 = vsel %vm859, %v764, %v862
    %v864 = vrot.slane %v350, 1
    %v865 = vsel %vm859, %v765, %v864
    %v866 = vrot.slane %v352, 1
    %v867 = vsel %vm859, %v766, %v866
    %v868 = vrot.slane %v354, 1
    %v869 = vsel %vm859, %v767, %v868
    %v870 = vrot.slane %v356, 1
    %v871 = vsel %vm859, %v768, %v870
    %v872 = vrot.slane %v358, 1
    %v873 = vsel %vm859, %v769, %v872
    %v874 = vrot.slane %v360, 1
    %v875 = vsel %vm859, %v770, %v874
    %v876 = vrot.slane %v362, 1
    %v877 = vsel %vm859, %v771, %v876
    %v878 = vrot.slane %v364, 1
    %v879 = vsel %vm859, %v772, %v878
    %v880 = vrot.slane %v366, 1
    %v881 = vsel %vm859, %v773, %v880
    %v882 = vrot.slane %v368, 1
    %v883 = vsel %vm859, %v774, %v882
    %v884 = vrot.slane %v370, 1
    %v885 = vsel %vm859, %v775, %v884
    %v886 = vrot.slane %v372, 1
    %v887 = vsel %vm859, %v776, %v886
    %v888 = vrot.slane %v374, 1
    %v889 = vsel %vm859, %v777, %v888
    %v890 = vrot.slane %v376, 1
    %v891 = vsel %vm859, %v778, %v890
    %v892 = vrot.slane %v378, 1
    %v893 = vsel %vm859, %v779, %v892
    %v894 = vrot.slane %v380, 1
    %v895 = vsel %vm859, %v780, %v894
    %v896 = vrot.slane %v382, 1
    %v897 = vsel %vm859, %v781, %v896
    %v898 = vrot.slane %v384, 1
    %v899 = vsel %vm859, %v782, %v898
    %v900 = vrot.slane %v386, 1
    %v901 = vsel %vm859, %v783, %v900
    %v902 = vrot.slane %v388, 1
    %v903 = vsel %vm859, %v784, %v902
    %v904 = vrot.slane %v390, 1
    %v905 = vsel %vm859, %v785, %v904
    %v906 = vrot.slane %v392, 1
    %v907 = vsel %vm859, %v786, %v906
    %v908 = vrot.slane %v394, 1
    %v909 = vsel %vm859, %v787, %v908
    %v910 = vrot.slane %v396, 1
    %v911 = vsel %vm859, %v788, %v910
    %v912 = vrot.slane %v398, 1
    %v913 = vsel %vm859, %v789, %v912
    %v914 = vrot.slane %v400, 1
    %v915 = vsel %vm859, %v790, %v914
    %v916 = vrot.slane %v402, 1
    %v917 = vsel %vm859, %v791, %v916
    %v918 = vrot.slane %v404, 1
    %v919 = vsel %vm859, %v792, %v918
    %v920 = vrot.slane %v406, 1
    %v921 = vsel %vm859, %v793, %v920
    %v922 = vrot.slane %v408, 1
    %v923 = vsel %vm859, %v794, %v922
    %988 = vst [vmem:[%s409 + $0x10] sm:$0xff] %v861
    %989 = vst [vmem:[%s409 + $0x28] sm:$0x7f] %v860
    %990 = vst [vmem:[%s409 + $0x40] sm:$0xff] %v863
    %991 = vst [vmem:[%s409 + $0x58] sm:$0x7f] %v862
    %992 = vst [vmem:[%s409 + $0x70] sm:$0xff] %v865
    %993 = vst [vmem:[%s409 + $0x88] sm:$0x7f] %v864
    %994 = vst [vmem:[%s409 + $0xa0] sm:$0xff] %v867
    %995 = vst [vmem:[%s409 + $0xb8] sm:$0x7f] %v866
    %996 = vst [vmem:[%s409 + $0xd0] sm:$0xff] %v869
    %997 = vst [vmem:[%s409 + $0xe8] sm:$0x7f] %v868
    %998 = vst [vmem:[%s409 + $0x100] sm:$0xff] %v871
    %999 = vst [vmem:[%s409 + $0x118] sm:$0x7f] %v870
    %1000 = vst [vmem:[%s409 + $0x130] sm:$0xff] %v873
    %1001 = vst [vmem:[%s409 + $0x148] sm:$0x7f] %v872
    %1002 = vst [vmem:[%s409 + $0x160] sm:$0xff] %v875
    %1003 = vst [vmem:[%s409 + $0x178] sm:$0x7f] %v874
    %1004 = vst [vmem:[%s409 + $0x190] sm:$0xff] %v877
    %1005 = vst [vmem:[%s409 + $0x1a8] sm:$0x7f] %v876
    %1006 = vst [vmem:[%s409 + $0x1c0] sm:$0xff] %v879
    %1007 = vst [vmem:[%s409 + $0x1d8] sm:$0x7f] %v878
    %1008 = vst [vmem:[%s409 + $0x1f0] sm:$0xff] %v881
    %1009 = vst [vmem:[%s409 + $0x208] sm:$0x7f] %v880
    %1010 = vst [vmem:[%s409 + $0x220] sm:$0xff] %v883
    %1011 = vst [vmem:[%s409 + $0x238] sm:$0x7f] %v882
    %1012 = vst [vmem:[%s409 + $0x250] sm:$0xff] %v885
    %1013 = vst [vmem:[%s409 + $0x268] sm:$0x7f] %v884
    %1014 = vst [vmem:[%s409 + $0x280] sm:$0xff] %v887
    %1015 = vst [vmem:[%s409 + $0x298] sm:$0x7f] %v886
    %1016 = vst [vmem:[%s409 + $0x2b0] sm:$0xff] %v889
    %1017 = vst [vmem:[%s409 + $0x2c8] sm:$0x7f] %v888
    %1018 = vst [vmem:[%s409 + $0x2e0] sm:$0xff] %v891
    %1019 = vst [vmem:[%s409 + $0x2f8] sm:$0x7f] %v890
    %1020 = vst [vmem:[%s409 + $0x370] sm:$0xff] %v893
    %1021 = vst [vmem:[%s409 + $0x388] sm:$0x7f] %v892
    %1022 = vst [vmem:[%s409 + $0x3a0] sm:$0xff] %v895
    %1023 = vst [vmem:[%s409 + $0x3b8] sm:$0x7f] %v894
    %1024 = vst [vmem:[%s409 + $0x3d0] sm:$0xff] %v897
    %1025 = vst [vmem:[%s409 + $0x3e8] sm:$0x7f] %v896
    %1026 = vst [vmem:[%s409 + $0x400] sm:$0xff] %v899
    %1027 = vst [vmem:[%s409 + $0x418] sm:$0x7f] %v898
    %1028 = vst [vmem:[%s409 + $0x430] sm:$0xff] %v901
    %1029 = vst [vmem:[%s409 + $0x448] sm:$0x7f] %v900
    %1030 = vst [vmem:[%s409 + $0x460] sm:$0xff] %v903
    %1031 = vst [vmem:[%s409 + $0x478] sm:$0x7f] %v902
    %1032 = vst [vmem:[%s409 + $0x490] sm:$0xff] %v905
    %1033 = vst [vmem:[%s409 + $0x4a8] sm:$0x7f] %v904
    %1034 = vst [vmem:[%s409 + $0x4c0] sm:$0xff] %v907
    %1035 = vst [vmem:[%s409 + $0x4d8] sm:$0x7f] %v906
    %1036 = vst [vmem:[%s409 + $0x4f0] sm:$0xff] %v909
    %1037 = vst [vmem:[%s409 + $0x508] sm:$0x7f] %v908
    %1038 = vst [vmem:[%s409 + $0x520] sm:$0xff] %v911
    %1039 = vst [vmem:[%s409 + $0x538] sm:$0x7f] %v910
    %1040 = vst [vmem:[%s409 + $0x550] sm:$0xff] %v913
    %1041 = vst [vmem:[%s409 + $0x568] sm:$0x7f] %v912
    %1042 = vst [vmem:[%s409 + $0x580] sm:$0xff] %v915
    %1043 = vst [vmem:[%s409 + $0x598] sm:$0x7f] %v914
    %1044 = vst [vmem:[%s409 + $0x5b0] sm:$0xff] %v917
    %1045 = vst [vmem:[%s409 + $0x5c8] sm:$0x7f] %v916
    %1046 = vst [vmem:[%s409 + $0x5e0] sm:$0xff] %v919
    %1047 = vst [vmem:[%s409 + $0x5f8] sm:$0x7f] %v918
    %1048 = vst [vmem:[%s409 + $0x610] sm:$0xff] %v921
    %1049 = vst [vmem:[%s409 + $0x628] sm:$0x7f] %v920
    %1050 = vst [vmem:[%s409 + $0x640] sm:$0xff] %v923
    %1051 = vst [vmem:[%s409 + $0x658] sm:$0x7f] %v922
    %v1052 = vrot.slane %v346, 6
    %v1053 = vrot.slane %v348, 6
    %v1054 = vrot.slane %v350, 6
    %v1055 = vrot.slane %v352, 6
    %v1056 = vrot.slane %v354, 6
    %v1057 = vrot.slane %v356, 6
    %v1058 = vrot.slane %v358, 6
    %v1059 = vrot.slane %v360, 6
    %v1060 = vrot.slane %v362, 6
    %v1061 = vrot.slane %v364, 6
    %v1062 = vrot.slane %v366, 6
    %v1063 = vrot.slane %v368, 6
    %v1064 = vrot.slane %v370, 6
    %v1065 = vrot.slane %v372, 6
    %v1066 = vrot.slane %v374, 6
    %v1067 = vrot.slane %v376, 6
    %v1068 = vrot.slane %v378, 6
    %v1069 = vrot.slane %v380, 6
    %v1070 = vrot.slane %v382, 6
    %v1071 = vrot.slane %v384, 6
    %v1072 = vrot.slane %v386, 6
    %v1073 = vrot.slane %v388, 6
    %v1074 = vrot.slane %v390, 6
    %v1075 = vrot.slane %v392, 6
    %v1076 = vrot.slane %v394, 6
    %v1077 = vrot.slane %v396, 6
    %v1078 = vrot.slane %v398, 6
    %v1079 = vrot.slane %v400, 6
    %v1080 = vrot.slane %v402, 6
    %v1081 = vrot.slane %v404, 6
    %v1082 = vrot.slane %v406, 6
    %v1083 = vrot.slane %v408, 6
    %1116 = vst [vmem:[%s409 + $0x2f] sm:$0x1] %v1052
    %1117 = vst [vmem:[%s409 + $0x5f] sm:$0x1] %v1053
    %1118 = vst [vmem:[%s409 + $0x8f] sm:$0x1] %v1054
    %1119 = vst [vmem:[%s409 + $0xbf] sm:$0x1] %v1055
    %1120 = vst [vmem:[%s409 + $0xef] sm:$0x1] %v1056
    %1121 = vst [vmem:[%s409 + $0x11f] sm:$0x1] %v1057
    %1122 = vst [vmem:[%s409 + $0x14f] sm:$0x1] %v1058
    %1123 = vst [vmem:[%s409 + $0x17f] sm:$0x1] %v1059
    %1124 = vst [vmem:[%s409 + $0x1af] sm:$0x1] %v1060
    %1125 = vst [vmem:[%s409 + $0x1df] sm:$0x1] %v1061
    %1126 = vst [vmem:[%s409 + $0x20f] sm:$0x1] %v1062
    %1127 = vst [vmem:[%s409 + $0x23f] sm:$0x1] %v1063
    %1128 = vst [vmem:[%s409 + $0x26f] sm:$0x1] %v1064
    %1129 = vst [vmem:[%s409 + $0x29f] sm:$0x1] %v1065
    %1130 = vst [vmem:[%s409 + $0x2cf] sm:$0x1] %v1066
    %1131 = vst [vmem:[%s409 + $0x2ff] sm:$0x1] %v1067
    %1132 = vst [vmem:[%s409 + $0x38f] sm:$0x1] %v1068
    %1133 = vst [vmem:[%s409 + $0x3bf] sm:$0x1] %v1069
    %1134 = vst [vmem:[%s409 + $0x3ef] sm:$0x1] %v1070
    %1135 = vst [vmem:[%s409 + $0x41f] sm:$0x1] %v1071
    %1136 = vst [vmem:[%s409 + $0x44f] sm:$0x1] %v1072
    %1137 = vst [vmem:[%s409 + $0x47f] sm:$0x1] %v1073
    %1138 = vst [vmem:[%s409 + $0x4af] sm:$0x1] %v1074
    %1139 = vst [vmem:[%s409 + $0x4df] sm:$0x1] %v1075
    %1140 = vst [vmem:[%s409 + $0x50f] sm:$0x1] %v1076
    %1141 = vst [vmem:[%s409 + $0x53f] sm:$0x1] %v1077
    %1142 = vst [vmem:[%s409 + $0x56f] sm:$0x1] %v1078
    %1143 = vst [vmem:[%s409 + $0x59f] sm:$0x1] %v1079
    %1144 = vst [vmem:[%s409 + $0x5cf] sm:$0x1] %v1080
    %1145 = vst [vmem:[%s409 + $0x5ff] sm:$0x1] %v1081
    %1146 = vst [vmem:[%s409 + $0x62f] sm:$0x1] %v1082
    %1147 = vst [vmem:[%s409 + $0x65f] sm:$0x1] %v1083
    %v1148 = vld [vmem:[#allocation3] sm:$0xff]
    %v1149 = vld [vmem:[#allocation3 + $0x8] sm:$0xff]
    %v1150 = vld [vmem:[#allocation3 + $0x10] sm:$0xff]
    %v1151 = vld [vmem:[#allocation3 + $0x18] sm:$0xff]
    %v1152 = vmul.f32 %v1148, %v209
    %v1153 = vmul.f32 %v1149, %v209
    %v1154 = vmul.f32 %v1150, %v209
    %v1155 = vmul.f32 %v1151, %v209
    %v1156 = vadd.f32 %v1152, %v279
    %v1157 = vadd.f32 %v1153, %v279
    %v1158 = vadd.f32 %v1154, %v279
    %v1159 = vadd.f32 %v1155, %v279
    %v1160 = vmax.f32 %v1156, 0.0
    %v1161 = vmax.f32 %v1157, 0.0
    %v1162 = vmax.f32 %v1158, 0.0
    %v1163 = vmax.f32 %v1159, 0.0
    %1164 = vst [vmem:[#allocation2 + $0x8] sm:$0xff] %v1160
    %1165 = vst [vmem:[#allocation2 + $0x20] sm:$0xff] %v1161
    %1166 = vst [vmem:[#allocation2 + $0x368] sm:$0xff] %v1162
    %1167 = vst [vmem:[#allocation2 + $0x380] sm:$0xff] %v1163
    %v1172 = vrot.slane %v1160, 7
    %v1173 = vrot.slane %v1161, 7
    %v1174 = vsel %vm538, %v1172, %v1173
    %v1175 = vrot.slane %v1162, 7
    %v1176 = vrot.slane %v1163, 7
    %v1177 = vsel %vm538, %v1175, %v1176
    %1182 = vst [vmem:[#allocation2] sm:$0xfe] %v1172
    %1183 = vst [vmem:[#allocation2 + $0x18] sm:$0xff] %v1174
    %1184 = vst [vmem:[#allocation2 + $0x360] sm:$0xfe] %v1175
    %1185 = vst [vmem:[#allocation2 + $0x378] sm:$0xff] %v1177
    %v1186 = vrot.slane %v1160, 1
    %v1187 = vrot.slane %v1162, 1
    %1190 = vst [vmem:[#allocation2] sm:$0x1] %v1186
    %1191 = vst [vmem:[#allocation2 + $0x360] sm:$0x1] %v1187
    %v1192 = vrot.slane %v1161, 1
    %v1193 = vsel %vm859, %v1186, %v1192
    %v1194 = vrot.slane %v1163, 1
    %v1195 = vsel %vm859, %v1187, %v1194
    %1200 = vst [vmem:[#allocation2 + $0x10] sm:$0xff] %v1193
    %1201 = vst [vmem:[#allocation2 + $0x28] sm:$0x7f] %v1192
    %1202 = vst [vmem:[#allocation2 + $0x370] sm:$0xff] %v1195
    %1203 = vst [vmem:[#allocation2 + $0x388] sm:$0x7f] %v1194
    %v1204 = vrot.slane %v1161, 6
    %v1205 = vrot.slane %v1163, 6
    %1208 = vst [vmem:[#allocation2 + $0x2f] sm:$0x1] %v1204
    %1209 = vst [vmem:[#allocation2 + $0x38f] sm:$0x1] %v1205
    %v1210 = vld [vmem:[#allocation4] sm:$0xff]
    %v1211 = vld [vmem:[#allocation4 + $0x8] sm:$0xff]
    %v1212 = vld [vmem:[#allocation4 + $0x10] sm:$0xff]
    %v1213 = vld [vmem:[#allocation4 + $0x18] sm:$0xff]
    %v1214 = vmul.f32 %v1210, %v209
    %v1215 = vmul.f32 %v1211, %v209
    %v1216 = vmul.f32 %v1212, %v209
    %v1217 = vmul.f32 %v1213, %v209
    %v1218 = vadd.f32 %v1214, %v279
    %v1219 = vadd.f32 %v1215, %v279
    %v1220 = vadd.f32 %v1216, %v279
    %v1221 = vadd.f32 %v1217, %v279
    %v1222 = vmax.f32 %v1218, 0.0
    %v1223 = vmax.f32 %v1219, 0.0
    %v1224 = vmax.f32 %v1220, 0.0
    %v1225 = vmax.f32 %v1221, 0.0
    %s1226 = scalar_lea.vmem [#allocation2], 816
    %1227 = vst [vmem:[%s1226 + $0x8] sm:$0xff] %v1222
    %1228 = vst [vmem:[%s1226 + $0x20] sm:$0xff] %v1223
    %1229 = vst [vmem:[%s1226 + $0x368] sm:$0xff] %v1224
    %1230 = vst [vmem:[%s1226 + $0x380] sm:$0xff] %v1225
    %v1235 = vrot.slane %v1222, 7
    %v1236 = vrot.slane %v1223, 7
    %v1237 = vsel %vm538, %v1235, %v1236
    %v1238 = vrot.slane %v1224, 7
    %v1239 = vrot.slane %v1225, 7
    %v1240 = vsel %vm538, %v1238, %v1239
    %1245 = vst [vmem:[%s1226] sm:$0xfe] %v1235
    %1246 = vst [vmem:[%s1226 + $0x18] sm:$0xff] %v1237
    %1247 = vst [vmem:[%s1226 + $0x360] sm:$0xfe] %v1238
    %1248 = vst [vmem:[%s1226 + $0x378] sm:$0xff] %v1240
    %v1249 = vrot.slane %v1222, 1
    %v1250 = vrot.slane %v1224, 1
    %1253 = vst [vmem:[%s1226] sm:$0x1] %v1249
    %1254 = vst [vmem:[%s1226 + $0x360] sm:$0x1] %v1250
    %v1255 = vrot.slane %v1223, 1
    %v1256 = vsel %vm859, %v1249, %v1255
    %v1257 = vrot.slane %v1225, 1
    %v1258 = vsel %vm859, %v1250, %v1257
    %1263 = vst [vmem:[%s1226 + $0x10] sm:$0xff] %v1256
    %1264 = vst [vmem:[%s1226 + $0x28] sm:$0x7f] %v1255
    %1265 = vst [vmem:[%s1226 + $0x370] sm:$0xff] %v1258
    %1266 = vst [vmem:[%s1226 + $0x388] sm:$0x7f] %v1257
    %v1267 = vrot.slane %v1223, 6
    %v1268 = vrot.slane %v1225, 6
    %1271 = vst [vmem:[%s1226 + $0x2f] sm:$0x1] %v1267
    %1272 = vst [vmem:[%s1226 + $0x38f] sm:$0x1] %v1268
    %v1273 = vld [vmem:[#allocation2] sm:$0xff]
    %v1274 = vld [vmem:[#allocation2 + $0x8] sm:$0xff]
    %v1275 = vld [vmem:[#allocation2 + $0x10] sm:$0xff]
    %v1276 = vld [vmem:[#allocation2 + $0x18] sm:$0xff]
    %v1277 = vld [vmem:[#allocation2 + $0x20] sm:$0xff]
    %v1278 = vld [vmem:[#allocation2 + $0x28] sm:$0xff]
    %v1279 = vld [vmem:[#allocation2 + $0x30] sm:$0xff]
    %v1280 = vld [vmem:[#allocation2 + $0x38] sm:$0xff]
    %v1281 = vld [vmem:[#allocation2 + $0x40] sm:$0xff]
    %v1282 = vld [vmem:[#allocation2 + $0x48] sm:$0xff]
    %v1283 = vld [vmem:[#allocation2 + $0x50] sm:$0xff]
    %v1284 = vld [vmem:[#allocation2 + $0x58] sm:$0xff]
    %v1285 = vld [vmem:[#allocation2 + $0x60] sm:$0xff]
    %v1286 = vld [vmem:[#allocation2 + $0x68] sm:$0xff]
    %v1287 = vld [vmem:[#allocation2 + $0x70] sm:$0xff]
    %v1288 = vld [vmem:[#allocation2 + $0x78] sm:$0xff]
    %v1289 = vld [vmem:[#allocation2 + $0x80] sm:$0xff]
    %v1290 = vld [vmem:[#allocation2 + $0x88] sm:$0xff]
    %v1291 = vld [vmem:[#allocation2 + $0x90] sm:$0xff]
    %v1292 = vld [vmem:[#allocation2 + $0x98] sm:$0xff]
    %v1293 = vld [vmem:[#allocation2 + $0xa0] sm:$0xff]
    %v1294 = vld [vmem:[#allocation2 + $0xa8] sm:$0xff]
    %v1295 = vld [vmem:[#allocation2 + $0xb0] sm:$0xff]
    %v1296 = vld [vmem:[#allocation2 + $0xb8] sm:$0xff]
    %v1297 = vld [vmem:[#allocation2 + $0xc0] sm:$0xff]
    %v1298 = vld [vmem:[#allocation2 + $0xc8] sm:$0xff]
    %v1299 = vld [vmem:[#allocation2 + $0xd0] sm:$0xff]
    %v1300 = vld [vmem:[#allocation2 + $0xd8] sm:$0xff]
    %v1301 = vld [vmem:[#allocation2 + $0xe0] sm:$0xff]
    %v1302 = vld [vmem:[#allocation2 + $0xe8] sm:$0xff]
    %v1303 = vld [vmem:[#allocation2 + $0xf0] sm:$0xff]
    %v1304 = vld [vmem:[#allocation2 + $0xf8] sm:$0xff]
    %v1305 = vld [vmem:[#allocation2 + $0x100] sm:$0xff]
    %v1306 = vld [vmem:[#allocation2 + $0x108] sm:$0xff]
    %v1307 = vld [vmem:[#allocation2 + $0x110] sm:$0xff]
    %v1308 = vld [vmem:[#allocation2 + $0x118] sm:$0xff]
    %v1309 = vld [vmem:[#allocation2 + $0x120] sm:$0xff]
    %v1310 = vld [vmem:[#allocation2 + $0x128] sm:$0xff]
    %v1311 = vld [vmem:[#allocation2 + $0x130] sm:$0xff]
    %v1312 = vld [vmem:[#allocation2 + $0x138] sm:$0xff]
    %v1313 = vld [vmem:[#allocation2 + $0x140] sm:$0xff]
    %v1314 = vld [vmem:[#allocation2 + $0x148] sm:$0xff]
    %v1315 = vld [vmem:[#allocation2 + $0x150] sm:$0xff]
    %v1316 = vld [vmem:[#allocation2 + $0x158] sm:$0xff]
    %v1317 = vld [vmem:[#allocation2 + $0x160] sm:$0xff]
    %v1318 = vld [vmem:[#allocation2 + $0x168] sm:$0xff]
    %v1319 = vld [vmem:[#allocation2 + $0x170] sm:$0xff]
    %v1320 = vld [vmem:[#allocation2 + $0x178] sm:$0xff]
    %v1321 = vld [vmem:[#allocation2 + $0x180] sm:$0xff]
    %v1322 = vld [vmem:[#allocation2 + $0x188] sm:$0xff]
    %v1323 = vld [vmem:[#allocation2 + $0x190] sm:$0xff]
    %v1324 = vld [vmem:[#allocation2 + $0x198] sm:$0xff]
    %v1325 = vld [vmem:[#allocation2 + $0x1a0] sm:$0xff]
    %v1326 = vld [vmem:[#allocation2 + $0x1a8] sm:$0xff]
    %v1327 = vld [vmem:[#allocation2 + $0x1b0] sm:$0xff]
    %v1328 = vld [vmem:[#allocation2 + $0x1b8] sm:$0xff]
    %v1329 = vld [vmem:[#allocation2 + $0x1c0] sm:$0xff]
    %v1330 = vld [vmem:[#allocation2 + $0x1c8] sm:$0xff]
    %v1331 = vld [vmem:[#allocation2 + $0x1d0] sm:$0xff]
    %v1332 = vld [vmem:[#allocation2 + $0x1d8] sm:$0xff]
    %v1333 = vld [vmem:[#allocation2 + $0x1e0] sm:$0xff]
    %v1334 = vld [vmem:[#allocation2 + $0x1e8] sm:$0xff]
    %v1335 = vld [vmem:[#allocation2 + $0x1f0] sm:$0xff]
    %v1336 = vld [vmem:[#allocation2 + $0x1f8] sm:$0xff]
    %v1337 = vld [vmem:[#allocation2 + $0x200] sm:$0xff]
    %v1338 = vld [vmem:[#allocation2 + $0x208] sm:$0xff]
    %v1339 = vld [vmem:[#allocation2 + $0x210] sm:$0xff]
    %v1340 = vld [vmem:[#allocation2 + $0x218] sm:$0xff]
    %v1341 = vld [vmem:[#allocation2 + $0x220] sm:$0xff]
    %v1342 = vld [vmem:[#allocation2 + $0x228] sm:$0xff]
    %v1343 = vld [vmem:[#allocation2 + $0x230] sm:$0xff]
    %v1344 = vld [vmem:[#allocation2 + $0x238] sm:$0xff]
    %v1345 = vld [vmem:[#allocation2 + $0x240] sm:$0xff]
    %v1346 = vld [vmem:[#allocation2 + $0x248] sm:$0xff]
    %v1347 = vld [vmem:[#allocation2 + $0x250] sm:$0xff]
    %v1348 = vld [vmem:[#allocation2 + $0x258] sm:$0xff]
    %v1349 = vld [vmem:[#allocation2 + $0x260] sm:$0xff]
    %v1350 = vld [vmem:[#allocation2 + $0x268] sm:$0xff]
    %v1351 = vld [vmem:[#allocation2 + $0x270] sm:$0xff]
    %v1352 = vld [vmem:[#allocation2 + $0x278] sm:$0xff]
    %v1353 = vld [vmem:[#allocation2 + $0x280] sm:$0xff]
    %v1354 = vld [vmem:[#allocation2 + $0x288] sm:$0xff]
    %v1355 = vld [vmem:[#allocation2 + $0x290] sm:$0xff]
    %v1356 = vld [vmem:[#allocation2 + $0x298] sm:$0xff]
    %v1357 = vld [vmem:[#allocation2 + $0x2a0] sm:$0xff]
    %v1358 = vld [vmem:[#allocation2 + $0x2a8] sm:$0xff]
    %v1359 = vld [vmem:[#allocation2 + $0x2b0] sm:$0xff]
    %v1360 = vld [vmem:[#allocation2 + $0x2b8] sm:$0xff]
    %v1361 = vld [vmem:[#allocation2 + $0x2c0] sm:$0xff]
    %v1362 = vld [vmem:[#allocation2 + $0x2c8] sm:$0xff]
    %v1363 = vld [vmem:[#allocation2 + $0x2d0] sm:$0xff]
    %v1364 = vld [vmem:[#allocation2 + $0x2d8] sm:$0xff]
    %v1365 = vld [vmem:[#allocation2 + $0x2e0] sm:$0xff]
    %v1366 = vld [vmem:[#allocation2 + $0x2e8] sm:$0xff]
    %v1367 = vld [vmem:[#allocation2 + $0x2f0] sm:$0xff]
    %v1368 = vld [vmem:[#allocation2 + $0x2f8] sm:$0xff]
    %v1369 = vld [vmem:[#allocation2 + $0x360] sm:$0xff]
    %v1370 = vld [vmem:[#allocation2 + $0x368] sm:$0xff]
    %v1371 = vld [vmem:[#allocation2 + $0x370] sm:$0xff]
    %v1372 = vld [vmem:[#allocation2 + $0x378] sm:$0xff]
    %v1373 = vld [vmem:[#allocation2 + $0x380] sm:$0xff]
    %v1374 = vld [vmem:[#allocation2 + $0x388] sm:$0xff]
    %v1375 = vld [vmem:[#allocation2 + $0x390] sm:$0xff]
    %v1376 = vld [vmem:[#allocation2 + $0x398] sm:$0xff]
    %v1377 = vld [vmem:[#allocation2 + $0x3a0] sm:$0xff]
    %v1378 = vld [vmem:[#allocation2 + $0x3a8] sm:$0xff]
    %v1379 = vld [vmem:[#allocation2 + $0x3b0] sm:$0xff]
    %v1380 = vld [vmem:[#allocation2 + $0x3b8] sm:$0xff]
    %v1381 = vld [vmem:[#allocation2 + $0x3c0] sm:$0xff]
    %v1382 = vld [vmem:[#allocation2 + $0x3c8] sm:$0xff]
    %v1383 = vld [vmem:[#allocation2 + $0x3d0] sm:$0xff]
    %v1384 = vld [vmem:[#allocation2 + $0x3d8] sm:$0xff]
    %v1385 = vld [vmem:[#allocation2 + $0x3e0] sm:$0xff]
    %v1386 = vld [vmem:[#allocation2 + $0x3e8] sm:$0xff]
    %v1387 = vld [vmem:[#allocation2 + $0x3f0] sm:$0xff]
    %v1388 = vld [vmem:[#allocation2 + $0x3f8] sm:$0xff]
    %v1389 = vld [vmem:[#allocation2 + $0x400] sm:$0xff]
    %v1390 = vld [vmem:[#allocation2 + $0x408] sm:$0xff]
    %v1391 = vld [vmem:[#allocation2 + $0x410] sm:$0xff]
    %v1392 = vld [vmem:[#allocation2 + $0x418] sm:$0xff]
    %v1393 = vld [vmem:[#allocation2 + $0x420] sm:$0xff]
    %v1394 = vld [vmem:[#allocation2 + $0x428] sm:$0xff]
    %v1395 = vld [vmem:[#allocation2 + $0x430] sm:$0xff]
    %v1396 = vld [vmem:[#allocation2 + $0x438] sm:$0xff]
    %v1397 = vld [vmem:[#allocation2 + $0x440] sm:$0xff]
    %v1398 = vld [vmem:[#allocation2 + $0x448] sm:$0xff]
    %v1399 = vld [vmem:[#allocation2 + $0x450] sm:$0xff]
    %v1400 = vld [vmem:[#allocation2 + $0x458] sm:$0xff]
    %v1401 = vld [vmem:[#allocation2 + $0x460] sm:$0xff]
    %v1402 = vld [vmem:[#allocation2 + $0x468] sm:$0xff]
    %v1403 = vld [vmem:[#allocation2 + $0x470] sm:$0xff]
    %v1404 = vld [vmem:[#allocation2 + $0x478] sm:$0xff]
    %v1405 = vld [vmem:[#allocation2 + $0x480] sm:$0xff]
    %v1406 = vld [vmem:[#allocation2 + $0x488] sm:$0xff]
    %v1407 = vld [vmem:[#allocation2 + $0x490] sm:$0xff]
    %v1408 = vld [vmem:[#allocation2 + $0x498] sm:$0xff]
    %v1409 = vld [vmem:[#allocation2 + $0x4a0] sm:$0xff]
    %v1410 = vld [vmem:[#allocation2 + $0x4a8] sm:$0xff]
    %v1411 = vld [vmem:[#allocation2 + $0x4b0] sm:$0xff]
    %v1412 = vld [vmem:[#allocation2 + $0x4b8] sm:$0xff]
    %v1413 = vld [vmem:[#allocation2 + $0x4c0] sm:$0xff]
    %v1414 = vld [vmem:[#allocation2 + $0x4c8] sm:$0xff]
    %v1415 = vld [vmem:[#allocation2 + $0x4d0] sm:$0xff]
    %v1416 = vld [vmem:[#allocation2 + $0x4d8] sm:$0xff]
    %v1417 = vld [vmem:[#allocation2 + $0x4e0] sm:$0xff]
    %v1418 = vld [vmem:[#allocation2 + $0x4e8] sm:$0xff]
    %v1419 = vld [vmem:[#allocation2 + $0x4f0] sm:$0xff]
    %v1420 = vld [vmem:[#allocation2 + $0x4f8] sm:$0xff]
    %v1421 = vld [vmem:[#allocation2 + $0x500] sm:$0xff]
    %v1422 = vld [vmem:[#allocation2 + $0x508] sm:$0xff]
    %v1423 = vld [vmem:[#allocation2 + $0x510] sm:$0xff]
    %v1424 = vld [vmem:[#allocation2 + $0x518] sm:$0xff]
    %v1425 = vld [vmem:[#allocation2 + $0x520] sm:$0xff]
    %v1426 = vld [vmem:[#allocation2 + $0x528] sm:$0xff]
    %v1427 = vld [vmem:[#allocation2 + $0x530] sm:$0xff]
    %v1428 = vld [vmem:[#allocation2 + $0x538] sm:$0xff]
    %v1429 = vld [vmem:[#allocation2 + $0x540] sm:$0xff]
    %v1430 = vld [vmem:[#allocation2 + $0x548] sm:$0xff]
    %v1431 = vld [vmem:[#allocation2 + $0x550] sm:$0xff]
    %v1432 = vld [vmem:[#allocation2 + $0x558] sm:$0xff]
    %v1433 = vld [vmem:[#allocation2 + $0x560] sm:$0xff]
    %v1434 = vld [vmem:[#allocation2 + $0x568] sm:$0xff]
    %v1435 = vld [vmem:[#allocation2 + $0x570] sm:$0xff]
    %v1436 = vld [vmem:[#allocation2 + $0x578] sm:$0xff]
    %v1437 = vld [vmem:[#allocation2 + $0x580] sm:$0xff]
    %v1438 = vld [vmem:[#allocation2 + $0x588] sm:$0xff]
    %v1439 = vld [vmem:[#allocation2 + $0x590] sm:$0xff]
    %v1440 = vld [vmem:[#allocation2 + $0x598] sm:$0xff]
    %v1441 = vld [vmem:[#allocation2 + $0x5a0] sm:$0xff]
    %v1442 = vld [vmem:[#allocation2 + $0x5a8] sm:$0xff]
    %v1443 = vld [vmem:[#allocation2 + $0x5b0] sm:$0xff]
    %v1444 = vld [vmem:[#allocation2 + $0x5b8] sm:$0xff]
    %v1445 = vld [vmem:[#allocation2 + $0x5c0] sm:$0xff]
    %v1446 = vld [vmem:[#allocation2 + $0x5c8] sm:$0xff]
    %v1447 = vld [vmem:[#allocation2 + $0x5d0] sm:$0xff]
    %v1448 = vld [vmem:[#allocation2 + $0x5d8] sm:$0xff]
    %v1449 = vld [vmem:[#allocation2 + $0x5e0] sm:$0xff]
    %v1450 = vld [vmem:[#allocation2 + $0x5e8] sm:$0xff]
    %v1451 = vld [vmem:[#allocation2 + $0x5f0] sm:$0xff]
    %v1452 = vld [vmem:[#allocation2 + $0x5f8] sm:$0xff]
    %v1453 = vld [vmem:[#allocation2 + $0x600] sm:$0xff]
    %v1454 = vld [vmem:[#allocation2 + $0x608] sm:$0xff]
    %v1455 = vld [vmem:[#allocation2 + $0x610] sm:$0xff]
    %v1456 = vld [vmem:[#allocation2 + $0x618] sm:$0xff]
    %v1457 = vld [vmem:[#allocation2 + $0x620] sm:$0xff]
    %v1458 = vld [vmem:[#allocation2 + $0x628] sm:$0xff]
    %v1459 = vld [vmem:[#allocation2 + $0x630] sm:$0xff]
    %v1460 = vld [vmem:[#allocation2 + $0x638] sm:$0xff]
    %v1461 = vld [vmem:[#allocation2 + $0x640] sm:$0xff]
    %v1462 = vld [vmem:[#allocation2 + $0x648] sm:$0xff]
    %v1463 = vld [vmem:[#allocation2 + $0x650] sm:$0xff]
    %v1464 = vld [vmem:[#allocation2 + $0x658] sm:$0xff]
    %v1465 = vld [vmem:[%s3] sm:$0xff]
    %v1466 = vld [vmem:[%s3 + $0x8] sm:$0xff]
    %v1467 = vld [vmem:[%s3 + $0x10] sm:$0xff]
    %v1468 = vld [vmem:[%s3 + $0x18] sm:$0xff]
    %v1469 = vld [vmem:[%s3 + $0x20] sm:$0xff]
    %v1470 = vld [vmem:[%s3 + $0x28] sm:$0xff]
    %v1471 = vld [vmem:[%s3 + $0x30] sm:$0xff]
    %v1472 = vld [vmem:[%s3 + $0x38] sm:$0xff]
    %v1473 = vld [vmem:[%s3 + $0x40] sm:$0xff]
    %v1474 = vld [vmem:[%s3 + $0x48] sm:$0xff]
    %v1475 = vld [vmem:[%s3 + $0x50] sm:$0xff]
    %v1476 = vld [vmem:[%s3 + $0x58] sm:$0xff]
    %v1477 = vld [vmem:[%s3 + $0x60] sm:$0xff]
    %v1478 = vld [vmem:[%s3 + $0x68] sm:$0xff]
    %v1479 = vld [vmem:[%s3 + $0x70] sm:$0xff]
    %v1480 = vld [vmem:[%s3 + $0x78] sm:$0xff]
    %v1481 = vld [vmem:[%s3 + $0x80] sm:$0xff]
    %v1482 = vld [vmem:[%s3 + $0x88] sm:$0xff]
    %v1483 = vld [vmem:[%s3 + $0x90] sm:$0xff]
    %v1484 = vld [vmem:[%s3 + $0x98] sm:$0xff]
    %v1485 = vld [vmem:[%s3 + $0xa0] sm:$0xff]
    %v1486 = vld [vmem:[%s3 + $0xa8] sm:$0xff]
    %v1487 = vld [vmem:[%s3 + $0xb0] sm:$0xff]
    %v1488 = vld [vmem:[%s3 + $0xb8] sm:$0xff]
    %v1489 = vld [vmem:[%s3 + $0xc0] sm:$0xff]
    %v1490 = vld [vmem:[%s3 + $0xc8] sm:$0xff]
    %v1491 = vld [vmem:[%s3 + $0xd0] sm:$0xff]
    %v1492 = vld [vmem:[%s3 + $0xd8] sm:$0xff]
    %v1493 = vld [vmem:[%s3 + $0xe0] sm:$0xff]
    %v1494 = vld [vmem:[%s3 + $0xe8] sm:$0xff]
    %v1495 = vld [vmem:[%s3 + $0xf0] sm:$0xff]
    %v1496 = vld [vmem:[%s3 + $0xf8] sm:$0xff]
    %v1497 = vld [vmem:[%s3 + $0x100] sm:$0xff]
    %v1498 = vld [vmem:[%s3 + $0x108] sm:$0xff]
    %v1499 = vld [vmem:[%s3 + $0x110] sm:$0xff]
    %v1500 = vld [vmem:[%s3 + $0x118] sm:$0xff]
    %v1501 = vld [vmem:[%s3 + $0x120] sm:$0xff]
    %v1502 = vld [vmem:[%s3 + $0x128] sm:$0xff]
    %v1503 = vld [vmem:[%s3 + $0x130] sm:$0xff]
    %v1504 = vld [vmem:[%s3 + $0x138] sm:$0xff]
    %v1505 = vld [vmem:[%s3 + $0x140] sm:$0xff]
    %v1506 = vld [vmem:[%s3 + $0x148] sm:$0xff]
    %v1507 = vld [vmem:[%s3 + $0x150] sm:$0xff]
    %v1508 = vld [vmem:[%s3 + $0x158] sm:$0xff]
    %v1509 = vld [vmem:[%s3 + $0x160] sm:$0xff]
    %v1510 = vld [vmem:[%s3 + $0x168] sm:$0xff]
    %v1511 = vld [vmem:[%s3 + $0x170] sm:$0xff]
    %v1512 = vld [vmem:[%s3 + $0x178] sm:$0xff]
    %v1513 = vld [vmem:[%s409] sm:$0xff]
    %v1514 = vld [vmem:[%s409 + $0x8] sm:$0xff]
    %v1515 = vld [vmem:[%s409 + $0x10] sm:$0xff]
    %v1516 = vld [vmem:[%s409 + $0x18] sm:$0xff]
    %v1517 = vld [vmem:[%s409 + $0x20] sm:$0xff]
    %v1518 = vld [vmem:[%s409 + $0x28] sm:$0xff]
    %v1519 = vld [vmem:[%s409 + $0x30] sm:$0xff]
    %v1520 = vld [vmem:[%s409 + $0x38] sm:$0xff]
    %v1521 = vld [vmem:[%s409 + $0x40] sm:$0xff]
    %v1522 = vld [vmem:[%s409 + $0x48] sm:$0xff]
    %v1523 = vld [vmem:[%s409 + $0x50] sm:$0xff]
    %v1524 = vld [vmem:[%s409 + $0x58] sm:$0xff]
    %v1525 = vld [vmem:[%s409 + $0x60] sm:$0xff]
    %v1526 = vld [vmem:[%s409 + $0x68] sm:$0xff]
    %v1527 = vld [vmem:[%s409 + $0x70] sm:$0xff]
    %v1528 = vld [vmem:[%s409 + $0x78] sm:$0xff]
    %v1529 = vld [vmem:[%s409 + $0x80] sm:$0xff]
    %v1530 = vld [vmem:[%s409 + $0x88] sm:$0xff]
    %v1531 = vld [vmem:[%s409 + $0x90] sm:$0xff]
    %v1532 = vld [vmem:[%s409 + $0x98] sm:$0xff]
    %v1533 = vld [vmem:[%s409 + $0xa0] sm:$0xff]
    %v1534 = vld [vmem:[%s409 + $0xa8] sm:$0xff]
    %v1535 = vld [vmem:[%s409 + $0xb0] sm:$0xff]
    %v1536 = vld [vmem:[%s409 + $0xb8] sm:$0xff]
    %v1537 = vld [vmem:[%s409 + $0xc0] sm:$0xff]
    %v1538 = vld [vmem:[%s409 + $0xc8] sm:$0xff]
    %v1539 = vld [vmem:[%s409 + $0xd0] sm:$0xff]
    %v1540 = vld [vmem:[%s409 + $0xd8] sm:$0xff]
    %v1541 = vld [vmem:[%s409 + $0xe0] sm:$0xff]
    %v1542 = vld [vmem:[%s409 + $0xe8] sm:$0xff]
    %v1543 = vld [vmem:[%s409 + $0xf0] sm:$0xff]
    %v1544 = vld [vmem:[%s409 + $0xf8] sm:$0xff]
    %v1545 = vld [vmem:[%s409 + $0x100] sm:$0xff]
    %v1546 = vld [vmem:[%s409 + $0x108] sm:$0xff]
    %v1547 = vld [vmem:[%s409 + $0x110] sm:$0xff]
    %v1548 = vld [vmem:[%s409 + $0x118] sm:$0xff]
    %v1549 = vld [vmem:[%s409 + $0x120] sm:$0xff]
    %v1550 = vld [vmem:[%s409 + $0x128] sm:$0xff]
    %v1551 = vld [vmem:[%s409 + $0x130] sm:$0xff]
    %v1552 = vld [vmem:[%s409 + $0x138] sm:$0xff]
    %v1553 = vld [vmem:[%s409 + $0x140] sm:$0xff]
    %v1554 = vld [vmem:[%s409 + $0x148] sm:$0xff]
    %v1555 = vld [vmem:[%s409 + $0x150] sm:$0xff]
    %v1556 = vld [vmem:[%s409 + $0x158] sm:$0xff]
    %v1557 = vld [vmem:[%s409 + $0x160] sm:$0xff]
    %v1558 = vld [vmem:[%s409 + $0x168] sm:$0xff]
    %v1559 = vld [vmem:[%s409 + $0x170] sm:$0xff]
    %v1560 = vld [vmem:[%s409 + $0x178] sm:$0xff]
    %v1561 = vld [vmem:[%s409 + $0x180] sm:$0xff]
    %v1562 = vld [vmem:[%s409 + $0x188] sm:$0xff]
    %v1563 = vld [vmem:[%s409 + $0x190] sm:$0xff]
    %v1564 = vld [vmem:[%s409 + $0x198] sm:$0xff]
    %v1565 = vld [vmem:[%s409 + $0x1a0] sm:$0xff]
    %v1566 = vld [vmem:[%s409 + $0x1a8] sm:$0xff]
    %v1567 = vld [vmem:[%s409 + $0x1b0] sm:$0xff]
    %v1568 = vld [vmem:[%s409 + $0x1b8] sm:$0xff]
    %v1569 = vld [vmem:[%s409 + $0x1c0] sm:$0xff]
    %v1570 = vld [vmem:[%s409 + $0x1c8] sm:$0xff]
    %v1571 = vld [vmem:[%s409 + $0x1d0] sm:$0xff]
    %v1572 = vld [vmem:[%s409 + $0x1d8] sm:$0xff]
    %v1573 = vld [vmem:[%s409 + $0x1e0] sm:$0xff]
    %v1574 = vld [vmem:[%s409 + $0x1e8] sm:$0xff]
    %v1575 = vld [vmem:[%s409 + $0x1f0] sm:$0xff]
    %v1576 = vld [vmem:[%s409 + $0x1f8] sm:$0xff]
    %v1577 = vld [vmem:[%s409 + $0x200] sm:$0xff]
    %v1578 = vld [vmem:[%s409 + $0x208] sm:$0xff]
    %v1579 = vld [vmem:[%s409 + $0x210] sm:$0xff]
    %v1580 = vld [vmem:[%s409 + $0x218] sm:$0xff]
    %v1581 = vld [vmem:[%s409 + $0x220] sm:$0xff]
    %v1582 = vld [vmem:[%s409 + $0x228] sm:$0xff]
    %v1583 = vld [vmem:[%s409 + $0x230] sm:$0xff]
    %v1584 = vld [vmem:[%s409 + $0x238] sm:$0xff]
    %v1585 = vld [vmem:[%s409 + $0x240] sm:$0xff]
    %v1586 = vld [vmem:[%s409 + $0x248] sm:$0xff]
    %v1587 = vld [vmem:[%s409 + $0x250] sm:$0xff]
    %v1588 = vld [vmem:[%s409 + $0x258] sm:$0xff]
    %v1589 = vld [vmem:[%s409 + $0x260] sm:$0xff]
    %v1590 = vld [vmem:[%s409 + $0x268] sm:$0xff]
    %v1591 = vld [vmem:[%s409 + $0x270] sm:$0xff]
    %v1592 = vld [vmem:[%s409 + $0x278] sm:$0xff]
    %v1593 = vld [vmem:[%s409 + $0x280] sm:$0xff]
    %v1594 = vld [vmem:[%s409 + $0x288] sm:$0xff]
    %v1595 = vld [vmem:[%s409 + $0x290] sm:$0xff]
    %v1596 = vld [vmem:[%s409 + $0x298] sm:$0xff]
    %v1597 = vld [vmem:[%s409 + $0x2a0] sm:$0xff]
    %v1598 = vld [vmem:[%s409 + $0x2a8] sm:$0xff]
    %v1599 = vld [vmem:[%s409 + $0x2b0] sm:$0xff]
    %v1600 = vld [vmem:[%s409 + $0x2b8] sm:$0xff]
    %v1601 = vld [vmem:[%s409 + $0x2c0] sm:$0xff]
    %v1602 = vld [vmem:[%s409 + $0x2c8] sm:$0xff]
    %v1603 = vld [vmem:[%s409 + $0x2d0] sm:$0xff]
    %v1604 = vld [vmem:[%s409 + $0x2d8] sm:$0xff]
    %v1605 = vld [vmem:[%s409 + $0x2e0] sm:$0xff]
    %v1606 = vld [vmem:[%s409 + $0x2e8] sm:$0xff]
    %v1607 = vld [vmem:[%s409 + $0x2f0] sm:$0xff]
    %v1608 = vld [vmem:[%s409 + $0x2f8] sm:$0xff]
    %v1609 = vld [vmem:[%s409 + $0x360] sm:$0xff]
    %v1610 = vld [vmem:[%s409 + $0x368] sm:$0xff]
    %v1611 = vld [vmem:[%s409 + $0x370] sm:$0xff]
    %v1612 = vld [vmem:[%s409 + $0x378] sm:$0xff]
    %v1613 = vld [vmem:[%s409 + $0x380] sm:$0xff]
    %v1614 = vld [vmem:[%s409 + $0x388] sm:$0xff]
    %v1615 = vld [vmem:[%s409 + $0x390] sm:$0xff]
    %v1616 = vld [vmem:[%s409 + $0x398] sm:$0xff]
    %v1617 = vld [vmem:[%s409 + $0x3a0] sm:$0xff]
    %v1618 = vld [vmem:[%s409 + $0x3a8] sm:$0xff]
    %v1619 = vld [vmem:[%s409 + $0x3b0] sm:$0xff]
    %v1620 = vld [vmem:[%s409 + $0x3b8] sm:$0xff]
    %v1621 = vld [vmem:[%s409 + $0x3c0] sm:$0xff]
    %v1622 = vld [vmem:[%s409 + $0x3c8] sm:$0xff]
    %v1623 = vld [vmem:[%s409 + $0x3d0] sm:$0xff]
    %v1624 = vld [vmem:[%s409 + $0x3d8] sm:$0xff]
    %v1625 = vld [vmem:[%s409 + $0x3e0] sm:$0xff]
    %v1626 = vld [vmem:[%s409 + $0x3e8] sm:$0xff]
    %v1627 = vld [vmem:[%s409 + $0x3f0] sm:$0xff]
    %v1628 = vld [vmem:[%s409 + $0x3f8] sm:$0xff]
    %v1629 = vld [vmem:[%s409 + $0x400] sm:$0xff]
    %v1630 = vld [vmem:[%s409 + $0x408] sm:$0xff]
    %v1631 = vld [vmem:[%s409 + $0x410] sm:$0xff]
    %v1632 = vld [vmem:[%s409 + $0x418] sm:$0xff]
    %v1633 = vld [vmem:[%s409 + $0x420] sm:$0xff]
    %v1634 = vld [vmem:[%s409 + $0x428] sm:$0xff]
    %v1635 = vld [vmem:[%s409 + $0x430] sm:$0xff]
    %v1636 = vld [vmem:[%s409 + $0x438] sm:$0xff]
    %v1637 = vld [vmem:[%s409 + $0x440] sm:$0xff]
    %v1638 = vld [vmem:[%s409 + $0x448] sm:$0xff]
    %v1639 = vld [vmem:[%s409 + $0x450] sm:$0xff]
    %v1640 = vld [vmem:[%s409 + $0x458] sm:$0xff]
    %v1641 = vld [vmem:[%s409 + $0x460] sm:$0xff]
    %v1642 = vld [vmem:[%s409 + $0x468] sm:$0xff]
    %v1643 = vld [vmem:[%s409 + $0x470] sm:$0xff]
    %v1644 = vld [vmem:[%s409 + $0x478] sm:$0xff]
    %v1645 = vld [vmem:[%s409 + $0x480] sm:$0xff]
    %v1646 = vld [vmem:[%s409 + $0x488] sm:$0xff]
    %v1647 = vld [vmem:[%s409 + $0x490] sm:$0xff]
    %v1648 = vld [vmem:[%s409 + $0x498] sm:$0xff]
    %v1649 = vld [vmem:[%s409 + $0x4a0] sm:$0xff]
    %v1650 = vld [vmem:[%s409 + $0x4a8] sm:$0xff]
    %v1651 = vld [vmem:[%s409 + $0x4b0] sm:$0xff]
    %v1652 = vld [vmem:[%s409 + $0x4b8] sm:$0xff]
    %v1653 = vld [vmem:[%s409 + $0x4c0] sm:$0xff]
    %v1654 = vld [vmem:[%s409 + $0x4c8] sm:$0xff]
    %v1655 = vld [vmem:[%s409 + $0x4d0] sm:$0xff]
    %v1656 = vld [vmem:[%s409 + $0x4d8] sm:$0xff]
    %v1657 = vld [vmem:[%s409 + $0x4e0] sm:$0xff]
    %v1658 = vld [vmem:[%s409 + $0x4e8] sm:$0xff]
    %v1659 = vld [vmem:[%s409 + $0x4f0] sm:$0xff]
    %v1660 = vld [vmem:[%s409 + $0x4f8] sm:$0xff]
    %v1661 = vld [vmem:[%s409 + $0x500] sm:$0xff]
    %v1662 = vld [vmem:[%s409 + $0x508] sm:$0xff]
    %v1663 = vld [vmem:[%s409 + $0x510] sm:$0xff]
    %v1664 = vld [vmem:[%s409 + $0x518] sm:$0xff]
    %v1665 = vld [vmem:[%s409 + $0x520] sm:$0xff]
    %v1666 = vld [vmem:[%s409 + $0x528] sm:$0xff]
    %v1667 = vld [vmem:[%s409 + $0x530] sm:$0xff]
    %v1668 = vld [vmem:[%s409 + $0x538] sm:$0xff]
    %v1669 = vld [vmem:[%s409 + $0x540] sm:$0xff]
    %v1670 = vld [vmem:[%s409 + $0x548] sm:$0xff]
    %v1671 = vld [vmem:[%s409 + $0x550] sm:$0xff]
    %v1672 = vld [vmem:[%s409 + $0x558] sm:$0xff]
    %v1673 = vld [vmem:[%s409 + $0x560] sm:$0xff]
    %v1674 = vld [vmem:[%s409 + $0x568] sm:$0xff]
    %v1675 = vld [vmem:[%s409 + $0x570] sm:$0xff]
    %v1676 = vld [vmem:[%s409 + $0x578] sm:$0xff]
    %v1677 = vld [vmem:[%s409 + $0x580] sm:$0xff]
    %v1678 = vld [vmem:[%s409 + $0x588] sm:$0xff]
    %v1679 = vld [vmem:[%s409 + $0x590] sm:$0xff]
    %v1680 = vld [vmem:[%s409 + $0x598] sm:$0xff]
    %v1681 = vld [vmem:[%s409 + $0x5a0] sm:$0xff]
    %v1682 = vld [vmem:[%s409 + $0x5a8] sm:$0xff]
    %v1683 = vld [vmem:[%s409 + $0x5b0] sm:$0xff]
    %v1684 = vld [vmem:[%s409 + $0x5b8] sm:$0xff]
    %v1685 = vld [vmem:[%s409 + $0x5c0] sm:$0xff]
    %v1686 = vld [vmem:[%s409 + $0x5c8] sm:$0xff]
    %v1687 = vld [vmem:[%s409 + $0x5d0] sm:$0xff]
    %v1688 = vld [vmem:[%s409 + $0x5d8] sm:$0xff]
    %v1689 = vld [vmem:[%s409 + $0x5e0] sm:$0xff]
    %v1690 = vld [vmem:[%s409 + $0x5e8] sm:$0xff]
    %v1691 = vld [vmem:[%s409 + $0x5f0] sm:$0xff]
    %v1692 = vld [vmem:[%s409 + $0x5f8] sm:$0xff]
    %v1693 = vld [vmem:[%s409 + $0x600] sm:$0xff]
    %v1694 = vld [vmem:[%s409 + $0x608] sm:$0xff]
    %v1695 = vld [vmem:[%s409 + $0x610] sm:$0xff]
    %v1696 = vld [vmem:[%s409 + $0x618] sm:$0xff]
    %v1697 = vld [vmem:[%s409 + $0x620] sm:$0xff]
    %v1698 = vld [vmem:[%s409 + $0x628] sm:$0xff]
    %v1699 = vld [vmem:[%s409 + $0x630] sm:$0xff]
    %v1700 = vld [vmem:[%s409 + $0x638] sm:$0xff]
    %v1701 = vld [vmem:[%s409 + $0x640] sm:$0xff]
    %v1702 = vld [vmem:[%s409 + $0x648] sm:$0xff]
    %v1703 = vld [vmem:[%s409 + $0x650] sm:$0xff]
    %v1704 = vld [vmem:[%s409 + $0x658] sm:$0xff]
    %s1705 = scalar_lea.vmem %s3, 384
    %v1706 = vld [vmem:[%s1705] sm:$0xff]
    %v1707 = vld [vmem:[%s1705 + $0x8] sm:$0xff]
    %v1708 = vld [vmem:[%s1705 + $0x10] sm:$0xff]
    %v1709 = vld [vmem:[%s1705 + $0x18] sm:$0xff]
    %v1710 = vld [vmem:[%s1705 + $0x20] sm:$0xff]
    %v1711 = vld [vmem:[%s1705 + $0x28] sm:$0xff]
    %v1712 = vld [vmem:[%s1705 + $0x30] sm:$0xff]
    %v1713 = vld [vmem:[%s1705 + $0x38] sm:$0xff]
    %v1714 = vld [vmem:[%s1705 + $0x40] sm:$0xff]
    %v1715 = vld [vmem:[%s1705 + $0x48] sm:$0xff]
    %v1716 = vld [vmem:[%s1705 + $0x50] sm:$0xff]
    %v1717 = vld [vmem:[%s1705 + $0x58] sm:$0xff]
    %v1718 = vld [vmem:[%s1705 + $0x60] sm:$0xff]
    %v1719 = vld [vmem:[%s1705 + $0x68] sm:$0xff]
    %v1720 = vld [vmem:[%s1705 + $0x70] sm:$0xff]
    %v1721 = vld [vmem:[%s1705 + $0x78] sm:$0xff]
    %v1722 = vld [vmem:[%s1705 + $0x80] sm:$0xff]
    %v1723 = vld [vmem:[%s1705 + $0x88] sm:$0xff]
    %v1724 = vld [vmem:[%s1705 + $0x90] sm:$0xff]
    %v1725 = vld [vmem:[%s1705 + $0x98] sm:$0xff]
    %v1726 = vld [vmem:[%s1705 + $0xa0] sm:$0xff]
    %v1727 = vld [vmem:[%s1705 + $0xa8] sm:$0xff]
    %v1728 = vld [vmem:[%s1705 + $0xb0] sm:$0xff]
    %v1729 = vld [vmem:[%s1705 + $0xb8] sm:$0xff]
    %v1730 = vld [vmem:[%s1705 + $0xc0] sm:$0xff]
    %v1731 = vld [vmem:[%s1705 + $0xc8] sm:$0xff]
    %v1732 = vld [vmem:[%s1705 + $0xd0] sm:$0xff]
    %v1733 = vld [vmem:[%s1705 + $0xd8] sm:$0xff]
    %v1734 = vld [vmem:[%s1705 + $0xe0] sm:$0xff]
    %v1735 = vld [vmem:[%s1705 + $0xe8] sm:$0xff]
    %v1736 = vld [vmem:[%s1705 + $0xf0] sm:$0xff]
    %v1737 = vld [vmem:[%s1705 + $0xf8] sm:$0xff]
    %v1738 = vld [vmem:[%s1705 + $0x100] sm:$0xff]
    %v1739 = vld [vmem:[%s1705 + $0x108] sm:$0xff]
    %v1740 = vld [vmem:[%s1705 + $0x110] sm:$0xff]
    %v1741 = vld [vmem:[%s1705 + $0x118] sm:$0xff]
    %v1742 = vld [vmem:[%s1705 + $0x120] sm:$0xff]
    %v1743 = vld [vmem:[%s1705 + $0x128] sm:$0xff]
    %v1744 = vld [vmem:[%s1705 + $0x130] sm:$0xff]
    %v1745 = vld [vmem:[%s1705 + $0x138] sm:$0xff]
    %v1746 = vld [vmem:[%s1705 + $0x140] sm:$0xff]
    %v1747 = vld [vmem:[%s1705 + $0x148] sm:$0xff]
    %v1748 = vld [vmem:[%s1705 + $0x150] sm:$0xff]
    %v1749 = vld [vmem:[%s1705 + $0x158] sm:$0xff]
    %v1750 = vld [vmem:[%s1705 + $0x160] sm:$0xff]
    %v1751 = vld [vmem:[%s1705 + $0x168] sm:$0xff]
    %v1752 = vld [vmem:[%s1705 + $0x170] sm:$0xff]
    %v1753 = vld [vmem:[%s1705 + $0x178] sm:$0xff]
    %1754 = vmatprep.subr.mxu0 0.0
    %1755 = vmatpush1.msra.mxu0 %v1706
    %1756 = vmatprep.subr.mxu0 0.0
    %1757 = vmatpush1.msra.mxu0 %v1707
    %1758 = vmatprep.subr.mxu0 0.0
    %1759 = vmatpush1.msra.mxu0 %v1708
    %1760 = vmatprep.subr.mxu0 0.0
    %1761 = vmatpush1.msra.mxu0 %v1709
    %1762 = vmatprep.subr.mxu0 0.0
    %1763 = vmatpush1.msra.mxu0 %v1710
    %1764 = vmatprep.subr.mxu0 0.0
    %1765 = vmatpush1.msra.mxu0 %v1711
    %1766 = vmatprep.subr.mxu0 0.0
    %1767 = vmatpush1.msra.mxu0 %v1712
    %1768 = vmatprep.subr.mxu0 0.0
    %1769 = vmatpush1.msra.mxu0 %v1713
    %1770 = vmatprep.subr.mxu0 0.0
    %1771 = vmatpush1.msra.mxu0 %v1714
    %1772 = vmatprep.subr.mxu0 0.0
    %1773 = vmatpush1.msra.mxu0 %v1715
    %1774 = vmatprep.subr.mxu0 0.0
    %1775 = vmatpush1.msra.mxu0 %v1716
    %1776 = vmatprep.subr.mxu0 0.0
    %1777 = vmatpush1.msra.mxu0 %v1717
    %1778 = vmatprep.subr.mxu0 0.0
    %1779 = vmatpush1.msra.mxu0 %v1718
    %1780 = vmatprep.subr.mxu0 0.0
    %1781 = vmatpush1.msra.mxu0 %v1719
    %1782 = vmatprep.subr.mxu0 0.0
    %1783 = vmatpush1.msra.mxu0 %v1720
    %1784 = vmatprep.subr.mxu0 0.0
    %1785 = vmatpush1.msra.mxu0 %v1721
    %1786 = vmatprep.subr.mxu0 0.0
    %1787 = vmatpush1.msra.mxu0 %v1722
    %1788 = vmatprep.subr.mxu0 0.0
    %1789 = vmatpush1.msra.mxu0 %v1723
    %1790 = vmatprep.subr.mxu0 0.0
    %1791 = vmatpush1.msra.mxu0 %v1724
    %1792 = vmatprep.subr.mxu0 0.0
    %1793 = vmatpush1.msra.mxu0 %v1725
    %1794 = vmatprep.subr.mxu0 0.0
    %1795 = vmatpush1.msra.mxu0 %v1726
    %1796 = vmatprep.subr.mxu0 0.0
    %1797 = vmatpush1.msra.mxu0 %v1727
    %1798 = vmatprep.subr.mxu0 0.0
    %1799 = vmatpush1.msra.mxu0 %v1728
    %1800 = vmatprep.subr.mxu0 0.0
    %1801 = vmatpush1.msra.mxu0 %v1729
    %1802 = vmatprep.subr.mxu0 0.0
    %1803 = vmatpush1.msra.mxu0 %v1730
    %1804 = vmatprep.subr.mxu0 0.0
    %1805 = vmatpush1.msra.mxu0 %v1731
    %1806 = vmatprep.subr.mxu0 0.0
    %1807 = vmatpush1.msra.mxu0 %v1732
    %1808 = vmatprep.subr.mxu0 0.0
    %1809 = vmatpush1.msra.mxu0 %v1733
    %1810 = vmatprep.subr.mxu0 0.0
    %1811 = vmatpush1.msra.mxu0 %v1734
    %1812 = vmatprep.subr.mxu0 0.0
    %1813 = vmatpush1.msra.mxu0 %v1735
    %1814 = vmatprep.subr.mxu0 0.0
    %1815 = vmatpush1.msra.mxu0 %v1736
    %1816 = vmatprep.subr.mxu0 0.0
    %1817 = vmatpush1.msra.mxu0 %v1737
    %1818 = vmatprep.mubr.f32.mxu0 %v1514
    %1819 = vmatmul.mubr.f32.gmra.mrb[0].mxu0 %v1513
    %v1820 = vpop.f32.mrb[0].mxu0
    %v1821 = vadd.f32 0.0, %v1820
    %v1822 = vpop.f32.mrb[0].mxu0
    %1823 = vmatprep.mubr.f32.mxu0 %v1517
    %1824 = vmatmul.mubr.f32.gmra.mrb[0].mxu0 %v1516
    %v1825 = vpop.f32.mrb[0].mxu0
    %v1826 = vadd.f32 0.0, %v1825
    %v1827 = vpop.f32.mrb[0].mxu0
    %1828 = vmatprep.mubr.f32.mxu0 %v1520
    %1829 = vmatmul.mubr.f32.gmra.mrb[0].mxu0 %v1519
    %v1830 = vpop.f32.mrb[0].mxu0
    %v1831 = vadd.f32 0.0, %v1830
    %v1832 = vpop.f32.mrb[0].mxu0
    %1833 = vmatprep.mubr.f32.mxu0 %v1523
    %1834 = vmatmul.mubr.f32.gmra.mrb[0].mxu0 %v1522
    %v1835 = vpop.f32.mrb[0].mxu0
    %v1836 = vadd.f32 0.0, %v1835
    %v1837 = vpop.f32.mrb[0].mxu0
    %1838 = vmatprep.mubr.f32.mxu0 %v1526
    %1839 = vmatmul.mubr.f32.gmra.mrb[0].mxu0 %v1525
    %v1840 = vpop.f32.mrb[0].mxu0
    %v1841 = vadd.f32 0.0, %v1840
    %v1842 = vpop.f32.mrb[0].mxu0
    %1843 = vmatprep.mubr.f32.mxu0 %v1529
    %1844 = vmatmul.mubr.f32.gmra.mrb[0].mxu0 %v1528
    %v1845 = vpop.f32.mrb[0].mxu0
    %v1846 = vadd.f32 0.0, %v1845
    %v1847 = vpop.f32.mrb[0].mxu0
    %1848 = vmatprep.mubr.f32.mxu0 %v1532
    %1849 = vmatmul.mubr.f32.gmra.mrb[0].mxu0 %v1531
    %v1850 = vpop.f32.mrb[0].mxu0
    %v1851 = vadd.f32 0.0, %v1850
    %v1852 = vpop.f32.mrb[0].mxu0
    %1853 = vmatprep.mubr.f32.mxu0 %v1535
    %1854 = vmatmul.mubr.f32.gmra.mrb[0].mxu0 %v1534
    %v1855 = vpop.f32.mrb[0].mxu0
    %v1856 = vadd.f32 0.0, %v1855
    %v1857 = vpop.f32.mrb[0].mxu0
    %1858 = vmatprep.mubr.f32.mxu0 %v1538
    %1859 = vmatmul.mubr.f32.gmra.mrb[0].mxu0 %v1537
    %v1860 = vpop.f32.mrb[0].mxu0
    %v1861 = vadd.f32 0.0, %v1860
    %v1862 = vpop.f32.mrb[0].mxu0
    %1863 = vmatprep.mubr.f32.mxu0 %v1541
    %1864 = vmatmul.mubr.f32.gmra.mrb[0].mxu0 %v1540
    %v1865 = vpop.f32.mrb[0].mxu0
    %v1866 = vadd.f32 0.0, %v1865
    %v1867 = vpop.f32.mrb[0].mxu0
    %1868 = vmatprep.mubr.f32.mxu0 %v1544
    %1869 = vmatmul.mubr.f32.gmra.mrb[0].mxu0 %v1543
    %v1870 = vpop.f32.mrb[0].mxu0
    %v1871 = vadd.f32 0.0, %v1870
    %v1872 = vpop.f32.mrb[0].mxu0
    %1873 = vmatprep.mubr.f32.mxu0 %v1547
    %1874 = vmatmul.mubr.f32.gmra.mrb[0].mxu0 %v1546
    %v1875 = vpop.f32.mrb[0].mxu0
    %v1876 = vadd.f32 0.0, %v1875
    %v1877 = vpop.f32.mrb[0].mxu0
    %1878 = vmatprep.mubr.f32.mxu0 %v1550
    %1879 = vmatmul.mubr.f32.gmra.mrb[0].mxu0 %v1549
    %v1880 = vpop.f32.mrb[0].mxu0
    %v1881 = vadd.f32 0.0, %v1880
    %v1882 = vpop.f32.mrb[0].mxu0
    %1883 = vmatprep.mubr.f32.mxu0 %v1553
    %1884 = vmatmul.mubr.f32.gmra.mrb[0].mxu0 %v1552
    %v1885 = vpop.f32.mrb[0].mxu0
    %v1886 = vadd.f32 0.0, %v1885
    %v1887 = vpop.f32.mrb[0].mxu0
    %1888 = vmatprep.mubr.f32.mxu0 %v1556
    %1889 = vmatmul.mubr.f32.gmra.mrb[0].mxu0 %v1555
    %v1890 = vpop.f32.mrb[0].mxu0
    %v1891 = vadd.f32 0.0, %v1890
    %v1892 = vpop.f32.mrb[0].mxu0
    %1893 = vmatprep.mubr.f32.mxu0 %v1559
    %1894 = vmatmul.mubr.f32.gmra.mrb[0].mxu0 %v1558
    %v1895 = vpop.f32.mrb[0].mxu0
    %v1896 = vadd.f32 0.0, %v1895
    %v1897 = vpop.f32.mrb[0].mxu0
    %1898 = vmatprep.mubr.f32.mxu0 %v1562
    %1899 = vmatmul.mubr.f32.gmra.mrb[0].mxu0 %v1561
    %v1900 = vpop.f32.mrb[0].mxu0
    %v1901 = vadd.f32 0.0, %v1900
    %v1902 = vpop.f32.mrb[0].mxu0
    %1903 = vmatprep.mubr.f32.mxu0 %v1565
    %1904 = vmatmul.mubr.f32.gmra.mrb[0].mxu0 %v1564
    %v1905 = vpop.f32.mrb[0].mxu0
    %v1906 = vadd.f32 0.0, %v1905
    %v1907 = vpop.f32.mrb[0].mxu0
    %1908 = vmatprep.mubr.f32.mxu0 %v1568
    %1909 = vmatmul.mubr.f32.gmra.mrb[0].mxu0 %v1567
    %v1910 = vpop.f32.mrb[0].mxu0
    %v1911 = vadd.f32 0.0, %v1910
    %v1912 = vpop.f32.mrb[0].mxu0
    %1913 = vmatprep.mubr.f32.mxu0 %v1571
    %1914 = vmatmul.mubr.f32.gmra.mrb[0].mxu0 %v1570
    %v1915 = vpop.f32.mrb[0].mxu0
    %v1916 = vadd.f32 0.0, %v1915
    %v1917 = vpop.f32.mrb[0].mxu0
    %1918 = vmatprep.mubr.f32.mxu0 %v1574
    %1919 = vmatmul.mubr.f32.gmra.mrb[0].mxu0 %v1573
    %v1920 = vpop.f32.mrb[0].mxu0
    %v1921 = vadd.f32 0.0, %v1920
    %v1922 = vpop.f32.mrb[0].mxu0
    %1923 = vmatprep.mubr.f32.mxu0 %v1577
    %1924 = vmatmul.mubr.f32.gmra.mrb[0].mxu0 %v1576
    %v1925 = vpop.f32.mrb[0].mxu0
    %v1926 = vadd.f32 0.0, %v1925
    %v1927 = vpop.f32.mrb[0].mxu0
    %1928 = vmatprep.mubr.f32.mxu0 %v1580
    %1929 = vmatmul.mubr.f32.gmra.mrb[0].mxu0 %v1579
    %v1930 = vpop.f32.mrb[0].mxu0
    %v1931 = vadd.f32 0.0, %v1930
    %v1932 = vpop.f32.mrb[0].mxu0
    %1933 = vmatprep.mubr.f32.mxu0 %v1583
    %1934 = vmatmul.mubr.f32.gmra.mrb[0].mxu0 %v1582
    %v1935 = vpop.f32.mrb[0].mxu0
    %v1936 = vadd.f32 0.0, %v1935
    %v1937 = vpop.f32.mrb[0].mxu0
    %1938 = vmatprep.mubr.f32.mxu0 %v1586
    %1939 = vmatmul.mubr.f32.gmra.mrb[0].mxu0 %v1585
    %v1940 = vpop.f32.mrb[0].mxu0
    %v1941 = vadd.f32 0.0, %v1940
    %v1942 = vpop.f32.mrb[0].mxu0
    %1943 = vmatprep.mubr.f32.mxu0 %v1589
    %1944 = vmatmul.mubr.f32.gmra.mrb[0].mxu0 %v1588
    %v1945 = vpop.f32.mrb[0].mxu0
    %v1946 = vadd.f32 0.0, %v1945
    %v1947 = vpop.f32.mrb[0].mxu0
    %1948 = vmatprep.mubr.f32.mxu0 %v1592
    %1949 = vmatmul.mubr.f32.gmra.mrb[0].mxu0 %v1591
    %v1950 = vpop.f32.mrb[0].mxu0
    %v1951 = vadd.f32 0.0, %v1950
    %v1952 = vpop.f32.mrb[0].mxu0
    %1953 = vmatprep.mubr.f32.mxu0 %v1595
    %1954 = vmatmul.mubr.f32.gmra.mrb[0].mxu0 %v1594
    %v1955 = vpop.f32.mrb[0].mxu0
    %v1956 = vadd.f32 0.0, %v1955
    %v1957 = vpop.f32.mrb[0].mxu0
    %1958 = vmatprep.mubr.f32.mxu0 %v1598
    %1959 = vmatmul.mubr.f32.gmra.mrb[0].mxu0 %v1597
    %v1960 = vpop.f32.mrb[0].mxu0
    %v1961 = vadd.f32 0.0, %v1960
    %v1962 = vpop.f32.mrb[0].mxu0
    %1963 = vmatprep.mubr.f32.mxu0 %v1601
    %1964 = vmatmul.mubr.f32.gmra.mrb[0].mxu0 %v1600
    %v1965 = vpop.f32.mrb[0].mxu0
    %v1966 = vadd.f32 0.0, %v1965
    %v1967 = vpop.f32.mrb[0].mxu0
    %1968 = vmatprep.mubr.f32.mxu0 %v1604
    %1969 = vmatmul.mubr.f32.gmra.mrb[0].mxu0 %v1603
    %v1970 = vpop.f32.mrb[0].mxu0
    %v1971 = vadd.f32 0.0, %v1970
    %v1972 = vpop.f32.mrb[0].mxu0
    %1973 = vmatprep.mubr.f32.mxu0 %v1607
    %1974 = vmatmul.mubr.f32.gmra.mrb[0].mxu0 %v1606
    %v1975 = vpop.f32.mrb[0].mxu0
    %v1976 = vadd.f32 0.0, %v1975
    %v1977 = vpop.f32.mrb[0].mxu0
    %1978 = vmatprep.mubr.f32.mxu0 %v1610
    %1979 = vmatmul.mubr.f32.gmra.mrb[0].mxu0 %v1609
    %v1980 = vpop.f32.mrb[0].mxu0
    %v1981 = vadd.f32 0.0, %v1980
    %v1982 = vpop.f32.mrb[0].mxu0
    %1983 = vmatprep.mubr.f32.mxu0 %v1613
    %1984 = vmatmul.mubr.f32.gmra.mrb[0].mxu0 %v1612
    %v1985 = vpop.f32.mrb[0].mxu0
    %v1986 = vadd.f32 0.0, %v1985
    %v1987 = vpop.f32.mrb[0].mxu0
    %1988 = vmatprep.mubr.f32.mxu0 %v1616
    %1989 = vmatmul.mubr.f32.gmra.mrb[0].mxu0 %v1615
    %v1990 = vpop.f32.mrb[0].mxu0
    %v1991 = vadd.f32 0.0, %v1990
    %v1992 = vpop.f32.mrb[0].mxu0
    %1993 = vmatprep.mubr.f32.mxu0 %v1619
    %1994 = vmatmul.mubr.f32.gmra.mrb[0].mxu0 %v1618
    %v1995 = vpop.f32.mrb[0].mxu0
    %v1996 = vadd.f32 0.0, %v1995
    %v1997 = vpop.f32.mrb[0].mxu0
    %1998 = vmatprep.mubr.f32.mxu0 %v1622
    %1999 = vmatmul.mubr.f32.gmra.mrb[0].mxu0 %v1621
    %v2000 = vpop.f32.mrb[0].mxu0
    %v2001 = vadd.f32 0.0, %v2000
    %v2002 = vpop.f32.mrb[0].mxu0
    %2003 = vmatprep.mubr.f32.mxu0 %v1625
    %2004 = vmatmul.mubr.f32.gmra.mrb[0].mxu0 %v1624
    %v2005 = vpop.f32.mrb[0].mxu0
    %v2006 = vadd.f32 0.0, %v2005
    %v2007 = vpop.f32.mrb[0].mxu0
    %2008 = vmatprep.mubr.f32.mxu0 %v1628
    %2009 = vmatmul.mubr.f32.gmra.mrb[0].mxu0 %v1627
    %v2010 = vpop.f32.mrb[0].mxu0
    %v2011 = vadd.f32 0.0, %v2010
    %v2012 = vpop.f32.mrb[0].mxu0
    %2013 = vmatprep.mubr.f32.mxu0 %v1631
    %2014 = vmatmul.mubr.f32.gmra.mrb[0].mxu0 %v1630
    %v2015 = vpop.f32.mrb[0].mxu0
    %v2016 = vadd.f32 0.0, %v2015
    %v2017 = vpop.f32.mrb[0].mxu0
    %2018 = vmatprep.mubr.f32.mxu0 %v1634
    %2019 = vmatmul.mubr.f32.gmra.mrb[0].mxu0 %v1633
    %v2020 = vpop.f32.mrb[0].mxu0
    %v2021 = vadd.f32 0.0, %v2020
    %v2022 = vpop.f32.mrb[0].mxu0
    %2023 = vmatprep.mubr.f32.mxu0 %v1637
    %2024 = vmatmul.mubr.f32.gmra.mrb[0].mxu0 %v1636
    %v2025 = vpop.f32.mrb[0].mxu0
    %v2026 = vadd.f32 0.0, %v2025
    %v2027 = vpop.f32.mrb[0].mxu0
    %2028 = vmatprep.mubr.f32.mxu0 %v1640
    %2029 = vmatmul.mubr.f32.gmra.mrb[0].mxu0 %v1639
    %v2030 = vpop.f32.mrb[0].mxu0
    %v2031 = vadd.f32 0.0, %v2030
    %v2032 = vpop.f32.mrb[0].mxu0
    %2033 = vmatprep.mubr.f32.mxu0 %v1643
    %2034 = vmatmul.mubr.f32.gmra.mrb[0].mxu0 %v1642
    %v2035 = vpop.f32.mrb[0].mxu0
    %v2036 = vadd.f32 0.0, %v2035
    %v2037 = vpop.f32.mrb[0].mxu0
    %2038 = vmatprep.mubr.f32.mxu0 %v1646
    %2039 = vmatmul.mubr.f32.gmra.mrb[0].mxu0 %v1645
    %v2040 = vpop.f32.mrb[0].mxu0
    %v2041 = vadd.f32 0.0, %v2040
    %v2042 = vpop.f32.mrb[0].mxu0
    %2043 = vmatprep.mubr.f32.mxu0 %v1649
    %2044 = vmatmul.mubr.f32.gmra.mrb[0].mxu0 %v1648
    %v2045 = vpop.f32.mrb[0].mxu0
    %v2046 = vadd.f32 0.0, %v2045
    %v2047 = vpop.f32.mrb[0].mxu0
    %2048 = vmatprep.mubr.f32.mxu0 %v1652
    %2049 = vmatmul.mubr.f32.gmra.mrb[0].mxu0 %v1651
    %v2050 = vpop.f32.mrb[0].mxu0
    %v2051 = vadd.f32 0.0, %v2050
    %v2052 = vpop.f32.mrb[0].mxu0
    %2053 = vmatprep.mubr.f32.mxu0 %v1655
    %2054 = vmatmul.mubr.f32.gmra.mrb[0].mxu0 %v1654
    %v2055 = vpop.f32.mrb[0].mxu0
    %v2056 = vadd.f32 0.0, %v2055
    %v2057 = vpop.f32.mrb[0].mxu0
    %2058 = vmatprep.mubr.f32.mxu0 %v1658
    %2059 = vmatmul.mubr.f32.gmra.mrb[0].mxu0 %v1657
    %v2060 = vpop.f32.mrb[0].mxu0
    %v2061 = vadd.f32 0.0, %v2060
    %v2062 = vpop.f32.mrb[0].mxu0
    %2063 = vmatprep.mubr.f32.mxu0 %v1661
    %2064 = vmatmul.mubr.f32.gmra.mrb[0].mxu0 %v1660
    %v2065 = vpop.f32.mrb[0].mxu0
    %v2066 = vadd.f32 0.0, %v2065
    %v2067 = vpop.f32.mrb[0].mxu0
    %2068 = vmatprep.mubr.f32.mxu0 %v1664
    %2069 = vmatmul.mubr.f32.gmra.mrb[0].mxu0 %v1663
    %v2070 = vpop.f32.mrb[0].mxu0
    %v2071 = vadd.f32 0.0, %v2070
    %v2072 = vpop.f32.mrb[0].mxu0
    %2073 = vmatprep.mubr.f32.mxu0 %v1667
    %2074 = vmatmul.mubr.f32.gmra.mrb[0].mxu0 %v1666
    %v2075 = vpop.f32.mrb[0].mxu0
    %v2076 = vadd.f32 0.0, %v2075
    %v2077 = vpop.f32.mrb[0].mxu0
    %2078 = vmatprep.mubr.f32.mxu0 %v1670
    %2079 = vmatmul.mubr.f32.gmra.mrb[0].mxu0 %v1669
    %v2080 = vpop.f32.mrb[0].mxu0
    %v2081 = vadd.f32 0.0, %v2080
    %v2082 = vpop.f32.mrb[0].mxu0
    %2083 = vmatprep.mubr.f32.mxu0 %v1673
    %2084 = vmatmul.mubr.f32.gmra.mrb[0].mxu0 %v1672
    %v2085 = vpop.f32.mrb[0].mxu0
    %v2086 = vadd.f32 0.0, %v2085
    %v2087 = vpop.f32.mrb[0].mxu0
    %2088 = vmatprep.mubr.f32.mxu0 %v1676
    %2089 = vmatmul.mubr.f32.gmra.mrb[0].mxu0 %v1675
    %v2090 = vpop.f32.mrb[0].mxu0
    %v2091 = vadd.f32 0.0, %v2090
    %v2092 = vpop.f32.mrb[0].mxu0
    %2093 = vmatprep.mubr.f32.mxu0 %v1679
    %2094 = vmatmul.mubr.f32.gmra.mrb[0].mxu0 %v1678
    %v2095 = vpop.f32.mrb[0].mxu0
    %v2096 = vadd.f32 0.0, %v2095
    %v2097 = vpop.f32.mrb[0].mxu0
    %2098 = vmatprep.mubr.f32.mxu0 %v1682
    %2099 = vmatmul.mubr.f32.gmra.mrb[0].mxu0 %v1681
    %v2100 = vpop.f32.mrb[0].mxu0
    %v2101 = vadd.f32 0.0, %v2100
    %v2102 = vpop.f32.mrb[0].mxu0
    %2103 = vmatprep.mubr.f32.mxu0 %v1685
    %2104 = vmatmul.mubr.f32.gmra.mrb[0].mxu0 %v1684
    %v2105 = vpop.f32.mrb[0].mxu0
    %v2106 = vadd.f32 0.0, %v2105
    %v2107 = vpop.f32.mrb[0].mxu0
    %2108 = vmatprep.mubr.f32.mxu0 %v1688
    %2109 = vmatmul.mubr.f32.gmra.mrb[0].mxu0 %v1687
    %v2110 = vpop.f32.mrb[0].mxu0
    %v2111 = vadd.f32 0.0, %v2110
    %v2112 = vpop.f32.mrb[0].mxu0
    %2113 = vmatprep.mubr.f32.mxu0 %v1691
    %2114 = vmatmul.mubr.f32.gmra.mrb[0].mxu0 %v1690
    %v2115 = vpop.f32.mrb[0].mxu0
    %v2116 = vadd.f32 0.0, %v2115
    %v2117 = vpop.f32.mrb[0].mxu0
    %2118 = vmatprep.mubr.f32.mxu0 %v1694
    %2119 = vmatmul.mubr.f32.gmra.mrb[0].mxu0 %v1693
    %v2120 = vpop.f32.mrb[0].mxu0
    %v2121 = vadd.f32 0.0, %v2120
    %v2122 = vpop.f32.mrb[0].mxu0
    %2123 = vmatprep.mubr.f32.mxu0 %v1697
    %2124 = vmatmul.mubr.f32.gmra.mrb[0].mxu0 %v1696
    %v2125 = vpop.f32.mrb[0].mxu0
    %v2126 = vadd.f32 0.0, %v2125
    %v2127 = vpop.f32.mrb[0].mxu0
    %2128 = vmatprep.mubr.f32.mxu0 %v1700
    %2129 = vmatmul.mubr.f32.gmra.mrb[0].mxu0 %v1699
    %v2130 = vpop.f32.mrb[0].mxu0
    %v2131 = vadd.f32 0.0, %v2130
    %v2132 = vpop.f32.mrb[0].mxu0
    %2133 = vmatprep.mubr.f32.mxu0 %v1703
    %2134 = vmatmul.mubr.f32.gmra.mrb[0].mxu0 %v1702
    %v2135 = vpop.f32.mrb[0].mxu0
    %v2136 = vadd.f32 0.0, %v2135
    %v2137 = vpop.f32.mrb[0].mxu0
    %2138 = vdwg.mxu0
    %2139 = vmatprep.subr.mxu0 0.0
    %2140 = vmatpush1.msra.mxu0 %v1738
    %2141 = vmatprep.subr.mxu0 0.0
    %2142 = vmatpush1.msra.mxu0 %v1739
    %2143 = vmatprep.subr.mxu0 0.0
    %2144 = vmatpush1.msra.mxu0 %v1740
    %2145 = vmatprep.subr.mxu0 0.0
    %2146 = vmatpush1.msra.mxu0 %v1741
    %2147 = vmatprep.subr.mxu0 0.0
    %2148 = vmatpush1.msra.mxu0 %v1742
    %2149 = vmatprep.subr.mxu0 0.0
    %2150 = vmatpush1.msra.mxu0 %v1743
    %2151 = vmatprep.subr.mxu0 0.0
    %2152 = vmatpush1.msra.mxu0 %v1744
    %2153 = vmatprep.subr.mxu0 0.0
    %2154 = vmatpush1.msra.mxu0 %v1745
    %2155 = vmatprep.subr.mxu0 0.0
    %2156 = vmatpush1.msra.mxu0 %v1746
    %2157 = vmatprep.subr.mxu0 0.0
    %2158 = vmatpush1.msra.mxu0 %v1747
    %2159 = vmatprep.subr.mxu0 0.0
    %2160 = vmatpush1.msra.mxu0 %v1748
    %2161 = vmatprep.subr.mxu0 0.0
    %2162 = vmatpush1.msra.mxu0 %v1749
    %2163 = vmatprep.subr.mxu0 0.0
    %2164 = vmatpush1.msra.mxu0 %v1750
    %2165 = vmatprep.subr.mxu0 0.0
    %2166 = vmatpush1.msra.mxu0 %v1751
    %2167 = vmatprep.subr.mxu0 0.0
    %2168 = vmatpush1.msra.mxu0 %v1752
    %2169 = vmatprep.subr.mxu0 0.0
    %2170 = vmatpush1.msra.mxu0 %v1753
    %2171 = vmatprep.subr.mxu0 0.0
    %2172 = vmatpush1.msra.mxu0 0.0
    %2173 = vmatprep.subr.mxu0 0.0
    %2174 = vmatpush1.msra.mxu0 0.0
    %2175 = vmatprep.subr.mxu0 0.0
    %2176 = vmatpush1.msra.mxu0 0.0
    %2177 = vmatprep.subr.mxu0 0.0
    %2178 = vmatpush1.msra.mxu0 0.0
    %2179 = vmatprep.subr.mxu0 0.0
    %2180 = vmatpush1.msra.mxu0 0.0
    %2181 = vmatprep.subr.mxu0 0.0
    %2182 = vmatpush1.msra.mxu0 0.0
    %2183 = vmatprep.subr.mxu0 0.0
    %2184 = vmatpush1.msra.mxu0 0.0
    %2185 = vmatprep.subr.mxu0 0.0
    %2186 = vmatpush1.msra.mxu0 0.0
    %2187 = vmatprep.subr.mxu0 0.0
    %2188 = vmatpush1.msra.mxu0 0.0
    %2189 = vmatprep.subr.mxu0 0.0
    %2190 = vmatpush1.msra.mxu0 0.0
    %2191 = vmatprep.subr.mxu0 0.0
    %2192 = vmatpush1.msra.mxu0 0.0
    %2193 = vmatprep.subr.mxu0 0.0
    %2194 = vmatpush1.msra.mxu0 0.0
    %2195 = vmatprep.subr.mxu0 0.0
    %2196 = vmatpush1.msra.mxu0 0.0
    %2197 = vmatprep.subr.mxu0 0.0
    %2198 = vmatpush1.msra.mxu0 0.0
    %2199 = vmatprep.subr.mxu0 0.0
    %2200 = vmatpush1.msra.mxu0 0.0
    %2201 = vmatprep.subr.mxu0 0.0
    %2202 = vmatpush1.msra.mxu0 0.0
    %2203 = vmatprep.mubr.f32.mxu0 0.0
    %2204 = vmatmul.mubr.f32.gmra.mrb[0].mxu0 %v1515
    %v2205 = vpop.f32.mrb[0].mxu0
    %v2206 = vadd.f32 %v1821, %v2205
    %v2207 = vpop.f32.mrb[0].mxu0
    %2208 = vmatprep.mubr.f32.mxu0 0.0
    %2209 = vmatmul.mubr.f32.gmra.mrb[0].mxu0 %v1518
    %v2210 = vpop.f32.mrb[0].mxu0
    %v2211 = vadd.f32 %v1826, %v2210
    %v2212 = vpop.f32.mrb[0].mxu0
    %2213 = vmatprep.mubr.f32.mxu0 0.0
    %2214 = vmatmul.mubr.f32.gmra.mrb[0].mxu0 %v1521
    %v2215 = vpop.f32.mrb[0].mxu0
    %v2216 = vadd.f32 %v1831, %v2215
    %v2217 = vpop.f32.mrb[0].mxu0
    %2218 = vmatprep.mubr.f32.mxu0 0.0
    %2219 = vmatmul.mubr.f32.gmra.mrb[0].mxu0 %v1524
    %v2220 = vpop.f32.mrb[0].mxu0
    %v2221 = vadd.f32 %v1836, %v2220
    %v2222 = vpop.f32.mrb[0].mxu0
    %2223 = vmatprep.mubr.f32.mxu0 0.0
    %2224 = vmatmul.mubr.f32.gmra.mrb[0].mxu0 %v1527
    %v2225 = vpop.f32.mrb[0].mxu0
    %v2226 = vadd.f32 %v1841, %v2225
    %v2227 = vpop.f32.mrb[0].mxu0
    %2228 = vmatprep.mubr.f32.mxu0 0.0
    %2229 = vmatmul.mubr.f32.gmra.mrb[0].mxu0 %v1530
    %v2230 = vpop.f32.mrb[0].mxu0
    %v2231 = vadd.f32 %v1846, %v2230
    %v2232 = vpop.f32.mrb[0].mxu0
    %2233 = vmatprep.mubr.f32.mxu0 0.0
    %2234 = vmatmul.mubr.f32.gmra.mrb[0].mxu0 %v1533
    %v2235 = vpop.f32.mrb[0].mxu0
    %v2236 = vadd.f32 %v1851, %v2235
    %v2237 = vpop.f32.mrb[0].mxu0
    %2238 = vmatprep.mubr.f32.mxu0 0.0
    %2239 = vmatmul.mubr.f32.gmra.mrb[0].mxu0 %v1536
    %v2240 = vpop.f32.mrb[0].mxu0
    %v2241 = vadd.f32 %v1856, %v2240
    %v2242 = vpop.f32.mrb[0].mxu0
    %2243 = vmatprep.mubr.f32.mxu0 0.0
    %2244 = vmatmul.mubr.f32.gmra.mrb[0].mxu0 %v1539
    %v2245 = vpop.f32.mrb[0].mxu0
    %v2246 = vadd.f32 %v1861, %v2245
    %v2247 = vpop.f32.mrb[0].mxu0
    %2248 = vmatprep.mubr.f32.mxu0 0.0
    %2249 = vmatmul.mubr.f32.gmra.mrb[0].mxu0 %v1542
    %v2250 = vpop.f32.mrb[0].mxu0
    %v2251 = vadd.f32 %v1866, %v2250
    %v2252 = vpop.f32.mrb[0].mxu0
    %2253 = vmatprep.mubr.f32.mxu0 0.0
    %2254 = vmatmul.mubr.f32.gmra.mrb[0].mxu0 %v1545
    %v2255 = vpop.f32.mrb[0].mxu0
    %v2256 = vadd.f32 %v1871, %v2255
    %v2257 = vpop.f32.mrb[0].mxu0
    %2258 = vmatprep.mubr.f32.mxu0 0.0
    %2259 = vmatmul.mubr.f32.gmra.mrb[0].mxu0 %v1548
    %v2260 = vpop.f32.mrb[0].mxu0
    %v2261 = vadd.f32 %v1876, %v2260
    %v2262 = vpop.f32.mrb[0].mxu0
    %2263 = vmatprep.mubr.f32.mxu0 0.0
    %2264 = vmatmul.mubr.f32.gmra.mrb[0].mxu0 %v1551
    %v2265 = vpop.f32.mrb[0].mxu0
    %v2266 = vadd.f32 %v1881, %v2265
    %v2267 = vpop.f32.mrb[0].mxu0
    %2268 = vmatprep.mubr.f32.mxu0 0.0
    %2269 = vmatmul.mubr.f32.gmra.mrb[0].mxu0 %v1554
    %v2270 = vpop.f32.mrb[0].mxu0
    %v2271 = vadd.f32 %v1886, %v2270
    %v2272 = vpop.f32.mrb[0].mxu0
    %2273 = vmatprep.mubr.f32.mxu0 0.0
    %2274 = vmatmul.mubr.f32.gmra.mrb[0].mxu0 %v1557
    %v2275 = vpop.f32.mrb[0].mxu0
    %v2276 = vadd.f32 %v1891, %v2275
    %v2277 = vpop.f32.mrb[0].mxu0
    %2278 = vmatprep.mubr.f32.mxu0 0.0
    %2279 = vmatmul.mubr.f32.gmra.mrb[0].mxu0 %v1560
    %v2280 = vpop.f32.mrb[0].mxu0
    %v2281 = vadd.f32 %v1896, %v2280
    %v2282 = vpop.f32.mrb[0].mxu0
    %2283 = vmatprep.mubr.f32.mxu0 0.0
    %2284 = vmatmul.mubr.f32.gmra.mrb[0].mxu0 %v1563
    %v2285 = vpop.f32.mrb[0].mxu0
    %v2286 = vadd.f32 %v1901, %v2285
    %v2287 = vpop.f32.mrb[0].mxu0
    %2288 = vmatprep.mubr.f32.mxu0 0.0
    %2289 = vmatmul.mubr.f32.gmra.mrb[0].mxu0 %v1566
    %v2290 = vpop.f32.mrb[0].mxu0
    %v2291 = vadd.f32 %v1906, %v2290
    %v2292 = vpop.f32.mrb[0].mxu0
    %2293 = vmatprep.mubr.f32.mxu0 0.0
    %2294 = vmatmul.mubr.f32.gmra.mrb[0].mxu0 %v1569
    %v2295 = vpop.f32.mrb[0].mxu0
    %v2296 = vadd.f32 %v1911, %v2295
    %v2297 = vpop.f32.mrb[0].mxu0
    %2298 = vmatprep.mubr.f32.mxu0 0.0
    %2299 = vmatmul.mubr.f32.gmra.mrb[0].mxu0 %v1572
    %v2300 = vpop.f32.mrb[0].mxu0
    %v2301 = vadd.f32 %v1916, %v2300
    %v2302 = vpop.f32.mrb[0].mxu0
    %2303 = vmatprep.mubr.f32.mxu0 0.0
    %2304 = vmatmul.mubr.f32.gmra.mrb[0].mxu0 %v1575
    %v2305 = vpop.f32.mrb[0].mxu0
    %v2306 = vadd.f32 %v1921, %v2305
    %v2307 = vpop.f32.mrb[0].mxu0
    %2308 = vmatprep.mubr.f32.mxu0 0.0
    %2309 = vmatmul.mubr.f32.gmra.mrb[0].mxu0 %v1578
    %v2310 = vpop.f32.mrb[0].mxu0
    %v2311 = vadd.f32 %v1926, %v2310
    %v2312 = vpop.f32.mrb[0].mxu0
    %2313 = vmatprep.mubr.f32.mxu0 0.0
    %2314 = vmatmul.mubr.f32.gmra.mrb[0].mxu0 %v1581
    %v2315 = vpop.f32.mrb[0].mxu0
    %v2316 = vadd.f32 %v1931, %v2315
    %v2317 = vpop.f32.mrb[0].mxu0
    %2318 = vmatprep.mubr.f32.mxu0 0.0
    %2319 = vmatmul.mubr.f32.gmra.mrb[0].mxu0 %v1584
    %v2320 = vpop.f32.mrb[0].mxu0
    %v2321 = vadd.f32 %v1936, %v2320
    %v2322 = vpop.f32.mrb[0].mxu0
    %2323 = vmatprep.mubr.f32.mxu0 0.0
    %2324 = vmatmul.mubr.f32.gmra.mrb[0].mxu0 %v1587
    %v2325 = vpop.f32.mrb[0].mxu0
    %v2326 = vadd.f32 %v1941, %v2325
    %v2327 = vpop.f32.mrb[0].mxu0
    %2328 = vmatprep.mubr.f32.mxu0 0.0
    %2329 = vmatmul.mubr.f32.gmra.mrb[0].mxu0 %v1590
    %v2330 = vpop.f32.mrb[0].mxu0
    %v2331 = vadd.f32 %v1946, %v2330
    %v2332 = vpop.f32.mrb[0].mxu0
    %2333 = vmatprep.mubr.f32.mxu0 0.0
    %2334 = vmatmul.mubr.f32.gmra.mrb[0].mxu0 %v1593
    %v2335 = vpop.f32.mrb[0].mxu0
    %v2336 = vadd.f32 %v1951, %v2335
    %v2337 = vpop.f32.mrb[0].mxu0
    %2338 = vmatprep.mubr.f32.mxu0 0.0
    %2339 = vmatmul.mubr.f32.gmra.mrb[0].mxu0 %v1596
    %v2340 = vpop.f32.mrb[0].mxu0
    %v2341 = vadd.f32 %v1956, %v2340
    %v2342 = vpop.f32.mrb[0].mxu0
    %2343 = vmatprep.mubr.f32.mxu0 0.0
    %2344 = vmatmul.mubr.f32.gmra.mrb[0].mxu0 %v1599
    %v2345 = vpop.f32.mrb[0].mxu0
    %v2346 = vadd.f32 %v1961, %v2345
    %v2347 = vpop.f32.mrb[0].mxu0
    %2348 = vmatprep.mubr.f32.mxu0 0.0
    %2349 = vmatmul.mubr.f32.gmra.mrb[0].mxu0 %v1602
    %v2350 = vpop.f32.mrb[0].mxu0
    %v2351 = vadd.f32 %v1966, %v2350
    %v2352 = vpop.f32.mrb[0].mxu0
    %2353 = vmatprep.mubr.f32.mxu0 0.0
    %2354 = vmatmul.mubr.f32.gmra.mrb[0].mxu0 %v1605
    %v2355 = vpop.f32.mrb[0].mxu0
    %v2356 = vadd.f32 %v1971, %v2355
    %v2357 = vpop.f32.mrb[0].mxu0
    %2358 = vmatprep.mubr.f32.mxu0 0.0
    %2359 = vmatmul.mubr.f32.gmra.mrb[0].mxu0 %v1608
    %v2360 = vpop.f32.mrb[0].mxu0
    %v2361 = vadd.f32 %v1976, %v2360
    %v2362 = vpop.f32.mrb[0].mxu0
    %2363 = vmatprep.mubr.f32.mxu0 0.0
    %2364 = vmatmul.mubr.f32.gmra.mrb[0].mxu0 %v1611
    %v2365 = vpop.f32.mrb[0].mxu0
    %v2366 = vadd.f32 %v1981, %v2365
    %v2367 = vpop.f32.mrb[0].mxu0
    %2368 = vmatprep.mubr.f32.mxu0 0.0
    %2369 = vmatmul.mubr.f32.gmra.mrb[0].mxu0 %v1614
    %v2370 = vpop.f32.mrb[0].mxu0
    %v2371 = vadd.f32 %v1986, %v2370
    %v2372 = vpop.f32.mrb[0].mxu0
    %2373 = vmatprep.mubr.f32.mxu0 0.0
    %2374 = vmatmul.mubr.f32.gmra.mrb[0].mxu0 %v1617
    %v2375 = vpop.f32.mrb[0].mxu0
    %v2376 = vadd.f32 %v1991, %v2375
    %v2377 = vpop.f32.mrb[0].mxu0
    %2378 = vmatprep.mubr.f32.mxu0 0.0
    %2379 = vmatmul.mubr.f32.gmra.mrb[0].mxu0 %v1620
    %v2380 = vpop.f32.mrb[0].mxu0
    %v2381 = vadd.f32 %v1996, %v2380
    %v2382 = vpop.f32.mrb[0].mxu0
    %2383 = vmatprep.mubr.f32.mxu0 0.0
    %2384 = vmatmul.mubr.f32.gmra.mrb[0].mxu0 %v1623
    %v2385 = vpop.f32.mrb[0].mxu0
    %v2386 = vadd.f32 %v2001, %v2385
    %v2387 = vpop.f32.mrb[0].mxu0
    %2388 = vmatprep.mubr.f32.mxu0 0.0
    %2389 = vmatmul.mubr.f32.gmra.mrb[0].mxu0 %v1626
    %v2390 = vpop.f32.mrb[0].mxu0
    %v2391 = vadd.f32 %v2006, %v2390
    %v2392 = vpop.f32.mrb[0].mxu0
    %2393 = vmatprep.mubr.f32.mxu0 0.0
    %2394 = vmatmul.mubr.f32.gmra.mrb[0].mxu0 %v1629
    %v2395 = vpop.f32.mrb[0].mxu0
    %v2396 = vadd.f32 %v2011, %v2395
    %v2397 = vpop.f32.mrb[0].mxu0
    %2398 = vmatprep.mubr.f32.mxu0 0.0
    %2399 = vmatmul.mubr.f32.gmra.mrb[0].mxu0 %v1632
    %v2400 = vpop.f32.mrb[0].mxu0
    %v2401 = vadd.f32 %v2016, %v2400
    %v2402 = vpop.f32.mrb[0].mxu0
    %2403 = vmatprep.mubr.f32.mxu0 0.0
    %2404 = vmatmul.mubr.f32.gmra.mrb[0].mxu0 %v1635
    %v2405 = vpop.f32.mrb[0].mxu0
    %v2406 = vadd.f32 %v2021, %v2405
    %v2407 = vpop.f32.mrb[0].mxu0
    %2408 = vmatprep.mubr.f32.mxu0 0.0
    %2409 = vmatmul.mubr.f32.gmra.mrb[0].mxu0 %v1638
    %v2410 = vpop.f32.mrb[0].mxu0
    %v2411 = vadd.f32 %v2026, %v2410
    %v2412 = vpop.f32.mrb[0].mxu0
    %2413 = vmatprep.mubr.f32.mxu0 0.0
    %2414 = vmatmul.mubr.f32.gmra.mrb[0].mxu0 %v1641
    %v2415 = vpop.f32.mrb[0].mxu0
    %v2416 = vadd.f32 %v2031, %v2415
    %v2417 = vpop.f32.mrb[0].mxu0
    %2418 = vmatprep.mubr.f32.mxu0 0.0
    %2419 = vmatmul.mubr.f32.gmra.mrb[0].mxu0 %v1644
    %v2420 = vpop.f32.mrb[0].mxu0
    %v2421 = vadd.f32 %v2036, %v2420
    %v2422 = vpop.f32.mrb[0].mxu0
    %2423 = vmatprep.mubr.f32.mxu0 0.0
    %2424 = vmatmul.mubr.f32.gmra.mrb[0].mxu0 %v1647
    %v2425 = vpop.f32.mrb[0].mxu0
    %v2426 = vadd.f32 %v2041, %v2425
    %v2427 = vpop.f32.mrb[0].mxu0
    %2428 = vmatprep.mubr.f32.mxu0 0.0
    %2429 = vmatmul.mubr.f32.gmra.mrb[0].mxu0 %v1650
    %v2430 = vpop.f32.mrb[0].mxu0
    %v2431 = vadd.f32 %v2046, %v2430
    %v2432 = vpop.f32.mrb[0].mxu0
    %2433 = vmatprep.mubr.f32.mxu0 0.0
    %2434 = vmatmul.mubr.f32.gmra.mrb[0].mxu0 %v1653
    %v2435 = vpop.f32.mrb[0].mxu0
    %v2436 = vadd.f32 %v2051, %v2435
    %v2437 = vpop.f32.mrb[0].mxu0
    %2438 = vmatprep.mubr.f32.mxu0 0.0
    %2439 = vmatmul.mubr.f32.gmra.mrb[0].mxu0 %v1656
    %v2440 = vpop.f32.mrb[0].mxu0
    %v2441 = vadd.f32 %v2056, %v2440
    %v2442 = vpop.f32.mrb[0].mxu0
    %2443 = vmatprep.mubr.f32.mxu0 0.0
    %2444 = vmatmul.mubr.f32.gmra.mrb[0].mxu0 %v1659
    %v2445 = vpop.f32.mrb[0].mxu0
    %v2446 = vadd.f32 %v2061, %v2445
    %v2447 = vpop.f32.mrb[0].mxu0
    %2448 = vmatprep.mubr.f32.mxu0 0.0
    %2449 = vmatmul.mubr.f32.gmra.mrb[0].mxu0 %v1662
    %v2450 = vpop.f32.mrb[0].mxu0
    %v2451 = vadd.f32 %v2066, %v2450
    %v2452 = vpop.f32.mrb[0].mxu0
    %2453 = vmatprep.mubr.f32.mxu0 0.0
    %2454 = vmatmul.mubr.f32.gmra.mrb[0].mxu0 %v1665
    %v2455 = vpop.f32.mrb[0].mxu0
    %v2456 = vadd.f32 %v2071, %v2455
    %v2457 = vpop.f32.mrb[0].mxu0
    %2458 = vmatprep.mubr.f32.mxu0 0.0
    %2459 = vmatmul.mubr.f32.gmra.mrb[0].mxu0 %v1668
    %v2460 = vpop.f32.mrb[0].mxu0
    %v2461 = vadd.f32 %v2076, %v2460
    %v2462 = vpop.f32.mrb[0].mxu0
    %2463 = vmatprep.mubr.f32.mxu0 0.0
    %2464 = vmatmul.mubr.f32.gmra.mrb[0].mxu0 %v1671
    %v2465 = vpop.f32.mrb[0].mxu0
    %v2466 = vadd.f32 %v2081, %v2465
    %v2467 = vpop.f32.mrb[0].mxu0
    %2468 = vmatprep.mubr.f32.mxu0 0.0
    %2469 = vmatmul.mubr.f32.gmra.mrb[0].mxu0 %v1674
    %v2470 = vpop.f32.mrb[0].mxu0
    %v2471 = vadd.f32 %v2086, %v2470
    %v2472 = vpop.f32.mrb[0].mxu0
    %2473 = vmatprep.mubr.f32.mxu0 0.0
    %2474 = vmatmul.mubr.f32.gmra.mrb[0].mxu0 %v1677
    %v2475 = vpop.f32.mrb[0].mxu0
    %v2476 = vadd.f32 %v2091, %v2475
    %v2477 = vpop.f32.mrb[0].mxu0
    %2478 = vmatprep.mubr.f32.mxu0 0.0
    %2479 = vmatmul.mubr.f32.gmra.mrb[0].mxu0 %v1680
    %v2480 = vpop.f32.mrb[0].mxu0
    %v2481 = vadd.f32 %v2096, %v2480
    %v2482 = vpop.f32.mrb[0].mxu0
    %2483 = vmatprep.mubr.f32.mxu0 0.0
    %2484 = vmatmul.mubr.f32.gmra.mrb[0].mxu0 %v1683
    %v2485 = vpop.f32.mrb[0].mxu0
    %v2486 = vadd.f32 %v2101, %v2485
    %v2487 = vpop.f32.mrb[0].mxu0
    %2488 = vmatprep.mubr.f32.mxu0 0.0
    %2489 = vmatmul.mubr.f32.gmra.mrb[0].mxu0 %v1686
    %v2490 = vpop.f32.mrb[0].mxu0
    %v2491 = vadd.f32 %v2106, %v2490
    %v2492 = vpop.f32.mrb[0].mxu0
    %2493 = vmatprep.mubr.f32.mxu0 0.0
    %2494 = vmatmul.mubr.f32.gmra.mrb[0].mxu0 %v1689
    %v2495 = vpop.f32.mrb[0].mxu0
    %v2496 = vadd.f32 %v2111, %v2495
    %v2497 = vpop.f32.mrb[0].mxu0
    %2498 = vmatprep.mubr.f32.mxu0 0.0
    %2499 = vmatmul.mubr.f32.gmra.mrb[0].mxu0 %v1692
    %v2500 = vpop.f32.mrb[0].mxu0
    %v2501 = vadd.f32 %v2116, %v2500
    %v2502 = vpop.f32.mrb[0].mxu0
    %2503 = vmatprep.mubr.f32.mxu0 0.0
    %2504 = vmatmul.mubr.f32.gmra.mrb[0].mxu0 %v1695
    %v2505 = vpop.f32.mrb[0].mxu0
    %v2506 = vadd.f32 %v2121, %v2505
    %v2507 = vpop.f32.mrb[0].mxu0
    %2508 = vmatprep.mubr.f32.mxu0 0.0
    %2509 = vmatmul.mubr.f32.gmra.mrb[0].mxu0 %v1698
    %v2510 = vpop.f32.mrb[0].mxu0
    %v2511 = vadd.f32 %v2126, %v2510
    %v2512 = vpop.f32.mrb[0].mxu0
    %2513 = vmatprep.mubr.f32.mxu0 0.0
    %2514 = vmatmul.mubr.f32.gmra.mrb[0].mxu0 %v1701
    %v2515 = vpop.f32.mrb[0].mxu0
    %v2516 = vadd.f32 %v2131, %v2515
    %v2517 = vpop.f32.mrb[0].mxu0
    %2518 = vmatprep.mubr.f32.mxu0 0.0
    %2519 = vmatmul.mubr.f32.gmra.mrb[0].mxu0 %v1704
    %v2520 = vpop.f32.mrb[0].mxu0
    %v2521 = vadd.f32 %v2136, %v2520
    %v2522 = vpop.f32.mrb[0].mxu0
    %2523 = vdwg.mxu0
    %2524 = vmatprep.subr.mxu0 0.0
    %2525 = vmatpush1.msra.mxu0 %v1465
    %2526 = vmatprep.subr.mxu0 0.0
    %2527 = vmatpush1.msra.mxu0 %v1466
    %2528 = vmatprep.subr.mxu0 0.0
    %2529 = vmatpush1.msra.mxu0 %v1467
    %2530 = vmatprep.subr.mxu0 0.0
    %2531 = vmatpush1.msra.mxu0 %v1468
    %2532 = vmatprep.subr.mxu0 0.0
    %2533 = vmatpush1.msra.mxu0 %v1469
    %2534 = vmatprep.subr.mxu0 0.0
    %2535 = vmatpush1.msra.mxu0 %v1470
    %2536 = vmatprep.subr.mxu0 0.0
    %2537 = vmatpush1.msra.mxu0 %v1471
    %2538 = vmatprep.subr.mxu0 0.0
    %2539 = vmatpush1.msra.mxu0 %v1472
    %2540 = vmatprep.subr.mxu0 0.0
    %2541 = vmatpush1.msra.mxu0 %v1473
    %2542 = vmatprep.subr.mxu0 0.0
    %2543 = vmatpush1.msra.mxu0 %v1474
    %2544 = vmatprep.subr.mxu0 0.0
    %2545 = vmatpush1.msra.mxu0 %v1475
    %2546 = vmatprep.subr.mxu0 0.0
    %2547 = vmatpush1.msra.mxu0 %v1476
    %2548 = vmatprep.subr.mxu0 0.0
    %2549 = vmatpush1.msra.mxu0 %v1477
    %2550 = vmatprep.subr.mxu0 0.0
    %2551 = vmatpush1.msra.mxu0 %v1478
    %2552 = vmatprep.subr.mxu0 0.0
    %2553 = vmatpush1.msra.mxu0 %v1479
    %2554 = vmatprep.subr.mxu0 0.0
    %2555 = vmatpush1.msra.mxu0 %v1480
    %2556 = vmatprep.subr.mxu0 0.0
    %2557 = vmatpush1.msra.mxu0 %v1481
    %2558 = vmatprep.subr.mxu0 0.0
    %2559 = vmatpush1.msra.mxu0 %v1482
    %2560 = vmatprep.subr.mxu0 0.0
    %2561 = vmatpush1.msra.mxu0 %v1483
    %2562 = vmatprep.subr.mxu0 0.0
    %2563 = vmatpush1.msra.mxu0 %v1484
    %2564 = vmatprep.subr.mxu0 0.0
    %2565 = vmatpush1.msra.mxu0 %v1485
    %2566 = vmatprep.subr.mxu0 0.0
    %2567 = vmatpush1.msra.mxu0 %v1486
    %2568 = vmatprep.subr.mxu0 0.0
    %2569 = vmatpush1.msra.mxu0 %v1487
    %2570 = vmatprep.subr.mxu0 0.0
    %2571 = vmatpush1.msra.mxu0 %v1488
    %2572 = vmatprep.subr.mxu0 0.0
    %2573 = vmatpush1.msra.mxu0 %v1489
    %2574 = vmatprep.subr.mxu0 0.0
    %2575 = vmatpush1.msra.mxu0 %v1490
    %2576 = vmatprep.subr.mxu0 0.0
    %2577 = vmatpush1.msra.mxu0 %v1491
    %2578 = vmatprep.subr.mxu0 0.0
    %2579 = vmatpush1.msra.mxu0 %v1492
    %2580 = vmatprep.subr.mxu0 0.0
    %2581 = vmatpush1.msra.mxu0 %v1493
    %2582 = vmatprep.subr.mxu0 0.0
    %2583 = vmatpush1.msra.mxu0 %v1494
    %2584 = vmatprep.subr.mxu0 0.0
    %2585 = vmatpush1.msra.mxu0 %v1495
    %2586 = vmatprep.subr.mxu0 0.0
    %2587 = vmatpush1.msra.mxu0 %v1496
    %2588 = vmatprep.mubr.f32.mxu0 %v1274
    %2589 = vmatmul.mubr.f32.gmra.mrb[0].mxu0 %v1273
    %v2590 = vpop.f32.mrb[0].mxu0
    %v2591 = vadd.f32 %v2206, %v2590
    %v2592 = vpop.f32.mrb[0].mxu0
    %2593 = vmatprep.mubr.f32.mxu0 %v1277
    %2594 = vmatmul.mubr.f32.gmra.mrb[0].mxu0 %v1276
    %v2595 = vpop.f32.mrb[0].mxu0
    %v2596 = vadd.f32 %v2211, %v2595
    %v2597 = vpop.f32.mrb[0].mxu0
    %2598 = vmatprep.mubr.f32.mxu0 %v1280
    %2599 = vmatmul.mubr.f32.gmra.mrb[0].mxu0 %v1279
    %v2600 = vpop.f32.mrb[0].mxu0
    %v2601 = vadd.f32 %v2216, %v2600
    %v2602 = vpop.f32.mrb[0].mxu0
    %2603 = vmatprep.mubr.f32.mxu0 %v1283
    %2604 = vmatmul.mubr.f32.gmra.mrb[0].mxu0 %v1282
    %v2605 = vpop.f32.mrb[0].mxu0
    %v2606 = vadd.f32 %v2221, %v2605
    %v2607 = vpop.f32.mrb[0].mxu0
    %2608 = vmatprep.mubr.f32.mxu0 %v1286
    %2609 = vmatmul.mubr.f32.gmra.mrb[0].mxu0 %v1285
    %v2610 = vpop.f32.mrb[0].mxu0
    %v2611 = vadd.f32 %v2226, %v2610
    %v2612 = vpop.f32.mrb[0].mxu0
    %2613 = vmatprep.mubr.f32.mxu0 %v1289
    %2614 = vmatmul.mubr.f32.gmra.mrb[0].mxu0 %v1288
    %v2615 = vpop.f32.mrb[0].mxu0
    %v2616 = vadd.f32 %v2231, %v2615
    %v2617 = vpop.f32.mrb[0].mxu0
    %2618 = vmatprep.mubr.f32.mxu0 %v1292
    %2619 = vmatmul.mubr.f32.gmra.mrb[0].mxu0 %v1291
    %v2620 = vpop.f32.mrb[0].mxu0
    %v2621 = vadd.f32 %v2236, %v2620
    %v2622 = vpop.f32.mrb[0].mxu0
    %2623 = vmatprep.mubr.f32.mxu0 %v1295
    %2624 = vmatmul.mubr.f32.gmra.mrb[0].mxu0 %v1294
    %v2625 = vpop.f32.mrb[0].mxu0
    %v2626 = vadd.f32 %v2241, %v2625
    %v2627 = vpop.f32.mrb[0].mxu0
    %2628 = vmatprep.mubr.f32.mxu0 %v1298
    %2629 = vmatmul.mubr.f32.gmra.mrb[0].mxu0 %v1297
    %v2630 = vpop.f32.mrb[0].mxu0
    %v2631 = vadd.f32 %v2246, %v2630
    %v2632 = vpop.f32.mrb[0].mxu0
    %2633 = vmatprep.mubr.f32.mxu0 %v1301
    %2634 = vmatmul.mubr.f32.gmra.mrb[0].mxu0 %v1300
    %v2635 = vpop.f32.mrb[0].mxu0
    %v2636 = vadd.f32 %v2251, %v2635
    %v2637 = vpop.f32.mrb[0].mxu0
    %2638 = vmatprep.mubr.f32.mxu0 %v1304
    %2639 = vmatmul.mubr.f32.gmra.mrb[0].mxu0 %v1303
    %v2640 = vpop.f32.mrb[0].mxu0
    %v2641 = vadd.f32 %v2256, %v2640
    %v2642 = vpop.f32.mrb[0].mxu0
    %2643 = vmatprep.mubr.f32.mxu0 %v1307
    %2644 = vmatmul.mubr.f32.gmra.mrb[0].mxu0 %v1306
    %v2645 = vpop.f32.mrb[0].mxu0
    %v2646 = vadd.f32 %v2261, %v2645
    %v2647 = vpop.f32.mrb[0].mxu0
    %2648 = vmatprep.mubr.f32.mxu0 %v1310
    %2649 = vmatmul.mubr.f32.gmra.mrb[0].mxu0 %v1309
    %v2650 = vpop.f32.mrb[0].mxu0
    %v2651 = vadd.f32 %v2266, %v2650
    %v2652 = vpop.f32.mrb[0].mxu0
    %2653 = vmatprep.mubr.f32.mxu0 %v1313
    %2654 = vmatmul.mubr.f32.gmra.mrb[0].mxu0 %v1312
    %v2655 = vpop.f32.mrb[0].mxu0
    %v2656 = vadd.f32 %v2271, %v2655
    %v2657 = vpop.f32.mrb[0].mxu0
    %2658 = vmatprep.mubr.f32.mxu0 %v1316
    %2659 = vmatmul.mubr.f32.gmra.mrb[0].mxu0 %v1315
    %v2660 = vpop.f32.mrb[0].mxu0
    %v2661 = vadd.f32 %v2276, %v2660
    %v2662 = vpop.f32.mrb[0].mxu0
    %2663 = vmatprep.mubr.f32.mxu0 %v1319
    %2664 = vmatmul.mubr.f32.gmra.mrb[0].mxu0 %v1318
    %v2665 = vpop.f32.mrb[0].mxu0
    %v2666 = vadd.f32 %v2281, %v2665
    %v2667 = vpop.f32.mrb[0].mxu0
    %2668 = vmatprep.mubr.f32.mxu0 %v1322
    %2669 = vmatmul.mubr.f32.gmra.mrb[0].mxu0 %v1321
    %v2670 = vpop.f32.mrb[0].mxu0
    %v2671 = vadd.f32 %v2286, %v2670
    %v2672 = vpop.f32.mrb[0].mxu0
    %2673 = vmatprep.mubr.f32.mxu0 %v1325
    %2674 = vmatmul.mubr.f32.gmra.mrb[0].mxu0 %v1324
    %v2675 = vpop.f32.mrb[0].mxu0
    %v2676 = vadd.f32 %v2291, %v2675
    %v2677 = vpop.f32.mrb[0].mxu0
    %2678 = vmatprep.mubr.f32.mxu0 %v1328
    %2679 = vmatmul.mubr.f32.gmra.mrb[0].mxu0 %v1327
    %v2680 = vpop.f32.mrb[0].mxu0
    %v2681 = vadd.f32 %v2296, %v2680
    %v2682 = vpop.f32.mrb[0].mxu0
    %2683 = vmatprep.mubr.f32.mxu0 %v1331
    %2684 = vmatmul.mubr.f32.gmra.mrb[0].mxu0 %v1330
    %v2685 = vpop.f32.mrb[0].mxu0
    %v2686 = vadd.f32 %v2301, %v2685
    %v2687 = vpop.f32.mrb[0].mxu0
    %2688 = vmatprep.mubr.f32.mxu0 %v1334
    %2689 = vmatmul.mubr.f32.gmra.mrb[0].mxu0 %v1333
    %v2690 = vpop.f32.mrb[0].mxu0
    %v2691 = vadd.f32 %v2306, %v2690
    %v2692 = vpop.f32.mrb[0].mxu0
    %2693 = vmatprep.mubr.f32.mxu0 %v1337
    %2694 = vmatmul.mubr.f32.gmra.mrb[0].mxu0 %v1336
    %v2695 = vpop.f32.mrb[0].mxu0
    %v2696 = vadd.f32 %v2311, %v2695
    %v2697 = vpop.f32.mrb[0].mxu0
    %2698 = vmatprep.mubr.f32.mxu0 %v1340
    %2699 = vmatmul.mubr.f32.gmra.mrb[0].mxu0 %v1339
    %v2700 = vpop.f32.mrb[0].mxu0
    %v2701 = vadd.f32 %v2316, %v2700
    %v2702 = vpop.f32.mrb[0].mxu0
    %2703 = vmatprep.mubr.f32.mxu0 %v1343
    %2704 = vmatmul.mubr.f32.gmra.mrb[0].mxu0 %v1342
    %v2705 = vpop.f32.mrb[0].mxu0
    %v2706 = vadd.f32 %v2321, %v2705
    %v2707 = vpop.f32.mrb[0].mxu0
    %2708 = vmatprep.mubr.f32.mxu0 %v1346
    %2709 = vmatmul.mubr.f32.gmra.mrb[0].mxu0 %v1345
    %v2710 = vpop.f32.mrb[0].mxu0
    %v2711 = vadd.f32 %v2326, %v2710
    %v2712 = vpop.f32.mrb[0].mxu0
    %2713 = vmatprep.mubr.f32.mxu0 %v1349
    %2714 = vmatmul.mubr.f32.gmra.mrb[0].mxu0 %v1348
    %v2715 = vpop.f32.mrb[0].mxu0
    %v2716 = vadd.f32 %v2331, %v2715
    %v2717 = vpop.f32.mrb[0].mxu0
    %2718 = vmatprep.mubr.f32.mxu0 %v1352
    %2719 = vmatmul.mubr.f32.gmra.mrb[0].mxu0 %v1351
    %v2720 = vpop.f32.mrb[0].mxu0
    %v2721 = vadd.f32 %v2336, %v2720
    %v2722 = vpop.f32.mrb[0].mxu0
    %2723 = vmatprep.mubr.f32.mxu0 %v1355
    %2724 = vmatmul.mubr.f32.gmra.mrb[0].mxu0 %v1354
    %v2725 = vpop.f32.mrb[0].mxu0
    %v2726 = vadd.f32 %v2341, %v2725
    %v2727 = vpop.f32.mrb[0].mxu0
    %2728 = vmatprep.mubr.f32.mxu0 %v1358
    %2729 = vmatmul.mubr.f32.gmra.mrb[0].mxu0 %v1357
    %v2730 = vpop.f32.mrb[0].mxu0
    %v2731 = vadd.f32 %v2346, %v2730
    %v2732 = vpop.f32.mrb[0].mxu0
    %2733 = vmatprep.mubr.f32.mxu0 %v1361
    %2734 = vmatmul.mubr.f32.gmra.mrb[0].mxu0 %v1360
    %v2735 = vpop.f32.mrb[0].mxu0
    %v2736 = vadd.f32 %v2351, %v2735
    %v2737 = vpop.f32.mrb[0].mxu0
    %2738 = vmatprep.mubr.f32.mxu0 %v1364
    %2739 = vmatmul.mubr.f32.gmra.mrb[0].mxu0 %v1363
    %v2740 = vpop.f32.mrb[0].mxu0
    %v2741 = vadd.f32 %v2356, %v2740
    %v2742 = vpop.f32.mrb[0].mxu0
    %2743 = vmatprep.mubr.f32.mxu0 %v1367
    %2744 = vmatmul.mubr.f32.gmra.mrb[0].mxu0 %v1366
    %v2745 = vpop.f32.mrb[0].mxu0
    %v2746 = vadd.f32 %v2361, %v2745
    %v2747 = vpop.f32.mrb[0].mxu0
    %2748 = vmatprep.mubr.f32.mxu0 %v1370
    %2749 = vmatmul.mubr.f32.gmra.mrb[0].mxu0 %v1369
    %v2750 = vpop.f32.mrb[0].mxu0
    %v2751 = vadd.f32 %v2366, %v2750
    %v2752 = vpop.f32.mrb[0].mxu0
    %2753 = vmatprep.mubr.f32.mxu0 %v1373
    %2754 = vmatmul.mubr.f32.gmra.mrb[0].mxu0 %v1372
    %v2755 = vpop.f32.mrb[0].mxu0
    %v2756 = vadd.f32 %v2371, %v2755
    %v2757 = vpop.f32.mrb[0].mxu0
    %2758 = vmatprep.mubr.f32.mxu0 %v1376
    %2759 = vmatmul.mubr.f32.gmra.mrb[0].mxu0 %v1375
    %v2760 = vpop.f32.mrb[0].mxu0
    %v2761 = vadd.f32 %v2376, %v2760
    %v2762 = vpop.f32.mrb[0].mxu0
    %2763 = vmatprep.mubr.f32.mxu0 %v1379
    %2764 = vmatmul.mubr.f32.gmra.mrb[0].mxu0 %v1378
    %v2765 = vpop.f32.mrb[0].mxu0
    %v2766 = vadd.f32 %v2381, %v2765
    %v2767 = vpop.f32.mrb[0].mxu0
    %2768 = vmatprep.mubr.f32.mxu0 %v1382
    %2769 = vmatmul.mubr.f32.gmra.mrb[0].mxu0 %v1381
    %v2770 = vpop.f32.mrb[0].mxu0
    %v2771 = vadd.f32 %v2386, %v2770
    %v2772 = vpop.f32.mrb[0].mxu0
    %2773 = vmatprep.mubr.f32.mxu0 %v1385
    %2774 = vmatmul.mubr.f32.gmra.mrb[0].mxu0 %v1384
    %v2775 = vpop.f32.mrb[0].mxu0
    %v2776 = vadd.f32 %v2391, %v2775
    %v2777 = vpop.f32.mrb[0].mxu0
    %2778 = vmatprep.mubr.f32.mxu0 %v1388
    %2779 = vmatmul.mubr.f32.gmra.mrb[0].mxu0 %v1387
    %v2780 = vpop.f32.mrb[0].mxu0
    %v2781 = vadd.f32 %v2396, %v2780
    %v2782 = vpop.f32.mrb[0].mxu0
    %2783 = vmatprep.mubr.f32.mxu0 %v1391
    %2784 = vmatmul.mubr.f32.gmra.mrb[0].mxu0 %v1390
    %v2785 = vpop.f32.mrb[0].mxu0
    %v2786 = vadd.f32 %v2401, %v2785
    %v2787 = vpop.f32.mrb[0].mxu0
    %2788 = vmatprep.mubr.f32.mxu0 %v1394
    %2789 = vmatmul.mubr.f32.gmra.mrb[0].mxu0 %v1393
    %v2790 = vpop.f32.mrb[0].mxu0
    %v2791 = vadd.f32 %v2406, %v2790
    %v2792 = vpop.f32.mrb[0].mxu0
    %2793 = vmatprep.mubr.f32.mxu0 %v1397
    %2794 = vmatmul.mubr.f32.gmra.mrb[0].mxu0 %v1396
    %v2795 = vpop.f32.mrb[0].mxu0
    %v2796 = vadd.f32 %v2411, %v2795
    %v2797 = vpop.f32.mrb[0].mxu0
    %2798 = vmatprep.mubr.f32.mxu0 %v1400
    %2799 = vmatmul.mubr.f32.gmra.mrb[0].mxu0 %v1399
    %v2800 = vpop.f32.mrb[0].mxu0
    %v2801 = vadd.f32 %v2416, %v2800
    %v2802 = vpop.f32.mrb[0].mxu0
    %2803 = vmatprep.mubr.f32.mxu0 %v1403
    %2804 = vmatmul.mubr.f32.gmra.mrb[0].mxu0 %v1402
    %v2805 = vpop.f32.mrb[0].mxu0
    %v2806 = vadd.f32 %v2421, %v2805
    %v2807 = vpop.f32.mrb[0].mxu0
    %2808 = vmatprep.mubr.f32.mxu0 %v1406
    %2809 = vmatmul.mubr.f32.gmra.mrb[0].mxu0 %v1405
    %v2810 = vpop.f32.mrb[0].mxu0
    %v2811 = vadd.f32 %v2426, %v2810
    %v2812 = vpop.f32.mrb[0].mxu0
    %2813 = vmatprep.mubr.f32.mxu0 %v1409
    %2814 = vmatmul.mubr.f32.gmra.mrb[0].mxu0 %v1408
    %v2815 = vpop.f32.mrb[0].mxu0
    %v2816 = vadd.f32 %v2431, %v2815
    %v2817 = vpop.f32.mrb[0].mxu0
    %2818 = vmatprep.mubr.f32.mxu0 %v1412
    %2819 = vmatmul.mubr.f32.gmra.mrb[0].mxu0 %v1411
    %v2820 = vpop.f32.mrb[0].mxu0
    %v2821 = vadd.f32 %v2436, %v2820
    %v2822 = vpop.f32.mrb[0].mxu0
    %2823 = vmatprep.mubr.f32.mxu0 %v1415
    %2824 = vmatmul.mubr.f32.gmra.mrb[0].mxu0 %v1414
    %v2825 = vpop.f32.mrb[0].mxu0
    %v2826 = vadd.f32 %v2441, %v2825
    %v2827 = vpop.f32.mrb[0].mxu0
    %2828 = vmatprep.mubr.f32.mxu0 %v1418
    %2829 = vmatmul.mubr.f32.gmra.mrb[0].mxu0 %v1417
    %v2830 = vpop.f32.mrb[0].mxu0
    %v2831 = vadd.f32 %v2446, %v2830
    %v2832 = vpop.f32.mrb[0].mxu0
    %2833 = vmatprep.mubr.f32.mxu0 %v1421
    %2834 = vmatmul.mubr.f32.gmra.mrb[0].mxu0 %v1420
    %v2835 = vpop.f32.mrb[0].mxu0
    %v2836 = vadd.f32 %v2451, %v2835
    %v2837 = vpop.f32.mrb[0].mxu0
    %2838 = vmatprep.mubr.f32.mxu0 %v1424
    %2839 = vmatmul.mubr.f32.gmra.mrb[0].mxu0 %v1423
    %v2840 = vpop.f32.mrb[0].mxu0
    %v2841 = vadd.f32 %v2456, %v2840
    %v2842 = vpop.f32.mrb[0].mxu0
    %2843 = vmatprep.mubr.f32.mxu0 %v1427
    %2844 = vmatmul.mubr.f32.gmra.mrb[0].mxu0 %v1426
    %v2845 = vpop.f32.mrb[0].mxu0
    %v2846 = vadd.f32 %v2461, %v2845
    %v2847 = vpop.f32.mrb[0].mxu0
    %2848 = vmatprep.mubr.f32.mxu0 %v1430
    %2849 = vmatmul.mubr.f32.gmra.mrb[0].mxu0 %v1429
    %v2850 = vpop.f32.mrb[0].mxu0
    %v2851 = vadd.f32 %v2466, %v2850
    %v2852 = vpop.f32.mrb[0].mxu0
    %2853 = vmatprep.mubr.f32.mxu0 %v1433
    %2854 = vmatmul.mubr.f32.gmra.mrb[0].mxu0 %v1432
    %v2855 = vpop.f32.mrb[0].mxu0
    %v2856 = vadd.f32 %v2471, %v2855
    %v2857 = vpop.f32.mrb[0].mxu0
    %2858 = vmatprep.mubr.f32.mxu0 %v1436
    %2859 = vmatmul.mubr.f32.gmra.mrb[0].mxu0 %v1435
    %v2860 = vpop.f32.mrb[0].mxu0
    %v2861 = vadd.f32 %v2476, %v2860
    %v2862 = vpop.f32.mrb[0].mxu0
    %2863 = vmatprep.mubr.f32.mxu0 %v1439
    %2864 = vmatmul.mubr.f32.gmra.mrb[0].mxu0 %v1438
    %v2865 = vpop.f32.mrb[0].mxu0
    %v2866 = vadd.f32 %v2481, %v2865
    %v2867 = vpop.f32.mrb[0].mxu0
    %2868 = vmatprep.mubr.f32.mxu0 %v1442
    %2869 = vmatmul.mubr.f32.gmra.mrb[0].mxu0 %v1441
    %v2870 = vpop.f32.mrb[0].mxu0
    %v2871 = vadd.f32 %v2486, %v2870
    %v2872 = vpop.f32.mrb[0].mxu0
    %2873 = vmatprep.mubr.f32.mxu0 %v1445
    %2874 = vmatmul.mubr.f32.gmra.mrb[0].mxu0 %v1444
    %v2875 = vpop.f32.mrb[0].mxu0
    %v2876 = vadd.f32 %v2491, %v2875
    %v2877 = vpop.f32.mrb[0].mxu0
    %2878 = vmatprep.mubr.f32.mxu0 %v1448
    %2879 = vmatmul.mubr.f32.gmra.mrb[0].mxu0 %v1447
    %v2880 = vpop.f32.mrb[0].mxu0
    %v2881 = vadd.f32 %v2496, %v2880
    %v2882 = vpop.f32.mrb[0].mxu0
    %2883 = vmatprep.mubr.f32.mxu0 %v1451
    %2884 = vmatmul.mubr.f32.gmra.mrb[0].mxu0 %v1450
    %v2885 = vpop.f32.mrb[0].mxu0
    %v2886 = vadd.f32 %v2501, %v2885
    %v2887 = vpop.f32.mrb[0].mxu0
    %2888 = vmatprep.mubr.f32.mxu0 %v1454
    %2889 = vmatmul.mubr.f32.gmra.mrb[0].mxu0 %v1453
    %v2890 = vpop.f32.mrb[0].mxu0
    %v2891 = vadd.f32 %v2506, %v2890
    %v2892 = vpop.f32.mrb[0].mxu0
    %2893 = vmatprep.mubr.f32.mxu0 %v1457
    %2894 = vmatmul.mubr.f32.gmra.mrb[0].mxu0 %v1456
    %v2895 = vpop.f32.mrb[0].mxu0
    %v2896 = vadd.f32 %v2511, %v2895
    %v2897 = vpop.f32.mrb[0].mxu0
    %2898 = vmatprep.mubr.f32.mxu0 %v1460
    %2899 = vmatmul.mubr.f32.gmra.mrb[0].mxu0 %v1459
    %v2900 = vpop.f32.mrb[0].mxu0
    %v2901 = vadd.f32 %v2516, %v2900
    %v2902 = vpop.f32.mrb[0].mxu0
    %2903 = vmatprep.mubr.f32.mxu0 %v1463
    %2904 = vmatmul.mubr.f32.gmra.mrb[0].mxu0 %v1462
    %v2905 = vpop.f32.mrb[0].mxu0
    %v2906 = vadd.f32 %v2521, %v2905
    %v2907 = vpop.f32.mrb[0].mxu0
    %2908 = vdwg.mxu0
    %2909 = vmatprep.subr.mxu0 0.0
    %2910 = vmatpush1.msra.mxu0 %v1497
    %2911 = vmatprep.subr.mxu0 0.0
    %2912 = vmatpush1.msra.mxu0 %v1498
    %2913 = vmatprep.subr.mxu0 0.0
    %2914 = vmatpush1.msra.mxu0 %v1499
    %2915 = vmatprep.subr.mxu0 0.0
    %2916 = vmatpush1.msra.mxu0 %v1500
    %2917 = vmatprep.subr.mxu0 0.0
    %2918 = vmatpush1.msra.mxu0 %v1501
    %2919 = vmatprep.subr.mxu0 0.0
    %2920 = vmatpush1.msra.mxu0 %v1502
    %2921 = vmatprep.subr.mxu0 0.0
    %2922 = vmatpush1.msra.mxu0 %v1503
    %2923 = vmatprep.subr.mxu0 0.0
    %2924 = vmatpush1.msra.mxu0 %v1504
    %2925 = vmatprep.subr.mxu0 0.0
    %2926 = vmatpush1.msra.mxu0 %v1505
    %2927 = vmatprep.subr.mxu0 0.0
    %2928 = vmatpush1.msra.mxu0 %v1506
    %2929 = vmatprep.subr.mxu0 0.0
    %2930 = vmatpush1.msra.mxu0 %v1507
    %2931 = vmatprep.subr.mxu0 0.0
    %2932 = vmatpush1.msra.mxu0 %v1508
    %2933 = vmatprep.subr.mxu0 0.0
    %2934 = vmatpush1.msra.mxu0 %v1509
    %2935 = vmatprep.subr.mxu0 0.0
    %2936 = vmatpush1.msra.mxu0 %v1510
    %2937 = vmatprep.subr.mxu0 0.0
    %2938 = vmatpush1.msra.mxu0 %v1511
    %2939 = vmatprep.subr.mxu0 0.0
    %2940 = vmatpush1.msra.mxu0 %v1512
    %2941 = vmatprep.subr.mxu0 0.0
    %2942 = vmatpush1.msra.mxu0 0.0
    %2943 = vmatprep.subr.mxu0 0.0
    %2944 = vmatpush1.msra.mxu0 0.0
    %2945 = vmatprep.subr.mxu0 0.0
    %2946 = vmatpush1.msra.mxu0 0.0
    %2947 = vmatprep.subr.mxu0 0.0
    %2948 = vmatpush1.msra.mxu0 0.0
    %2949 = vmatprep.subr.mxu0 0.0
    %2950 = vmatpush1.msra.mxu0 0.0
    %2951 = vmatprep.subr.mxu0 0.0
    %2952 = vmatpush1.msra.mxu0 0.0
    %2953 = vmatprep.subr.mxu0 0.0
    %2954 = vmatpush1.msra.mxu0 0.0
    %2955 = vmatprep.subr.mxu0 0.0
    %2956 = vmatpush1.msra.mxu0 0.0
    %2957 = vmatprep.subr.mxu0 0.0
    %2958 = vmatpush1.msra.mxu0 0.0
    %2959 = vmatprep.subr.mxu0 0.0
    %2960 = vmatpush1.msra.mxu0 0.0
    %2961 = vmatprep.subr.mxu0 0.0
    %2962 = vmatpush1.msra.mxu0 0.0
    %2963 = vmatprep.subr.mxu0 0.0
    %2964 = vmatpush1.msra.mxu0 0.0
    %2965 = vmatprep.subr.mxu0 0.0
    %2966 = vmatpush1.msra.mxu0 0.0
    %2967 = vmatprep.subr.mxu0 0.0
    %2968 = vmatpush1.msra.mxu0 0.0
    %2969 = vmatprep.subr.mxu0 0.0
    %2970 = vmatpush1.msra.mxu0 0.0
    %2971 = vmatprep.subr.mxu0 0.0
    %2972 = vmatpush1.msra.mxu0 0.0
    %2973 = vmatprep.mubr.f32.mxu0 0.0
    %2974 = vmatmul.mubr.f32.gmra.mrb[0].mxu0 %v1275
    %v2975 = vpop.f32.mrb[0].mxu0
    %v2976 = vadd.f32 %v2591, %v2975
    %v2977 = vpop.f32.mrb[0].mxu0
    %2978 = vmatprep.mubr.f32.mxu0 0.0
    %2979 = vmatmul.mubr.f32.gmra.mrb[0].mxu0 %v1278
    %v2980 = vpop.f32.mrb[0].mxu0
    %v2981 = vadd.f32 %v2596, %v2980
    %v2982 = vpop.f32.mrb[0].mxu0
    %2983 = vmatprep.mubr.f32.mxu0 0.0
    %2984 = vmatmul.mubr.f32.gmra.mrb[0].mxu0 %v1281
    %v2985 = vpop.f32.mrb[0].mxu0
    %v2986 = vadd.f32 %v2601, %v2985
    %v2987 = vpop.f32.mrb[0].mxu0
    %2988 = vmatprep.mubr.f32.mxu0 0.0
    %2989 = vmatmul.mubr.f32.gmra.mrb[0].mxu0 %v1284
    %v2990 = vpop.f32.mrb[0].mxu0
    %v2991 = vadd.f32 %v2606, %v2990
    %v2992 = vpop.f32.mrb[0].mxu0
    %2993 = vmatprep.mubr.f32.mxu0 0.0
    %2994 = vmatmul.mubr.f32.gmra.mrb[0].mxu0 %v1287
    %v2995 = vpop.f32.mrb[0].mxu0
    %v2996 = vadd.f32 %v2611, %v2995
    %v2997 = vpop.f32.mrb[0].mxu0
    %2998 = vmatprep.mubr.f32.mxu0 0.0
    %2999 = vmatmul.mubr.f32.gmra.mrb[0].mxu0 %v1290
    %v3000 = vpop.f32.mrb[0].mxu0
    %v3001 = vadd.f32 %v2616, %v3000
    %v3002 = vpop.f32.mrb[0].mxu0
    %3003 = vmatprep.mubr.f32.mxu0 0.0
    %3004 = vmatmul.mubr.f32.gmra.mrb[0].mxu0 %v1293
    %v3005 = vpop.f32.mrb[0].mxu0
    %v3006 = vadd.f32 %v2621, %v3005
    %v3007 = vpop.f32.mrb[0].mxu0
    %3008 = vmatprep.mubr.f32.mxu0 0.0
    %3009 = vmatmul.mubr.f32.gmra.mrb[0].mxu0 %v1296
    %v3010 = vpop.f32.mrb[0].mxu0
    %v3011 = vadd.f32 %v2626, %v3010
    %v3012 = vpop.f32.mrb[0].mxu0
    %3013 = vmatprep.mubr.f32.mxu0 0.0
    %3014 = vmatmul.mubr.f32.gmra.mrb[0].mxu0 %v1299
    %v3015 = vpop.f32.mrb[0].mxu0
    %v3016 = vadd.f32 %v2631, %v3015
    %v3017 = vpop.f32.mrb[0].mxu0
    %3018 = vmatprep.mubr.f32.mxu0 0.0
    %3019 = vmatmul.mubr.f32.gmra.mrb[0].mxu0 %v1302
    %v3020 = vpop.f32.mrb[0].mxu0
    %v3021 = vadd.f32 %v2636, %v3020
    %v3022 = vpop.f32.mrb[0].mxu0
    %3023 = vmatprep.mubr.f32.mxu0 0.0
    %3024 = vmatmul.mubr.f32.gmra.mrb[0].mxu0 %v1305
    %v3025 = vpop.f32.mrb[0].mxu0
    %v3026 = vadd.f32 %v2641, %v3025
    %v3027 = vpop.f32.mrb[0].mxu0
    %3028 = vmatprep.mubr.f32.mxu0 0.0
    %3029 = vmatmul.mubr.f32.gmra.mrb[0].mxu0 %v1308
    %v3030 = vpop.f32.mrb[0].mxu0
    %v3031 = vadd.f32 %v2646, %v3030
    %v3032 = vpop.f32.mrb[0].mxu0
    %3033 = vmatprep.mubr.f32.mxu0 0.0
    %3034 = vmatmul.mubr.f32.gmra.mrb[0].mxu0 %v1311
    %v3035 = vpop.f32.mrb[0].mxu0
    %v3036 = vadd.f32 %v2651, %v3035
    %v3037 = vpop.f32.mrb[0].mxu0
    %3038 = vmatprep.mubr.f32.mxu0 0.0
    %3039 = vmatmul.mubr.f32.gmra.mrb[0].mxu0 %v1314
    %v3040 = vpop.f32.mrb[0].mxu0
    %v3041 = vadd.f32 %v2656, %v3040
    %v3042 = vpop.f32.mrb[0].mxu0
    %3043 = vmatprep.mubr.f32.mxu0 0.0
    %3044 = vmatmul.mubr.f32.gmra.mrb[0].mxu0 %v1317
    %v3045 = vpop.f32.mrb[0].mxu0
    %v3046 = vadd.f32 %v2661, %v3045
    %v3047 = vpop.f32.mrb[0].mxu0
    %3048 = vmatprep.mubr.f32.mxu0 0.0
    %3049 = vmatmul.mubr.f32.gmra.mrb[0].mxu0 %v1320
    %v3050 = vpop.f32.mrb[0].mxu0
    %v3051 = vadd.f32 %v2666, %v3050
    %v3052 = vpop.f32.mrb[0].mxu0
    %3053 = vmatprep.mubr.f32.mxu0 0.0
    %3054 = vmatmul.mubr.f32.gmra.mrb[0].mxu0 %v1323
    %v3055 = vpop.f32.mrb[0].mxu0
    %v3056 = vadd.f32 %v2671, %v3055
    %v3057 = vpop.f32.mrb[0].mxu0
    %3058 = vmatprep.mubr.f32.mxu0 0.0
    %3059 = vmatmul.mubr.f32.gmra.mrb[0].mxu0 %v1326
    %v3060 = vpop.f32.mrb[0].mxu0
    %v3061 = vadd.f32 %v2676, %v3060
    %v3062 = vpop.f32.mrb[0].mxu0
    %3063 = vmatprep.mubr.f32.mxu0 0.0
    %3064 = vmatmul.mubr.f32.gmra.mrb[0].mxu0 %v1329
    %v3065 = vpop.f32.mrb[0].mxu0
    %v3066 = vadd.f32 %v2681, %v3065
    %v3067 = vpop.f32.mrb[0].mxu0
    %3068 = vmatprep.mubr.f32.mxu0 0.0
    %3069 = vmatmul.mubr.f32.gmra.mrb[0].mxu0 %v1332
    %v3070 = vpop.f32.mrb[0].mxu0
    %v3071 = vadd.f32 %v2686, %v3070
    %v3072 = vpop.f32.mrb[0].mxu0
    %3073 = vmatprep.mubr.f32.mxu0 0.0
    %3074 = vmatmul.mubr.f32.gmra.mrb[0].mxu0 %v1335
    %v3075 = vpop.f32.mrb[0].mxu0
    %v3076 = vadd.f32 %v2691, %v3075
    %v3077 = vpop.f32.mrb[0].mxu0
    %3078 = vmatprep.mubr.f32.mxu0 0.0
    %3079 = vmatmul.mubr.f32.gmra.mrb[0].mxu0 %v1338
    %v3080 = vpop.f32.mrb[0].mxu0
    %v3081 = vadd.f32 %v2696, %v3080
    %v3082 = vpop.f32.mrb[0].mxu0
    %3083 = vmatprep.mubr.f32.mxu0 0.0
    %3084 = vmatmul.mubr.f32.gmra.mrb[0].mxu0 %v1341
    %v3085 = vpop.f32.mrb[0].mxu0
    %v3086 = vadd.f32 %v2701, %v3085
    %v3087 = vpop.f32.mrb[0].mxu0
    %3088 = vmatprep.mubr.f32.mxu0 0.0
    %3089 = vmatmul.mubr.f32.gmra.mrb[0].mxu0 %v1344
    %v3090 = vpop.f32.mrb[0].mxu0
    %v3091 = vadd.f32 %v2706, %v3090
    %v3092 = vpop.f32.mrb[0].mxu0
    %3093 = vmatprep.mubr.f32.mxu0 0.0
    %3094 = vmatmul.mubr.f32.gmra.mrb[0].mxu0 %v1347
    %v3095 = vpop.f32.mrb[0].mxu0
    %v3096 = vadd.f32 %v2711, %v3095
    %v3097 = vpop.f32.mrb[0].mxu0
    %3098 = vmatprep.mubr.f32.mxu0 0.0
    %3099 = vmatmul.mubr.f32.gmra.mrb[0].mxu0 %v1350
    %v3100 = vpop.f32.mrb[0].mxu0
    %v3101 = vadd.f32 %v2716, %v3100
    %v3102 = vpop.f32.mrb[0].mxu0
    %3103 = vmatprep.mubr.f32.mxu0 0.0
    %3104 = vmatmul.mubr.f32.gmra.mrb[0].mxu0 %v1353
    %v3105 = vpop.f32.mrb[0].mxu0
    %v3106 = vadd.f32 %v2721, %v3105
    %v3107 = vpop.f32.mrb[0].mxu0
    %3108 = vmatprep.mubr.f32.mxu0 0.0
    %3109 = vmatmul.mubr.f32.gmra.mrb[0].mxu0 %v1356
    %v3110 = vpop.f32.mrb[0].mxu0
    %v3111 = vadd.f32 %v2726, %v3110
    %v3112 = vpop.f32.mrb[0].mxu0
    %3113 = vmatprep.mubr.f32.mxu0 0.0
    %3114 = vmatmul.mubr.f32.gmra.mrb[0].mxu0 %v1359
    %v3115 = vpop.f32.mrb[0].mxu0
    %v3116 = vadd.f32 %v2731, %v3115
    %v3117 = vpop.f32.mrb[0].mxu0
    %3118 = vmatprep.mubr.f32.mxu0 0.0
    %3119 = vmatmul.mubr.f32.gmra.mrb[0].mxu0 %v1362
    %v3120 = vpop.f32.mrb[0].mxu0
    %v3121 = vadd.f32 %v2736, %v3120
    %v3122 = vpop.f32.mrb[0].mxu0
    %3123 = vmatprep.mubr.f32.mxu0 0.0
    %3124 = vmatmul.mubr.f32.gmra.mrb[0].mxu0 %v1365
    %v3125 = vpop.f32.mrb[0].mxu0
    %v3126 = vadd.f32 %v2741, %v3125
    %v3127 = vpop.f32.mrb[0].mxu0
    %3128 = vmatprep.mubr.f32.mxu0 0.0
    %3129 = vmatmul.mubr.f32.gmra.mrb[0].mxu0 %v1368
    %v3130 = vpop.f32.mrb[0].mxu0
    %v3131 = vadd.f32 %v2746, %v3130
    %v3132 = vpop.f32.mrb[0].mxu0
    %3133 = vmatprep.mubr.f32.mxu0 0.0
    %3134 = vmatmul.mubr.f32.gmra.mrb[0].mxu0 %v1371
    %v3135 = vpop.f32.mrb[0].mxu0
    %v3136 = vadd.f32 %v2751, %v3135
    %v3137 = vpop.f32.mrb[0].mxu0
    %3138 = vmatprep.mubr.f32.mxu0 0.0
    %3139 = vmatmul.mubr.f32.gmra.mrb[0].mxu0 %v1374
    %v3140 = vpop.f32.mrb[0].mxu0
    %v3141 = vadd.f32 %v2756, %v3140
    %v3142 = vpop.f32.mrb[0].mxu0
    %3143 = vmatprep.mubr.f32.mxu0 0.0
    %3144 = vmatmul.mubr.f32.gmra.mrb[0].mxu0 %v1377
    %v3145 = vpop.f32.mrb[0].mxu0
    %v3146 = vadd.f32 %v2761, %v3145
    %v3147 = vpop.f32.mrb[0].mxu0
    %3148 = vmatprep.mubr.f32.mxu0 0.0
    %3149 = vmatmul.mubr.f32.gmra.mrb[0].mxu0 %v1380
    %v3150 = vpop.f32.mrb[0].mxu0
    %v3151 = vadd.f32 %v2766, %v3150
    %v3152 = vpop.f32.mrb[0].mxu0
    %3153 = vmatprep.mubr.f32.mxu0 0.0
    %3154 = vmatmul.mubr.f32.gmra.mrb[0].mxu0 %v1383
    %v3155 = vpop.f32.mrb[0].mxu0
    %v3156 = vadd.f32 %v2771, %v3155
    %v3157 = vpop.f32.mrb[0].mxu0
    %3158 = vmatprep.mubr.f32.mxu0 0.0
    %3159 = vmatmul.mubr.f32.gmra.mrb[0].mxu0 %v1386
    %v3160 = vpop.f32.mrb[0].mxu0
    %v3161 = vadd.f32 %v2776, %v3160
    %v3162 = vpop.f32.mrb[0].mxu0
    %3163 = vmatprep.mubr.f32.mxu0 0.0
    %3164 = vmatmul.mubr.f32.gmra.mrb[0].mxu0 %v1389
    %v3165 = vpop.f32.mrb[0].mxu0
    %v3166 = vadd.f32 %v2781, %v3165
    %v3167 = vpop.f32.mrb[0].mxu0
    %3168 = vmatprep.mubr.f32.mxu0 0.0
    %3169 = vmatmul.mubr.f32.gmra.mrb[0].mxu0 %v1392
    %v3170 = vpop.f32.mrb[0].mxu0
    %v3171 = vadd.f32 %v2786, %v3170
    %v3172 = vpop.f32.mrb[0].mxu0
    %3173 = vmatprep.mubr.f32.mxu0 0.0
    %3174 = vmatmul.mubr.f32.gmra.mrb[0].mxu0 %v1395
    %v3175 = vpop.f32.mrb[0].mxu0
    %v3176 = vadd.f32 %v2791, %v3175
    %v3177 = vpop.f32.mrb[0].mxu0
    %3178 = vmatprep.mubr.f32.mxu0 0.0
    %3179 = vmatmul.mubr.f32.gmra.mrb[0].mxu0 %v1398
    %v3180 = vpop.f32.mrb[0].mxu0
    %v3181 = vadd.f32 %v2796, %v3180
    %v3182 = vpop.f32.mrb[0].mxu0
    %3183 = vmatprep.mubr.f32.mxu0 0.0
    %3184 = vmatmul.mubr.f32.gmra.mrb[0].mxu0 %v1401
    %v3185 = vpop.f32.mrb[0].mxu0
    %v3186 = vadd.f32 %v2801, %v3185
    %v3187 = vpop.f32.mrb[0].mxu0
    %3188 = vmatprep.mubr.f32.mxu0 0.0
    %3189 = vmatmul.mubr.f32.gmra.mrb[0].mxu0 %v1404
    %v3190 = vpop.f32.mrb[0].mxu0
    %v3191 = vadd.f32 %v2806, %v3190
    %v3192 = vpop.f32.mrb[0].mxu0
    %3193 = vmatprep.mubr.f32.mxu0 0.0
    %3194 = vmatmul.mubr.f32.gmra.mrb[0].mxu0 %v1407
    %v3195 = vpop.f32.mrb[0].mxu0
    %v3196 = vadd.f32 %v2811, %v3195
    %v3197 = vpop.f32.mrb[0].mxu0
    %3198 = vmatprep.mubr.f32.mxu0 0.0
    %3199 = vmatmul.mubr.f32.gmra.mrb[0].mxu0 %v1410
    %v3200 = vpop.f32.mrb[0].mxu0
    %v3201 = vadd.f32 %v2816, %v3200
    %v3202 = vpop.f32.mrb[0].mxu0
    %3203 = vmatprep.mubr.f32.mxu0 0.0
    %3204 = vmatmul.mubr.f32.gmra.mrb[0].mxu0 %v1413
    %v3205 = vpop.f32.mrb[0].mxu0
    %v3206 = vadd.f32 %v2821, %v3205
    %v3207 = vpop.f32.mrb[0].mxu0
    %3208 = vmatprep.mubr.f32.mxu0 0.0
    %3209 = vmatmul.mubr.f32.gmra.mrb[0].mxu0 %v1416
    %v3210 = vpop.f32.mrb[0].mxu0
    %v3211 = vadd.f32 %v2826, %v3210
    %v3212 = vpop.f32.mrb[0].mxu0
    %3213 = vmatprep.mubr.f32.mxu0 0.0
    %3214 = vmatmul.mubr.f32.gmra.mrb[0].mxu0 %v1419
    %v3215 = vpop.f32.mrb[0].mxu0
    %v3216 = vadd.f32 %v2831, %v3215
    %v3217 = vpop.f32.mrb[0].mxu0
    %3218 = vmatprep.mubr.f32.mxu0 0.0
    %3219 = vmatmul.mubr.f32.gmra.mrb[0].mxu0 %v1422
    %v3220 = vpop.f32.mrb[0].mxu0
    %v3221 = vadd.f32 %v2836, %v3220
    %v3222 = vpop.f32.mrb[0].mxu0
    %3223 = vmatprep.mubr.f32.mxu0 0.0
    %3224 = vmatmul.mubr.f32.gmra.mrb[0].mxu0 %v1425
    %v3225 = vpop.f32.mrb[0].mxu0
    %v3226 = vadd.f32 %v2841, %v3225
    %v3227 = vpop.f32.mrb[0].mxu0
    %3228 = vmatprep.mubr.f32.mxu0 0.0
    %3229 = vmatmul.mubr.f32.gmra.mrb[0].mxu0 %v1428
    %v3230 = vpop.f32.mrb[0].mxu0
    %v3231 = vadd.f32 %v2846, %v3230
    %v3232 = vpop.f32.mrb[0].mxu0
    %3233 = vmatprep.mubr.f32.mxu0 0.0
    %3234 = vmatmul.mubr.f32.gmra.mrb[0].mxu0 %v1431
    %v3235 = vpop.f32.mrb[0].mxu0
    %v3236 = vadd.f32 %v2851, %v3235
    %v3237 = vpop.f32.mrb[0].mxu0
    %3238 = vmatprep.mubr.f32.mxu0 0.0
    %3239 = vmatmul.mubr.f32.gmra.mrb[0].mxu0 %v1434
    %v3240 = vpop.f32.mrb[0].mxu0
    %v3241 = vadd.f32 %v2856, %v3240
    %v3242 = vpop.f32.mrb[0].mxu0
    %3243 = vmatprep.mubr.f32.mxu0 0.0
    %3244 = vmatmul.mubr.f32.gmra.mrb[0].mxu0 %v1437
    %v3245 = vpop.f32.mrb[0].mxu0
    %v3246 = vadd.f32 %v2861, %v3245
    %v3247 = vpop.f32.mrb[0].mxu0
    %3248 = vmatprep.mubr.f32.mxu0 0.0
    %3249 = vmatmul.mubr.f32.gmra.mrb[0].mxu0 %v1440
    %v3250 = vpop.f32.mrb[0].mxu0
    %v3251 = vadd.f32 %v2866, %v3250
    %v3252 = vpop.f32.mrb[0].mxu0
    %3253 = vmatprep.mubr.f32.mxu0 0.0
    %3254 = vmatmul.mubr.f32.gmra.mrb[0].mxu0 %v1443
    %v3255 = vpop.f32.mrb[0].mxu0
    %v3256 = vadd.f32 %v2871, %v3255
    %v3257 = vpop.f32.mrb[0].mxu0
    %3258 = vmatprep.mubr.f32.mxu0 0.0
    %3259 = vmatmul.mubr.f32.gmra.mrb[0].mxu0 %v1446
    %v3260 = vpop.f32.mrb[0].mxu0
    %v3261 = vadd.f32 %v2876, %v3260
    %v3262 = vpop.f32.mrb[0].mxu0
    %3263 = vmatprep.mubr.f32.mxu0 0.0
    %3264 = vmatmul.mubr.f32.gmra.mrb[0].mxu0 %v1449
    %v3265 = vpop.f32.mrb[0].mxu0
    %v3266 = vadd.f32 %v2881, %v3265
    %v3267 = vpop.f32.mrb[0].mxu0
    %3268 = vmatprep.mubr.f32.mxu0 0.0
    %3269 = vmatmul.mubr.f32.gmra.mrb[0].mxu0 %v1452
    %v3270 = vpop.f32.mrb[0].mxu0
    %v3271 = vadd.f32 %v2886, %v3270
    %v3272 = vpop.f32.mrb[0].mxu0
    %3273 = vmatprep.mubr.f32.mxu0 0.0
    %3274 = vmatmul.mubr.f32.gmra.mrb[0].mxu0 %v1455
    %v3275 = vpop.f32.mrb[0].mxu0
    %v3276 = vadd.f32 %v2891, %v3275
    %v3277 = vpop.f32.mrb[0].mxu0
    %3278 = vmatprep.mubr.f32.mxu0 0.0
    %3279 = vmatmul.mubr.f32.gmra.mrb[0].mxu0 %v1458
    %v3280 = vpop.f32.mrb[0].mxu0
    %v3281 = vadd.f32 %v2896, %v3280
    %v3282 = vpop.f32.mrb[0].mxu0
    %3283 = vmatprep.mubr.f32.mxu0 0.0
    %3284 = vmatmul.mubr.f32.gmra.mrb[0].mxu0 %v1461
    %v3285 = vpop.f32.mrb[0].mxu0
    %v3286 = vadd.f32 %v2901, %v3285
    %v3287 = vpop.f32.mrb[0].mxu0
    %3288 = vmatprep.mubr.f32.mxu0 0.0
    %3289 = vmatmul.mubr.f32.gmra.mrb[0].mxu0 %v1464
    %v3290 = vpop.f32.mrb[0].mxu0
    %v3291 = vadd.f32 %v2906, %v3290
    %v3292 = vpop.f32.mrb[0].mxu0
    %3293 = vdwg.mxu0
    %s3294 = scalar_lea.vmem [#allocation2], 96
    %v3295 = vld [vmem:[%s3294] sm:$0xff]
    %v3296 = vld [vmem:[%s3294 + $0x8] sm:$0xff]
    %v3297 = vld [vmem:[%s3294 + $0x10] sm:$0xff]
    %v3298 = vld [vmem:[%s3294 + $0x18] sm:$0xff]
    %v3299 = vld [vmem:[%s3294 + $0x20] sm:$0xff]
    %v3300 = vld [vmem:[%s3294 + $0x28] sm:$0xff]
    %v3301 = vld [vmem:[%s3294 + $0x30] sm:$0xff]
    %v3302 = vld [vmem:[%s3294 + $0x38] sm:$0xff]
    %v3303 = vld [vmem:[%s3294 + $0x40] sm:$0xff]
    %v3304 = vld [vmem:[%s3294 + $0x48] sm:$0xff]
    %v3305 = vld [vmem:[%s3294 + $0x50] sm:$0xff]
    %v3306 = vld [vmem:[%s3294 + $0x58] sm:$0xff]
    %v3307 = vld [vmem:[%s3294 + $0x60] sm:$0xff]
    %v3308 = vld [vmem:[%s3294 + $0x68] sm:$0xff]
    %v3309 = vld [vmem:[%s3294 + $0x70] sm:$0xff]
    %v3310 = vld [vmem:[%s3294 + $0x78] sm:$0xff]
    %v3311 = vld [vmem:[%s3294 + $0x80] sm:$0xff]
    %v3312 = vld [vmem:[%s3294 + $0x88] sm:$0xff]
    %v3313 = vld [vmem:[%s3294 + $0x90] sm:$0xff]
    %v3314 = vld [vmem:[%s3294 + $0x98] sm:$0xff]
    %v3315 = vld [vmem:[%s3294 + $0xa0] sm:$0xff]
    %v3316 = vld [vmem:[%s3294 + $0xa8] sm:$0xff]
    %v3317 = vld [vmem:[%s3294 + $0xb0] sm:$0xff]
    %v3318 = vld [vmem:[%s3294 + $0xb8] sm:$0xff]
    %v3319 = vld [vmem:[%s3294 + $0xc0] sm:$0xff]
    %v3320 = vld [vmem:[%s3294 + $0xc8] sm:$0xff]
    %v3321 = vld [vmem:[%s3294 + $0xd0] sm:$0xff]
    %v3322 = vld [vmem:[%s3294 + $0xd8] sm:$0xff]
    %v3323 = vld [vmem:[%s3294 + $0xe0] sm:$0xff]
    %v3324 = vld [vmem:[%s3294 + $0xe8] sm:$0xff]
    %v3325 = vld [vmem:[%s3294 + $0xf0] sm:$0xff]
    %v3326 = vld [vmem:[%s3294 + $0xf8] sm:$0xff]
    %v3327 = vld [vmem:[%s3294 + $0x100] sm:$0xff]
    %v3328 = vld [vmem:[%s3294 + $0x108] sm:$0xff]
    %v3329 = vld [vmem:[%s3294 + $0x110] sm:$0xff]
    %v3330 = vld [vmem:[%s3294 + $0x118] sm:$0xff]
    %v3331 = vld [vmem:[%s3294 + $0x120] sm:$0xff]
    %v3332 = vld [vmem:[%s3294 + $0x128] sm:$0xff]
    %v3333 = vld [vmem:[%s3294 + $0x130] sm:$0xff]
    %v3334 = vld [vmem:[%s3294 + $0x138] sm:$0xff]
    %v3335 = vld [vmem:[%s3294 + $0x140] sm:$0xff]
    %v3336 = vld [vmem:[%s3294 + $0x148] sm:$0xff]
    %v3337 = vld [vmem:[%s3294 + $0x150] sm:$0xff]
    %v3338 = vld [vmem:[%s3294 + $0x158] sm:$0xff]
    %v3339 = vld [vmem:[%s3294 + $0x160] sm:$0xff]
    %v3340 = vld [vmem:[%s3294 + $0x168] sm:$0xff]
    %v3341 = vld [vmem:[%s3294 + $0x170] sm:$0xff]
    %v3342 = vld [vmem:[%s3294 + $0x178] sm:$0xff]
    %v3343 = vld [vmem:[%s3294 + $0x180] sm:$0xff]
    %v3344 = vld [vmem:[%s3294 + $0x188] sm:$0xff]
    %v3345 = vld [vmem:[%s3294 + $0x190] sm:$0xff]
    %v3346 = vld [vmem:[%s3294 + $0x198] sm:$0xff]
    %v3347 = vld [vmem:[%s3294 + $0x1a0] sm:$0xff]
    %v3348 = vld [vmem:[%s3294 + $0x1a8] sm:$0xff]
    %v3349 = vld [vmem:[%s3294 + $0x1b0] sm:$0xff]
    %v3350 = vld [vmem:[%s3294 + $0x1b8] sm:$0xff]
    %v3351 = vld [vmem:[%s3294 + $0x1c0] sm:$0xff]
    %v3352 = vld [vmem:[%s3294 + $0x1c8] sm:$0xff]
    %v3353 = vld [vmem:[%s3294 + $0x1d0] sm:$0xff]
    %v3354 = vld [vmem:[%s3294 + $0x1d8] sm:$0xff]
    %v3355 = vld [vmem:[%s3294 + $0x1e0] sm:$0xff]
    %v3356 = vld [vmem:[%s3294 + $0x1e8] sm:$0xff]
    %v3357 = vld [vmem:[%s3294 + $0x1f0] sm:$0xff]
    %v3358 = vld [vmem:[%s3294 + $0x1f8] sm:$0xff]
    %v3359 = vld [vmem:[%s3294 + $0x200] sm:$0xff]
    %v3360 = vld [vmem:[%s3294 + $0x208] sm:$0xff]
    %v3361 = vld [vmem:[%s3294 + $0x210] sm:$0xff]
    %v3362 = vld [vmem:[%s3294 + $0x218] sm:$0xff]
    %v3363 = vld [vmem:[%s3294 + $0x220] sm:$0xff]
    %v3364 = vld [vmem:[%s3294 + $0x228] sm:$0xff]
    %v3365 = vld [vmem:[%s3294 + $0x230] sm:$0xff]
    %v3366 = vld [vmem:[%s3294 + $0x238] sm:$0xff]
    %v3367 = vld [vmem:[%s3294 + $0x240] sm:$0xff]
    %v3368 = vld [vmem:[%s3294 + $0x248] sm:$0xff]
    %v3369 = vld [vmem:[%s3294 + $0x250] sm:$0xff]
    %v3370 = vld [vmem:[%s3294 + $0x258] sm:$0xff]
    %v3371 = vld [vmem:[%s3294 + $0x260] sm:$0xff]
    %v3372 = vld [vmem:[%s3294 + $0x268] sm:$0xff]
    %v3373 = vld [vmem:[%s3294 + $0x270] sm:$0xff]
    %v3374 = vld [vmem:[%s3294 + $0x278] sm:$0xff]
    %v3375 = vld [vmem:[%s3294 + $0x280] sm:$0xff]
    %v3376 = vld [vmem:[%s3294 + $0x288] sm:$0xff]
    %v3377 = vld [vmem:[%s3294 + $0x290] sm:$0xff]
    %v3378 = vld [vmem:[%s3294 + $0x298] sm:$0xff]
    %v3379 = vld [vmem:[%s3294 + $0x2a0] sm:$0xff]
    %v3380 = vld [vmem:[%s3294 + $0x2a8] sm:$0xff]
    %v3381 = vld [vmem:[%s3294 + $0x2b0] sm:$0xff]
    %v3382 = vld [vmem:[%s3294 + $0x2b8] sm:$0xff]
    %v3383 = vld [vmem:[%s3294 + $0x2c0] sm:$0xff]
    %v3384 = vld [vmem:[%s3294 + $0x2c8] sm:$0xff]
    %v3385 = vld [vmem:[%s3294 + $0x2d0] sm:$0xff]
    %v3386 = vld [vmem:[%s3294 + $0x2d8] sm:$0xff]
    %v3387 = vld [vmem:[%s3294 + $0x2e0] sm:$0xff]
    %v3388 = vld [vmem:[%s3294 + $0x2e8] sm:$0xff]
    %v3389 = vld [vmem:[%s3294 + $0x2f0] sm:$0xff]
    %v3390 = vld [vmem:[%s3294 + $0x2f8] sm:$0xff]
    %v3391 = vld [vmem:[%s3294 + $0x360] sm:$0xff]
    %v3392 = vld [vmem:[%s3294 + $0x368] sm:$0xff]
    %v3393 = vld [vmem:[%s3294 + $0x370] sm:$0xff]
    %v3394 = vld [vmem:[%s3294 + $0x378] sm:$0xff]
    %v3395 = vld [vmem:[%s3294 + $0x380] sm:$0xff]
    %v3396 = vld [vmem:[%s3294 + $0x388] sm:$0xff]
    %v3397 = vld [vmem:[%s3294 + $0x390] sm:$0xff]
    %v3398 = vld [vmem:[%s3294 + $0x398] sm:$0xff]
    %v3399 = vld [vmem:[%s3294 + $0x3a0] sm:$0xff]
    %v3400 = vld [vmem:[%s3294 + $0x3a8] sm:$0xff]
    %v3401 = vld [vmem:[%s3294 + $0x3b0] sm:$0xff]
    %v3402 = vld [vmem:[%s3294 + $0x3b8] sm:$0xff]
    %v3403 = vld [vmem:[%s3294 + $0x3c0] sm:$0xff]
    %v3404 = vld [vmem:[%s3294 + $0x3c8] sm:$0xff]
    %v3405 = vld [vmem:[%s3294 + $0x3d0] sm:$0xff]
    %v3406 = vld [vmem:[%s3294 + $0x3d8] sm:$0xff]
    %v3407 = vld [vmem:[%s3294 + $0x3e0] sm:$0xff]
    %v3408 = vld [vmem:[%s3294 + $0x3e8] sm:$0xff]
    %v3409 = vld [vmem:[%s3294 + $0x3f0] sm:$0xff]
    %v3410 = vld [vmem:[%s3294 + $0x3f8] sm:$0xff]
    %v3411 = vld [vmem:[%s3294 + $0x400] sm:$0xff]
    %v3412 = vld [vmem:[%s3294 + $0x408] sm:$0xff]
    %v3413 = vld [vmem:[%s3294 + $0x410] sm:$0xff]
    %v3414 = vld [vmem:[%s3294 + $0x418] sm:$0xff]
    %v3415 = vld [vmem:[%s3294 + $0x420] sm:$0xff]
    %v3416 = vld [vmem:[%s3294 + $0x428] sm:$0xff]
    %v3417 = vld [vmem:[%s3294 + $0x430] sm:$0xff]
    %v3418 = vld [vmem:[%s3294 + $0x438] sm:$0xff]
    %v3419 = vld [vmem:[%s3294 + $0x440] sm:$0xff]
    %v3420 = vld [vmem:[%s3294 + $0x448] sm:$0xff]
    %v3421 = vld [vmem:[%s3294 + $0x450] sm:$0xff]
    %v3422 = vld [vmem:[%s3294 + $0x458] sm:$0xff]
    %v3423 = vld [vmem:[%s3294 + $0x460] sm:$0xff]
    %v3424 = vld [vmem:[%s3294 + $0x468] sm:$0xff]
    %v3425 = vld [vmem:[%s3294 + $0x470] sm:$0xff]
    %v3426 = vld [vmem:[%s3294 + $0x478] sm:$0xff]
    %v3427 = vld [vmem:[%s3294 + $0x480] sm:$0xff]
    %v3428 = vld [vmem:[%s3294 + $0x488] sm:$0xff]
    %v3429 = vld [vmem:[%s3294 + $0x490] sm:$0xff]
    %v3430 = vld [vmem:[%s3294 + $0x498] sm:$0xff]
    %v3431 = vld [vmem:[%s3294 + $0x4a0] sm:$0xff]
    %v3432 = vld [vmem:[%s3294 + $0x4a8] sm:$0xff]
    %v3433 = vld [vmem:[%s3294 + $0x4b0] sm:$0xff]
    %v3434 = vld [vmem:[%s3294 + $0x4b8] sm:$0xff]
    %v3435 = vld [vmem:[%s3294 + $0x4c0] sm:$0xff]
    %v3436 = vld [vmem:[%s3294 + $0x4c8] sm:$0xff]
    %v3437 = vld [vmem:[%s3294 + $0x4d0] sm:$0xff]
    %v3438 = vld [vmem:[%s3294 + $0x4d8] sm:$0xff]
    %v3439 = vld [vmem:[%s3294 + $0x4e0] sm:$0xff]
    %v3440 = vld [vmem:[%s3294 + $0x4e8] sm:$0xff]
    %v3441 = vld [vmem:[%s3294 + $0x4f0] sm:$0xff]
    %v3442 = vld [vmem:[%s3294 + $0x4f8] sm:$0xff]
    %v3443 = vld [vmem:[%s3294 + $0x500] sm:$0xff]
    %v3444 = vld [vmem:[%s3294 + $0x508] sm:$0xff]
    %v3445 = vld [vmem:[%s3294 + $0x510] sm:$0xff]
    %v3446 = vld [vmem:[%s3294 + $0x518] sm:$0xff]
    %v3447 = vld [vmem:[%s3294 + $0x520] sm:$0xff]
    %v3448 = vld [vmem:[%s3294 + $0x528] sm:$0xff]
    %v3449 = vld [vmem:[%s3294 + $0x530] sm:$0xff]
    %v3450 = vld [vmem:[%s3294 + $0x538] sm:$0xff]
    %v3451 = vld [vmem:[%s3294 + $0x540] sm:$0xff]
    %v3452 = vld [vmem:[%s3294 + $0x548] sm:$0xff]
    %v3453 = vld [vmem:[%s3294 + $0x550] sm:$0xff]
    %v3454 = vld [vmem:[%s3294 + $0x558] sm:$0xff]
    %v3455 = vld [vmem:[%s3294 + $0x560] sm:$0xff]
    %v3456 = vld [vmem:[%s3294 + $0x568] sm:$0xff]
    %v3457 = vld [vmem:[%s3294 + $0x570] sm:$0xff]
    %v3458 = vld [vmem:[%s3294 + $0x578] sm:$0xff]
    %v3459 = vld [vmem:[%s3294 + $0x580] sm:$0xff]
    %v3460 = vld [vmem:[%s3294 + $0x588] sm:$0xff]
    %v3461 = vld [vmem:[%s3294 + $0x590] sm:$0xff]
    %v3462 = vld [vmem:[%s3294 + $0x598] sm:$0xff]
    %v3463 = vld [vmem:[%s3294 + $0x5a0] sm:$0xff]
    %v3464 = vld [vmem:[%s3294 + $0x5a8] sm:$0xff]
    %v3465 = vld [vmem:[%s3294 + $0x5b0] sm:$0xff]
    %v3466 = vld [vmem:[%s3294 + $0x5b8] sm:$0xff]
    %v3467 = vld [vmem:[%s3294 + $0x5c0] sm:$0xff]
    %v3468 = vld [vmem:[%s3294 + $0x5c8] sm:$0xff]
    %v3469 = vld [vmem:[%s3294 + $0x5d0] sm:$0xff]
    %v3470 = vld [vmem:[%s3294 + $0x5d8] sm:$0xff]
    %v3471 = vld [vmem:[%s3294 + $0x5e0] sm:$0xff]
    %v3472 = vld [vmem:[%s3294 + $0x5e8] sm:$0xff]
    %v3473 = vld [vmem:[%s3294 + $0x5f0] sm:$0xff]
    %v3474 = vld [vmem:[%s3294 + $0x5f8] sm:$0xff]
    %v3475 = vld [vmem:[%s3294 + $0x600] sm:$0xff]
    %v3476 = vld [vmem:[%s3294 + $0x608] sm:$0xff]
    %v3477 = vld [vmem:[%s3294 + $0x610] sm:$0xff]
    %v3478 = vld [vmem:[%s3294 + $0x618] sm:$0xff]
    %v3479 = vld [vmem:[%s3294 + $0x620] sm:$0xff]
    %v3480 = vld [vmem:[%s3294 + $0x628] sm:$0xff]
    %v3481 = vld [vmem:[%s3294 + $0x630] sm:$0xff]
    %v3482 = vld [vmem:[%s3294 + $0x638] sm:$0xff]
    %v3483 = vld [vmem:[%s3294 + $0x640] sm:$0xff]
    %v3484 = vld [vmem:[%s3294 + $0x648] sm:$0xff]
    %v3485 = vld [vmem:[%s3294 + $0x650] sm:$0xff]
    %v3486 = vld [vmem:[%s3294 + $0x658] sm:$0xff]
    %s3487 = scalar_lea.vmem %s3, 768
    %v3488 = vld [vmem:[%s3487] sm:$0xff]
    %v3489 = vld [vmem:[%s3487 + $0x8] sm:$0xff]
    %v3490 = vld [vmem:[%s3487 + $0x10] sm:$0xff]
    %v3491 = vld [vmem:[%s3487 + $0x18] sm:$0xff]
    %v3492 = vld [vmem:[%s3487 + $0x20] sm:$0xff]
    %v3493 = vld [vmem:[%s3487 + $0x28] sm:$0xff]
    %v3494 = vld [vmem:[%s3487 + $0x30] sm:$0xff]
    %v3495 = vld [vmem:[%s3487 + $0x38] sm:$0xff]
    %v3496 = vld [vmem:[%s3487 + $0x40] sm:$0xff]
    %v3497 = vld [vmem:[%s3487 + $0x48] sm:$0xff]
    %v3498 = vld [vmem:[%s3487 + $0x50] sm:$0xff]
    %v3499 = vld [vmem:[%s3487 + $0x58] sm:$0xff]
    %v3500 = vld [vmem:[%s3487 + $0x60] sm:$0xff]
    %v3501 = vld [vmem:[%s3487 + $0x68] sm:$0xff]
    %v3502 = vld [vmem:[%s3487 + $0x70] sm:$0xff]
    %v3503 = vld [vmem:[%s3487 + $0x78] sm:$0xff]
    %v3504 = vld [vmem:[%s3487 + $0x80] sm:$0xff]
    %v3505 = vld [vmem:[%s3487 + $0x88] sm:$0xff]
    %v3506 = vld [vmem:[%s3487 + $0x90] sm:$0xff]
    %v3507 = vld [vmem:[%s3487 + $0x98] sm:$0xff]
    %v3508 = vld [vmem:[%s3487 + $0xa0] sm:$0xff]
    %v3509 = vld [vmem:[%s3487 + $0xa8] sm:$0xff]
    %v3510 = vld [vmem:[%s3487 + $0xb0] sm:$0xff]
    %v3511 = vld [vmem:[%s3487 + $0xb8] sm:$0xff]
    %v3512 = vld [vmem:[%s3487 + $0xc0] sm:$0xff]
    %v3513 = vld [vmem:[%s3487 + $0xc8] sm:$0xff]
    %v3514 = vld [vmem:[%s3487 + $0xd0] sm:$0xff]
    %v3515 = vld [vmem:[%s3487 + $0xd8] sm:$0xff]
    %v3516 = vld [vmem:[%s3487 + $0xe0] sm:$0xff]
    %v3517 = vld [vmem:[%s3487 + $0xe8] sm:$0xff]
    %v3518 = vld [vmem:[%s3487 + $0xf0] sm:$0xff]
    %v3519 = vld [vmem:[%s3487 + $0xf8] sm:$0xff]
    %v3520 = vld [vmem:[%s3487 + $0x100] sm:$0xff]
    %v3521 = vld [vmem:[%s3487 + $0x108] sm:$0xff]
    %v3522 = vld [vmem:[%s3487 + $0x110] sm:$0xff]
    %v3523 = vld [vmem:[%s3487 + $0x118] sm:$0xff]
    %v3524 = vld [vmem:[%s3487 + $0x120] sm:$0xff]
    %v3525 = vld [vmem:[%s3487 + $0x128] sm:$0xff]
    %v3526 = vld [vmem:[%s3487 + $0x130] sm:$0xff]
    %v3527 = vld [vmem:[%s3487 + $0x138] sm:$0xff]
    %v3528 = vld [vmem:[%s3487 + $0x140] sm:$0xff]
    %v3529 = vld [vmem:[%s3487 + $0x148] sm:$0xff]
    %v3530 = vld [vmem:[%s3487 + $0x150] sm:$0xff]
    %v3531 = vld [vmem:[%s3487 + $0x158] sm:$0xff]
    %v3532 = vld [vmem:[%s3487 + $0x160] sm:$0xff]
    %v3533 = vld [vmem:[%s3487 + $0x168] sm:$0xff]
    %v3534 = vld [vmem:[%s3487 + $0x170] sm:$0xff]
    %v3535 = vld [vmem:[%s3487 + $0x178] sm:$0xff]
    %3536 = vmatprep.subr.mxu0 0.0
    %3537 = vmatpush1.msra.mxu0 %v3488
    %3538 = vmatprep.subr.mxu0 0.0
    %3539 = vmatpush1.msra.mxu0 %v3489
    %3540 = vmatprep.subr.mxu0 0.0
    %3541 = vmatpush1.msra.mxu0 %v3490
    %3542 = vmatprep.subr.mxu0 0.0
    %3543 = vmatpush1.msra.mxu0 %v3491
    %3544 = vmatprep.subr.mxu0 0.0
    %3545 = vmatpush1.msra.mxu0 %v3492
    %3546 = vmatprep.subr.mxu0 0.0
    %3547 = vmatpush1.msra.mxu0 %v3493
    %3548 = vmatprep.subr.mxu0 0.0
    %3549 = vmatpush1.msra.mxu0 %v3494
    %3550 = vmatprep.subr.mxu0 0.0
    %3551 = vmatpush1.msra.mxu0 %v3495
    %3552 = vmatprep.subr.mxu0 0.0
    %3553 = vmatpush1.msra.mxu0 %v3496
    %3554 = vmatprep.subr.mxu0 0.0
    %3555 = vmatpush1.msra.mxu0 %v3497
    %3556 = vmatprep.subr.mxu0 0.0
    %3557 = vmatpush1.msra.mxu0 %v3498
    %3558 = vmatprep.subr.mxu0 0.0
    %3559 = vmatpush1.msra.mxu0 %v3499
    %3560 = vmatprep.subr.mxu0 0.0
    %3561 = vmatpush1.msra.mxu0 %v3500
    %3562 = vmatprep.subr.mxu0 0.0
    %3563 = vmatpush1.msra.mxu0 %v3501
    %3564 = vmatprep.subr.mxu0 0.0
    %3565 = vmatpush1.msra.mxu0 %v3502
    %3566 = vmatprep.subr.mxu0 0.0
    %3567 = vmatpush1.msra.mxu0 %v3503
    %3568 = vmatprep.subr.mxu0 0.0
    %3569 = vmatpush1.msra.mxu0 %v3504
    %3570 = vmatprep.subr.mxu0 0.0
    %3571 = vmatpush1.msra.mxu0 %v3505
    %3572 = vmatprep.subr.mxu0 0.0
    %3573 = vmatpush1.msra.mxu0 %v3506
    %3574 = vmatprep.subr.mxu0 0.0
    %3575 = vmatpush1.msra.mxu0 %v3507
    %3576 = vmatprep.subr.mxu0 0.0
    %3577 = vmatpush1.msra.mxu0 %v3508
    %3578 = vmatprep.subr.mxu0 0.0
    %3579 = vmatpush1.msra.mxu0 %v3509
    %3580 = vmatprep.subr.mxu0 0.0
    %3581 = vmatpush1.msra.mxu0 %v3510
    %3582 = vmatprep.subr.mxu0 0.0
    %3583 = vmatpush1.msra.mxu0 %v3511
    %3584 = vmatprep.subr.mxu0 0.0
    %3585 = vmatpush1.msra.mxu0 %v3512
    %3586 = vmatprep.subr.mxu0 0.0
    %3587 = vmatpush1.msra.mxu0 %v3513
    %3588 = vmatprep.subr.mxu0 0.0
    %3589 = vmatpush1.msra.mxu0 %v3514
    %3590 = vmatprep.subr.mxu0 0.0
    %3591 = vmatpush1.msra.mxu0 %v3515
    %3592 = vmatprep.subr.mxu0 0.0
    %3593 = vmatpush1.msra.mxu0 %v3516
    %3594 = vmatprep.subr.mxu0 0.0
    %3595 = vmatpush1.msra.mxu0 %v3517
    %3596 = vmatprep.subr.mxu0 0.0
    %3597 = vmatpush1.msra.mxu0 %v3518
    %3598 = vmatprep.subr.mxu0 0.0
    %3599 = vmatpush1.msra.mxu0 %v3519
    %3600 = vmatprep.mubr.f32.mxu0 %v3296
    %3601 = vmatmul.mubr.f32.gmra.mrb[0].mxu0 %v3295
    %v3602 = vpop.f32.mrb[0].mxu0
    %v3603 = vadd.f32 0.0, %v3602
    %v3604 = vpop.f32.mrb[0].mxu0
    %3605 = vmatprep.mubr.f32.mxu0 %v3299
    %3606 = vmatmul.mubr.f32.gmra.mrb[0].mxu0 %v3298
    %v3607 = vpop.f32.mrb[0].mxu0
    %v3608 = vadd.f32 0.0, %v3607
    %v3609 = vpop.f32.mrb[0].mxu0
    %3610 = vmatprep.mubr.f32.mxu0 %v3302
    %3611 = vmatmul.mubr.f32.gmra.mrb[0].mxu0 %v3301
    %v3612 = vpop.f32.mrb[0].mxu0
    %v3613 = vadd.f32 0.0, %v3612
    %v3614 = vpop.f32.mrb[0].mxu0
    %3615 = vmatprep.mubr.f32.mxu0 %v3305
    %3616 = vmatmul.mubr.f32.gmra.mrb[0].mxu0 %v3304
    %v3617 = vpop.f32.mrb[0].mxu0
    %v3618 = vadd.f32 0.0, %v3617
    %v3619 = vpop.f32.mrb[0].mxu0
    %3620 = vmatprep.mubr.f32.mxu0 %v3308
    %3621 = vmatmul.mubr.f32.gmra.mrb[0].mxu0 %v3307
    %v3622 = vpop.f32.mrb[0].mxu0
    %v3623 = vadd.f32 0.0, %v3622
    %v3624 = vpop.f32.mrb[0].mxu0
    %3625 = vmatprep.mubr.f32.mxu0 %v3311
    %3626 = vmatmul.mubr.f32.gmra.mrb[0].mxu0 %v3310
    %v3627 = vpop.f32.mrb[0].mxu0
    %v3628 = vadd.f32 0.0, %v3627
    %v3629 = vpop.f32.mrb[0].mxu0
    %3630 = vmatprep.mubr.f32.mxu0 %v3314
    %3631 = vmatmul.mubr.f32.gmra.mrb[0].mxu0 %v3313
    %v3632 = vpop.f32.mrb[0].mxu0
    %v3633 = vadd.f32 0.0, %v3632
    %v3634 = vpop.f32.mrb[0].mxu0
    %3635 = vmatprep.mubr.f32.mxu0 %v3317
    %3636 = vmatmul.mubr.f32.gmra.mrb[0].mxu0 %v3316
    %v3637 = vpop.f32.mrb[0].mxu0
    %v3638 = vadd.f32 0.0, %v3637
    %v3639 = vpop.f32.mrb[0].mxu0
    %3640 = vmatprep.mubr.f32.mxu0 %v3320
    %3641 = vmatmul.mubr.f32.gmra.mrb[0].mxu0 %v3319
    %v3642 = vpop.f32.mrb[0].mxu0
    %v3643 = vadd.f32 0.0, %v3642
    %v3644 = vpop.f32.mrb[0].mxu0
    %3645 = vmatprep.mubr.f32.mxu0 %v3323
    %3646 = vmatmul.mubr.f32.gmra.mrb[0].mxu0 %v3322
    %v3647 = vpop.f32.mrb[0].mxu0
    %v3648 = vadd.f32 0.0, %v3647
    %v3649 = vpop.f32.mrb[0].mxu0
    %3650 = vmatprep.mubr.f32.mxu0 %v3326
    %3651 = vmatmul.mubr.f32.gmra.mrb[0].mxu0 %v3325
    %v3652 = vpop.f32.mrb[0].mxu0
    %v3653 = vadd.f32 0.0, %v3652
    %v3654 = vpop.f32.mrb[0].mxu0
    %3655 = vmatprep.mubr.f32.mxu0 %v3329
    %3656 = vmatmul.mubr.f32.gmra.mrb[0].mxu0 %v3328
    %v3657 = vpop.f32.mrb[0].mxu0
    %v3658 = vadd.f32 0.0, %v3657
    %v3659 = vpop.f32.mrb[0].mxu0
    %3660 = vmatprep.mubr.f32.mxu0 %v3332
    %3661 = vmatmul.mubr.f32.gmra.mrb[0].mxu0 %v3331
    %v3662 = vpop.f32.mrb[0].mxu0
    %v3663 = vadd.f32 0.0, %v3662
    %v3664 = vpop.f32.mrb[0].mxu0
    %3665 = vmatprep.mubr.f32.mxu0 %v3335
    %3666 = vmatmul.mubr.f32.gmra.mrb[0].mxu0 %v3334
    %v3667 = vpop.f32.mrb[0].mxu0
    %v3668 = vadd.f32 0.0, %v3667
    %v3669 = vpop.f32.mrb[0].mxu0
    %3670 = vmatprep.mubr.f32.mxu0 %v3338
    %3671 = vmatmul.mubr.f32.gmra.mrb[0].mxu0 %v3337
    %v3672 = vpop.f32.mrb[0].mxu0
    %v3673 = vadd.f32 0.0, %v3672
    %v3674 = vpop.f32.mrb[0].mxu0
    %3675 = vmatprep.mubr.f32.mxu0 %v3341
    %3676 = vmatmul.mubr.f32.gmra.mrb[0].mxu0 %v3340
    %v3677 = vpop.f32.mrb[0].mxu0
    %v3678 = vadd.f32 0.0, %v3677
    %v3679 = vpop.f32.mrb[0].mxu0
    %3680 = vmatprep.mubr.f32.mxu0 %v3344
    %3681 = vmatmul.mubr.f32.gmra.mrb[0].mxu0 %v3343
    %v3682 = vpop.f32.mrb[0].mxu0
    %v3683 = vadd.f32 0.0, %v3682
    %v3684 = vpop.f32.mrb[0].mxu0
    %3685 = vmatprep.mubr.f32.mxu0 %v3347
    %3686 = vmatmul.mubr.f32.gmra.mrb[0].mxu0 %v3346
    %v3687 = vpop.f32.mrb[0].mxu0
    %v3688 = vadd.f32 0.0, %v3687
    %v3689 = vpop.f32.mrb[0].mxu0
    %3690 = vmatprep.mubr.f32.mxu0 %v3350
    %3691 = vmatmul.mubr.f32.gmra.mrb[0].mxu0 %v3349
    %v3692 = vpop.f32.mrb[0].mxu0
    %v3693 = vadd.f32 0.0, %v3692
    %v3694 = vpop.f32.mrb[0].mxu0
    %3695 = vmatprep.mubr.f32.mxu0 %v3353
    %3696 = vmatmul.mubr.f32.gmra.mrb[0].mxu0 %v3352
    %v3697 = vpop.f32.mrb[0].mxu0
    %v3698 = vadd.f32 0.0, %v3697
    %v3699 = vpop.f32.mrb[0].mxu0
    %3700 = vmatprep.mubr.f32.mxu0 %v3356
    %3701 = vmatmul.mubr.f32.gmra.mrb[0].mxu0 %v3355
    %v3702 = vpop.f32.mrb[0].mxu0
    %v3703 = vadd.f32 0.0, %v3702
    %v3704 = vpop.f32.mrb[0].mxu0
    %3705 = vmatprep.mubr.f32.mxu0 %v3359
    %3706 = vmatmul.mubr.f32.gmra.mrb[0].mxu0 %v3358
    %v3707 = vpop.f32.mrb[0].mxu0
    %v3708 = vadd.f32 0.0, %v3707
    %v3709 = vpop.f32.mrb[0].mxu0
    %3710 = vmatprep.mubr.f32.mxu0 %v3362
    %3711 = vmatmul.mubr.f32.gmra.mrb[0].mxu0 %v3361
    %v3712 = vpop.f32.mrb[0].mxu0
    %v3713 = vadd.f32 0.0, %v3712
    %v3714 = vpop.f32.mrb[0].mxu0
    %3715 = vmatprep.mubr.f32.mxu0 %v3365
    %3716 = vmatmul.mubr.f32.gmra.mrb[0].mxu0 %v3364
    %v3717 = vpop.f32.mrb[0].mxu0
    %v3718 = vadd.f32 0.0, %v3717
    %v3719 = vpop.f32.mrb[0].mxu0
    %3720 = vmatprep.mubr.f32.mxu0 %v3368
    %3721 = vmatmul.mubr.f32.gmra.mrb[0].mxu0 %v3367
    %v3722 = vpop.f32.mrb[0].mxu0
    %v3723 = vadd.f32 0.0, %v3722
    %v3724 = vpop.f32.mrb[0].mxu0
    %3725 = vmatprep.mubr.f32.mxu0 %v3371
    %3726 = vmatmul.mubr.f32.gmra.mrb[0].mxu0 %v3370
    %v3727 = vpop.f32.mrb[0].mxu0
    %v3728 = vadd.f32 0.0, %v3727
    %v3729 = vpop.f32.mrb[0].mxu0
    %3730 = vmatprep.mubr.f32.mxu0 %v3374
    %3731 = vmatmul.mubr.f32.gmra.mrb[0].mxu0 %v3373
    %v3732 = vpop.f32.mrb[0].mxu0
    %v3733 = vadd.f32 0.0, %v3732
    %v3734 = vpop.f32.mrb[0].mxu0
    %3735 = vmatprep.mubr.f32.mxu0 %v3377
    %3736 = vmatmul.mubr.f32.gmra.mrb[0].mxu0 %v3376
    %v3737 = vpop.f32.mrb[0].mxu0
    %v3738 = vadd.f32 0.0, %v3737
    %v3739 = vpop.f32.mrb[0].mxu0
    %3740 = vmatprep.mubr.f32.mxu0 %v3380
    %3741 = vmatmul.mubr.f32.gmra.mrb[0].mxu0 %v3379
    %v3742 = vpop.f32.mrb[0].mxu0
    %v3743 = vadd.f32 0.0, %v3742
    %v3744 = vpop.f32.mrb[0].mxu0
    %3745 = vmatprep.mubr.f32.mxu0 %v3383
    %3746 = vmatmul.mubr.f32.gmra.mrb[0].mxu0 %v3382
    %v3747 = vpop.f32.mrb[0].mxu0
    %v3748 = vadd.f32 0.0, %v3747
    %v3749 = vpop.f32.mrb[0].mxu0
    %3750 = vmatprep.mubr.f32.mxu0 %v3386
    %3751 = vmatmul.mubr.f32.gmra.mrb[0].mxu0 %v3385
    %v3752 = vpop.f32.mrb[0].mxu0
    %v3753 = vadd.f32 0.0, %v3752
    %v3754 = vpop.f32.mrb[0].mxu0
    %3755 = vmatprep.mubr.f32.mxu0 %v3389
    %3756 = vmatmul.mubr.f32.gmra.mrb[0].mxu0 %v3388
    %v3757 = vpop.f32.mrb[0].mxu0
    %v3758 = vadd.f32 0.0, %v3757
    %v3759 = vpop.f32.mrb[0].mxu0
    %3760 = vmatprep.mubr.f32.mxu0 %v3392
    %3761 = vmatmul.mubr.f32.gmra.mrb[0].mxu0 %v3391
    %v3762 = vpop.f32.mrb[0].mxu0
    %v3763 = vadd.f32 0.0, %v3762
    %v3764 = vpop.f32.mrb[0].mxu0
    %3765 = vmatprep.mubr.f32.mxu0 %v3395
    %3766 = vmatmul.mubr.f32.gmra.mrb[0].mxu0 %v3394
    %v3767 = vpop.f32.mrb[0].mxu0
    %v3768 = vadd.f32 0.0, %v3767
    %v3769 = vpop.f32.mrb[0].mxu0
    %3770 = vmatprep.mubr.f32.mxu0 %v3398
    %3771 = vmatmul.mubr.f32.gmra.mrb[0].mxu0 %v3397
    %v3772 = vpop.f32.mrb[0].mxu0
    %v3773 = vadd.f32 0.0, %v3772
    %v3774 = vpop.f32.mrb[0].mxu0
    %3775 = vmatprep.mubr.f32.mxu0 %v3401
    %3776 = vmatmul.mubr.f32.gmra.mrb[0].mxu0 %v3400
    %v3777 = vpop.f32.mrb[0].mxu0
    %v3778 = vadd.f32 0.0, %v3777
    %v3779 = vpop.f32.mrb[0].mxu0
    %3780 = vmatprep.mubr.f32.mxu0 %v3404
    %3781 = vmatmul.mubr.f32.gmra.mrb[0].mxu0 %v3403
    %v3782 = vpop.f32.mrb[0].mxu0
    %v3783 = vadd.f32 0.0, %v3782
    %v3784 = vpop.f32.mrb[0].mxu0
    %3785 = vmatprep.mubr.f32.mxu0 %v3407
    %3786 = vmatmul.mubr.f32.gmra.mrb[0].mxu0 %v3406
    %v3787 = vpop.f32.mrb[0].mxu0
    %v3788 = vadd.f32 0.0, %v3787
    %v3789 = vpop.f32.mrb[0].mxu0
    %3790 = vmatprep.mubr.f32.mxu0 %v3410
    %3791 = vmatmul.mubr.f32.gmra.mrb[0].mxu0 %v3409
    %v3792 = vpop.f32.mrb[0].mxu0
    %v3793 = vadd.f32 0.0, %v3792
    %v3794 = vpop.f32.mrb[0].mxu0
    %3795 = vmatprep.mubr.f32.mxu0 %v3413
    %3796 = vmatmul.mubr.f32.gmra.mrb[0].mxu0 %v3412
    %v3797 = vpop.f32.mrb[0].mxu0
    %v3798 = vadd.f32 0.0, %v3797
    %v3799 = vpop.f32.mrb[0].mxu0
    %3800 = vmatprep.mubr.f32.mxu0 %v3416
    %3801 = vmatmul.mubr.f32.gmra.mrb[0].mxu0 %v3415
    %v3802 = vpop.f32.mrb[0].mxu0
    %v3803 = vadd.f32 0.0, %v3802
    %v3804 = vpop.f32.mrb[0].mxu0
    %3805 = vmatprep.mubr.f32.mxu0 %v3419
    %3806 = vmatmul.mubr.f32.gmra.mrb[0].mxu0 %v3418
    %v3807 = vpop.f32.mrb[0].mxu0
    %v3808 = vadd.f32 0.0, %v3807
    %v3809 = vpop.f32.mrb[0].mxu0
    %3810 = vmatprep.mubr.f32.mxu0 %v3422
    %3811 = vmatmul.mubr.f32.gmra.mrb[0].mxu0 %v3421
    %v3812 = vpop.f32.mrb[0].mxu0
    %v3813 = vadd.f32 0.0, %v3812
    %v3814 = vpop.f32.mrb[0].mxu0
    %3815 = vmatprep.mubr.f32.mxu0 %v3425
    %3816 = vmatmul.mubr.f32.gmra.mrb[0].mxu0 %v3424
    %v3817 = vpop.f32.mrb[0].mxu0
    %v3818 = vadd.f32 0.0, %v3817
    %v3819 = vpop.f32.mrb[0].mxu0
    %3820 = vmatprep.mubr.f32.mxu0 %v3428
    %3821 = vmatmul.mubr.f32.gmra.mrb[0].mxu0 %v3427
    %v3822 = vpop.f32.mrb[0].mxu0
    %v3823 = vadd.f32 0.0, %v3822
    %v3824 = vpop.f32.mrb[0].mxu0
    %3825 = vmatprep.mubr.f32.mxu0 %v3431
    %3826 = vmatmul.mubr.f32.gmra.mrb[0].mxu0 %v3430
    %v3827 = vpop.f32.mrb[0].mxu0
    %v3828 = vadd.f32 0.0, %v3827
    %v3829 = vpop.f32.mrb[0].mxu0
    %3830 = vmatprep.mubr.f32.mxu0 %v3434
    %3831 = vmatmul.mubr.f32.gmra.mrb[0].mxu0 %v3433
    %v3832 = vpop.f32.mrb[0].mxu0
    %v3833 = vadd.f32 0.0, %v3832
    %v3834 = vpop.f32.mrb[0].mxu0
    %3835 = vmatprep.mubr.f32.mxu0 %v3437
    %3836 = vmatmul.mubr.f32.gmra.mrb[0].mxu0 %v3436
    %v3837 = vpop.f32.mrb[0].mxu0
    %v3838 = vadd.f32 0.0, %v3837
    %v3839 = vpop.f32.mrb[0].mxu0
    %3840 = vmatprep.mubr.f32.mxu0 %v3440
    %3841 = vmatmul.mubr.f32.gmra.mrb[0].mxu0 %v3439
    %v3842 = vpop.f32.mrb[0].mxu0
    %v3843 = vadd.f32 0.0, %v3842
    %v3844 = vpop.f32.mrb[0].mxu0
    %3845 = vmatprep.mubr.f32.mxu0 %v3443
    %3846 = vmatmul.mubr.f32.gmra.mrb[0].mxu0 %v3442
    %v3847 = vpop.f32.mrb[0].mxu0
    %v3848 = vadd.f32 0.0, %v3847
    %v3849 = vpop.f32.mrb[0].mxu0
    %3850 = vmatprep.mubr.f32.mxu0 %v3446
    %3851 = vmatmul.mubr.f32.gmra.mrb[0].mxu0 %v3445
    %v3852 = vpop.f32.mrb[0].mxu0
    %v3853 = vadd.f32 0.0, %v3852
    %v3854 = vpop.f32.mrb[0].mxu0
    %3855 = vmatprep.mubr.f32.mxu0 %v3449
    %3856 = vmatmul.mubr.f32.gmra.mrb[0].mxu0 %v3448
    %v3857 = vpop.f32.mrb[0].mxu0
    %v3858 = vadd.f32 0.0, %v3857
    %v3859 = vpop.f32.mrb[0].mxu0
    %3860 = vmatprep.mubr.f32.mxu0 %v3452
    %3861 = vmatmul.mubr.f32.gmra.mrb[0].mxu0 %v3451
    %v3862 = vpop.f32.mrb[0].mxu0
    %v3863 = vadd.f32 0.0, %v3862
    %v3864 = vpop.f32.mrb[0].mxu0
    %3865 = vmatprep.mubr.f32.mxu0 %v3455
    %3866 = vmatmul.mubr.f32.gmra.mrb[0].mxu0 %v3454
    %v3867 = vpop.f32.mrb[0].mxu0
    %v3868 = vadd.f32 0.0, %v3867
    %v3869 = vpop.f32.mrb[0].mxu0
    %3870 = vmatprep.mubr.f32.mxu0 %v3458
    %3871 = vmatmul.mubr.f32.gmra.mrb[0].mxu0 %v3457
    %v3872 = vpop.f32.mrb[0].mxu0
    %v3873 = vadd.f32 0.0, %v3872
    %v3874 = vpop.f32.mrb[0].mxu0
    %3875 = vmatprep.mubr.f32.mxu0 %v3461
    %3876 = vmatmul.mubr.f32.gmra.mrb[0].mxu0 %v3460
    %v3877 = vpop.f32.mrb[0].mxu0
    %v3878 = vadd.f32 0.0, %v3877
    %v3879 = vpop.f32.mrb[0].mxu0
    %3880 = vmatprep.mubr.f32.mxu0 %v3464
    %3881 = vmatmul.mubr.f32.gmra.mrb[0].mxu0 %v3463
    %v3882 = vpop.f32.mrb[0].mxu0
    %v3883 = vadd.f32 0.0, %v3882
    %v3884 = vpop.f32.mrb[0].mxu0
    %3885 = vmatprep.mubr.f32.mxu0 %v3467
    %3886 = vmatmul.mubr.f32.gmra.mrb[0].mxu0 %v3466
    %v3887 = vpop.f32.mrb[0].mxu0
    %v3888 = vadd.f32 0.0, %v3887
    %v3889 = vpop.f32.mrb[0].mxu0
    %3890 = vmatprep.mubr.f32.mxu0 %v3470
    %3891 = vmatmul.mubr.f32.gmra.mrb[0].mxu0 %v3469
    %v3892 = vpop.f32.mrb[0].mxu0
    %v3893 = vadd.f32 0.0, %v3892
    %v3894 = vpop.f32.mrb[0].mxu0
    %3895 = vmatprep.mubr.f32.mxu0 %v3473
    %3896 = vmatmul.mubr.f32.gmra.mrb[0].mxu0 %v3472
    %v3897 = vpop.f32.mrb[0].mxu0
    %v3898 = vadd.f32 0.0, %v3897
    %v3899 = vpop.f32.mrb[0].mxu0
    %3900 = vmatprep.mubr.f32.mxu0 %v3476
    %3901 = vmatmul.mubr.f32.gmra.mrb[0].mxu0 %v3475
    %v3902 = vpop.f32.mrb[0].mxu0
    %v3903 = vadd.f32 0.0, %v3902
    %v3904 = vpop.f32.mrb[0].mxu0
    %3905 = vmatprep.mubr.f32.mxu0 %v3479
    %3906 = vmatmul.mubr.f32.gmra.mrb[0].mxu0 %v3478
    %v3907 = vpop.f32.mrb[0].mxu0
    %v3908 = vadd.f32 0.0, %v3907
    %v3909 = vpop.f32.mrb[0].mxu0
    %3910 = vmatprep.mubr.f32.mxu0 %v3482
    %3911 = vmatmul.mubr.f32.gmra.mrb[0].mxu0 %v3481
    %v3912 = vpop.f32.mrb[0].mxu0
    %v3913 = vadd.f32 0.0, %v3912
    %v3914 = vpop.f32.mrb[0].mxu0
    %3915 = vmatprep.mubr.f32.mxu0 %v3485
    %3916 = vmatmul.mubr.f32.gmra.mrb[0].mxu0 %v3484
    %v3917 = vpop.f32.mrb[0].mxu0
    %v3918 = vadd.f32 0.0, %v3917
    %v3919 = vpop.f32.mrb[0].mxu0
    %3920 = vdwg.mxu0
    %3921 = vmatprep.subr.mxu0 0.0
    %3922 = vmatpush1.msra.mxu0 %v3520
    %3923 = vmatprep.subr.mxu0 0.0
    %3924 = vmatpush1.msra.mxu0 %v3521
    %3925 = vmatprep.subr.mxu0 0.0
    %3926 = vmatpush1.msra.mxu0 %v3522
    %3927 = vmatprep.subr.mxu0 0.0
    %3928 = vmatpush1.msra.mxu0 %v3523
    %3929 = vmatprep.subr.mxu0 0.0
    %3930 = vmatpush1.msra.mxu0 %v3524
    %3931 = vmatprep.subr.mxu0 0.0
    %3932 = vmatpush1.msra.mxu0 %v3525
    %3933 = vmatprep.subr.mxu0 0.0
    %3934 = vmatpush1.msra.mxu0 %v3526
    %3935 = vmatprep.subr.mxu0 0.0
    %3936 = vmatpush1.msra.mxu0 %v3527
    %3937 = vmatprep.subr.mxu0 0.0
    %3938 = vmatpush1.msra.mxu0 %v3528
    %3939 = vmatprep.subr.mxu0 0.0
    %3940 = vmatpush1.msra.mxu0 %v3529
    %3941 = vmatprep.subr.mxu0 0.0
    %3942 = vmatpush1.msra.mxu0 %v3530
    %3943 = vmatprep.subr.mxu0 0.0
    %3944 = vmatpush1.msra.mxu0 %v3531
    %3945 = vmatprep.subr.mxu0 0.0
    %3946 = vmatpush1.msra.mxu0 %v3532
    %3947 = vmatprep.subr.mxu0 0.0
    %3948 = vmatpush1.msra.mxu0 %v3533
    %3949 = vmatprep.subr.mxu0 0.0
    %3950 = vmatpush1.msra.mxu0 %v3534
    %3951 = vmatprep.subr.mxu0 0.0
    %3952 = vmatpush1.msra.mxu0 %v3535
    %3953 = vmatprep.subr.mxu0 0.0
    %3954 = vmatpush1.msra.mxu0 0.0
    %3955 = vmatprep.subr.mxu0 0.0
    %3956 = vmatpush1.msra.mxu0 0.0
    %3957 = vmatprep.subr.mxu0 0.0
    %3958 = vmatpush1.msra.mxu0 0.0
    %3959 = vmatprep.subr.mxu0 0.0
    %3960 = vmatpush1.msra.mxu0 0.0
    %3961 = vmatprep.subr.mxu0 0.0
    %3962 = vmatpush1.msra.mxu0 0.0
    %3963 = vmatprep.subr.mxu0 0.0
    %3964 = vmatpush1.msra.mxu0 0.0
    %3965 = vmatprep.subr.mxu0 0.0
    %3966 = vmatpush1.msra.mxu0 0.0
    %3967 = vmatprep.subr.mxu0 0.0
    %3968 = vmatpush1.msra.mxu0 0.0
    %3969 = vmatprep.subr.mxu0 0.0
    %3970 = vmatpush1.msra.mxu0 0.0
    %3971 = vmatprep.subr.mxu0 0.0
    %3972 = vmatpush1.msra.mxu0 0.0
    %3973 = vmatprep.subr.mxu0 0.0
    %3974 = vmatpush1.msra.mxu0 0.0
    %3975 = vmatprep.subr.mxu0 0.0
    %3976 = vmatpush1.msra.mxu0 0.0
    %3977 = vmatprep.subr.mxu0 0.0
    %3978 = vmatpush1.msra.mxu0 0.0
    %3979 = vmatprep.subr.mxu0 0.0
    %3980 = vmatpush1.msra.mxu0 0.0
    %3981 = vmatprep.subr.mxu0 0.0
    %3982 = vmatpush1.msra.mxu0 0.0
    %3983 = vmatprep.subr.mxu0 0.0
    %3984 = vmatpush1.msra.mxu0 0.0
    %3985 = vmatprep.mubr.f32.mxu0 0.0
    %3986 = vmatmul.mubr.f32.gmra.mrb[0].mxu0 %v3297
    %v3987 = vpop.f32.mrb[0].mxu0
    %v3988 = vadd.f32 %v3603, %v3987
    %v3989 = vpop.f32.mrb[0].mxu0
    %3990 = vmatprep.mubr.f32.mxu0 0.0
    %3991 = vmatmul.mubr.f32.gmra.mrb[0].mxu0 %v3300
    %v3992 = vpop.f32.mrb[0].mxu0
    %v3993 = vadd.f32 %v3608, %v3992
    %v3994 = vpop.f32.mrb[0].mxu0
    %3995 = vmatprep.mubr.f32.mxu0 0.0
    %3996 = vmatmul.mubr.f32.gmra.mrb[0].mxu0 %v3303
    %v3997 = vpop.f32.mrb[0].mxu0
    %v3998 = vadd.f32 %v3613, %v3997
    %v3999 = vpop.f32.mrb[0].mxu0
    %4000 = vmatprep.mubr.f32.mxu0 0.0
    %4001 = vmatmul.mubr.f32.gmra.mrb[0].mxu0 %v3306
    %v4002 = vpop.f32.mrb[0].mxu0
    %v4003 = vadd.f32 %v3618, %v4002
    %v4004 = vpop.f32.mrb[0].mxu0
    %4005 = vmatprep.mubr.f32.mxu0 0.0
    %4006 = vmatmul.mubr.f32.gmra.mrb[0].mxu0 %v3309
    %v4007 = vpop.f32.mrb[0].mxu0
    %v4008 = vadd.f32 %v3623, %v4007
    %v4009 = vpop.f32.mrb[0].mxu0
    %4010 = vmatprep.mubr.f32.mxu0 0.0
    %4011 = vmatmul.mubr.f32.gmra.mrb[0].mxu0 %v3312
    %v4012 = vpop.f32.mrb[0].mxu0
    %v4013 = vadd.f32 %v3628, %v4012
    %v4014 = vpop.f32.mrb[0].mxu0
    %4015 = vmatprep.mubr.f32.mxu0 0.0
    %4016 = vmatmul.mubr.f32.gmra.mrb[0].mxu0 %v3315
    %v4017 = vpop.f32.mrb[0].mxu0
    %v4018 = vadd.f32 %v3633, %v4017
    %v4019 = vpop.f32.mrb[0].mxu0
    %4020 = vmatprep.mubr.f32.mxu0 0.0
    %4021 = vmatmul.mubr.f32.gmra.mrb[0].mxu0 %v3318
    %v4022 = vpop.f32.mrb[0].mxu0
    %v4023 = vadd.f32 %v3638, %v4022
    %v4024 = vpop.f32.mrb[0].mxu0
    %4025 = vmatprep.mubr.f32.mxu0 0.0
    %4026 = vmatmul.mubr.f32.gmra.mrb[0].mxu0 %v3321
    %v4027 = vpop.f32.mrb[0].mxu0
    %v4028 = vadd.f32 %v3643, %v4027
    %v4029 = vpop.f32.mrb[0].mxu0
    %4030 = vmatprep.mubr.f32.mxu0 0.0
    %4031 = vmatmul.mubr.f32.gmra.mrb[0].mxu0 %v3324
    %v4032 = vpop.f32.mrb[0].mxu0
    %v4033 = vadd.f32 %v3648, %v4032
    %v4034 = vpop.f32.mrb[0].mxu0
    %4035 = vmatprep.mubr.f32.mxu0 0.0
    %4036 = vmatmul.mubr.f32.gmra.mrb[0].mxu0 %v3327
    %v4037 = vpop.f32.mrb[0].mxu0
    %v4038 = vadd.f32 %v3653, %v4037
    %v4039 = vpop.f32.mrb[0].mxu0
    %4040 = vmatprep.mubr.f32.mxu0 0.0
    %4041 = vmatmul.mubr.f32.gmra.mrb[0].mxu0 %v3330
    %v4042 = vpop.f32.mrb[0].mxu0
    %v4043 = vadd.f32 %v3658, %v4042
    %v4044 = vpop.f32.mrb[0].mxu0
    %4045 = vmatprep.mubr.f32.mxu0 0.0
    %4046 = vmatmul.mubr.f32.gmra.mrb[0].mxu0 %v3333
    %v4047 = vpop.f32.mrb[0].mxu0
    %v4048 = vadd.f32 %v3663, %v4047
    %v4049 = vpop.f32.mrb[0].mxu0
    %4050 = vmatprep.mubr.f32.mxu0 0.0
    %4051 = vmatmul.mubr.f32.gmra.mrb[0].mxu0 %v3336
    %v4052 = vpop.f32.mrb[0].mxu0
    %v4053 = vadd.f32 %v3668, %v4052
    %v4054 = vpop.f32.mrb[0].mxu0
    %4055 = vmatprep.mubr.f32.mxu0 0.0
    %4056 = vmatmul.mubr.f32.gmra.mrb[0].mxu0 %v3339
    %v4057 = vpop.f32.mrb[0].mxu0
    %v4058 = vadd.f32 %v3673, %v4057
    %v4059 = vpop.f32.mrb[0].mxu0
    %4060 = vmatprep.mubr.f32.mxu0 0.0
    %4061 = vmatmul.mubr.f32.gmra.mrb[0].mxu0 %v3342
    %v4062 = vpop.f32.mrb[0].mxu0
    %v4063 = vadd.f32 %v3678, %v4062
    %v4064 = vpop.f32.mrb[0].mxu0
    %4065 = vmatprep.mubr.f32.mxu0 0.0
    %4066 = vmatmul.mubr.f32.gmra.mrb[0].mxu0 %v3345
    %v4067 = vpop.f32.mrb[0].mxu0
    %v4068 = vadd.f32 %v3683, %v4067
    %v4069 = vpop.f32.mrb[0].mxu0
    %4070 = vmatprep.mubr.f32.mxu0 0.0
    %4071 = vmatmul.mubr.f32.gmra.mrb[0].mxu0 %v3348
    %v4072 = vpop.f32.mrb[0].mxu0
    %v4073 = vadd.f32 %v3688, %v4072
    %v4074 = vpop.f32.mrb[0].mxu0
    %4075 = vmatprep.mubr.f32.mxu0 0.0
    %4076 = vmatmul.mubr.f32.gmra.mrb[0].mxu0 %v3351
    %v4077 = vpop.f32.mrb[0].mxu0
    %v4078 = vadd.f32 %v3693, %v4077
    %v4079 = vpop.f32.mrb[0].mxu0
    %4080 = vmatprep.mubr.f32.mxu0 0.0
    %4081 = vmatmul.mubr.f32.gmra.mrb[0].mxu0 %v3354
    %v4082 = vpop.f32.mrb[0].mxu0
    %v4083 = vadd.f32 %v3698, %v4082
    %v4084 = vpop.f32.mrb[0].mxu0
    %4085 = vmatprep.mubr.f32.mxu0 0.0
    %4086 = vmatmul.mubr.f32.gmra.mrb[0].mxu0 %v3357
    %v4087 = vpop.f32.mrb[0].mxu0
    %v4088 = vadd.f32 %v3703, %v4087
    %v4089 = vpop.f32.mrb[0].mxu0
    %4090 = vmatprep.mubr.f32.mxu0 0.0
    %4091 = vmatmul.mubr.f32.gmra.mrb[0].mxu0 %v3360
    %v4092 = vpop.f32.mrb[0].mxu0
    %v4093 = vadd.f32 %v3708, %v4092
    %v4094 = vpop.f32.mrb[0].mxu0
    %4095 = vmatprep.mubr.f32.mxu0 0.0
    %4096 = vmatmul.mubr.f32.gmra.mrb[0].mxu0 %v3363
    %v4097 = vpop.f32.mrb[0].mxu0
    %v4098 = vadd.f32 %v3713, %v4097
    %v4099 = vpop.f32.mrb[0].mxu0
    %4100 = vmatprep.mubr.f32.mxu0 0.0
    %4101 = vmatmul.mubr.f32.gmra.mrb[0].mxu0 %v3366
    %v4102 = vpop.f32.mrb[0].mxu0
    %v4103 = vadd.f32 %v3718, %v4102
    %v4104 = vpop.f32.mrb[0].mxu0
    %4105 = vmatprep.mubr.f32.mxu0 0.0
    %4106 = vmatmul.mubr.f32.gmra.mrb[0].mxu0 %v3369
    %v4107 = vpop.f32.mrb[0].mxu0
    %v4108 = vadd.f32 %v3723, %v4107
    %v4109 = vpop.f32.mrb[0].mxu0
    %4110 = vmatprep.mubr.f32.mxu0 0.0
    %4111 = vmatmul.mubr.f32.gmra.mrb[0].mxu0 %v3372
    %v4112 = vpop.f32.mrb[0].mxu0
    %v4113 = vadd.f32 %v3728, %v4112
    %v4114 = vpop.f32.mrb[0].mxu0
    %4115 = vmatprep.mubr.f32.mxu0 0.0
    %4116 = vmatmul.mubr.f32.gmra.mrb[0].mxu0 %v3375
    %v4117 = vpop.f32.mrb[0].mxu0
    %v4118 = vadd.f32 %v3733, %v4117
    %v4119 = vpop.f32.mrb[0].mxu0
    %4120 = vmatprep.mubr.f32.mxu0 0.0
    %4121 = vmatmul.mubr.f32.gmra.mrb[0].mxu0 %v3378
    %v4122 = vpop.f32.mrb[0].mxu0
    %v4123 = vadd.f32 %v3738, %v4122
    %v4124 = vpop.f32.mrb[0].mxu0
    %4125 = vmatprep.mubr.f32.mxu0 0.0
    %4126 = vmatmul.mubr.f32.gmra.mrb[0].mxu0 %v3381
    %v4127 = vpop.f32.mrb[0].mxu0
    %v4128 = vadd.f32 %v3743, %v4127
    %v4129 = vpop.f32.mrb[0].mxu0
    %4130 = vmatprep.mubr.f32.mxu0 0.0
    %4131 = vmatmul.mubr.f32.gmra.mrb[0].mxu0 %v3384
    %v4132 = vpop.f32.mrb[0].mxu0
    %v4133 = vadd.f32 %v3748, %v4132
    %v4134 = vpop.f32.mrb[0].mxu0
    %4135 = vmatprep.mubr.f32.mxu0 0.0
    %4136 = vmatmul.mubr.f32.gmra.mrb[0].mxu0 %v3387
    %v4137 = vpop.f32.mrb[0].mxu0
    %v4138 = vadd.f32 %v3753, %v4137
    %v4139 = vpop.f32.mrb[0].mxu0
    %4140 = vmatprep.mubr.f32.mxu0 0.0
    %4141 = vmatmul.mubr.f32.gmra.mrb[0].mxu0 %v3390
    %v4142 = vpop.f32.mrb[0].mxu0
    %v4143 = vadd.f32 %v3758, %v4142
    %v4144 = vpop.f32.mrb[0].mxu0
    %4145 = vmatprep.mubr.f32.mxu0 0.0
    %4146 = vmatmul.mubr.f32.gmra.mrb[0].mxu0 %v3393
    %v4147 = vpop.f32.mrb[0].mxu0
    %v4148 = vadd.f32 %v3763, %v4147
    %v4149 = vpop.f32.mrb[0].mxu0
    %4150 = vmatprep.mubr.f32.mxu0 0.0
    %4151 = vmatmul.mubr.f32.gmra.mrb[0].mxu0 %v3396
    %v4152 = vpop.f32.mrb[0].mxu0
    %v4153 = vadd.f32 %v3768, %v4152
    %v4154 = vpop.f32.mrb[0].mxu0
    %4155 = vmatprep.mubr.f32.mxu0 0.0
    %4156 = vmatmul.mubr.f32.gmra.mrb[0].mxu0 %v3399
    %v4157 = vpop.f32.mrb[0].mxu0
    %v4158 = vadd.f32 %v3773, %v4157
    %v4159 = vpop.f32.mrb[0].mxu0
    %4160 = vmatprep.mubr.f32.mxu0 0.0
    %4161 = vmatmul.mubr.f32.gmra.mrb[0].mxu0 %v3402
    %v4162 = vpop.f32.mrb[0].mxu0
    %v4163 = vadd.f32 %v3778, %v4162
    %v4164 = vpop.f32.mrb[0].mxu0
    %4165 = vmatprep.mubr.f32.mxu0 0.0
    %4166 = vmatmul.mubr.f32.gmra.mrb[0].mxu0 %v3405
    %v4167 = vpop.f32.mrb[0].mxu0
    %v4168 = vadd.f32 %v3783, %v4167
    %v4169 = vpop.f32.mrb[0].mxu0
    %4170 = vmatprep.mubr.f32.mxu0 0.0
    %4171 = vmatmul.mubr.f32.gmra.mrb[0].mxu0 %v3408
    %v4172 = vpop.f32.mrb[0].mxu0
    %v4173 = vadd.f32 %v3788, %v4172
    %v4174 = vpop.f32.mrb[0].mxu0
    %4175 = vmatprep.mubr.f32.mxu0 0.0
    %4176 = vmatmul.mubr.f32.gmra.mrb[0].mxu0 %v3411
    %v4177 = vpop.f32.mrb[0].mxu0
    %v4178 = vadd.f32 %v3793, %v4177
    %v4179 = vpop.f32.mrb[0].mxu0
    %4180 = vmatprep.mubr.f32.mxu0 0.0
    %4181 = vmatmul.mubr.f32.gmra.mrb[0].mxu0 %v3414
    %v4182 = vpop.f32.mrb[0].mxu0
    %v4183 = vadd.f32 %v3798, %v4182
    %v4184 = vpop.f32.mrb[0].mxu0
    %4185 = vmatprep.mubr.f32.mxu0 0.0
    %4186 = vmatmul.mubr.f32.gmra.mrb[0].mxu0 %v3417
    %v4187 = vpop.f32.mrb[0].mxu0
    %v4188 = vadd.f32 %v3803, %v4187
    %v4189 = vpop.f32.mrb[0].mxu0
    %4190 = vmatprep.mubr.f32.mxu0 0.0
    %4191 = vmatmul.mubr.f32.gmra.mrb[0].mxu0 %v3420
    %v4192 = vpop.f32.mrb[0].mxu0
    %v4193 = vadd.f32 %v3808, %v4192
    %v4194 = vpop.f32.mrb[0].mxu0
    %4195 = vmatprep.mubr.f32.mxu0 0.0
    %4196 = vmatmul.mubr.f32.gmra.mrb[0].mxu0 %v3423
    %v4197 = vpop.f32.mrb[0].mxu0
    %v4198 = vadd.f32 %v3813, %v4197
    %v4199 = vpop.f32.mrb[0].mxu0
    %4200 = vmatprep.mubr.f32.mxu0 0.0
    %4201 = vmatmul.mubr.f32.gmra.mrb[0].mxu0 %v3426
    %v4202 = vpop.f32.mrb[0].mxu0
    %v4203 = vadd.f32 %v3818, %v4202
    %v4204 = vpop.f32.mrb[0].mxu0
    %4205 = vmatprep.mubr.f32.mxu0 0.0
    %4206 = vmatmul.mubr.f32.gmra.mrb[0].mxu0 %v3429
    %v4207 = vpop.f32.mrb[0].mxu0
    %v4208 = vadd.f32 %v3823, %v4207
    %v4209 = vpop.f32.mrb[0].mxu0
    %4210 = vmatprep.mubr.f32.mxu0 0.0
    %4211 = vmatmul.mubr.f32.gmra.mrb[0].mxu0 %v3432
    %v4212 = vpop.f32.mrb[0].mxu0
    %v4213 = vadd.f32 %v3828, %v4212
    %v4214 = vpop.f32.mrb[0].mxu0
    %4215 = vmatprep.mubr.f32.mxu0 0.0
    %4216 = vmatmul.mubr.f32.gmra.mrb[0].mxu0 %v3435
    %v4217 = vpop.f32.mrb[0].mxu0
    %v4218 = vadd.f32 %v3833, %v4217
    %v4219 = vpop.f32.mrb[0].mxu0
    %4220 = vmatprep.mubr.f32.mxu0 0.0
    %4221 = vmatmul.mubr.f32.gmra.mrb[0].mxu0 %v3438
    %v4222 = vpop.f32.mrb[0].mxu0
    %v4223 = vadd.f32 %v3838, %v4222
    %v4224 = vpop.f32.mrb[0].mxu0
    %4225 = vmatprep.mubr.f32.mxu0 0.0
    %4226 = vmatmul.mubr.f32.gmra.mrb[0].mxu0 %v3441
    %v4227 = vpop.f32.mrb[0].mxu0
    %v4228 = vadd.f32 %v3843, %v4227
    %v4229 = vpop.f32.mrb[0].mxu0
    %4230 = vmatprep.mubr.f32.mxu0 0.0
    %4231 = vmatmul.mubr.f32.gmra.mrb[0].mxu0 %v3444
    %v4232 = vpop.f32.mrb[0].mxu0
    %v4233 = vadd.f32 %v3848, %v4232
    %v4234 = vpop.f32.mrb[0].mxu0
    %4235 = vmatprep.mubr.f32.mxu0 0.0
    %4236 = vmatmul.mubr.f32.gmra.mrb[0].mxu0 %v3447
    %v4237 = vpop.f32.mrb[0].mxu0
    %v4238 = vadd.f32 %v3853, %v4237
    %v4239 = vpop.f32.mrb[0].mxu0
    %4240 = vmatprep.mubr.f32.mxu0 0.0
    %4241 = vmatmul.mubr.f32.gmra.mrb[0].mxu0 %v3450
    %v4242 = vpop.f32.mrb[0].mxu0
    %v4243 = vadd.f32 %v3858, %v4242
    %v4244 = vpop.f32.mrb[0].mxu0
    %4245 = vmatprep.mubr.f32.mxu0 0.0
    %4246 = vmatmul.mubr.f32.gmra.mrb[0].mxu0 %v3453
    %v4247 = vpop.f32.mrb[0].mxu0
    %v4248 = vadd.f32 %v3863, %v4247
    %v4249 = vpop.f32.mrb[0].mxu0
    %4250 = vmatprep.mubr.f32.mxu0 0.0
    %4251 = vmatmul.mubr.f32.gmra.mrb[0].mxu0 %v3456
    %v4252 = vpop.f32.mrb[0].mxu0
    %v4253 = vadd.f32 %v3868, %v4252
    %v4254 = vpop.f32.mrb[0].mxu0
    %4255 = vmatprep.mubr.f32.mxu0 0.0
    %4256 = vmatmul.mubr.f32.gmra.mrb[0].mxu0 %v3459
    %v4257 = vpop.f32.mrb[0].mxu0
    %v4258 = vadd.f32 %v3873, %v4257
    %v4259 = vpop.f32.mrb[0].mxu0
    %4260 = vmatprep.mubr.f32.mxu0 0.0
    %4261 = vmatmul.mubr.f32.gmra.mrb[0].mxu0 %v3462
    %v4262 = vpop.f32.mrb[0].mxu0
    %v4263 = vadd.f32 %v3878, %v4262
    %v4264 = vpop.f32.mrb[0].mxu0
    %4265 = vmatprep.mubr.f32.mxu0 0.0
    %4266 = vmatmul.mubr.f32.gmra.mrb[0].mxu0 %v3465
    %v4267 = vpop.f32.mrb[0].mxu0
    %v4268 = vadd.f32 %v3883, %v4267
    %v4269 = vpop.f32.mrb[0].mxu0
    %4270 = vmatprep.mubr.f32.mxu0 0.0
    %4271 = vmatmul.mubr.f32.gmra.mrb[0].mxu0 %v3468
    %v4272 = vpop.f32.mrb[0].mxu0
    %v4273 = vadd.f32 %v3888, %v4272
    %v4274 = vpop.f32.mrb[0].mxu0
    %4275 = vmatprep.mubr.f32.mxu0 0.0
    %4276 = vmatmul.mubr.f32.gmra.mrb[0].mxu0 %v3471
    %v4277 = vpop.f32.mrb[0].mxu0
    %v4278 = vadd.f32 %v3893, %v4277
    %v4279 = vpop.f32.mrb[0].mxu0
    %4280 = vmatprep.mubr.f32.mxu0 0.0
    %4281 = vmatmul.mubr.f32.gmra.mrb[0].mxu0 %v3474
    %v4282 = vpop.f32.mrb[0].mxu0
    %v4283 = vadd.f32 %v3898, %v4282
    %v4284 = vpop.f32.mrb[0].mxu0
    %4285 = vmatprep.mubr.f32.mxu0 0.0
    %4286 = vmatmul.mubr.f32.gmra.mrb[0].mxu0 %v3477
    %v4287 = vpop.f32.mrb[0].mxu0
    %v4288 = vadd.f32 %v3903, %v4287
    %v4289 = vpop.f32.mrb[0].mxu0
    %4290 = vmatprep.mubr.f32.mxu0 0.0
    %4291 = vmatmul.mubr.f32.gmra.mrb[0].mxu0 %v3480
    %v4292 = vpop.f32.mrb[0].mxu0
    %v4293 = vadd.f32 %v3908, %v4292
    %v4294 = vpop.f32.mrb[0].mxu0
    %4295 = vmatprep.mubr.f32.mxu0 0.0
    %4296 = vmatmul.mubr.f32.gmra.mrb[0].mxu0 %v3483
    %v4297 = vpop.f32.mrb[0].mxu0
    %v4298 = vadd.f32 %v3913, %v4297
    %v4299 = vpop.f32.mrb[0].mxu0
    %4300 = vmatprep.mubr.f32.mxu0 0.0
    %4301 = vmatmul.mubr.f32.gmra.mrb[0].mxu0 %v3486
    %v4302 = vpop.f32.mrb[0].mxu0
    %v4303 = vadd.f32 %v3918, %v4302
    %v4304 = vpop.f32.mrb[0].mxu0
    %4305 = vdwg.mxu0
    %v4306 = vadd.f32 %v2976, %v3988
    %v4307 = vadd.f32 %v2981, %v3993
    %v4308 = vadd.f32 %v2986, %v3998
    %v4309 = vadd.f32 %v2991, %v4003
    %v4310 = vadd.f32 %v2996, %v4008
    %v4311 = vadd.f32 %v3001, %v4013
    %v4312 = vadd.f32 %v3006, %v4018
    %v4313 = vadd.f32 %v3011, %v4023
    %v4314 = vadd.f32 %v3016, %v4028
    %v4315 = vadd.f32 %v3021, %v4033
    %v4316 = vadd.f32 %v3026, %v4038
    %v4317 = vadd.f32 %v3031, %v4043
    %v4318 = vadd.f32 %v3036, %v4048
    %v4319 = vadd.f32 %v3041, %v4053
    %v4320 = vadd.f32 %v3046, %v4058
    %v4321 = vadd.f32 %v3051, %v4063
    %v4322 = vadd.f32 %v3056, %v4068
    %v4323 = vadd.f32 %v3061, %v4073
    %v4324 = vadd.f32 %v3066, %v4078
    %v4325 = vadd.f32 %v3071, %v4083
    %v4326 = vadd.f32 %v3076, %v4088
    %v4327 = vadd.f32 %v3081, %v4093
    %v4328 = vadd.f32 %v3086, %v4098
    %v4329 = vadd.f32 %v3091, %v4103
    %v4330 = vadd.f32 %v3096, %v4108
    %v4331 = vadd.f32 %v3101, %v4113
    %v4332 = vadd.f32 %v3106, %v4118
    %v4333 = vadd.f32 %v3111, %v4123
    %v4334 = vadd.f32 %v3116, %v4128
    %v4335 = vadd.f32 %v3121, %v4133
    %v4336 = vadd.f32 %v3126, %v4138
    %v4337 = vadd.f32 %v3131, %v4143
    %v4338 = vadd.f32 %v3136, %v4148
    %v4339 = vadd.f32 %v3141, %v4153
    %v4340 = vadd.f32 %v3146, %v4158
    %v4341 = vadd.f32 %v3151, %v4163
    %v4342 = vadd.f32 %v3156, %v4168
    %v4343 = vadd.f32 %v3161, %v4173
    %v4344 = vadd.f32 %v3166, %v4178
    %v4345 = vadd.f32 %v3171, %v4183
    %v4346 = vadd.f32 %v3176, %v4188
    %v4347 = vadd.f32 %v3181, %v4193
    %v4348 = vadd.f32 %v3186, %v4198
    %v4349 = vadd.f32 %v3191, %v4203
    %v4350 = vadd.f32 %v3196, %v4208
    %v4351 = vadd.f32 %v3201, %v4213
    %v4352 = vadd.f32 %v3206, %v4218
    %v4353 = vadd.f32 %v3211, %v4223
    %v4354 = vadd.f32 %v3216, %v4228
    %v4355 = vadd.f32 %v3221, %v4233
    %v4356 = vadd.f32 %v3226, %v4238
    %v4357 = vadd.f32 %v3231, %v4243
    %v4358 = vadd.f32 %v3236, %v4248
    %v4359 = vadd.f32 %v3241, %v4253
    %v4360 = vadd.f32 %v3246, %v4258
    %v4361 = vadd.f32 %v3251, %v4263
    %v4362 = vadd.f32 %v3256, %v4268
    %v4363 = vadd.f32 %v3261, %v4273
    %v4364 = vadd.f32 %v3266, %v4278
    %v4365 = vadd.f32 %v3271, %v4283
    %v4366 = vadd.f32 %v3276, %v4288
    %v4367 = vadd.f32 %v3281, %v4293
    %v4368 = vadd.f32 %v3286, %v4298
    %v4369 = vadd.f32 %v3291, %v4303
    %4370 = vst [vmem:[%s6] sm:$0xff] %v4306
    %4371 = vst [vmem:[%s6 + $0x8] sm:$0xff] %v4307
    %4372 = vst [vmem:[%s6 + $0x10] sm:$0xff] %v4308
    %4373 = vst [vmem:[%s6 + $0x18] sm:$0xff] %v4309
    %4374 = vst [vmem:[%s6 + $0x20] sm:$0xff] %v4310
    %4375 = vst [vmem:[%s6 + $0x28] sm:$0xff] %v4311
    %4376 = vst [vmem:[%s6 + $0x30] sm:$0xff] %v4312
    %4377 = vst [vmem:[%s6 + $0x38] sm:$0xff] %v4313
    %4378 = vst [vmem:[%s6 + $0x40] sm:$0xff] %v4314
    %4379 = vst [vmem:[%s6 + $0x48] sm:$0xff] %v4315
    %4380 = vst [vmem:[%s6 + $0x50] sm:$0xff] %v4316
    %4381 = vst [vmem:[%s6 + $0x58] sm:$0xff] %v4317
    %4382 = vst [vmem:[%s6 + $0x60] sm:$0xff] %v4318
    %4383 = vst [vmem:[%s6 + $0x68] sm:$0xff] %v4319
    %4384 = vst [vmem:[%s6 + $0x70] sm:$0xff] %v4320
    %4385 = vst [vmem:[%s6 + $0x78] sm:$0xff] %v4321
    %4386 = vst [vmem:[%s6 + $0x80] sm:$0xff] %v4322
    %4387 = vst [vmem:[%s6 + $0x88] sm:$0xff] %v4323
    %4388 = vst [vmem:[%s6 + $0x90] sm:$0xff] %v4324
    %4389 = vst [vmem:[%s6 + $0x98] sm:$0xff] %v4325
    %4390 = vst [vmem:[%s6 + $0xa0] sm:$0xff] %v4326
    %4391 = vst [vmem:[%s6 + $0xa8] sm:$0xff] %v4327
    %4392 = vst [vmem:[%s6 + $0xb0] sm:$0xff] %v4328
    %4393 = vst [vmem:[%s6 + $0xb8] sm:$0xff] %v4329
    %4394 = vst [vmem:[%s6 + $0xc0] sm:$0xff] %v4330
    %4395 = vst [vmem:[%s6 + $0xc8] sm:$0xff] %v4331
    %4396 = vst [vmem:[%s6 + $0xd0] sm:$0xff] %v4332
    %4397 = vst [vmem:[%s6 + $0xd8] sm:$0xff] %v4333
    %4398 = vst [vmem:[%s6 + $0xe0] sm:$0xff] %v4334
    %4399 = vst [vmem:[%s6 + $0xe8] sm:$0xff] %v4335
    %4400 = vst [vmem:[%s6 + $0xf0] sm:$0xff] %v4336
    %4401 = vst [vmem:[%s6 + $0xf8] sm:$0xff] %v4337
    %4402 = vst [vmem:[%s6 + $0x100] sm:$0xff] %v4338
    %4403 = vst [vmem:[%s6 + $0x108] sm:$0xff] %v4339
    %4404 = vst [vmem:[%s6 + $0x110] sm:$0xff] %v4340
    %4405 = vst [vmem:[%s6 + $0x118] sm:$0xff] %v4341
    %4406 = vst [vmem:[%s6 + $0x120] sm:$0xff] %v4342
    %4407 = vst [vmem:[%s6 + $0x128] sm:$0xff] %v4343
    %4408 = vst [vmem:[%s6 + $0x130] sm:$0xff] %v4344
    %4409 = vst [vmem:[%s6 + $0x138] sm:$0xff] %v4345
    %4410 = vst [vmem:[%s6 + $0x140] sm:$0xff] %v4346
    %4411 = vst [vmem:[%s6 + $0x148] sm:$0xff] %v4347
    %4412 = vst [vmem:[%s6 + $0x150] sm:$0xff] %v4348
    %4413 = vst [vmem:[%s6 + $0x158] sm:$0xff] %v4349
    %4414 = vst [vmem:[%s6 + $0x160] sm:$0xff] %v4350
    %4415 = vst [vmem:[%s6 + $0x168] sm:$0xff] %v4351
    %4416 = vst [vmem:[%s6 + $0x170] sm:$0xff] %v4352
    %4417 = vst [vmem:[%s6 + $0x178] sm:$0xff] %v4353
    %4418 = vst [vmem:[%s6 + $0x180] sm:$0xff] %v4354
    %4419 = vst [vmem:[%s6 + $0x188] sm:$0xff] %v4355
    %4420 = vst [vmem:[%s6 + $0x190] sm:$0xff] %v4356
    %4421 = vst [vmem:[%s6 + $0x198] sm:$0xff] %v4357
    %4422 = vst [vmem:[%s6 + $0x1a0] sm:$0xff] %v4358
    %4423 = vst [vmem:[%s6 + $0x1a8] sm:$0xff] %v4359
    %4424 = vst [vmem:[%s6 + $0x1b0] sm:$0xff] %v4360
    %4425 = vst [vmem:[%s6 + $0x1b8] sm:$0xff] %v4361
    %4426 = vst [vmem:[%s6 + $0x1c0] sm:$0xff] %v4362
    %4427 = vst [vmem:[%s6 + $0x1c8] sm:$0xff] %v4363
    %4428 = vst [vmem:[%s6 + $0x1d0] sm:$0xff] %v4364
    %4429 = vst [vmem:[%s6 + $0x1d8] sm:$0xff] %v4365
    %4430 = vst [vmem:[%s6 + $0x1e0] sm:$0xff] %v4366
    %4431 = vst [vmem:[%s6 + $0x1e8] sm:$0xff] %v4367
    %4432 = vst [vmem:[%s6 + $0x1f0] sm:$0xff] %v4368
    %4433 = vst [vmem:[%s6 + $0x1f8] sm:$0xff] %v4369
    %v4434 = vadd.f32 %v4306, %v4307
    %v4435 = vadd.f32 %v4434, %v4308
    %v4436 = vadd.f32 %v4435, %v4309
    %v4437 = vadd.f32 %v4436, %v4310
    %v4438 = vadd.f32 %v4437, %v4311
    %v4439 = vadd.f32 %v4438, %v4312
    %v4440 = vadd.f32 %v4439, %v4313
    %v4441 = vadd.f32 %v4440, %v4314
    %v4442 = vadd.f32 %v4441, %v4315
    %v4443 = vadd.f32 %v4442, %v4316
    %v4444 = vadd.f32 %v4443, %v4317
    %v4445 = vadd.f32 %v4444, %v4318
    %v4446 = vadd.f32 %v4445, %v4319
    %v4447 = vadd.f32 %v4446, %v4320
    %v4448 = vadd.f32 %v4447, %v4321
    %v4449 = vadd.f32 %v4448, %v4322
    %v4450 = vadd.f32 %v4449, %v4323
    %v4451 = vadd.f32 %v4450, %v4324
    %v4452 = vadd.f32 %v4451, %v4325
    %v4453 = vadd.f32 %v4452, %v4326
    %v4454 = vadd.f32 %v4453, %v4327
    %v4455 = vadd.f32 %v4454, %v4328
    %v4456 = vadd.f32 %v4455, %v4329
    %v4457 = vadd.f32 %v4456, %v4330
    %v4458 = vadd.f32 %v4457, %v4331
    %v4459 = vadd.f32 %v4458, %v4332
    %v4460 = vadd.f32 %v4459, %v4333
    %v4461 = vadd.f32 %v4460, %v4334
    %v4462 = vadd.f32 %v4461, %v4335
    %v4463 = vadd.f32 %v4462, %v4336
    %v4464 = vadd.f32 %v4463, %v4337
    %v4465 = vadd.f32 %v4464, %v4338
    %v4466 = vadd.f32 %v4465, %v4339
    %v4467 = vadd.f32 %v4466, %v4340
    %v4468 = vadd.f32 %v4467, %v4341
    %v4469 = vadd.f32 %v4468, %v4342
    %v4470 = vadd.f32 %v4469, %v4343
    %v4471 = vadd.f32 %v4470, %v4344
    %v4472 = vadd.f32 %v4471, %v4345
    %v4473 = vadd.f32 %v4472, %v4346
    %v4474 = vadd.f32 %v4473, %v4347
    %v4475 = vadd.f32 %v4474, %v4348
    %v4476 = vadd.f32 %v4475, %v4349
    %v4477 = vadd.f32 %v4476, %v4350
    %v4478 = vadd.f32 %v4477, %v4351
    %v4479 = vadd.f32 %v4478, %v4352
    %v4480 = vadd.f32 %v4479, %v4353
    %v4481 = vadd.f32 %v4480, %v4354
    %v4482 = vadd.f32 %v4481, %v4355
    %v4483 = vadd.f32 %v4482, %v4356
    %v4484 = vadd.f32 %v4483, %v4357
    %v4485 = vadd.f32 %v4484, %v4358
    %v4486 = vadd.f32 %v4485, %v4359
    %v4487 = vadd.f32 %v4486, %v4360
    %v4488 = vadd.f32 %v4487, %v4361
    %v4489 = vadd.f32 %v4488, %v4362
    %v4490 = vadd.f32 %v4489, %v4363
    %v4491 = vadd.f32 %v4490, %v4364
    %v4492 = vadd.f32 %v4491, %v4365
    %v4493 = vadd.f32 %v4492, %v4366
    %v4494 = vadd.f32 %v4493, %v4367
    %v4495 = vadd.f32 %v4494, %v4368
    %v4496 = vadd.f32 %v4495, %v4369
    %v4497 = vrot.slane %v4496, 4
    %v4498 = vadd.f32 %v4496, %v4497
    %v4499 = vrot.slane %v4498, 2
    %v4500 = vadd.f32 %v4498, %v4499
    %v4501 = vrot.slane %v4500, 1
    %v4502 = vadd.f32 %v4500, %v4501
    %4503 = vst [vmem:[%s7] sm:$0x1] %v4502
    %v4504 = vmul.f32 %v4306, %v4306
    %v4505 = vmul.f32 %v4307, %v4307
    %v4506 = vmul.f32 %v4308, %v4308
    %v4507 = vmul.f32 %v4309, %v4309
    %v4508 = vmul.f32 %v4310, %v4310
    %v4509 = vmul.f32 %v4311, %v4311
    %v4510 = vmul.f32 %v4312, %v4312
    %v4511 = vmul.f32 %v4313, %v4313
    %v4512 = vmul.f32 %v4314, %v4314
    %v4513 = vmul.f32 %v4315, %v4315
    %v4514 = vmul.f32 %v4316, %v4316
    %v4515 = vmul.f32 %v4317, %v4317
    %v4516 = vmul.f32 %v4318, %v4318
    %v4517 = vmul.f32 %v4319, %v4319
    %v4518 = vmul.f32 %v4320, %v4320
    %v4519 = vmul.f32 %v4321, %v4321
    %v4520 = vmul.f32 %v4322, %v4322
    %v4521 = vmul.f32 %v4323, %v4323
    %v4522 = vmul.f32 %v4324, %v4324
    %v4523 = vmul.f32 %v4325, %v4325
    %v4524 = vmul.f32 %v4326, %v4326
    %v4525 = vmul.f32 %v4327, %v4327
    %v4526 = vmul.f32 %v4328, %v4328
    %v4527 = vmul.f32 %v4329, %v4329
    %v4528 = vmul.f32 %v4330, %v4330
    %v4529 = vmul.f32 %v4331, %v4331
    %v4530 = vmul.f32 %v4332, %v4332
    %v4531 = vmul.f32 %v4333, %v4333
    %v4532 = vmul.f32 %v4334, %v4334
    %v4533 = vmul.f32 %v4335, %v4335
    %v4534 = vmul.f32 %v4336, %v4336
    %v4535 = vmul.f32 %v4337, %v4337
    %v4536 = vmul.f32 %v4338, %v4338
    %v4537 = vmul.f32 %v4339, %v4339
    %v4538 = vmul.f32 %v4340, %v4340
    %v4539 = vmul.f32 %v4341, %v4341
    %v4540 = vmul.f32 %v4342, %v4342
    %v4541 = vmul.f32 %v4343, %v4343
    %v4542 = vmul.f32 %v4344, %v4344
    %v4543 = vmul.f32 %v4345, %v4345
    %v4544 = vmul.f32 %v4346, %v4346
    %v4545 = vmul.f32 %v4347, %v4347
    %v4546 = vmul.f32 %v4348, %v4348
    %v4547 = vmul.f32 %v4349, %v4349
    %v4548 = vmul.f32 %v4350, %v4350
    %v4549 = vmul.f32 %v4351, %v4351
    %v4550 = vmul.f32 %v4352, %v4352
    %v4551 = vmul.f32 %v4353, %v4353
    %v4552 = vmul.f32 %v4354, %v4354
    %v4553 = vmul.f32 %v4355, %v4355
    %v4554 = vmul.f32 %v4356, %v4356
    %v4555 = vmul.f32 %v4357, %v4357
    %v4556 = vmul.f32 %v4358, %v4358
    %v4557 = vmul.f32 %v4359, %v4359
    %v4558 = vmul.f32 %v4360, %v4360
    %v4559 = vmul.f32 %v4361, %v4361
    %v4560 = vmul.f32 %v4362, %v4362
    %v4561 = vmul.f32 %v4363, %v4363
    %v4562 = vmul.f32 %v4364, %v4364
    %v4563 = vmul.f32 %v4365, %v4365
    %v4564 = vmul.f32 %v4366, %v4366
    %v4565 = vmul.f32 %v4367, %v4367
    %v4566 = vmul.f32 %v4368, %v4368
    %v4567 = vmul.f32 %v4369, %v4369
    %v4568 = vadd.f32 %v4504, %v4505
    %v4569 = vadd.f32 %v4568, %v4506
    %v4570 = vadd.f32 %v4569, %v4507
    %v4571 = vadd.f32 %v4570, %v4508
    %v4572 = vadd.f32 %v4571, %v4509
    %v4573 = vadd.f32 %v4572, %v4510
    %v4574 = vadd.f32 %v4573, %v4511
    %v4575 = vadd.f32 %v4574, %v4512
    %v4576 = vadd.f32 %v4575, %v4513
    %v4577 = vadd.f32 %v4576, %v4514
    %v4578 = vadd.f32 %v4577, %v4515
    %v4579 = vadd.f32 %v4578, %v4516
    %v4580 = vadd.f32 %v4579, %v4517
    %v4581 = vadd.f32 %v4580, %v4518
    %v4582 = vadd.f32 %v4581, %v4519
    %v4583 = vadd.f32 %v4582, %v4520
    %v4584 = vadd.f32 %v4583, %v4521
    %v4585 = vadd.f32 %v4584, %v4522
    %v4586 = vadd.f32 %v4585, %v4523
    %v4587 = vadd.f32 %v4586, %v4524
    %v4588 = vadd.f32 %v4587, %v4525
    %v4589 = vadd.f32 %v4588, %v4526
    %v4590 = vadd.f32 %v4589, %v4527
    %v4591 = vadd.f32 %v4590, %v4528
    %v4592 = vadd.f32 %v4591, %v4529
    %v4593 = vadd.f32 %v4592, %v4530
    %v4594 = vadd.f32 %v4593, %v4531
    %v4595 = vadd.f32 %v4594, %v4532
    %v4596 = vadd.f32 %v4595, %v4533
    %v4597 = vadd.f32 %v4596, %v4534
    %v4598 = vadd.f32 %v4597, %v4535
    %v4599 = vadd.f32 %v4598, %v4536
    %v4600 = vadd.f32 %v4599, %v4537
    %v4601 = vadd.f32 %v4600, %v4538
    %v4602 = vadd.f32 %v4601, %v4539
    %v4603 = vadd.f32 %v4602, %v4540
    %v4604 = vadd.f32 %v4603, %v4541
    %v4605 = vadd.f32 %v4604, %v4542
    %v4606 = vadd.f32 %v4605, %v4543
    %v4607 = vadd.f32 %v4606, %v4544
    %v4608 = vadd.f32 %v4607, %v4545
    %v4609 = vadd.f32 %v4608, %v4546
    %v4610 = vadd.f32 %v4609, %v4547
    %v4611 = vadd.f32 %v4610, %v4548
    %v4612 = vadd.f32 %v4611, %v4549
    %v4613 = vadd.f32 %v4612, %v4550
    %v4614 = vadd.f32 %v4613, %v4551
    %v4615 = vadd.f32 %v4614, %v4552
    %v4616 = vadd.f32 %v4615, %v4553
    %v4617 = vadd.f32 %v4616, %v4554
    %v4618 = vadd.f32 %v4617, %v4555
    %v4619 = vadd.f32 %v4618, %v4556
    %v4620 = vadd.f32 %v4619, %v4557
    %v4621 = vadd.f32 %v4620, %v4558
    %v4622 = vadd.f32 %v4621, %v4559
    %v4623 = vadd.f32 %v4622, %v4560
    %v4624 = vadd.f32 %v4623, %v4561
    %v4625 = vadd.f32 %v4624, %v4562
    %v4626 = vadd.f32 %v4625, %v4563
    %v4627 = vadd.f32 %v4626, %v4564
    %v4628 = vadd.f32 %v4627, %v4565
    %v4629 = vadd.f32 %v4628, %v4566
    %v4630 = vadd.f32 %v4629, %v4567
    %v4631 = vrot.slane %v4630, 4
    %v4632 = vadd.f32 %v4630, %v4631
    %v4633 = vrot.slane %v4632, 2
    %v4634 = vadd.f32 %v4632, %v4633
    %v4635 = vrot.slane %v4634, 1
    %v4636 = vadd.f32 %v4634, %v4635
    %4637 = vst [vmem:[%s7 + $0x1] sm:$0x1] %v4636
    // Predicated region
    $region102: #{resblock_forward.4} parent=1 // pred_check
      _
    $region103: #{resblock_forward.4} parent=1 // pred_check_branch
      %4639 = sbr.rel (0) target = $region105
    $region104: #{resblock_forward.4} parent=1 // pred_region
      _
    $region105: #{resblock_forward.4} parent=1 // pred_fallthru
      _
    // Predicated region
    $region106: #{resblock_forward.4} parent=1 // pred_check
      _
    $region107: #{resblock_forward.4} parent=1 // pred_check_branch
      %4641 = sbr.rel (0) target = $region109
    $region108: #{resblock_forward.4} parent=1 // pred_region
      _
    $region109: #{resblock_forward.4} parent=1 // pred_fallthru
      _
    // Predicated region
    $region110: #{resblock_forward.4} parent=1 // pred_check
      _
    $region111: #{resblock_forward.4} parent=1 // pred_check_branch
      %4643 = sbr.rel (0) target = $region113
    $region112: #{resblock_forward.4} parent=1 // pred_region
      _
    $region113: #{resblock_forward.4} parent=1 // pred_fallthru
      _
    // Predicated region
    $region114: #{resblock_forward.4} parent=1 // pred_check
      _
    $region115: #{resblock_forward.4} parent=1 // pred_check_branch
      %4645 = sbr.rel (0) target = $region117
    $region116: #{resblock_forward.4} parent=1 // pred_region
      _
    $region117: #{resblock_forward.4} parent=1 // pred_fallthru
      _

</llo_original>
